<compile_context>
chip_gen: v5e
topology: v5e:2x2
jax: 0.10.0
libtpu: 0.0.40
codegen_flags: <defaults>
</compile_context>

<pallas_src>
import functools

import jax
import jax.numpy as jnp
from jax.experimental import pallas as pl
from jax.experimental.pallas import tpu as pltpu


def _amil_kernel(n_ref, h_ref, w1_ref, b1_ref, wa_ref, ba_ref, wc_ref,
                 wcls_ref, bcls_ref, logits_ref, m_sc, l_sc, acc_sc,
                 *, tile_n):
    """One tile of instances; online-softmax pooling carried across the grid."""
    i = pl.program_id(0)
    n_valid = n_ref[0]                                            # true bag size (SMEM scalar)

    @pl.when(i == 0)
    def _():
        m_sc[...] = jnp.full_like(m_sc, -jnp.inf)
        l_sc[...] = jnp.zeros_like(l_sc)
        acc_sc[...] = jnp.zeros_like(acc_sc)

    # Raw instance tile (tile_n, feats+2) f32 -> bf16 in-kernel (no host prep pass).
    hb = h_ref[...].astype(jnp.bfloat16)

    # fc: Linear(feats -> 512) + ReLU.  The 2 coordinate columns are dropped by the two
    # zero rows of W1p; bf16 MXU inputs, f32 accumulation.
    h1 = jnp.dot(hb, w1_ref[...], preferred_element_type=jnp.float32)
    h1 = jnp.maximum(h1 + b1_ref[...], 0.0)                       # (tile_n, 512) f32

    # Rows past the true bag size come from an uninitialized partial block: zero them so
    # the pooled accumulation below cannot be contaminated (0 * NaN/Inf guard).
    row = i * tile_n + jax.lax.broadcasted_iota(jnp.int32, (tile_n, 1), 0)
    valid = row < n_valid                                         # (tile_n, 1) bool
    h1 = jnp.where(valid, h1, 0.0)

    # Attn_Net layer 1: Linear(512 -> 256) + Tanh (bf16 MXU, f32 acc).
    a = jnp.tanh(jnp.dot(h1.astype(jnp.bfloat16), wa_ref[...],
                         preferred_element_type=jnp.float32) + ba_ref[...])

    # Attn_Net layer 2: Linear(256 -> 1).  Output dim 1 -> VPU broadcast-mul + lane
    # reduce instead of a degenerate MXU matmul.  The scalar bias bc of this layer
    # cancels in the instance softmax (shift invariance) so it is not passed in.
    s = jnp.sum(a * wc_ref[...], axis=-1, keepdims=True)          # (tile_n, 1)
    s = jnp.where(valid, s, -jnp.inf)                             # mask padded rows

    # Online softmax over the instance (grid) axis fused with attention pooling.
    m_prev = m_sc[...]                                            # (1, 1)
    m_new = jnp.maximum(m_prev, jnp.max(s, keepdims=True))        # (1, 1)
    scale = jnp.exp(m_prev - m_new)                               # (1, 1)
    p = jnp.exp(s - m_new)                                        # (tile_n, 1); 0 on masked rows

    l_sc[...] = scale * l_sc[...] + jnp.sum(p, keepdims=True)
    # Pooled update has output M=1: VPU broadcast-mul + sublane reduce, no transpose.
    acc_sc[...] = scale * acc_sc[...] + jnp.sum(p * h1, axis=0, keepdims=True)
    m_sc[...] = m_new

    @pl.when(i == pl.num_programs(0) - 1)
    def _():
        h_pool = acc_sc[...] / l_sc[...]                          # (1, 512)
        logits = jnp.dot(h_pool, wcls_ref[...],
                         preferred_element_type=jnp.float32) + bcls_ref[...]
        logits_ref[...] = logits.astype(logits_ref.dtype)


def amil_forward(data, params, *, n_classes=None, tile_n=512, n_valid=None):
    """data: (..., N, feats_size + 2) float array (bag of instances; first 2 cols coords).

    `n_valid` (optional): true bag size when `data` is padded/bucketed externally; the
    padded instance rows are masked inside the kernel, so bags bucketed to the same
    padded shape share a single compilation.
    """
    f2 = data.shape[-1]                                           # feats + 2
    # Pure reshape (free) -- no slice / pad / cast pass over the bag in HBM.
    h = data.astype(jnp.float32).reshape(-1, f2)                  # (N, feats+2) f32
    N = h.shape[0]
    n_valid = N if n_valid is None else n_valid

    H = params["w1"].shape[1]                                     # 512
    D = params["wa"].shape[1]                                     # 256
    C = params["wcls"].shape[1]

    # Fold the 2-coordinate drop into a zero-row-padded W1:  h_raw @ W1p == h_raw[:,2:] @ W1.
    w1p = jnp.concatenate(
        [jnp.zeros((2, H), params["w1"].dtype), params["w1"]], axis=0
    ).astype(jnp.bfloat16)                                        # (feats+2, 512) bf16
    wa = params["wa"].astype(jnp.bfloat16)                        # (512, 256) bf16
    b1, ba = params["b1"], params["ba"]                           # (1, 512), (1, 256) f32
    wc = params["wc"].reshape(1, -1).astype(jnp.float32)          # (1, 256) row for VPU reduce
    wcls, bcls = params["wcls"], params["bcls"]                   # (512, C), (1, C) f32

    # Tile the instance axis; ragged / partial last tile handled by in-kernel masking.
    tile = int(min(tile_n, N))                                    # block == full dim if N < tile_n
    grid = (pl.cdiv(N, tile),)
    n_arr = jnp.asarray([n_valid], dtype=jnp.int32)               # scalar-prefetch operand

    full = lambda i, n: (0, 0)                                    # index_maps see the prefetch ref
    kernel = functools.partial(_amil_kernel, tile_n=tile)

    logits = pl.pallas_call(
        kernel,
        out_shape=jax.ShapeDtypeStruct((1, C), jnp.float32),
        grid_spec=pltpu.PrefetchScalarGridSpec(
            num_scalar_prefetch=1,
            grid=grid,
            in_specs=[
                pl.BlockSpec((tile, f2), lambda i, n: (i, 0)),    # raw instance tile (f32)
                pl.BlockSpec((f2, H), full),                      # W1p (bf16), resident
                pl.BlockSpec((1, H), full),                       # b1 (f32)
                pl.BlockSpec((H, D), full),                       # Wa (bf16), resident
                pl.BlockSpec((1, D), full),                       # ba (f32)
                pl.BlockSpec((1, D), full),                       # Wc row (f32)
                pl.BlockSpec((H, C), full),                       # Wcls (f32)
                pl.BlockSpec((1, C), full),                       # bcls (f32)
            ],
            out_specs=pl.BlockSpec((1, C), full),
            scratch_shapes=[
                pltpu.VMEM((1, 1), jnp.float32),                  # running max
                pltpu.VMEM((1, 1), jnp.float32),                  # running denom
                pltpu.VMEM((1, H), jnp.float32),                  # weighted-feature acc
            ],
        ),
        compiler_params=pltpu.CompilerParams(
            dimension_semantics=("arbitrary",),                   # reduction carried across grid
            vmem_limit_bytes=32 << 20,                            # headroom for tile_n sweeps
        ),
    )(n_arr, h, w1p, b1, wa, ba, wc, wcls, bcls)

    y_prob = jax.nn.softmax(logits, axis=1)
    y_hat = jnp.argmax(logits, axis=1)
    return {"logits": logits, "Y_prob": y_prob, "Y_hat": y_hat}


def _reference_forward_f32(data, params):
    """Pure-JAX f32 reference mirroring the PyTorch module semantics."""
    feats = data.shape[-1] - 2
    h = data.astype(jnp.float32)[..., 2:].reshape(-1, feats)
    h1 = jax.nn.relu(h @ params["w1"] + params["b1"][0])
    a = jnp.tanh(h1 @ params["wa"] + params["ba"][0])
    s = a @ params["wc"] + params["bc"][0]                        # (N, 1)
    A = jax.nn.softmax(s.T, axis=1)                               # (1, N)
    hp = A @ h1                                                   # (1, 512)
    return hp @ params["wcls"] + params["bcls"][0]


def _reference_forward_bf16(data, params):
    """Reference with the same bf16 matmul inputs / f32 accumulation as the kernel."""
    feats = data.shape[-1] - 2
    h = data.astype(jnp.float32)[..., 2:].reshape(-1, feats).astype(jnp.bfloat16)
    w1 = params["w1"].astype(jnp.bfloat16)
    wa = params["wa"].astype(jnp.bfloat16)
    h1 = jax.nn.relu(jnp.dot(h, w1, preferred_element_type=jnp.float32) + params["b1"][0])
    a = jnp.tanh(jnp.dot(h1.astype(jnp.bfloat16), wa,
                         preferred_element_type=jnp.float32) + params["ba"][0])
    s = a @ params["wc"] + params["bc"][0]
    A = jax.nn.softmax(s.T, axis=1)
    hp = A @ h1
    return hp @ params["wcls"] + params["bcls"][0]


def init_params(key, feats_size=512, D=256, n_classes=2):
    ks = jax.random.split(key, 8)
    sc = 0.02
    return {
        "w1":   sc * jax.random.normal(ks[0], (feats_size, 512), jnp.float32),
        "b1":   sc * jax.random.normal(ks[1], (1, 512), jnp.float32),
        "wa":   sc * jax.random.normal(ks[2], (512, D), jnp.float32),
        "ba":   sc * jax.random.normal(ks[3], (1, D), jnp.float32),
        "wc":   sc * jax.random.normal(ks[4], (D, 1), jnp.float32),
        "bc":   sc * jax.random.normal(ks[5], (1, 1), jnp.float32),
        "wcls": sc * jax.random.normal(ks[6], (512, n_classes), jnp.float32),
        "bcls": sc * jax.random.normal(ks[7], (1, n_classes), jnp.float32),
    }


if __name__ == "__main__":
    key = jax.random.PRNGKey(0)
    k_data, k_param = jax.random.split(key)

    # Ragged bag size (not a multiple of the tile, >1 tile) exercises the partial-block
    # masking path and the multi-tile online-softmax carry.
    N, FEATS, C = 777, 512, 2
    data = jax.random.normal(k_data, (1, N, FEATS + 2), jnp.float32)
    params = init_params(k_param, feats_size=FEATS, n_classes=C)

    out = amil_forward(data, params, n_classes=C, tile_n=512)
    jax.block_until_ready(out["logits"])

    assert out["logits"].shape == (1, C)
    assert out["Y_prob"].shape == (1, C)
    assert out["Y_hat"].shape == (1,)

    # Tight check against a bf16-matched reference (same matmul precisions).
    ref_bf16 = _reference_forward_bf16(data, params)
    assert jnp.allclose(out["logits"], ref_bf16, atol=2e-3, rtol=2e-3), (
        out["logits"], ref_bf16)

    # Relaxed check against the full-f32 PyTorch-equivalent reference.
    ref_f32 = _reference_forward_f32(data, params)
    assert jnp.allclose(out["logits"], ref_f32, atol=2e-2, rtol=2e-2), (
        out["logits"], ref_f32)

    print("KERNEL_OK")
</pallas_src>

<mosaic_0001>
module attributes {stable_mosaic.version = 11 : i64} {
  func.func @_amil_kernel(%arg0: i32, %arg1: memref<1xi32, #tpu.memory_space<smem>>, %arg2: memref<512x514xf32, #tpu.memory_space<vmem>>, %arg3: memref<514x512xbf16, #tpu.memory_space<vmem>>, %arg4: memref<1x512xf32, #tpu.memory_space<vmem>>, %arg5: memref<512x256xbf16, #tpu.memory_space<vmem>>, %arg6: memref<1x256xf32, #tpu.memory_space<vmem>>, %arg7: memref<1x256xf32, #tpu.memory_space<vmem>>, %arg8: memref<512x2xf32, #tpu.memory_space<vmem>>, %arg9: memref<1x2xf32, #tpu.memory_space<vmem>>, %arg10: memref<1x2xf32, #tpu.memory_space<vmem>>, %arg11: memref<1x1xf32, #tpu.memory_space<vmem>>, %arg12: memref<1x1xf32, #tpu.memory_space<vmem>>, %arg13: memref<1x512xf32, #tpu.memory_space<vmem>>) attributes {dimension_semantics = [#tpu.dimension_semantics<arbitrary>], iteration_bounds = array<i64: 2>, scalar_prefetch = 1 : i64, scratch_operands = 3 : i64, tpu.core_type = #tpu.core_type<tc>, window_params = [{transform_indices = @transform_0, window_bounds = array<i64: 512, 514>}, {pipeline_mode = #tpu.pipeline_mode<synchronous>, transform_indices = @transform_1, window_bounds = array<i64: 514, 512>}, {pipeline_mode = #tpu.pipeline_mode<synchronous>, transform_indices = @transform_2, window_bounds = array<i64: 1, 512>}, {pipeline_mode = #tpu.pipeline_mode<synchronous>, transform_indices = @transform_3, window_bounds = array<i64: 512, 256>}, {pipeline_mode = #tpu.pipeline_mode<synchronous>, transform_indices = @transform_4, window_bounds = array<i64: 1, 256>}, {pipeline_mode = #tpu.pipeline_mode<synchronous>, transform_indices = @transform_5, window_bounds = array<i64: 1, 256>}, {pipeline_mode = #tpu.pipeline_mode<synchronous>, transform_indices = @transform_6, window_bounds = array<i64: 512, 2>}, {pipeline_mode = #tpu.pipeline_mode<synchronous>, transform_indices = @transform_7, window_bounds = array<i64: 1, 2>}, {pipeline_mode = #tpu.pipeline_mode<synchronous>, transform_indices = @transform_8, window_bounds = array<i64: 1, 2>}]} {
    %c0 = arith.constant 0 : index
    %0 = memref.load %arg1[%c0] : memref<1xi32, #tpu.memory_space<smem>>
    %c0_i32 = arith.constant 0 : i32
    %1 = arith.cmpi eq, %arg0, %c0_i32 : i32
    %2 = arith.extui %1 : i1 to i32
    %c0_i32_0 = arith.constant 0 : i32
    %3 = arith.cmpi ne, %2, %c0_i32_0 : i32
    scf.if %3 {
      %cst_34 = arith.constant 0xFF800000 : f32
      %71 = vector.broadcast %cst_34 : f32 to vector<1x1xf32>
      %c0_35 = arith.constant 0 : index
      %c0_36 = arith.constant 0 : index
      %72 = vector.load %arg11[%c0_35, %c0_36] : memref<1x1xf32, #tpu.memory_space<vmem>>, vector<1x1xf32>
      tpu.vector_store %arg11[%c0_35, %c0_36], %71 {strides = array<i32>} : memref<1x1xf32, #tpu.memory_space<vmem>>, vector<1x1xf32>,
      %cst_37 = arith.constant 0.000000e+00 : f32
      %73 = vector.broadcast %cst_37 : f32 to vector<1x1xf32>
      %c0_38 = arith.constant 0 : index
      %c0_39 = arith.constant 0 : index
      %74 = vector.load %arg12[%c0_38, %c0_39] : memref<1x1xf32, #tpu.memory_space<vmem>>, vector<1x1xf32>
      tpu.vector_store %arg12[%c0_38, %c0_39], %73 {strides = array<i32>} : memref<1x1xf32, #tpu.memory_space<vmem>>, vector<1x1xf32>,
      %cst_40 = arith.constant 0.000000e+00 : f32
      %75 = vector.broadcast %cst_40 : f32 to vector<1x512xf32>
      %c0_41 = arith.constant 0 : index
      %c0_42 = arith.constant 0 : index
      %76 = vector.load %arg13[%c0_41, %c0_42] : memref<1x512xf32, #tpu.memory_space<vmem>>, vector<1x512xf32>
      tpu.vector_store %arg13[%c0_41, %c0_42], %75 {strides = array<i32>} : memref<1x512xf32, #tpu.memory_space<vmem>>, vector<1x512xf32>,
    } else {
    }
    %c0_1 = arith.constant 0 : index
    %c0_2 = arith.constant 0 : index
    %4 = vector.load %arg2[%c0_1, %c0_2] : memref<512x514xf32, #tpu.memory_space<vmem>>, vector<512x514xf32>
    %5 = arith.truncf %4 : vector<512x514xf32> to vector<512x514xbf16>
    %c0_3 = arith.constant 0 : index
    %c0_4 = arith.constant 0 : index
    %6 = vector.load %arg3[%c0_3, %c0_4] : memref<514x512xbf16, #tpu.memory_space<vmem>>, vector<514x512xbf16>
    %cst = arith.constant dense<0.000000e+00> : vector<512x512xf32>
    %7 = tpu.matmul %5, %6, %cst {dimension_numbers = #tpu.dot_dimension_numbers<[1], [0], [0], [1], [0, 0, 1, 1], [], []>} : vector<512x514xbf16>, vector<514x512xbf16>, vector<512x512xf32> -> vector<512x512xf32>
    %c0_5 = arith.constant 0 : index
    %c0_6 = arith.constant 0 : index
    %8 = vector.load %arg4[%c0_5, %c0_6] : memref<1x512xf32, #tpu.memory_space<vmem>>, vector<1x512xf32>
    %9 = vector.broadcast %8 : vector<1x512xf32> to vector<512x512xf32>
    %10 = arith.addf %7, %9 : vector<512x512xf32>
    %cst_7 = arith.constant 0.000000e+00 : f32
    %11 = vector.broadcast %cst_7 : f32 to vector<512x512xf32>
    %12 = arith.maximumf %10, %11 : vector<512x512xf32>
    %c512_i32 = arith.constant 512 : i32
    %13 = arith.muli %arg0, %c512_i32 : i32
    %14 = tpu.iota {dimensions = array<i32: 0>} : vector<512x1xi32>
    %15 = vector.broadcast %13 : i32 to vector<512x1xi32>
    %16 = arith.addi %15, %14 : vector<512x1xi32>
    %17 = vector.broadcast %0 : i32 to vector<512x1xi32>
    %18 = arith.cmpi slt, %16, %17 : vector<512x1xi32>
    %cst_8 = arith.constant 0.000000e+00 : f32
    %19 = vector.shape_cast %18 : vector<512x1xi1> to vector<512x1xi1>
    %20 = vector.broadcast %19 : vector<512x1xi1> to vector<512x512xi1>
    %21 = vector.broadcast %cst_8 : f32 to vector<512x512xf32>
    %22 = arith.select %20, %12, %21 : vector<512x512xi1>, vector<512x512xf32>
    %23 = arith.truncf %22 : vector<512x512xf32> to vector<512x512xbf16>
    %c0_9 = arith.constant 0 : index
    %c0_10 = arith.constant 0 : index
    %24 = vector.load %arg5[%c0_9, %c0_10] : memref<512x256xbf16, #tpu.memory_space<vmem>>, vector<512x256xbf16>
    %cst_11 = arith.constant dense<0.000000e+00> : vector<512x256xf32>
    %25 = tpu.matmul %23, %24, %cst_11 {dimension_numbers = #tpu.dot_dimension_numbers<[1], [0], [0], [1], [0, 0, 1, 1], [], []>} : vector<512x512xbf16>, vector<512x256xbf16>, vector<512x256xf32> -> vector<512x256xf32>
    %c0_12 = arith.constant 0 : index
    %c0_13 = arith.constant 0 : index
    %26 = vector.load %arg6[%c0_12, %c0_13] : memref<1x256xf32, #tpu.memory_space<vmem>>, vector<1x256xf32>
    %27 = vector.broadcast %26 : vector<1x256xf32> to vector<512x256xf32>
    %28 = arith.addf %25, %27 : vector<512x256xf32>
    %29 = math.tanh %28 : vector<512x256xf32>
    %c0_14 = arith.constant 0 : index
    %c0_15 = arith.constant 0 : index
    %30 = vector.load %arg7[%c0_14, %c0_15] : memref<1x256xf32, #tpu.memory_space<vmem>>, vector<1x256xf32>
    %31 = vector.broadcast %30 : vector<1x256xf32> to vector<512x256xf32>
    %32 = arith.mulf %29, %31 : vector<512x256xf32>
    %cst_16 = arith.constant dense<0.000000e+00> : vector<512xf32>
    %33 = vector.multi_reduction <add>, %32, %cst_16 [1] : vector<512x256xf32> to vector<512xf32>
    %34 = vector.shape_cast %33 : vector<512xf32> to vector<512x1xf32>
    %cst_17 = arith.constant 0xFF800000 : f32
    %35 = vector.broadcast %cst_17 : f32 to vector<512x1xf32>
    %36 = arith.select %18, %34, %35 : vector<512x1xi1>, vector<512x1xf32>
    %c0_18 = arith.constant 0 : index
    %c0_19 = arith.constant 0 : index
    %37 = vector.load %arg11[%c0_18, %c0_19] : memref<1x1xf32, #tpu.memory_space<vmem>>, vector<1x1xf32>
    %38 = vector.shape_cast %36 : vector<512x1xf32> to vector<1x512x1xf32>
    %cst_20 = arith.constant dense<0xFF800000> : vector<1xf32>
    %39 = vector.multi_reduction <maximumf>, %38, %cst_20 [1, 2] : vector<1x512x1xf32> to vector<1xf32>
    %40 = vector.shape_cast %39 : vector<1xf32> to vector<1x1x1xf32>
    %41 = vector.extract %40[0, 0, 0] : f32 from vector<1x1x1xf32>
    %42 = vector.broadcast %41 : f32 to vector<1x1xf32>
    %43 = arith.maximumf %37, %42 : vector<1x1xf32>
    %44 = arith.subf %37, %43 : vector<1x1xf32>
    %45 = math.exp %44 : vector<1x1xf32>
    %46 = vector.broadcast %43 : vector<1x1xf32> to vector<512x1xf32>
    %47 = arith.subf %36, %46 : vector<512x1xf32>
    %48 = math.exp %47 : vector<512x1xf32>
    %c0_21 = arith.constant 0 : index
    %c0_22 = arith.constant 0 : index
    %49 = vector.load %arg12[%c0_21, %c0_22] : memref<1x1xf32, #tpu.memory_space<vmem>>, vector<1x1xf32>
    %50 = arith.mulf %45, %49 : vector<1x1xf32>
    %51 = vector.shape_cast %48 : vector<512x1xf32> to vector<1x512x1xf32>
    %cst_23 = arith.constant dense<0.000000e+00> : vector<1xf32>
    %52 = vector.multi_reduction <add>, %51, %cst_23 [1, 2] : vector<1x512x1xf32> to vector<1xf32>
    %53 = vector.shape_cast %52 : vector<1xf32> to vector<1x1x1xf32>
    %54 = vector.extract %53[0, 0, 0] : f32 from vector<1x1x1xf32>
    %55 = vector.broadcast %54 : f32 to vector<1x1xf32>
    %56 = arith.addf %50, %55 : vector<1x1xf32>
    %c0_24 = arith.constant 0 : index
    %c0_25 = arith.constant 0 : index
    %57 = vector.load %arg12[%c0_24, %c0_25] : memref<1x1xf32, #tpu.memory_space<vmem>>, vector<1x1xf32>
    tpu.vector_store %arg12[%c0_24, %c0_25], %56 {strides = array<i32>} : memref<1x1xf32, #tpu.memory_space<vmem>>, vector<1x1xf32>,
    %c0_26 = arith.constant 0 : index
    %c0_27 = arith.constant 0 : index
    %58 = vector.load %arg13[%c0_26, %c0_27] : memref<1x512xf32, #tpu.memory_space<vmem>>, vector<1x512xf32>
    %59 = vector.broadcast %45 : vector<1x1xf32> to vector<1x512xf32>
    %60 = arith.mulf %59, %58 : vector<1x512xf32>
    %61 = vector.broadcast %48 : vector<512x1xf32> to vector<512x512xf32>
    %62 = arith.mulf %61, %22 : vector<512x512xf32>
    %cst_28 = arith.constant dense<0.000000e+00> : vector<512xf32>
    %63 = vector.multi_reduction <add>, %62, %cst_28 [0] : vector<512x512xf32> to vector<512xf32>
    %64 = vector.shape_cast %63 : vector<512xf32> to vector<1x512xf32>
    %65 = arith.addf %60, %64 : vector<1x512xf32>
    %c0_29 = arith.constant 0 : index
    %c0_30 = arith.constant 0 : index
    %66 = vector.load %arg13[%c0_29, %c0_30] : memref<1x512xf32, #tpu.memory_space<vmem>>, vector<1x512xf32>
    tpu.vector_store %arg13[%c0_29, %c0_30], %65 {strides = array<i32>} : memref<1x512xf32, #tpu.memory_space<vmem>>, vector<1x512xf32>,
    %c0_31 = arith.constant 0 : index
    %c0_32 = arith.constant 0 : index
    %67 = vector.load %arg11[%c0_31, %c0_32] : memref<1x1xf32, #tpu.memory_space<vmem>>, vector<1x1xf32>
    tpu.vector_store %arg11[%c0_31, %c0_32], %43 {strides = array<i32>} : memref<1x1xf32, #tpu.memory_space<vmem>>, vector<1x1xf32>,
    %c1_i32 = arith.constant 1 : i32
    %68 = arith.cmpi eq, %arg0, %c1_i32 : i32
    %69 = arith.extui %68 : i1 to i32
    %c0_i32_33 = arith.constant 0 : i32
    %70 = arith.cmpi ne, %69, %c0_i32_33 : i32
    scf.if %70 {
      %c0_34 = arith.constant 0 : index
      %c0_35 = arith.constant 0 : index
      %71 = vector.load %arg13[%c0_34, %c0_35] : memref<1x512xf32, #tpu.memory_space<vmem>>, vector<1x512xf32>
      %c0_36 = arith.constant 0 : index
      %c0_37 = arith.constant 0 : index
      %72 = vector.load %arg12[%c0_36, %c0_37] : memref<1x1xf32, #tpu.memory_space<vmem>>, vector<1x1xf32>
      %73 = vector.broadcast %72 : vector<1x1xf32> to vector<1x512xf32>
      %74 = arith.divf %71, %73 : vector<1x512xf32>
      %c0_38 = arith.constant 0 : index
      %c0_39 = arith.constant 0 : index
      %75 = vector.load %arg8[%c0_38, %c0_39] : memref<512x2xf32, #tpu.memory_space<vmem>>, vector<512x2xf32>
      %cst_40 = arith.constant dense<0.000000e+00> : vector<1x2xf32>
      %76 = tpu.matmul %74, %75, %cst_40 {dimension_numbers = #tpu.dot_dimension_numbers<[1], [0], [0], [1], [0, 0, 1, 1], [], []>} : vector<1x512xf32>, vector<512x2xf32>, vector<1x2xf32> -> vector<1x2xf32>
      %c0_41 = arith.constant 0 : index
      %c0_42 = arith.constant 0 : index
      %77 = vector.load %arg9[%c0_41, %c0_42] : memref<1x2xf32, #tpu.memory_space<vmem>>, vector<1x2xf32>
      %78 = arith.addf %76, %77 : vector<1x2xf32>
      %c0_43 = arith.constant 0 : index
      %c0_44 = arith.constant 0 : index
      %79 = vector.load %arg10[%c0_43, %c0_44] : memref<1x2xf32, #tpu.memory_space<vmem>>, vector<1x2xf32>
      tpu.vector_store %arg10[%c0_43, %c0_44], %78 {strides = array<i32>} : memref<1x2xf32, #tpu.memory_space<vmem>>, vector<1x2xf32>,
    } else {
    }
    return
  }
  func.func @transform_0(%arg0: i32, %arg1: memref<1xi32, #tpu.memory_space<smem>>) -> (i32, i32) {
    %c0_i32 = arith.constant 0 : i32
    %c0_i32_0 = arith.constant 0 : i32
    return %arg0, %c0_i32 : i32, i32
  }
  func.func @transform_1(%arg0: i32, %arg1: memref<1xi32, #tpu.memory_space<smem>>) -> (i32, i32) {
    %c0_i32 = arith.constant 0 : i32
    %c0_i32_0 = arith.constant 0 : i32
    %c0_i32_1 = arith.constant 0 : i32
    return %c0_i32, %c0_i32_0 : i32, i32
  }
  func.func @transform_2(%arg0: i32, %arg1: memref<1xi32, #tpu.memory_space<smem>>) -> (i32, i32) {
    %c0_i32 = arith.constant 0 : i32
    %c0_i32_0 = arith.constant 0 : i32
    %c0_i32_1 = arith.constant 0 : i32
    return %c0_i32, %c0_i32_0 : i32, i32
  }
  func.func @transform_3(%arg0: i32, %arg1: memref<1xi32, #tpu.memory_space<smem>>) -> (i32, i32) {
    %c0_i32 = arith.constant 0 : i32
    %c0_i32_0 = arith.constant 0 : i32
    %c0_i32_1 = arith.constant 0 : i32
    return %c0_i32, %c0_i32_0 : i32, i32
  }
  func.func @transform_4(%arg0: i32, %arg1: memref<1xi32, #tpu.memory_space<smem>>) -> (i32, i32) {
    %c0_i32 = arith.constant 0 : i32
    %c0_i32_0 = arith.constant 0 : i32
    %c0_i32_1 = arith.constant 0 : i32
    return %c0_i32, %c0_i32_0 : i32, i32
  }
  func.func @transform_5(%arg0: i32, %arg1: memref<1xi32, #tpu.memory_space<smem>>) -> (i32, i32) {
    %c0_i32 = arith.constant 0 : i32
    %c0_i32_0 = arith.constant 0 : i32
    %c0_i32_1 = arith.constant 0 : i32
    return %c0_i32, %c0_i32_0 : i32, i32
  }
  func.func @transform_6(%arg0: i32, %arg1: memref<1xi32, #tpu.memory_space<smem>>) -> (i32, i32) {
    %c0_i32 = arith.constant 0 : i32
    %c0_i32_0 = arith.constant 0 : i32
    %c0_i32_1 = arith.constant 0 : i32
    return %c0_i32, %c0_i32_0 : i32, i32
  }
  func.func @transform_7(%arg0: i32, %arg1: memref<1xi32, #tpu.memory_space<smem>>) -> (i32, i32) {
    %c0_i32 = arith.constant 0 : i32
    %c0_i32_0 = arith.constant 0 : i32
    %c0_i32_1 = arith.constant 0 : i32
    return %c0_i32, %c0_i32_0 : i32, i32
  }
  func.func @transform_8(%arg0: i32, %arg1: memref<1xi32, #tpu.memory_space<smem>>) -> (i32, i32) {
    %c0_i32 = arith.constant 0 : i32
    %c0_i32_0 = arith.constant 0 : i32
    %c0_i32_1 = arith.constant 0 : i32
    return %c0_i32, %c0_i32_0 : i32, i32
  }
}

</mosaic_0001>

<llo_original>
// kernel: tpu_custom_call.1
$region0: #{tpu_custom_call.1}
  #allocation0 [shape = 'u32[]', space=smem, size = 0x4, offset = 0x4, fixed_abs, tag = 'smem constant byte address 0x4 - core index']
  #allocation1 [shape = 'u32[72,128]{1,0:T(1,128)}', space=vmem, size = 0x9000, scoped, tag = 'internal scratch']
  #allocation2 [shape = 'f32[1,1]{1,0:T(1,128)}', space=vmem, size = 0x200, scoped, tag = 'scratch operand']
  #allocation3 [shape = 'f32[1,1]{1,0:T(1,128)}', space=vmem, size = 0x200, scoped, tag = 'scratch operand']
  #allocation4 [shape = 'f32[1,512]{1,0:T(1,128)}', space=vmem, size = 0x800, scoped, tag = 'scratch operand']
  #allocation5 [shape = 's32[1]{0}', space=sflag, size = 0x4, scoped, tag = 'scoped memory for tpu_custom_call.1']
  #allocation6 [shape = 's32[1]{0:T(128)S(6)}', space=smem, size = 0x200, scoped, tag = 'prefetched SMEM operand 0']
  %s0 = inlined_call_operand.<no memory space> [shape: s32[1], index: 0, kind: input, shape index: {}]
  %s1 = inlined_call_operand.vmem [shape: f32[777,514], index: 1, kind: input, shape index: {}]
  %s2 = inlined_call_operand.vmem [shape: bf16[514,512], index: 2, kind: input, shape index: {}]
  %s3 = inlined_call_operand.vmem [shape: f32[1,512], index: 3, kind: input, shape index: {}]
  %s4 = inlined_call_operand.vmem [shape: bf16[512,256], index: 4, kind: input, shape index: {}]
  %s5 = inlined_call_operand.vmem [shape: f32[1,256], index: 5, kind: input, shape index: {}]
  %s6 = inlined_call_operand.vmem [shape: f32[1,256], index: 6, kind: input, shape index: {}]
  %s7 = inlined_call_operand.vmem [shape: f32[512,2], index: 7, kind: input, shape index: {}]
  %s8 = inlined_call_operand.vmem [shape: f32[1,2], index: 8, kind: input, shape index: {}]
  %s9 = inlined_call_operand.hbm [shape: f32[1,2], index: 9, kind: output, shape index: {}]
  %s10 = sld [smem:[#allocation0]]
  $region73: #{tpu_custom_call.1} parent=0
    _
  %s12 = ssub.s32 1, %s10
  %s13 = scalar_select 0, %s12, %s10
  %14 = sst [smem:[#allocation6]] %s0
  $region1: #{tpu_custom_call.1} parent=0
    #allocation7 [shape = 'u8[512]{0}', space=vmem, size = 0x400, scoped, tag = 'output window, operand 0, single buffered']
    #allocation8 [shape = 's32[2]{0}', space=sflag, size = 0x8, scoped, tag = 'scoped memory for tpu_custom_call.1']
    %15 = vsyncpa [#allocation8], 0
    loop: start=0, step=1, limit=4
    $region2: #{tpu_custom_call.1} parent=1 // loop_pre_header
      _
    $region3: #{tpu_custom_call.1} parent=1 // loop_header
      %s17 = sphi 0, %s21
      %p18 = scmp.ge.s32.totalorder %s17, 4
      %s27 = sphi 0, %s29
      %s30 = sphi 0, %s27
      %s31 = sphi 0, %s30
      %s47 = sphi 0, %s31
      %s51 = sphi 0, %s51
      %s53 = sphi 0, %s51
      %s54 = sphi 0, %s53
      %s68 = sphi 0, %s54
      %s72 = sphi 0, %s72
      %s74 = sphi 0, %s72
      %s75 = sphi 0, %s74
      %s89 = sphi 0, %s75
      %s93 = sphi 0, %s93
      %s95 = sphi 0, %s93
      %s96 = sphi 0, %s95
      %s110 = sphi 0, %s96
      %s114 = sphi 0, %s114
      %s116 = sphi 0, %s114
      %s117 = sphi 0, %s116
      %s131 = sphi 0, %s117
      %s135 = sphi 0, %s135
      %s137 = sphi 0, %s135
      %s138 = sphi 0, %s137
      %s152 = sphi 0, %s138
      %s156 = sphi 0, %s156
      %s158 = sphi 0, %s156
      %s159 = sphi 0, %s158
      %s173 = sphi 0, %s159
      %s177 = sphi 0, %s177
      %s179 = sphi 0, %s177
      %s180 = sphi 0, %s179
      %s194 = sphi 0, %s180
      %s198 = sphi 0, %s198
      %s200 = sphi 0, %s198
      %s201 = sphi 0, %s200
      %s215 = sphi 0, %s201
    $region4: #{tpu_custom_call.1} parent=1 // loop_header_branch
      %20 = sbr.rel (%p18) target = $region8
    $region5: #{tpu_custom_call.1} parent=1 // loop_body
      %s22 = ssub.s32 %s17, 1
      %s23 = ssub.s32 %s17, 2
      %s24 = sadd.s32 %s17, 1
      %s25 = ssub.s32 %s17, %s24
      %p26 = scmp.eq.s32.totalorder %s25, 0
      %s28 = sadd.s32 %s27, 1
      %s29 = scalar_select %p26, %s27, %s28
      %p32 = pneg %p26
      %p33 = scmp.eq.s32.totalorder %s17, 1
      %p34 = por %p32, %p33
      %p35 = scmp.ne.s32.totalorder %s27, %s30
      %p36 = scmp.eq.s32.totalorder %s17, 0
      %p37 = por %p35, %p36
      %p38 = scmp.ne.s32.totalorder %s27, %s30
      %p39 = scmp.eq.s32.totalorder %s22, 1
      %p40 = por %p38, %p39
      %p41 = scmp.ne.s32.totalorder %s30, %s31
      %p42 = scmp.eq.s32.totalorder %s22, 0
      %p43 = por %p41, %p42
      %p44 = scmp.ne.s32.totalorder %s30, %s31
      %p45 = scmp.eq.s32.totalorder %s23, 1
      %p46 = por %p44, %p45
      %p48 = scmp.ne.s32.totalorder %s31, %s47
      %p49 = scmp.eq.s32.totalorder %s23, 0
      %p50 = por %p48, %p49
      %s52 = sadd.s32 %s51, 1
      %p55 = scmp.eq.s32.totalorder %s17, 1
      %p56 = scmp.ne.s32.totalorder %s51, %s53
      %p57 = scmp.eq.s32.totalorder %s17, 0
      %p58 = por %p56, %p57
      %p59 = scmp.ne.s32.totalorder %s51, %s53
      %p60 = scmp.eq.s32.totalorder %s22, 1
      %p61 = por %p59, %p60
      %p62 = scmp.ne.s32.totalorder %s53, %s54
      %p63 = scmp.eq.s32.totalorder %s22, 0
      %p64 = por %p62, %p63
      %p65 = scmp.ne.s32.totalorder %s53, %s54
      %p66 = scmp.eq.s32.totalorder %s23, 1
      %p67 = por %p65, %p66
      %p69 = scmp.ne.s32.totalorder %s54, %s68
      %p70 = scmp.eq.s32.totalorder %s23, 0
      %p71 = por %p69, %p70
      %s73 = sadd.s32 %s72, 1
      %p76 = scmp.eq.s32.totalorder %s17, 1
      %p77 = scmp.ne.s32.totalorder %s72, %s74
      %p78 = scmp.eq.s32.totalorder %s17, 0
      %p79 = por %p77, %p78
      %p80 = scmp.ne.s32.totalorder %s72, %s74
      %p81 = scmp.eq.s32.totalorder %s22, 1
      %p82 = por %p80, %p81
      %p83 = scmp.ne.s32.totalorder %s74, %s75
      %p84 = scmp.eq.s32.totalorder %s22, 0
      %p85 = por %p83, %p84
      %p86 = scmp.ne.s32.totalorder %s74, %s75
      %p87 = scmp.eq.s32.totalorder %s23, 1
      %p88 = por %p86, %p87
      %p90 = scmp.ne.s32.totalorder %s75, %s89
      %p91 = scmp.eq.s32.totalorder %s23, 0
      %p92 = por %p90, %p91
      %s94 = sadd.s32 %s93, 1
      %p97 = scmp.eq.s32.totalorder %s17, 1
      %p98 = scmp.ne.s32.totalorder %s93, %s95
      %p99 = scmp.eq.s32.totalorder %s17, 0
      %p100 = por %p98, %p99
      %p101 = scmp.ne.s32.totalorder %s93, %s95
      %p102 = scmp.eq.s32.totalorder %s22, 1
      %p103 = por %p101, %p102
      %p104 = scmp.ne.s32.totalorder %s95, %s96
      %p105 = scmp.eq.s32.totalorder %s22, 0
      %p106 = por %p104, %p105
      %p107 = scmp.ne.s32.totalorder %s95, %s96
      %p108 = scmp.eq.s32.totalorder %s23, 1
      %p109 = por %p107, %p108
      %p111 = scmp.ne.s32.totalorder %s96, %s110
      %p112 = scmp.eq.s32.totalorder %s23, 0
      %p113 = por %p111, %p112
      %s115 = sadd.s32 %s114, 1
      %p118 = scmp.eq.s32.totalorder %s17, 1
      %p119 = scmp.ne.s32.totalorder %s114, %s116
      %p120 = scmp.eq.s32.totalorder %s17, 0
      %p121 = por %p119, %p120
      %p122 = scmp.ne.s32.totalorder %s114, %s116
      %p123 = scmp.eq.s32.totalorder %s22, 1
      %p124 = por %p122, %p123
      %p125 = scmp.ne.s32.totalorder %s116, %s117
      %p126 = scmp.eq.s32.totalorder %s22, 0
      %p127 = por %p125, %p126
      %p128 = scmp.ne.s32.totalorder %s116, %s117
      %p129 = scmp.eq.s32.totalorder %s23, 1
      %p130 = por %p128, %p129
      %p132 = scmp.ne.s32.totalorder %s117, %s131
      %p133 = scmp.eq.s32.totalorder %s23, 0
      %p134 = por %p132, %p133
      %s136 = sadd.s32 %s135, 1
      %p139 = scmp.eq.s32.totalorder %s17, 1
      %p140 = scmp.ne.s32.totalorder %s135, %s137
      %p141 = scmp.eq.s32.totalorder %s17, 0
      %p142 = por %p140, %p141
      %p143 = scmp.ne.s32.totalorder %s135, %s137
      %p144 = scmp.eq.s32.totalorder %s22, 1
      %p145 = por %p143, %p144
      %p146 = scmp.ne.s32.totalorder %s137, %s138
      %p147 = scmp.eq.s32.totalorder %s22, 0
      %p148 = por %p146, %p147
      %p149 = scmp.ne.s32.totalorder %s137, %s138
      %p150 = scmp.eq.s32.totalorder %s23, 1
      %p151 = por %p149, %p150
      %p153 = scmp.ne.s32.totalorder %s138, %s152
      %p154 = scmp.eq.s32.totalorder %s23, 0
      %p155 = por %p153, %p154
      %s157 = sadd.s32 %s156, 1
      %p160 = scmp.eq.s32.totalorder %s17, 1
      %p161 = scmp.ne.s32.totalorder %s156, %s158
      %p162 = scmp.eq.s32.totalorder %s17, 0
      %p163 = por %p161, %p162
      %p164 = scmp.ne.s32.totalorder %s156, %s158
      %p165 = scmp.eq.s32.totalorder %s22, 1
      %p166 = por %p164, %p165
      %p167 = scmp.ne.s32.totalorder %s158, %s159
      %p168 = scmp.eq.s32.totalorder %s22, 0
      %p169 = por %p167, %p168
      %p170 = scmp.ne.s32.totalorder %s158, %s159
      %p171 = scmp.eq.s32.totalorder %s23, 1
      %p172 = por %p170, %p171
      %p174 = scmp.ne.s32.totalorder %s159, %s173
      %p175 = scmp.eq.s32.totalorder %s23, 0
      %p176 = por %p174, %p175
      %s178 = sadd.s32 %s177, 1
      %p181 = scmp.eq.s32.totalorder %s17, 1
      %p182 = scmp.ne.s32.totalorder %s177, %s179
      %p183 = scmp.eq.s32.totalorder %s17, 0
      %p184 = por %p182, %p183
      %p185 = scmp.ne.s32.totalorder %s177, %s179
      %p186 = scmp.eq.s32.totalorder %s22, 1
      %p187 = por %p185, %p186
      %p188 = scmp.ne.s32.totalorder %s179, %s180
      %p189 = scmp.eq.s32.totalorder %s22, 0
      %p190 = por %p188, %p189
      %p191 = scmp.ne.s32.totalorder %s179, %s180
      %p192 = scmp.eq.s32.totalorder %s23, 1
      %p193 = por %p191, %p192
      %p195 = scmp.ne.s32.totalorder %s180, %s194
      %p196 = scmp.eq.s32.totalorder %s23, 0
      %p197 = por %p195, %p196
      %s199 = sadd.s32 %s198, 1
      %p202 = scmp.eq.s32.totalorder %s17, 1
      %p203 = scmp.ne.s32.totalorder %s198, %s200
      %p204 = scmp.eq.s32.totalorder %s17, 0
      %p205 = por %p203, %p204
      %p206 = scmp.ne.s32.totalorder %s198, %s200
      %p207 = scmp.eq.s32.totalorder %s22, 1
      %p208 = por %p206, %p207
      %p209 = scmp.ne.s32.totalorder %s200, %s201
      %p210 = scmp.eq.s32.totalorder %s22, 0
      %p211 = por %p209, %p210
      %p212 = scmp.ne.s32.totalorder %s200, %s201
      %p213 = scmp.eq.s32.totalorder %s23, 1
      %p214 = por %p212, %p213
      %p216 = scmp.ne.s32.totalorder %s201, %s215
      %p217 = scmp.eq.s32.totalorder %s23, 0
      %p218 = por %p216, %p217
      %p219 = scmp.le.s32.totalorder 1, %s17
      %p220 = scmp.lt.s32.totalorder %s17, 3
      %p221 = pnand %p219, %p220
      %p222 = pneg %p221
      // Predicated region
      $region9: #{tpu_custom_call.1} parent=5 // pred_check
        _
      $region10: #{tpu_custom_call.1} parent=5 // pred_check_branch
        %224 = sbr.rel (%p221) target = $region12
      $region11: #{tpu_custom_call.1} parent=5 // pred_region
        %s225 = ssub.s32 %s17, 1
        // Predicated region
        $region13: #{tpu_custom_call.1} parent=11 // pred_check
          %p226 = pneg %p64
        $region14: #{tpu_custom_call.1} parent=11 // pred_check_branch
          %228 = sbr.rel (%p226) target = $region16
        $region15: #{tpu_custom_call.1} parent=11 // pred_region
          _
        $region16: #{tpu_custom_call.1} parent=11 // pred_fallthru
          _
        // Predicated region
        $region17: #{tpu_custom_call.1} parent=11 // pred_check
          %p229 = pneg %p85
        $region18: #{tpu_custom_call.1} parent=11 // pred_check_branch
          %231 = sbr.rel (%p229) target = $region20
        $region19: #{tpu_custom_call.1} parent=11 // pred_region
          _
        $region20: #{tpu_custom_call.1} parent=11 // pred_fallthru
          _
        // Predicated region
        $region21: #{tpu_custom_call.1} parent=11 // pred_check
          %p232 = pneg %p106
        $region22: #{tpu_custom_call.1} parent=11 // pred_check_branch
          %234 = sbr.rel (%p232) target = $region24
        $region23: #{tpu_custom_call.1} parent=11 // pred_region
          _
        $region24: #{tpu_custom_call.1} parent=11 // pred_fallthru
          _
        // Predicated region
        $region25: #{tpu_custom_call.1} parent=11 // pred_check
          %p235 = pneg %p127
        $region26: #{tpu_custom_call.1} parent=11 // pred_check_branch
          %237 = sbr.rel (%p235) target = $region28
        $region27: #{tpu_custom_call.1} parent=11 // pred_region
          _
        $region28: #{tpu_custom_call.1} parent=11 // pred_fallthru
          _
        // Predicated region
        $region29: #{tpu_custom_call.1} parent=11 // pred_check
          %p238 = pneg %p148
        $region30: #{tpu_custom_call.1} parent=11 // pred_check_branch
          %240 = sbr.rel (%p238) target = $region32
        $region31: #{tpu_custom_call.1} parent=11 // pred_region
          _
        $region32: #{tpu_custom_call.1} parent=11 // pred_fallthru
          _
        // Predicated region
        $region33: #{tpu_custom_call.1} parent=11 // pred_check
          %p241 = pneg %p169
        $region34: #{tpu_custom_call.1} parent=11 // pred_check_branch
          %243 = sbr.rel (%p241) target = $region36
        $region35: #{tpu_custom_call.1} parent=11 // pred_region
          _
        $region36: #{tpu_custom_call.1} parent=11 // pred_fallthru
          _
        // Predicated region
        $region37: #{tpu_custom_call.1} parent=11 // pred_check
          %p244 = pneg %p190
        $region38: #{tpu_custom_call.1} parent=11 // pred_check_branch
          %246 = sbr.rel (%p244) target = $region40
        $region39: #{tpu_custom_call.1} parent=11 // pred_region
          _
        $region40: #{tpu_custom_call.1} parent=11 // pred_fallthru
          _
      $region12: #{tpu_custom_call.1} parent=5 // pred_fallthru
        _
      %p247 = scmp.lt.s32.totalorder %s17, 2
      // Predicated region
      $region41: #{tpu_custom_call.1} parent=5 // pred_check
        %p248 = pneg %p247
      $region42: #{tpu_custom_call.1} parent=5 // pred_check_branch
        %250 = sbr.rel (%p248) target = $region44
      $region43: #{tpu_custom_call.1} parent=5 // pred_region
        // Predicated region
        $region45: #{tpu_custom_call.1} parent=43 // pred_check
          %p251 = pneg %p37
        $region46: #{tpu_custom_call.1} parent=43 // pred_check_branch
          %253 = sbr.rel (%p251) target = $region48
        $region47: #{tpu_custom_call.1} parent=43 // pred_region
          %s254 = smul.u32 64, %s17
          %s255 = ssub.s32 98, %s254
          %p256 = scmp.lt.s32.totalorder %s255, 64
          %s257 = scalar_select %p256, %s255, 64
          %s258 = smul.u32 8, %s257
          %s259 = smul.u32 %s258, 5
          %p260 = scmp.lt.s32.totalorder %s254, 97
          %s261 = scalar_select %p260, %s254, 97
          %s262 = smul.addr %s261, 5
          %s263 = smul.addr %s262, 8
          %s264 = scalar_lea.vmem %s1, %s263
          %s265 = smul.u32 64, %s17
          %s266 = ssub.s32 98, %s265
          %p267 = scmp.lt.s32.totalorder %s266, 64
          %s268 = scalar_select %p267, %s266, 64
          %s269 = smul.u32 8, %s268
          %s270 = smul.u32 %s269, 5
        $region48: #{tpu_custom_call.1} parent=43 // pred_fallthru
          _
      $region44: #{tpu_custom_call.1} parent=5 // pred_fallthru
        _
      %p271 = scmp.le.s32.totalorder 1, %s17
      %p272 = scmp.lt.s32.totalorder %s17, 3
      %p273 = pnand %p271, %p272
      %p274 = pneg %p273
      // Predicated region
      $region49: #{tpu_custom_call.1} parent=5 // pred_check
        _
      $region50: #{tpu_custom_call.1} parent=5 // pred_check_branch
        %276 = sbr.rel (%p273) target = $region52
      $region51: #{tpu_custom_call.1} parent=5 // pred_region
        %s277 = ssub.s32 %s17, 1
        %s278 = smul.u32 64, %s22
        %s279 = ssub.s32 98, %s278
        %p280 = scmp.lt.s32.totalorder %s279, 64
        %s281 = scalar_select %p280, %s279, 64
        %s282 = smul.u32 8, %s281
        %s283 = smul.u32 %s282, 5
        %p284 = scmp.lt.s32.totalorder %s278, 97
        %s285 = scalar_select %p284, %s278, 97
        %s286 = smul.addr %s285, 5
        %s287 = smul.addr %s286, 8
        %s288 = scalar_lea.vmem %s1, %s287
        %p289 = pneg %p43
        %p290 = pneg %p40
        %p291 = pneg %p64
        %p292 = pneg %p61
        %p293 = pneg %p85
        %p294 = pneg %p82
        %p295 = pneg %p106
        %p296 = pneg %p103
        %p297 = pneg %p127
        %p298 = pneg %p124
        %p299 = pneg %p148
        %p300 = pneg %p145
        %p301 = pneg %p169
        %p302 = pneg %p166
        %p303 = pneg %p190
        %p304 = pneg %p187
        %p305 = pneg %p211
        %p306 = pneg %p208
        %s307 = smul.u32 64, %s22
        %s308 = ssub.s32 98, %s307
        %p309 = scmp.lt.s32.totalorder %s308, 64
        %s310 = scalar_select %p309, %s308, 64
        %s311 = smul.u32 8, %s310
        %s312 = smul.u32 %s311, 5
        %p313 = scmp.lt.s32.totalorder %s307, 97
        %s314 = scalar_select %p313, %s307, 97
        %s315 = smul.addr %s314, 5
        %s316 = smul.addr %s315, 8
        %s317 = scalar_lea.vmem %s1, %s316
        %s318 = smul.u32 64, %s22
        %s319 = ssub.s32 98, %s318
        %p320 = scmp.lt.s32.totalorder %s319, 64
        %s321 = scalar_select %p320, %s319, 64
        %s322 = smul.u32 8, %s321
        %s323 = smul.u32 %s322, 5
        %s325 = sld [smem:[#allocation6]]
        %p326 = scmp.eq.s32.totalorder %s22, 0
        // Predicated region
        $region53: #{tpu_custom_call.1} parent=51 // pred_check
          %p327 = pneg %p326
        $region54: #{tpu_custom_call.1} parent=51 // pred_check_branch
          %329 = sbr.rel (%p327) target = $region56
        $region55: #{tpu_custom_call.1} parent=51 // pred_region
          %vm330 = vcmask 0
          %331 = vst.msk [vmem:[#allocation2] sm:$0x1] %vm330, -inf
          %332 = vst.msk [vmem:[#allocation3] sm:$0x1] %vm330, 0.0
          %v333 = vlaneseq
          %vm334 = vcmp.ge.s32.totalorder %v333, 0
          %vm335 = vcmp.lt.s32.totalorder %v333, 512
          %vm336 = vmand %vm334, %vm335
          %337 = vst.msk [vmem:[#allocation4] sm:$0xf] %vm336, 0.0
        $region56: #{tpu_custom_call.1} parent=51 // pred_fallthru
          _
        %v338 = vld [vmem:[%s317] sm:$0xff]
        %v339 = vld [vmem:[%s317 + $0x8] sm:$0xff]
        %v340 = vld [vmem:[%s317 + $0x10] sm:$0xff]
        %v341 = vld [vmem:[%s317 + $0x18] sm:$0xff]
        %v342 = vld [vmem:[%s317 + $0x20] sm:$0xff]
        %v343 = vld [vmem:[%s317 + $0x28] sm:$0xff]
        %v344 = vld [vmem:[%s317 + $0x30] sm:$0xff]
        %v345 = vld [vmem:[%s317 + $0x38] sm:$0xff]
        %v346 = vld [vmem:[%s317 + $0x40] sm:$0xff]
        %v347 = vld [vmem:[%s317 + $0x48] sm:$0xff]
        %v348 = vld [vmem:[%s317 + $0x50] sm:$0xff]
        %v349 = vld [vmem:[%s317 + $0x58] sm:$0xff]
        %v350 = vld [vmem:[%s317 + $0x60] sm:$0xff]
        %v351 = vld [vmem:[%s317 + $0x68] sm:$0xff]
        %v352 = vld [vmem:[%s317 + $0x70] sm:$0xff]
        %v353 = vld [vmem:[%s317 + $0x78] sm:$0xff]
        %v354 = vld [vmem:[%s317 + $0x80] sm:$0xff]
        %v355 = vld [vmem:[%s317 + $0x88] sm:$0xff]
        %v356 = vld [vmem:[%s317 + $0x90] sm:$0xff]
        %v357 = vld [vmem:[%s317 + $0x98] sm:$0xff]
        %v358 = vld [vmem:[%s317 + $0xa0] sm:$0xff]
        %v359 = vld [vmem:[%s317 + $0xa8] sm:$0xff]
        %v360 = vld [vmem:[%s317 + $0xb0] sm:$0xff]
        %v361 = vld [vmem:[%s317 + $0xb8] sm:$0xff]
        %v362 = vld [vmem:[%s317 + $0xc0] sm:$0xff]
        %v363 = vld [vmem:[%s317 + $0xc8] sm:$0xff]
        %v364 = vld [vmem:[%s317 + $0xd0] sm:$0xff]
        %v365 = vld [vmem:[%s317 + $0xd8] sm:$0xff]
        %v366 = vld [vmem:[%s317 + $0xe0] sm:$0xff]
        %v367 = vld [vmem:[%s317 + $0xe8] sm:$0xff]
        %v368 = vld [vmem:[%s317 + $0xf0] sm:$0xff]
        %v369 = vld [vmem:[%s317 + $0xf8] sm:$0xff]
        %v370 = vld [vmem:[%s317 + $0x100] sm:$0xff]
        %v371 = vld [vmem:[%s317 + $0x108] sm:$0xff]
        %v372 = vld [vmem:[%s317 + $0x110] sm:$0xff]
        %v373 = vld [vmem:[%s317 + $0x118] sm:$0xff]
        %v374 = vld [vmem:[%s317 + $0x120] sm:$0xff]
        %v375 = vld [vmem:[%s317 + $0x128] sm:$0xff]
        %v376 = vld [vmem:[%s317 + $0x130] sm:$0xff]
        %v377 = vld [vmem:[%s317 + $0x138] sm:$0xff]
        %v378 = vld [vmem:[%s317 + $0x140] sm:$0xff]
        %v379 = vld [vmem:[%s317 + $0x148] sm:$0xff]
        %v380 = vld [vmem:[%s317 + $0x150] sm:$0xff]
        %v381 = vld [vmem:[%s317 + $0x158] sm:$0xff]
        %v382 = vld [vmem:[%s317 + $0x160] sm:$0xff]
        %v383 = vld [vmem:[%s317 + $0x168] sm:$0xff]
        %v384 = vld [vmem:[%s317 + $0x170] sm:$0xff]
        %v385 = vld [vmem:[%s317 + $0x178] sm:$0xff]
        %v386 = vld [vmem:[%s317 + $0x180] sm:$0xff]
        %v387 = vld [vmem:[%s317 + $0x188] sm:$0xff]
        %v388 = vld [vmem:[%s317 + $0x190] sm:$0xff]
        %v389 = vld [vmem:[%s317 + $0x198] sm:$0xff]
        %v390 = vld [vmem:[%s317 + $0x1a0] sm:$0xff]
        %v391 = vld [vmem:[%s317 + $0x1a8] sm:$0xff]
        %v392 = vld [vmem:[%s317 + $0x1b0] sm:$0xff]
        %v393 = vld [vmem:[%s317 + $0x1b8] sm:$0xff]
        %v394 = vld [vmem:[%s317 + $0x1c0] sm:$0xff]
        %v395 = vld [vmem:[%s317 + $0x1c8] sm:$0xff]
        %v396 = vld [vmem:[%s317 + $0x1d0] sm:$0xff]
        %v397 = vld [vmem:[%s317 + $0x1d8] sm:$0xff]
        %v398 = vld [vmem:[%s317 + $0x1e0] sm:$0xff]
        %v399 = vld [vmem:[%s317 + $0x1e8] sm:$0xff]
        %v400 = vld [vmem:[%s317 + $0x1f0] sm:$0xff]
        %v401 = vld [vmem:[%s317 + $0x1f8] sm:$0xff]
        %v402 = vld [vmem:[%s317 + $0x200] sm:$0xff]
        %v403 = vld [vmem:[%s317 + $0x208] sm:$0xff]
        %v404 = vld [vmem:[%s317 + $0x210] sm:$0xff]
        %v405 = vld [vmem:[%s317 + $0x218] sm:$0xff]
        %v406 = vld [vmem:[%s317 + $0x220] sm:$0xff]
        %v407 = vld [vmem:[%s317 + $0x228] sm:$0xff]
        %v408 = vld [vmem:[%s317 + $0x230] sm:$0xff]
        %v409 = vld [vmem:[%s317 + $0x238] sm:$0xff]
        %v410 = vld [vmem:[%s317 + $0x240] sm:$0xff]
        %v411 = vld [vmem:[%s317 + $0x248] sm:$0xff]
        %v412 = vld [vmem:[%s317 + $0x250] sm:$0xff]
        %v413 = vld [vmem:[%s317 + $0x258] sm:$0xff]
        %v414 = vld [vmem:[%s317 + $0x260] sm:$0xff]
        %v415 = vld [vmem:[%s317 + $0x268] sm:$0xff]
        %v416 = vld [vmem:[%s317 + $0x270] sm:$0xff]
        %v417 = vld [vmem:[%s317 + $0x278] sm:$0xff]
        %v418 = vld [vmem:[%s317 + $0x280] sm:$0xff]
        %v419 = vld [vmem:[%s317 + $0x288] sm:$0xff]
        %v420 = vld [vmem:[%s317 + $0x290] sm:$0xff]
        %v421 = vld [vmem:[%s317 + $0x298] sm:$0xff]
        %v422 = vld [vmem:[%s317 + $0x2a0] sm:$0xff]
        %v423 = vld [vmem:[%s317 + $0x2a8] sm:$0xff]
        %v424 = vld [vmem:[%s317 + $0x2b0] sm:$0xff]
        %v425 = vld [vmem:[%s317 + $0x2b8] sm:$0xff]
        %v426 = vld [vmem:[%s317 + $0x2c0] sm:$0xff]
        %v427 = vld [vmem:[%s317 + $0x2c8] sm:$0xff]
        %v428 = vld [vmem:[%s317 + $0x2d0] sm:$0xff]
        %v429 = vld [vmem:[%s317 + $0x2d8] sm:$0xff]
        %v430 = vld [vmem:[%s317 + $0x2e0] sm:$0xff]
        %v431 = vld [vmem:[%s317 + $0x2e8] sm:$0xff]
        %v432 = vld [vmem:[%s317 + $0x2f0] sm:$0xff]
        %v433 = vld [vmem:[%s317 + $0x2f8] sm:$0xff]
        %v434 = vld [vmem:[%s317 + $0x300] sm:$0xff]
        %v435 = vld [vmem:[%s317 + $0x308] sm:$0xff]
        %v436 = vld [vmem:[%s317 + $0x310] sm:$0xff]
        %v437 = vld [vmem:[%s317 + $0x318] sm:$0xff]
        %v438 = vld [vmem:[%s317 + $0x320] sm:$0xff]
        %v439 = vld [vmem:[%s317 + $0x328] sm:$0xff]
        %v440 = vld [vmem:[%s317 + $0x330] sm:$0xff]
        %v441 = vld [vmem:[%s317 + $0x338] sm:$0xff]
        %v442 = vld [vmem:[%s317 + $0x340] sm:$0xff]
        %v443 = vld [vmem:[%s317 + $0x348] sm:$0xff]
        %v444 = vld [vmem:[%s317 + $0x350] sm:$0xff]
        %v445 = vld [vmem:[%s317 + $0x358] sm:$0xff]
        %v446 = vld [vmem:[%s317 + $0x360] sm:$0xff]
        %v447 = vld [vmem:[%s317 + $0x368] sm:$0xff]
        %v448 = vld [vmem:[%s317 + $0x370] sm:$0xff]
        %v449 = vld [vmem:[%s317 + $0x378] sm:$0xff]
        %v450 = vld [vmem:[%s317 + $0x380] sm:$0xff]
        %v451 = vld [vmem:[%s317 + $0x388] sm:$0xff]
        %v452 = vld [vmem:[%s317 + $0x390] sm:$0xff]
        %v453 = vld [vmem:[%s317 + $0x398] sm:$0xff]
        %v454 = vld [vmem:[%s317 + $0x3a0] sm:$0xff]
        %v455 = vld [vmem:[%s317 + $0x3a8] sm:$0xff]
        %v456 = vld [vmem:[%s317 + $0x3b0] sm:$0xff]
        %v457 = vld [vmem:[%s317 + $0x3b8] sm:$0xff]
        %v458 = vld [vmem:[%s317 + $0x3c0] sm:$0xff]
        %v459 = vld [vmem:[%s317 + $0x3c8] sm:$0xff]
        %v460 = vld [vmem:[%s317 + $0x3d0] sm:$0xff]
        %v461 = vld [vmem:[%s317 + $0x3d8] sm:$0xff]
        %v462 = vld [vmem:[%s317 + $0x3e0] sm:$0xff]
        %v463 = vld [vmem:[%s317 + $0x3e8] sm:$0xff]
        %v464 = vld [vmem:[%s317 + $0x3f0] sm:$0xff]
        %v465 = vld [vmem:[%s317 + $0x3f8] sm:$0xff]
        %v466 = vld [vmem:[%s317 + $0x400] sm:$0xff]
        %v467 = vld [vmem:[%s317 + $0x408] sm:$0xff]
        %v468 = vld [vmem:[%s317 + $0x410] sm:$0xff]
        %v469 = vld [vmem:[%s317 + $0x418] sm:$0xff]
        %v470 = vld [vmem:[%s317 + $0x420] sm:$0xff]
        %v471 = vld [vmem:[%s317 + $0x428] sm:$0xff]
        %v472 = vld [vmem:[%s317 + $0x430] sm:$0xff]
        %v473 = vld [vmem:[%s317 + $0x438] sm:$0xff]
        %v474 = vld [vmem:[%s317 + $0x440] sm:$0xff]
        %v475 = vld [vmem:[%s317 + $0x448] sm:$0xff]
        %v476 = vld [vmem:[%s317 + $0x450] sm:$0xff]
        %v477 = vld [vmem:[%s317 + $0x458] sm:$0xff]
        %v478 = vld [vmem:[%s317 + $0x460] sm:$0xff]
        %v479 = vld [vmem:[%s317 + $0x468] sm:$0xff]
        %v480 = vld [vmem:[%s317 + $0x470] sm:$0xff]
        %v481 = vld [vmem:[%s317 + $0x478] sm:$0xff]
        %v482 = vld [vmem:[%s317 + $0x480] sm:$0xff]
        %v483 = vld [vmem:[%s317 + $0x488] sm:$0xff]
        %v484 = vld [vmem:[%s317 + $0x490] sm:$0xff]
        %v485 = vld [vmem:[%s317 + $0x498] sm:$0xff]
        %v486 = vld [vmem:[%s317 + $0x4a0] sm:$0xff]
        %v487 = vld [vmem:[%s317 + $0x4a8] sm:$0xff]
        %v488 = vld [vmem:[%s317 + $0x4b0] sm:$0xff]
        %v489 = vld [vmem:[%s317 + $0x4b8] sm:$0xff]
        %v490 = vld [vmem:[%s317 + $0x4c0] sm:$0xff]
        %v491 = vld [vmem:[%s317 + $0x4c8] sm:$0xff]
        %v492 = vld [vmem:[%s317 + $0x4d0] sm:$0xff]
        %v493 = vld [vmem:[%s317 + $0x4d8] sm:$0xff]
        %v494 = vld [vmem:[%s317 + $0x4e0] sm:$0xff]
        %v495 = vld [vmem:[%s317 + $0x4e8] sm:$0xff]
        %v496 = vld [vmem:[%s317 + $0x4f0] sm:$0xff]
        %v497 = vld [vmem:[%s317 + $0x4f8] sm:$0xff]
        %v498 = vld [vmem:[%s317 + $0x500] sm:$0xff]
        %v499 = vld [vmem:[%s317 + $0x508] sm:$0xff]
        %v500 = vld [vmem:[%s317 + $0x510] sm:$0xff]
        %v501 = vld [vmem:[%s317 + $0x518] sm:$0xff]
        %v502 = vld [vmem:[%s317 + $0x520] sm:$0xff]
        %v503 = vld [vmem:[%s317 + $0x528] sm:$0xff]
        %v504 = vld [vmem:[%s317 + $0x530] sm:$0xff]
        %v505 = vld [vmem:[%s317 + $0x538] sm:$0xff]
        %v506 = vld [vmem:[%s317 + $0x540] sm:$0xff]
        %v507 = vld [vmem:[%s317 + $0x548] sm:$0xff]
        %v508 = vld [vmem:[%s317 + $0x550] sm:$0xff]
        %v509 = vld [vmem:[%s317 + $0x558] sm:$0xff]
        %v510 = vld [vmem:[%s317 + $0x560] sm:$0xff]
        %v511 = vld [vmem:[%s317 + $0x568] sm:$0xff]
        %v512 = vld [vmem:[%s317 + $0x570] sm:$0xff]
        %v513 = vld [vmem:[%s317 + $0x578] sm:$0xff]
        %v514 = vld [vmem:[%s317 + $0x580] sm:$0xff]
        %v515 = vld [vmem:[%s317 + $0x588] sm:$0xff]
        %v516 = vld [vmem:[%s317 + $0x590] sm:$0xff]
        %v517 = vld [vmem:[%s317 + $0x598] sm:$0xff]
        %v518 = vld [vmem:[%s317 + $0x5a0] sm:$0xff]
        %v519 = vld [vmem:[%s317 + $0x5a8] sm:$0xff]
        %v520 = vld [vmem:[%s317 + $0x5b0] sm:$0xff]
        %v521 = vld [vmem:[%s317 + $0x5b8] sm:$0xff]
        %v522 = vld [vmem:[%s317 + $0x5c0] sm:$0xff]
        %v523 = vld [vmem:[%s317 + $0x5c8] sm:$0xff]
        %v524 = vld [vmem:[%s317 + $0x5d0] sm:$0xff]
        %v525 = vld [vmem:[%s317 + $0x5d8] sm:$0xff]
        %v526 = vld [vmem:[%s317 + $0x5e0] sm:$0xff]
        %v527 = vld [vmem:[%s317 + $0x5e8] sm:$0xff]
        %v528 = vld [vmem:[%s317 + $0x5f0] sm:$0xff]
        %v529 = vld [vmem:[%s317 + $0x5f8] sm:$0xff]
        %v530 = vld [vmem:[%s317 + $0x600] sm:$0xff]
        %v531 = vld [vmem:[%s317 + $0x608] sm:$0xff]
        %v532 = vld [vmem:[%s317 + $0x610] sm:$0xff]
        %v533 = vld [vmem:[%s317 + $0x618] sm:$0xff]
        %v534 = vld [vmem:[%s317 + $0x620] sm:$0xff]
        %v535 = vld [vmem:[%s317 + $0x628] sm:$0xff]
        %v536 = vld [vmem:[%s317 + $0x630] sm:$0xff]
        %v537 = vld [vmem:[%s317 + $0x638] sm:$0xff]
        %v538 = vld [vmem:[%s317 + $0x640] sm:$0xff]
        %v539 = vld [vmem:[%s317 + $0x648] sm:$0xff]
        %v540 = vld [vmem:[%s317 + $0x650] sm:$0xff]
        %v541 = vld [vmem:[%s317 + $0x658] sm:$0xff]
        %v542 = vld [vmem:[%s317 + $0x660] sm:$0xff]
        %v543 = vld [vmem:[%s317 + $0x668] sm:$0xff]
        %v544 = vld [vmem:[%s317 + $0x670] sm:$0xff]
        %v545 = vld [vmem:[%s317 + $0x678] sm:$0xff]
        %v546 = vld [vmem:[%s317 + $0x680] sm:$0xff]
        %v547 = vld [vmem:[%s317 + $0x688] sm:$0xff]
        %v548 = vld [vmem:[%s317 + $0x690] sm:$0xff]
        %v549 = vld [vmem:[%s317 + $0x698] sm:$0xff]
        %v550 = vld [vmem:[%s317 + $0x6a0] sm:$0xff]
        %v551 = vld [vmem:[%s317 + $0x6a8] sm:$0xff]
        %v552 = vld [vmem:[%s317 + $0x6b0] sm:$0xff]
        %v553 = vld [vmem:[%s317 + $0x6b8] sm:$0xff]
        %v554 = vld [vmem:[%s317 + $0x6c0] sm:$0xff]
        %v555 = vld [vmem:[%s317 + $0x6c8] sm:$0xff]
        %v556 = vld [vmem:[%s317 + $0x6d0] sm:$0xff]
        %v557 = vld [vmem:[%s317 + $0x6d8] sm:$0xff]
        %v558 = vld [vmem:[%s317 + $0x6e0] sm:$0xff]
        %v559 = vld [vmem:[%s317 + $0x6e8] sm:$0xff]
        %v560 = vld [vmem:[%s317 + $0x6f0] sm:$0xff]
        %v561 = vld [vmem:[%s317 + $0x6f8] sm:$0xff]
        %v562 = vld [vmem:[%s317 + $0x700] sm:$0xff]
        %v563 = vld [vmem:[%s317 + $0x708] sm:$0xff]
        %v564 = vld [vmem:[%s317 + $0x710] sm:$0xff]
        %v565 = vld [vmem:[%s317 + $0x718] sm:$0xff]
        %v566 = vld [vmem:[%s317 + $0x720] sm:$0xff]
        %v567 = vld [vmem:[%s317 + $0x728] sm:$0xff]
        %v568 = vld [vmem:[%s317 + $0x730] sm:$0xff]
        %v569 = vld [vmem:[%s317 + $0x738] sm:$0xff]
        %v570 = vld [vmem:[%s317 + $0x740] sm:$0xff]
        %v571 = vld [vmem:[%s317 + $0x748] sm:$0xff]
        %v572 = vld [vmem:[%s317 + $0x750] sm:$0xff]
        %v573 = vld [vmem:[%s317 + $0x758] sm:$0xff]
        %v574 = vld [vmem:[%s317 + $0x760] sm:$0xff]
        %v575 = vld [vmem:[%s317 + $0x768] sm:$0xff]
        %v576 = vld [vmem:[%s317 + $0x770] sm:$0xff]
        %v577 = vld [vmem:[%s317 + $0x778] sm:$0xff]
        %v578 = vld [vmem:[%s317 + $0x780] sm:$0xff]
        %v579 = vld [vmem:[%s317 + $0x788] sm:$0xff]
        %v580 = vld [vmem:[%s317 + $0x790] sm:$0xff]
        %v581 = vld [vmem:[%s317 + $0x798] sm:$0xff]
        %v582 = vld [vmem:[%s317 + $0x7a0] sm:$0xff]
        %v583 = vld [vmem:[%s317 + $0x7a8] sm:$0xff]
        %v584 = vld [vmem:[%s317 + $0x7b0] sm:$0xff]
        %v585 = vld [vmem:[%s317 + $0x7b8] sm:$0xff]
        %v586 = vld [vmem:[%s317 + $0x7c0] sm:$0xff]
        %v587 = vld [vmem:[%s317 + $0x7c8] sm:$0xff]
        %v588 = vld [vmem:[%s317 + $0x7d0] sm:$0xff]
        %v589 = vld [vmem:[%s317 + $0x7d8] sm:$0xff]
        %v590 = vld [vmem:[%s317 + $0x7e0] sm:$0xff]
        %v591 = vld [vmem:[%s317 + $0x7e8] sm:$0xff]
        %v592 = vld [vmem:[%s317 + $0x7f0] sm:$0xff]
        %v593 = vld [vmem:[%s317 + $0x7f8] sm:$0xff]
        %v594 = vld [vmem:[%s317 + $0x800] sm:$0xff]
        %v595 = vld [vmem:[%s317 + $0x808] sm:$0xff]
        %v596 = vld [vmem:[%s317 + $0x810] sm:$0xff]
        %v597 = vld [vmem:[%s317 + $0x818] sm:$0xff]
        %v598 = vld [vmem:[%s317 + $0x820] sm:$0xff]
        %v599 = vld [vmem:[%s317 + $0x828] sm:$0xff]
        %v600 = vld [vmem:[%s317 + $0x830] sm:$0xff]
        %v601 = vld [vmem:[%s317 + $0x838] sm:$0xff]
        %v602 = vld [vmem:[%s317 + $0x840] sm:$0xff]
        %v603 = vld [vmem:[%s317 + $0x848] sm:$0xff]
        %v604 = vld [vmem:[%s317 + $0x850] sm:$0xff]
        %v605 = vld [vmem:[%s317 + $0x858] sm:$0xff]
        %v606 = vld [vmem:[%s317 + $0x860] sm:$0xff]
        %v607 = vld [vmem:[%s317 + $0x868] sm:$0xff]
        %v608 = vld [vmem:[%s317 + $0x870] sm:$0xff]
        %v609 = vld [vmem:[%s317 + $0x878] sm:$0xff]
        %v610 = vld [vmem:[%s317 + $0x880] sm:$0xff]
        %v611 = vld [vmem:[%s317 + $0x888] sm:$0xff]
        %v612 = vld [vmem:[%s317 + $0x890] sm:$0xff]
        %v613 = vld [vmem:[%s317 + $0x898] sm:$0xff]
        %v614 = vld [vmem:[%s317 + $0x8a0] sm:$0xff]
        %v615 = vld [vmem:[%s317 + $0x8a8] sm:$0xff]
        %v616 = vld [vmem:[%s317 + $0x8b0] sm:$0xff]
        %v617 = vld [vmem:[%s317 + $0x8b8] sm:$0xff]
        %v618 = vld [vmem:[%s317 + $0x8c0] sm:$0xff]
        %v619 = vld [vmem:[%s317 + $0x8c8] sm:$0xff]
        %v620 = vld [vmem:[%s317 + $0x8d0] sm:$0xff]
        %v621 = vld [vmem:[%s317 + $0x8d8] sm:$0xff]
        %v622 = vld [vmem:[%s317 + $0x8e0] sm:$0xff]
        %v623 = vld [vmem:[%s317 + $0x8e8] sm:$0xff]
        %v624 = vld [vmem:[%s317 + $0x8f0] sm:$0xff]
        %v625 = vld [vmem:[%s317 + $0x8f8] sm:$0xff]
        %v626 = vld [vmem:[%s317 + $0x900] sm:$0xff]
        %v627 = vld [vmem:[%s317 + $0x908] sm:$0xff]
        %v628 = vld [vmem:[%s317 + $0x910] sm:$0xff]
        %v629 = vld [vmem:[%s317 + $0x918] sm:$0xff]
        %v630 = vld [vmem:[%s317 + $0x920] sm:$0xff]
        %v631 = vld [vmem:[%s317 + $0x928] sm:$0xff]
        %v632 = vld [vmem:[%s317 + $0x930] sm:$0xff]
        %v633 = vld [vmem:[%s317 + $0x938] sm:$0xff]
        %v634 = vld [vmem:[%s317 + $0x940] sm:$0xff]
        %v635 = vld [vmem:[%s317 + $0x948] sm:$0xff]
        %v636 = vld [vmem:[%s317 + $0x950] sm:$0xff]
        %v637 = vld [vmem:[%s317 + $0x958] sm:$0xff]
        %v638 = vld [vmem:[%s317 + $0x960] sm:$0xff]
        %v639 = vld [vmem:[%s317 + $0x968] sm:$0xff]
        %v640 = vld [vmem:[%s317 + $0x970] sm:$0xff]
        %v641 = vld [vmem:[%s317 + $0x978] sm:$0xff]
        %v642 = vld [vmem:[%s317 + $0x980] sm:$0xff]
        %v643 = vld [vmem:[%s317 + $0x988] sm:$0xff]
        %v644 = vld [vmem:[%s317 + $0x990] sm:$0xff]
        %v645 = vld [vmem:[%s317 + $0x998] sm:$0xff]
        %v646 = vld [vmem:[%s317 + $0x9a0] sm:$0xff]
        %v647 = vld [vmem:[%s317 + $0x9a8] sm:$0xff]
        %v648 = vld [vmem:[%s317 + $0x9b0] sm:$0xff]
        %v649 = vld [vmem:[%s317 + $0x9b8] sm:$0xff]
        %v650 = vld [vmem:[%s317 + $0x9c0] sm:$0xff]
        %v651 = vld [vmem:[%s317 + $0x9c8] sm:$0xff]
        %v652 = vld [vmem:[%s317 + $0x9d0] sm:$0xff]
        %v653 = vld [vmem:[%s317 + $0x9d8] sm:$0xff]
        %v654 = vld [vmem:[%s317 + $0x9e0] sm:$0xff]
        %v655 = vld [vmem:[%s317 + $0x9e8] sm:$0xff]
        %v656 = vld [vmem:[%s317 + $0x9f0] sm:$0xff]
        %v657 = vld [vmem:[%s317 + $0x9f8] sm:$0xff]
        %v658 = vpack.c.bf16 %v343, %v338
        %v659 = vpack.c.bf16 %v344, %v339
        %v660 = vpack.c.bf16 %v345, %v340
        %v661 = vpack.c.bf16 %v346, %v341
        %v662 = vpack.c.bf16 %v347, %v342
        %v663 = vpack.c.bf16 %v353, %v348
        %v664 = vpack.c.bf16 %v354, %v349
        %v665 = vpack.c.bf16 %v355, %v350
        %v666 = vpack.c.bf16 %v356, %v351
        %v667 = vpack.c.bf16 %v357, %v352
        %v668 = vpack.c.bf16 %v363, %v358
        %v669 = vpack.c.bf16 %v364, %v359
        %v670 = vpack.c.bf16 %v365, %v360
        %v671 = vpack.c.bf16 %v366, %v361
        %v672 = vpack.c.bf16 %v367, %v362
        %v673 = vpack.c.bf16 %v373, %v368
        %v674 = vpack.c.bf16 %v374, %v369
        %v675 = vpack.c.bf16 %v375, %v370
        %v676 = vpack.c.bf16 %v376, %v371
        %v677 = vpack.c.bf16 %v377, %v372
        %v678 = vpack.c.bf16 %v383, %v378
        %v679 = vpack.c.bf16 %v384, %v379
        %v680 = vpack.c.bf16 %v385, %v380
        %v681 = vpack.c.bf16 %v386, %v381
        %v682 = vpack.c.bf16 %v387, %v382
        %v683 = vpack.c.bf16 %v393, %v388
        %v684 = vpack.c.bf16 %v394, %v389
        %v685 = vpack.c.bf16 %v395, %v390
        %v686 = vpack.c.bf16 %v396, %v391
        %v687 = vpack.c.bf16 %v397, %v392
        %v688 = vpack.c.bf16 %v403, %v398
        %v689 = vpack.c.bf16 %v404, %v399
        %v690 = vpack.c.bf16 %v405, %v400
        %v691 = vpack.c.bf16 %v406, %v401
        %v692 = vpack.c.bf16 %v407, %v402
        %v693 = vpack.c.bf16 %v413, %v408
        %v694 = vpack.c.bf16 %v414, %v409
        %v695 = vpack.c.bf16 %v415, %v410
        %v696 = vpack.c.bf16 %v416, %v411
        %v697 = vpack.c.bf16 %v417, %v412
        %v698 = vpack.c.bf16 %v423, %v418
        %v699 = vpack.c.bf16 %v424, %v419
        %v700 = vpack.c.bf16 %v425, %v420
        %v701 = vpack.c.bf16 %v426, %v421
        %v702 = vpack.c.bf16 %v427, %v422
        %v703 = vpack.c.bf16 %v433, %v428
        %v704 = vpack.c.bf16 %v434, %v429
        %v705 = vpack.c.bf16 %v435, %v430
        %v706 = vpack.c.bf16 %v436, %v431
        %v707 = vpack.c.bf16 %v437, %v432
        %v708 = vpack.c.bf16 %v443, %v438
        %v709 = vpack.c.bf16 %v444, %v439
        %v710 = vpack.c.bf16 %v445, %v440
        %v711 = vpack.c.bf16 %v446, %v441
        %v712 = vpack.c.bf16 %v447, %v442
        %v713 = vpack.c.bf16 %v453, %v448
        %v714 = vpack.c.bf16 %v454, %v449
        %v715 = vpack.c.bf16 %v455, %v450
        %v716 = vpack.c.bf16 %v456, %v451
        %v717 = vpack.c.bf16 %v457, %v452
        %v718 = vpack.c.bf16 %v463, %v458
        %v719 = vpack.c.bf16 %v464, %v459
        %v720 = vpack.c.bf16 %v465, %v460
        %v721 = vpack.c.bf16 %v466, %v461
        %v722 = vpack.c.bf16 %v467, %v462
        %v723 = vpack.c.bf16 %v473, %v468
        %v724 = vpack.c.bf16 %v474, %v469
        %v725 = vpack.c.bf16 %v475, %v470
        %v726 = vpack.c.bf16 %v476, %v471
        %v727 = vpack.c.bf16 %v477, %v472
        %v728 = vpack.c.bf16 %v483, %v478
        %v729 = vpack.c.bf16 %v484, %v479
        %v730 = vpack.c.bf16 %v485, %v480
        %v731 = vpack.c.bf16 %v486, %v481
        %v732 = vpack.c.bf16 %v487, %v482
        %v733 = vpack.c.bf16 %v493, %v488
        %v734 = vpack.c.bf16 %v494, %v489
        %v735 = vpack.c.bf16 %v495, %v490
        %v736 = vpack.c.bf16 %v496, %v491
        %v737 = vpack.c.bf16 %v497, %v492
        %v738 = vpack.c.bf16 %v503, %v498
        %v739 = vpack.c.bf16 %v504, %v499
        %v740 = vpack.c.bf16 %v505, %v500
        %v741 = vpack.c.bf16 %v506, %v501
        %v742 = vpack.c.bf16 %v507, %v502
        %v743 = vpack.c.bf16 %v513, %v508
        %v744 = vpack.c.bf16 %v514, %v509
        %v745 = vpack.c.bf16 %v515, %v510
        %v746 = vpack.c.bf16 %v516, %v511
        %v747 = vpack.c.bf16 %v517, %v512
        %v748 = vpack.c.bf16 %v523, %v518
        %v749 = vpack.c.bf16 %v524, %v519
        %v750 = vpack.c.bf16 %v525, %v520
        %v751 = vpack.c.bf16 %v526, %v521
        %v752 = vpack.c.bf16 %v527, %v522
        %v753 = vpack.c.bf16 %v533, %v528
        %v754 = vpack.c.bf16 %v534, %v529
        %v755 = vpack.c.bf16 %v535, %v530
        %v756 = vpack.c.bf16 %v536, %v531
        %v757 = vpack.c.bf16 %v537, %v532
        %v758 = vpack.c.bf16 %v543, %v538
        %v759 = vpack.c.bf16 %v544, %v539
        %v760 = vpack.c.bf16 %v545, %v540
        %v761 = vpack.c.bf16 %v546, %v541
        %v762 = vpack.c.bf16 %v547, %v542
        %v763 = vpack.c.bf16 %v553, %v548
        %v764 = vpack.c.bf16 %v554, %v549
        %v765 = vpack.c.bf16 %v555, %v550
        %v766 = vpack.c.bf16 %v556, %v551
        %v767 = vpack.c.bf16 %v557, %v552
        %v768 = vpack.c.bf16 %v563, %v558
        %v769 = vpack.c.bf16 %v564, %v559
        %v770 = vpack.c.bf16 %v565, %v560
        %v771 = vpack.c.bf16 %v566, %v561
        %v772 = vpack.c.bf16 %v567, %v562
        %v773 = vpack.c.bf16 %v573, %v568
        %v774 = vpack.c.bf16 %v574, %v569
        %v775 = vpack.c.bf16 %v575, %v570
        %v776 = vpack.c.bf16 %v576, %v571
        %v777 = vpack.c.bf16 %v577, %v572
        %v778 = vpack.c.bf16 %v583, %v578
        %v779 = vpack.c.bf16 %v584, %v579
        %v780 = vpack.c.bf16 %v585, %v580
        %v781 = vpack.c.bf16 %v586, %v581
        %v782 = vpack.c.bf16 %v587, %v582
        %v783 = vpack.c.bf16 %v593, %v588
        %v784 = vpack.c.bf16 %v594, %v589
        %v785 = vpack.c.bf16 %v595, %v590
        %v786 = vpack.c.bf16 %v596, %v591
        %v787 = vpack.c.bf16 %v597, %v592
        %v788 = vpack.c.bf16 %v603, %v598
        %v789 = vpack.c.bf16 %v604, %v599
        %v790 = vpack.c.bf16 %v605, %v600
        %v791 = vpack.c.bf16 %v606, %v601
        %v792 = vpack.c.bf16 %v607, %v602
        %v793 = vpack.c.bf16 %v613, %v608
        %v794 = vpack.c.bf16 %v614, %v609
        %v795 = vpack.c.bf16 %v615, %v610
        %v796 = vpack.c.bf16 %v616, %v611
        %v797 = vpack.c.bf16 %v617, %v612
        %v798 = vpack.c.bf16 %v623, %v618
        %v799 = vpack.c.bf16 %v624, %v619
        %v800 = vpack.c.bf16 %v625, %v620
        %v801 = vpack.c.bf16 %v626, %v621
        %v802 = vpack.c.bf16 %v627, %v622
        %v803 = vpack.c.bf16 %v633, %v628
        %v804 = vpack.c.bf16 %v634, %v629
        %v805 = vpack.c.bf16 %v635, %v630
        %v806 = vpack.c.bf16 %v636, %v631
        %v807 = vpack.c.bf16 %v637, %v632
        %v808 = vpack.c.bf16 %v643, %v638
        %v809 = vpack.c.bf16 %v644, %v639
        %v810 = vpack.c.bf16 %v645, %v640
        %v811 = vpack.c.bf16 %v646, %v641
        %v812 = vpack.c.bf16 %v647, %v642
        %v813 = vpack.c.bf16 %v653, %v648
        %v814 = vpack.c.bf16 %v654, %v649
        %v815 = vpack.c.bf16 %v655, %v650
        %v816 = vpack.c.bf16 %v656, %v651
        %v817 = vpack.c.bf16 %v657, %v652
        %v818 = vld [vmem:[%s2] sm:$0xff]
        %v819 = vld [vmem:[%s2 + $0x8] sm:$0xff]
        %v820 = vld [vmem:[%s2 + $0x10] sm:$0xff]
        %v821 = vld [vmem:[%s2 + $0x18] sm:$0xff]
        %v822 = vld [vmem:[%s2 + $0x20] sm:$0xff]
        %v823 = vld [vmem:[%s2 + $0x28] sm:$0xff]
        %v824 = vld [vmem:[%s2 + $0x30] sm:$0xff]
        %v825 = vld [vmem:[%s2 + $0x38] sm:$0xff]
        %v826 = vld [vmem:[%s2 + $0x40] sm:$0xff]
        %v827 = vld [vmem:[%s2 + $0x48] sm:$0xff]
        %v828 = vld [vmem:[%s2 + $0x50] sm:$0xff]
        %v829 = vld [vmem:[%s2 + $0x58] sm:$0xff]
        %v830 = vld [vmem:[%s2 + $0x60] sm:$0xff]
        %v831 = vld [vmem:[%s2 + $0x68] sm:$0xff]
        %v832 = vld [vmem:[%s2 + $0x70] sm:$0xff]
        %v833 = vld [vmem:[%s2 + $0x78] sm:$0xff]
        %v834 = vld [vmem:[%s2 + $0x80] sm:$0xff]
        %v835 = vld [vmem:[%s2 + $0x88] sm:$0xff]
        %v836 = vld [vmem:[%s2 + $0x90] sm:$0xff]
        %v837 = vld [vmem:[%s2 + $0x98] sm:$0xff]
        %v838 = vld [vmem:[%s2 + $0xa0] sm:$0xff]
        %v839 = vld [vmem:[%s2 + $0xa8] sm:$0xff]
        %v840 = vld [vmem:[%s2 + $0xb0] sm:$0xff]
        %v841 = vld [vmem:[%s2 + $0xb8] sm:$0xff]
        %v842 = vld [vmem:[%s2 + $0xc0] sm:$0xff]
        %v843 = vld [vmem:[%s2 + $0xc8] sm:$0xff]
        %v844 = vld [vmem:[%s2 + $0xd0] sm:$0xff]
        %v845 = vld [vmem:[%s2 + $0xd8] sm:$0xff]
        %v846 = vld [vmem:[%s2 + $0xe0] sm:$0xff]
        %v847 = vld [vmem:[%s2 + $0xe8] sm:$0xff]
        %v848 = vld [vmem:[%s2 + $0xf0] sm:$0xff]
        %v849 = vld [vmem:[%s2 + $0xf8] sm:$0xff]
        %v850 = vld [vmem:[%s2 + $0x100] sm:$0xff]
        %v851 = vld [vmem:[%s2 + $0x108] sm:$0xff]
        %v852 = vld [vmem:[%s2 + $0x110] sm:$0xff]
        %v853 = vld [vmem:[%s2 + $0x118] sm:$0xff]
        %v854 = vld [vmem:[%s2 + $0x120] sm:$0xff]
        %v855 = vld [vmem:[%s2 + $0x128] sm:$0xff]
        %v856 = vld [vmem:[%s2 + $0x130] sm:$0xff]
        %v857 = vld [vmem:[%s2 + $0x138] sm:$0xff]
        %v858 = vld [vmem:[%s2 + $0x140] sm:$0xff]
        %v859 = vld [vmem:[%s2 + $0x148] sm:$0xff]
        %v860 = vld [vmem:[%s2 + $0x150] sm:$0xff]
        %v861 = vld [vmem:[%s2 + $0x158] sm:$0xff]
        %v862 = vld [vmem:[%s2 + $0x160] sm:$0xff]
        %v863 = vld [vmem:[%s2 + $0x168] sm:$0xff]
        %v864 = vld [vmem:[%s2 + $0x170] sm:$0xff]
        %v865 = vld [vmem:[%s2 + $0x178] sm:$0xff]
        %v866 = vld [vmem:[%s2 + $0x180] sm:$0xff]
        %v867 = vld [vmem:[%s2 + $0x188] sm:$0xff]
        %v868 = vld [vmem:[%s2 + $0x190] sm:$0xff]
        %v869 = vld [vmem:[%s2 + $0x198] sm:$0xff]
        %v870 = vld [vmem:[%s2 + $0x1a0] sm:$0xff]
        %v871 = vld [vmem:[%s2 + $0x1a8] sm:$0xff]
        %v872 = vld [vmem:[%s2 + $0x1b0] sm:$0xff]
        %v873 = vld [vmem:[%s2 + $0x1b8] sm:$0xff]
        %v874 = vld [vmem:[%s2 + $0x1c0] sm:$0xff]
        %v875 = vld [vmem:[%s2 + $0x1c8] sm:$0xff]
        %v876 = vld [vmem:[%s2 + $0x1d0] sm:$0xff]
        %v877 = vld [vmem:[%s2 + $0x1d8] sm:$0xff]
        %v878 = vld [vmem:[%s2 + $0x1e0] sm:$0xff]
        %v879 = vld [vmem:[%s2 + $0x1e8] sm:$0xff]
        %v880 = vld [vmem:[%s2 + $0x1f0] sm:$0xff]
        %v881 = vld [vmem:[%s2 + $0x1f8] sm:$0xff]
        %v882 = vld [vmem:[%s2 + $0x200] sm:$0xff]
        %v883 = vld [vmem:[%s2 + $0x208] sm:$0xff]
        %v884 = vld [vmem:[%s2 + $0x210] sm:$0xff]
        %v885 = vld [vmem:[%s2 + $0x218] sm:$0xff]
        %v886 = vld [vmem:[%s2 + $0x220] sm:$0xff]
        %v887 = vld [vmem:[%s2 + $0x228] sm:$0xff]
        %v888 = vld [vmem:[%s2 + $0x230] sm:$0xff]
        %v889 = vld [vmem:[%s2 + $0x238] sm:$0xff]
        %v890 = vld [vmem:[%s2 + $0x240] sm:$0xff]
        %v891 = vld [vmem:[%s2 + $0x248] sm:$0xff]
        %v892 = vld [vmem:[%s2 + $0x250] sm:$0xff]
        %v893 = vld [vmem:[%s2 + $0x258] sm:$0xff]
        %v894 = vld [vmem:[%s2 + $0x260] sm:$0xff]
        %v895 = vld [vmem:[%s2 + $0x268] sm:$0xff]
        %v896 = vld [vmem:[%s2 + $0x270] sm:$0xff]
        %v897 = vld [vmem:[%s2 + $0x278] sm:$0xff]
        %v898 = vld [vmem:[%s2 + $0x280] sm:$0xff]
        %v899 = vld [vmem:[%s2 + $0x288] sm:$0xff]
        %v900 = vld [vmem:[%s2 + $0x290] sm:$0xff]
        %v901 = vld [vmem:[%s2 + $0x298] sm:$0xff]
        %v902 = vld [vmem:[%s2 + $0x2a0] sm:$0xff]
        %v903 = vld [vmem:[%s2 + $0x2a8] sm:$0xff]
        %v904 = vld [vmem:[%s2 + $0x2b0] sm:$0xff]
        %v905 = vld [vmem:[%s2 + $0x2b8] sm:$0xff]
        %v906 = vld [vmem:[%s2 + $0x2c0] sm:$0xff]
        %v907 = vld [vmem:[%s2 + $0x2c8] sm:$0xff]
        %v908 = vld [vmem:[%s2 + $0x2d0] sm:$0xff]
        %v909 = vld [vmem:[%s2 + $0x2d8] sm:$0xff]
        %v910 = vld [vmem:[%s2 + $0x2e0] sm:$0xff]
        %v911 = vld [vmem:[%s2 + $0x2e8] sm:$0xff]
        %v912 = vld [vmem:[%s2 + $0x2f0] sm:$0xff]
        %v913 = vld [vmem:[%s2 + $0x2f8] sm:$0xff]
        %v914 = vld [vmem:[%s2 + $0x300] sm:$0xff]
        %v915 = vld [vmem:[%s2 + $0x308] sm:$0xff]
        %v916 = vld [vmem:[%s2 + $0x310] sm:$0xff]
        %v917 = vld [vmem:[%s2 + $0x318] sm:$0xff]
        %v918 = vld [vmem:[%s2 + $0x320] sm:$0xff]
        %v919 = vld [vmem:[%s2 + $0x328] sm:$0xff]
        %v920 = vld [vmem:[%s2 + $0x330] sm:$0xff]
        %v921 = vld [vmem:[%s2 + $0x338] sm:$0xff]
        %v922 = vld [vmem:[%s2 + $0x340] sm:$0xff]
        %v923 = vld [vmem:[%s2 + $0x348] sm:$0xff]
        %v924 = vld [vmem:[%s2 + $0x350] sm:$0xff]
        %v925 = vld [vmem:[%s2 + $0x358] sm:$0xff]
        %v926 = vld [vmem:[%s2 + $0x360] sm:$0xff]
        %v927 = vld [vmem:[%s2 + $0x368] sm:$0xff]
        %v928 = vld [vmem:[%s2 + $0x370] sm:$0xff]
        %v929 = vld [vmem:[%s2 + $0x378] sm:$0xff]
        %v930 = vld [vmem:[%s2 + $0x380] sm:$0xff]
        %v931 = vld [vmem:[%s2 + $0x388] sm:$0xff]
        %v932 = vld [vmem:[%s2 + $0x390] sm:$0xff]
        %v933 = vld [vmem:[%s2 + $0x398] sm:$0xff]
        %v934 = vld [vmem:[%s2 + $0x3a0] sm:$0xff]
        %v935 = vld [vmem:[%s2 + $0x3a8] sm:$0xff]
        %v936 = vld [vmem:[%s2 + $0x3b0] sm:$0xff]
        %v937 = vld [vmem:[%s2 + $0x3b8] sm:$0xff]
        %v938 = vld [vmem:[%s2 + $0x3c0] sm:$0xff]
        %v939 = vld [vmem:[%s2 + $0x3c8] sm:$0xff]
        %v940 = vld [vmem:[%s2 + $0x3d0] sm:$0xff]
        %v941 = vld [vmem:[%s2 + $0x3d8] sm:$0xff]
        %v942 = vld [vmem:[%s2 + $0x3e0] sm:$0xff]
        %v943 = vld [vmem:[%s2 + $0x3e8] sm:$0xff]
        %v944 = vld [vmem:[%s2 + $0x3f0] sm:$0xff]
        %v945 = vld [vmem:[%s2 + $0x3f8] sm:$0xff]
        %v946 = vld [vmem:[%s2 + $0x400] sm:$0x11]
        %v947 = vld [vmem:[%s2 + $0x408] sm:$0x11]
        %v948 = vld [vmem:[%s3] sm:$0xf]
        %v950 = vperm.slane %v948, 0
        %v951 = vperm.slane %v948, 1
        %v952 = vperm.slane %v948, 2
        %v953 = vperm.slane %v948, 3
        %v1088 = vunpack.c.l.b16 %v818
        %v1089 = vunpack.c.h.b16 %v818
        %v1090 = vunpack.c.l.b16 %v819
        %v1091 = vunpack.c.h.b16 %v819
        %v1092 = vunpack.c.l.b16 %v820
        %v1093 = vunpack.c.h.b16 %v820
        %v1094 = vunpack.c.l.b16 %v821
        %v1095 = vunpack.c.h.b16 %v821
        %v1096 = vunpack.c.l.b16 %v822
        %v1097 = vunpack.c.h.b16 %v822
        %v1098 = vunpack.c.l.b16 %v823
        %v1099 = vunpack.c.h.b16 %v823
        %v1100 = vunpack.c.l.b16 %v824
        %v1101 = vunpack.c.h.b16 %v824
        %v1102 = vunpack.c.l.b16 %v825
        %v1103 = vunpack.c.h.b16 %v825
        %v1104 = vunpack.c.l.b16 %v826
        %v1105 = vunpack.c.h.b16 %v826
        %v1106 = vunpack.c.l.b16 %v827
        %v1107 = vunpack.c.h.b16 %v827
        %v1108 = vunpack.c.l.b16 %v828
        %v1109 = vunpack.c.h.b16 %v828
        %v1110 = vunpack.c.l.b16 %v829
        %v1111 = vunpack.c.h.b16 %v829
        %v1112 = vunpack.c.l.b16 %v830
        %v1113 = vunpack.c.h.b16 %v830
        %v1114 = vunpack.c.l.b16 %v831
        %v1115 = vunpack.c.h.b16 %v831
        %v1116 = vunpack.c.l.b16 %v832
        %v1117 = vunpack.c.h.b16 %v832
        %v1118 = vunpack.c.l.b16 %v833
        %v1119 = vunpack.c.h.b16 %v833
        %v1120 = vunpack.c.l.b16 %v834
        %v1121 = vunpack.c.h.b16 %v834
        %v1122 = vunpack.c.l.b16 %v835
        %v1123 = vunpack.c.h.b16 %v835
        %v1124 = vunpack.c.l.b16 %v836
        %v1125 = vunpack.c.h.b16 %v836
        %v1126 = vunpack.c.l.b16 %v837
        %v1127 = vunpack.c.h.b16 %v837
        %v1128 = vunpack.c.l.b16 %v838
        %v1129 = vunpack.c.h.b16 %v838
        %v1130 = vunpack.c.l.b16 %v839
        %v1131 = vunpack.c.h.b16 %v839
        %v1132 = vunpack.c.l.b16 %v840
        %v1133 = vunpack.c.h.b16 %v840
        %v1134 = vunpack.c.l.b16 %v841
        %v1135 = vunpack.c.h.b16 %v841
        %v1136 = vunpack.c.l.b16 %v842
        %v1137 = vunpack.c.h.b16 %v842
        %v1138 = vunpack.c.l.b16 %v843
        %v1139 = vunpack.c.h.b16 %v843
        %v1140 = vunpack.c.l.b16 %v844
        %v1141 = vunpack.c.h.b16 %v844
        %v1142 = vunpack.c.l.b16 %v845
        %v1143 = vunpack.c.h.b16 %v845
        %v1144 = vunpack.c.l.b16 %v846
        %v1145 = vunpack.c.h.b16 %v846
        %v1146 = vunpack.c.l.b16 %v847
        %v1147 = vunpack.c.h.b16 %v847
        %v1148 = vunpack.c.l.b16 %v848
        %v1149 = vunpack.c.h.b16 %v848
        %v1150 = vunpack.c.l.b16 %v849
        %v1151 = vunpack.c.h.b16 %v849
        %v1152 = vunpack.c.l.b16 %v850
        %v1153 = vunpack.c.h.b16 %v850
        %v1154 = vunpack.c.l.b16 %v851
        %v1155 = vunpack.c.h.b16 %v851
        %v1156 = vunpack.c.l.b16 %v852
        %v1157 = vunpack.c.h.b16 %v852
        %v1158 = vunpack.c.l.b16 %v853
        %v1159 = vunpack.c.h.b16 %v853
        %v1160 = vunpack.c.l.b16 %v854
        %v1161 = vunpack.c.h.b16 %v854
        %v1162 = vunpack.c.l.b16 %v855
        %v1163 = vunpack.c.h.b16 %v855
        %v1164 = vunpack.c.l.b16 %v856
        %v1165 = vunpack.c.h.b16 %v856
        %v1166 = vunpack.c.l.b16 %v857
        %v1167 = vunpack.c.h.b16 %v857
        %v1168 = vunpack.c.l.b16 %v858
        %v1169 = vunpack.c.h.b16 %v858
        %v1170 = vunpack.c.l.b16 %v859
        %v1171 = vunpack.c.h.b16 %v859
        %v1172 = vunpack.c.l.b16 %v860
        %v1173 = vunpack.c.h.b16 %v860
        %v1174 = vunpack.c.l.b16 %v861
        %v1175 = vunpack.c.h.b16 %v861
        %v1176 = vunpack.c.l.b16 %v862
        %v1177 = vunpack.c.h.b16 %v862
        %v1178 = vunpack.c.l.b16 %v863
        %v1179 = vunpack.c.h.b16 %v863
        %v1180 = vunpack.c.l.b16 %v864
        %v1181 = vunpack.c.h.b16 %v864
        %v1182 = vunpack.c.l.b16 %v865
        %v1183 = vunpack.c.h.b16 %v865
        %v1184 = vunpack.c.l.b16 %v866
        %v1185 = vunpack.c.h.b16 %v866
        %v1186 = vunpack.c.l.b16 %v867
        %v1187 = vunpack.c.h.b16 %v867
        %v1188 = vunpack.c.l.b16 %v868
        %v1189 = vunpack.c.h.b16 %v868
        %v1190 = vunpack.c.l.b16 %v869
        %v1191 = vunpack.c.h.b16 %v869
        %v1192 = vunpack.c.l.b16 %v870
        %v1193 = vunpack.c.h.b16 %v870
        %v1194 = vunpack.c.l.b16 %v871
        %v1195 = vunpack.c.h.b16 %v871
        %v1196 = vunpack.c.l.b16 %v872
        %v1197 = vunpack.c.h.b16 %v872
        %v1198 = vunpack.c.l.b16 %v873
        %v1199 = vunpack.c.h.b16 %v873
        %v1200 = vunpack.c.l.b16 %v874
        %v1201 = vunpack.c.h.b16 %v874
        %v1202 = vunpack.c.l.b16 %v875
        %v1203 = vunpack.c.h.b16 %v875
        %v1204 = vunpack.c.l.b16 %v876
        %v1205 = vunpack.c.h.b16 %v876
        %v1206 = vunpack.c.l.b16 %v877
        %v1207 = vunpack.c.h.b16 %v877
        %v1208 = vunpack.c.l.b16 %v878
        %v1209 = vunpack.c.h.b16 %v878
        %v1210 = vunpack.c.l.b16 %v879
        %v1211 = vunpack.c.h.b16 %v879
        %v1212 = vunpack.c.l.b16 %v880
        %v1213 = vunpack.c.h.b16 %v880
        %v1214 = vunpack.c.l.b16 %v881
        %v1215 = vunpack.c.h.b16 %v881
        %v1216 = vunpack.c.l.b16 %v882
        %v1217 = vunpack.c.h.b16 %v882
        %v1218 = vunpack.c.l.b16 %v883
        %v1219 = vunpack.c.h.b16 %v883
        %v1220 = vunpack.c.l.b16 %v884
        %v1221 = vunpack.c.h.b16 %v884
        %v1222 = vunpack.c.l.b16 %v885
        %v1223 = vunpack.c.h.b16 %v885
        %v1224 = vunpack.c.l.b16 %v886
        %v1225 = vunpack.c.h.b16 %v886
        %v1226 = vunpack.c.l.b16 %v887
        %v1227 = vunpack.c.h.b16 %v887
        %v1228 = vunpack.c.l.b16 %v888
        %v1229 = vunpack.c.h.b16 %v888
        %v1230 = vunpack.c.l.b16 %v889
        %v1231 = vunpack.c.h.b16 %v889
        %v1232 = vunpack.c.l.b16 %v890
        %v1233 = vunpack.c.h.b16 %v890
        %v1234 = vunpack.c.l.b16 %v891
        %v1235 = vunpack.c.h.b16 %v891
        %v1236 = vunpack.c.l.b16 %v892
        %v1237 = vunpack.c.h.b16 %v892
        %v1238 = vunpack.c.l.b16 %v893
        %v1239 = vunpack.c.h.b16 %v893
        %v1240 = vunpack.c.l.b16 %v894
        %v1241 = vunpack.c.h.b16 %v894
        %v1242 = vunpack.c.l.b16 %v895
        %v1243 = vunpack.c.h.b16 %v895
        %v1244 = vunpack.c.l.b16 %v896
        %v1245 = vunpack.c.h.b16 %v896
        %v1246 = vunpack.c.l.b16 %v897
        %v1247 = vunpack.c.h.b16 %v897
        %v1248 = vunpack.c.l.b16 %v898
        %v1249 = vunpack.c.h.b16 %v898
        %v1250 = vunpack.c.l.b16 %v899
        %v1251 = vunpack.c.h.b16 %v899
        %v1252 = vunpack.c.l.b16 %v900
        %v1253 = vunpack.c.h.b16 %v900
        %v1254 = vunpack.c.l.b16 %v901
        %v1255 = vunpack.c.h.b16 %v901
        %v1256 = vunpack.c.l.b16 %v902
        %v1257 = vunpack.c.h.b16 %v902
        %v1258 = vunpack.c.l.b16 %v903
        %v1259 = vunpack.c.h.b16 %v903
        %v1260 = vunpack.c.l.b16 %v904
        %v1261 = vunpack.c.h.b16 %v904
        %v1262 = vunpack.c.l.b16 %v905
        %v1263 = vunpack.c.h.b16 %v905
        %v1264 = vunpack.c.l.b16 %v906
        %v1265 = vunpack.c.h.b16 %v906
        %v1266 = vunpack.c.l.b16 %v907
        %v1267 = vunpack.c.h.b16 %v907
        %v1268 = vunpack.c.l.b16 %v908
        %v1269 = vunpack.c.h.b16 %v908
        %v1270 = vunpack.c.l.b16 %v909
        %v1271 = vunpack.c.h.b16 %v909
        %v1272 = vunpack.c.l.b16 %v910
        %v1273 = vunpack.c.h.b16 %v910
        %v1274 = vunpack.c.l.b16 %v911
        %v1275 = vunpack.c.h.b16 %v911
        %v1276 = vunpack.c.l.b16 %v912
        %v1277 = vunpack.c.h.b16 %v912
        %v1278 = vunpack.c.l.b16 %v913
        %v1279 = vunpack.c.h.b16 %v913
        %v1280 = vunpack.c.l.b16 %v914
        %v1281 = vunpack.c.h.b16 %v914
        %v1282 = vunpack.c.l.b16 %v915
        %v1283 = vunpack.c.h.b16 %v915
        %v1284 = vunpack.c.l.b16 %v916
        %v1285 = vunpack.c.h.b16 %v916
        %v1286 = vunpack.c.l.b16 %v917
        %v1287 = vunpack.c.h.b16 %v917
        %v1288 = vunpack.c.l.b16 %v918
        %v1289 = vunpack.c.h.b16 %v918
        %v1290 = vunpack.c.l.b16 %v919
        %v1291 = vunpack.c.h.b16 %v919
        %v1292 = vunpack.c.l.b16 %v920
        %v1293 = vunpack.c.h.b16 %v920
        %v1294 = vunpack.c.l.b16 %v921
        %v1295 = vunpack.c.h.b16 %v921
        %v1296 = vunpack.c.l.b16 %v922
        %v1297 = vunpack.c.h.b16 %v922
        %v1298 = vunpack.c.l.b16 %v923
        %v1299 = vunpack.c.h.b16 %v923
        %v1300 = vunpack.c.l.b16 %v924
        %v1301 = vunpack.c.h.b16 %v924
        %v1302 = vunpack.c.l.b16 %v925
        %v1303 = vunpack.c.h.b16 %v925
        %v1304 = vunpack.c.l.b16 %v926
        %v1305 = vunpack.c.h.b16 %v926
        %v1306 = vunpack.c.l.b16 %v927
        %v1307 = vunpack.c.h.b16 %v927
        %v1308 = vunpack.c.l.b16 %v928
        %v1309 = vunpack.c.h.b16 %v928
        %v1310 = vunpack.c.l.b16 %v929
        %v1311 = vunpack.c.h.b16 %v929
        %v1312 = vunpack.c.l.b16 %v930
        %v1313 = vunpack.c.h.b16 %v930
        %v1314 = vunpack.c.l.b16 %v931
        %v1315 = vunpack.c.h.b16 %v931
        %v1316 = vunpack.c.l.b16 %v932
        %v1317 = vunpack.c.h.b16 %v932
        %v1318 = vunpack.c.l.b16 %v933
        %v1319 = vunpack.c.h.b16 %v933
        %v1320 = vunpack.c.l.b16 %v934
        %v1321 = vunpack.c.h.b16 %v934
        %v1322 = vunpack.c.l.b16 %v935
        %v1323 = vunpack.c.h.b16 %v935
        %v1324 = vunpack.c.l.b16 %v936
        %v1325 = vunpack.c.h.b16 %v936
        %v1326 = vunpack.c.l.b16 %v937
        %v1327 = vunpack.c.h.b16 %v937
        %v1328 = vunpack.c.l.b16 %v938
        %v1329 = vunpack.c.h.b16 %v938
        %v1330 = vunpack.c.l.b16 %v939
        %v1331 = vunpack.c.h.b16 %v939
        %v1332 = vunpack.c.l.b16 %v940
        %v1333 = vunpack.c.h.b16 %v940
        %v1334 = vunpack.c.l.b16 %v941
        %v1335 = vunpack.c.h.b16 %v941
        %v1336 = vunpack.c.l.b16 %v942
        %v1337 = vunpack.c.h.b16 %v942
        %v1338 = vunpack.c.l.b16 %v943
        %v1339 = vunpack.c.h.b16 %v943
        %v1340 = vunpack.c.l.b16 %v944
        %v1341 = vunpack.c.h.b16 %v944
        %v1342 = vunpack.c.l.b16 %v945
        %v1343 = vunpack.c.h.b16 %v945
        %v1344 = vunpack.c.l.b16 %v946
        %v1345 = vunpack.c.h.b16 %v946
        %v1346 = vunpack.c.l.b16 %v947
        %v1347 = vunpack.c.h.b16 %v947
        %v1348 = vpack.c.b16 %v1092, %v1088
        %v1349 = vpack.c.b16 %v1093, %v1089
        %v1350 = vpack.c.b16 %v1094, %v1090
        %v1351 = vpack.c.b16 %v1095, %v1091
        %v1352 = vpack.c.b16 %v1100, %v1096
        %v1353 = vpack.c.b16 %v1101, %v1097
        %v1354 = vpack.c.b16 %v1102, %v1098
        %v1355 = vpack.c.b16 %v1103, %v1099
        %v1356 = vpack.c.b16 %v1108, %v1104
        %v1357 = vpack.c.b16 %v1109, %v1105
        %v1358 = vpack.c.b16 %v1110, %v1106
        %v1359 = vpack.c.b16 %v1111, %v1107
        %v1360 = vpack.c.b16 %v1116, %v1112
        %v1361 = vpack.c.b16 %v1117, %v1113
        %v1362 = vpack.c.b16 %v1118, %v1114
        %v1363 = vpack.c.b16 %v1119, %v1115
        %v1364 = vpack.c.b16 %v1124, %v1120
        %v1365 = vpack.c.b16 %v1125, %v1121
        %v1366 = vpack.c.b16 %v1126, %v1122
        %v1367 = vpack.c.b16 %v1127, %v1123
        %v1368 = vpack.c.b16 %v1132, %v1128
        %v1369 = vpack.c.b16 %v1133, %v1129
        %v1370 = vpack.c.b16 %v1134, %v1130
        %v1371 = vpack.c.b16 %v1135, %v1131
        %v1372 = vpack.c.b16 %v1140, %v1136
        %v1373 = vpack.c.b16 %v1141, %v1137
        %v1374 = vpack.c.b16 %v1142, %v1138
        %v1375 = vpack.c.b16 %v1143, %v1139
        %v1376 = vpack.c.b16 %v1148, %v1144
        %v1377 = vpack.c.b16 %v1149, %v1145
        %v1378 = vpack.c.b16 %v1150, %v1146
        %v1379 = vpack.c.b16 %v1151, %v1147
        %v1380 = vpack.c.b16 %v1156, %v1152
        %v1381 = vpack.c.b16 %v1157, %v1153
        %v1382 = vpack.c.b16 %v1158, %v1154
        %v1383 = vpack.c.b16 %v1159, %v1155
        %v1384 = vpack.c.b16 %v1164, %v1160
        %v1385 = vpack.c.b16 %v1165, %v1161
        %v1386 = vpack.c.b16 %v1166, %v1162
        %v1387 = vpack.c.b16 %v1167, %v1163
        %v1388 = vpack.c.b16 %v1172, %v1168
        %v1389 = vpack.c.b16 %v1173, %v1169
        %v1390 = vpack.c.b16 %v1174, %v1170
        %v1391 = vpack.c.b16 %v1175, %v1171
        %v1392 = vpack.c.b16 %v1180, %v1176
        %v1393 = vpack.c.b16 %v1181, %v1177
        %v1394 = vpack.c.b16 %v1182, %v1178
        %v1395 = vpack.c.b16 %v1183, %v1179
        %v1396 = vpack.c.b16 %v1188, %v1184
        %v1397 = vpack.c.b16 %v1189, %v1185
        %v1398 = vpack.c.b16 %v1190, %v1186
        %v1399 = vpack.c.b16 %v1191, %v1187
        %v1400 = vpack.c.b16 %v1196, %v1192
        %v1401 = vpack.c.b16 %v1197, %v1193
        %v1402 = vpack.c.b16 %v1198, %v1194
        %v1403 = vpack.c.b16 %v1199, %v1195
        %v1404 = vpack.c.b16 %v1204, %v1200
        %v1405 = vpack.c.b16 %v1205, %v1201
        %v1406 = vpack.c.b16 %v1206, %v1202
        %v1407 = vpack.c.b16 %v1207, %v1203
        %v1408 = vpack.c.b16 %v1212, %v1208
        %v1409 = vpack.c.b16 %v1213, %v1209
        %v1410 = vpack.c.b16 %v1214, %v1210
        %v1411 = vpack.c.b16 %v1215, %v1211
        %v1412 = vpack.c.b16 %v1220, %v1216
        %v1413 = vpack.c.b16 %v1221, %v1217
        %v1414 = vpack.c.b16 %v1222, %v1218
        %v1415 = vpack.c.b16 %v1223, %v1219
        %v1416 = vpack.c.b16 %v1228, %v1224
        %v1417 = vpack.c.b16 %v1229, %v1225
        %v1418 = vpack.c.b16 %v1230, %v1226
        %v1419 = vpack.c.b16 %v1231, %v1227
        %v1420 = vpack.c.b16 %v1236, %v1232
        %v1421 = vpack.c.b16 %v1237, %v1233
        %v1422 = vpack.c.b16 %v1238, %v1234
        %v1423 = vpack.c.b16 %v1239, %v1235
        %v1424 = vpack.c.b16 %v1244, %v1240
        %v1425 = vpack.c.b16 %v1245, %v1241
        %v1426 = vpack.c.b16 %v1246, %v1242
        %v1427 = vpack.c.b16 %v1247, %v1243
        %v1428 = vpack.c.b16 %v1252, %v1248
        %v1429 = vpack.c.b16 %v1253, %v1249
        %v1430 = vpack.c.b16 %v1254, %v1250
        %v1431 = vpack.c.b16 %v1255, %v1251
        %v1432 = vpack.c.b16 %v1260, %v1256
        %v1433 = vpack.c.b16 %v1261, %v1257
        %v1434 = vpack.c.b16 %v1262, %v1258
        %v1435 = vpack.c.b16 %v1263, %v1259
        %v1436 = vpack.c.b16 %v1268, %v1264
        %v1437 = vpack.c.b16 %v1269, %v1265
        %v1438 = vpack.c.b16 %v1270, %v1266
        %v1439 = vpack.c.b16 %v1271, %v1267
        %v1440 = vpack.c.b16 %v1276, %v1272
        %v1441 = vpack.c.b16 %v1277, %v1273
        %v1442 = vpack.c.b16 %v1278, %v1274
        %v1443 = vpack.c.b16 %v1279, %v1275
        %v1444 = vpack.c.b16 %v1284, %v1280
        %v1445 = vpack.c.b16 %v1285, %v1281
        %v1446 = vpack.c.b16 %v1286, %v1282
        %v1447 = vpack.c.b16 %v1287, %v1283
        %v1448 = vpack.c.b16 %v1292, %v1288
        %v1449 = vpack.c.b16 %v1293, %v1289
        %v1450 = vpack.c.b16 %v1294, %v1290
        %v1451 = vpack.c.b16 %v1295, %v1291
        %v1452 = vpack.c.b16 %v1300, %v1296
        %v1453 = vpack.c.b16 %v1301, %v1297
        %v1454 = vpack.c.b16 %v1302, %v1298
        %v1455 = vpack.c.b16 %v1303, %v1299
        %v1456 = vpack.c.b16 %v1308, %v1304
        %v1457 = vpack.c.b16 %v1309, %v1305
        %v1458 = vpack.c.b16 %v1310, %v1306
        %v1459 = vpack.c.b16 %v1311, %v1307
        %v1460 = vpack.c.b16 %v1316, %v1312
        %v1461 = vpack.c.b16 %v1317, %v1313
        %v1462 = vpack.c.b16 %v1318, %v1314
        %v1463 = vpack.c.b16 %v1319, %v1315
        %v1464 = vpack.c.b16 %v1324, %v1320
        %v1465 = vpack.c.b16 %v1325, %v1321
        %v1466 = vpack.c.b16 %v1326, %v1322
        %v1467 = vpack.c.b16 %v1327, %v1323
        %v1468 = vpack.c.b16 %v1332, %v1328
        %v1469 = vpack.c.b16 %v1333, %v1329
        %v1470 = vpack.c.b16 %v1334, %v1330
        %v1471 = vpack.c.b16 %v1335, %v1331
        %v1472 = vpack.c.b16 %v1340, %v1336
        %v1473 = vpack.c.b16 %v1341, %v1337
        %v1474 = vpack.c.b16 %v1342, %v1338
        %v1475 = vpack.c.b16 %v1343, %v1339
        %v1476 = vpack.c.b16 %v1344, %v1344
        %v1477 = vpack.c.b16 %v1345, %v1345
        %v1478 = vpack.c.b16 %v1346, %v1346
        %v1479 = vpack.c.b16 %v1347, %v1347
        %vm1608 = vcmask 15360
        %v1610 = vsel %vm1608, %v662, 0
        %v1613 = vsel %vm1608, %v667, 0
        %v1616 = vsel %vm1608, %v672, 0
        %v1619 = vsel %vm1608, %v677, 0
        %v1622 = vsel %vm1608, %v682, 0
        %v1625 = vsel %vm1608, %v687, 0
        %v1628 = vsel %vm1608, %v692, 0
        %v1631 = vsel %vm1608, %v697, 0
        %v1634 = vsel %vm1608, %v702, 0
        %v1637 = vsel %vm1608, %v707, 0
        %v1640 = vsel %vm1608, %v712, 0
        %v1643 = vsel %vm1608, %v717, 0
        %v1646 = vsel %vm1608, %v722, 0
        %v1649 = vsel %vm1608, %v727, 0
        %v1652 = vsel %vm1608, %v732, 0
        %v1655 = vsel %vm1608, %v737, 0
        %v1658 = vsel %vm1608, %v742, 0
        %v1661 = vsel %vm1608, %v747, 0
        %v1664 = vsel %vm1608, %v752, 0
        %v1667 = vsel %vm1608, %v757, 0
        %v1670 = vsel %vm1608, %v762, 0
        %v1673 = vsel %vm1608, %v767, 0
        %v1676 = vsel %vm1608, %v772, 0
        %v1679 = vsel %vm1608, %v777, 0
        %v1682 = vsel %vm1608, %v782, 0
        %v1685 = vsel %vm1608, %v787, 0
        %v1688 = vsel %vm1608, %v792, 0
        %v1691 = vsel %vm1608, %v797, 0
        %v1694 = vsel %vm1608, %v802, 0
        %v1697 = vsel %vm1608, %v807, 0
        %v1700 = vsel %vm1608, %v812, 0
        %v1703 = vsel %vm1608, %v817, 0
        %vm1705 = vcmask 1040384
        %v1707 = vsel %vm1705, %v1476, 0
        %v1710 = vsel %vm1705, %v1477, 0
        %v1713 = vsel %vm1705, %v1478, 0
        %v1716 = vsel %vm1705, %v1479, 0
        %1718 = vmatpush.bf16.msra.mxu0 %v1376
        %1719 = vmatpush.bf16.msra.mxu0 %v1372
        %1720 = vmatpush.bf16.msra.mxu0 %v1368
        %1721 = vmatpush.bf16.msra.mxu0 %v1364
        %1722 = vmatpush.bf16.msra.mxu0 %v1360
        %1723 = vmatpush.bf16.msra.mxu0 %v1356
        %1724 = vmatpush.bf16.msra.mxu0 %v1352
        %1725 = vmatpush.bf16.msra.mxu0 %v1348
        %1726 = vmatmul.bf16.gmra.mxu0 %v658
        %v1727 = vpop.f32.mrf.mxu0
        %v1728 = vadd.f32 %v950, %v1727
        %v1729 = vpop.f32.mrf.mxu0
        %v1730 = vadd.f32 %v950, %v1729
        %1731 = vmatmul.bf16.gmra.mxu0 %v663
        %v1732 = vpop.f32.mrf.mxu0
        %v1733 = vadd.f32 %v950, %v1732
        %v1734 = vpop.f32.mrf.mxu0
        %v1735 = vadd.f32 %v950, %v1734
        %1736 = vmatmul.bf16.gmra.mxu0 %v668
        %v1737 = vpop.f32.mrf.mxu0
        %v1738 = vadd.f32 %v950, %v1737
        %v1739 = vpop.f32.mrf.mxu0
        %v1740 = vadd.f32 %v950, %v1739
        %1741 = vmatmul.bf16.gmra.mxu0 %v673
        %v1742 = vpop.f32.mrf.mxu0
        %v1743 = vadd.f32 %v950, %v1742
        %v1744 = vpop.f32.mrf.mxu0
        %v1745 = vadd.f32 %v950, %v1744
        %1746 = vmatmul.bf16.gmra.mxu0 %v678
        %v1747 = vpop.f32.mrf.mxu0
        %v1748 = vadd.f32 %v950, %v1747
        %v1749 = vpop.f32.mrf.mxu0
        %v1750 = vadd.f32 %v950, %v1749
        %1751 = vmatmul.bf16.gmra.mxu0 %v683
        %v1752 = vpop.f32.mrf.mxu0
        %v1753 = vadd.f32 %v950, %v1752
        %v1754 = vpop.f32.mrf.mxu0
        %v1755 = vadd.f32 %v950, %v1754
        %1756 = vmatmul.bf16.gmra.mxu0 %v688
        %v1757 = vpop.f32.mrf.mxu0
        %v1758 = vadd.f32 %v950, %v1757
        %v1759 = vpop.f32.mrf.mxu0
        %v1760 = vadd.f32 %v950, %v1759
        %1761 = vmatmul.bf16.gmra.mxu0 %v693
        %v1762 = vpop.f32.mrf.mxu0
        %v1763 = vadd.f32 %v950, %v1762
        %v1764 = vpop.f32.mrf.mxu0
        %v1765 = vadd.f32 %v950, %v1764
        %1766 = vmatmul.bf16.gmra.mxu0 %v698
        %v1767 = vpop.f32.mrf.mxu0
        %v1768 = vadd.f32 %v950, %v1767
        %v1769 = vpop.f32.mrf.mxu0
        %v1770 = vadd.f32 %v950, %v1769
        %1771 = vmatmul.bf16.gmra.mxu0 %v703
        %v1772 = vpop.f32.mrf.mxu0
        %v1773 = vadd.f32 %v950, %v1772
        %v1774 = vpop.f32.mrf.mxu0
        %v1775 = vadd.f32 %v950, %v1774
        %1776 = vmatmul.bf16.gmra.mxu0 %v708
        %v1777 = vpop.f32.mrf.mxu0
        %v1778 = vadd.f32 %v950, %v1777
        %v1779 = vpop.f32.mrf.mxu0
        %v1780 = vadd.f32 %v950, %v1779
        %1781 = vmatmul.bf16.gmra.mxu0 %v713
        %v1782 = vpop.f32.mrf.mxu0
        %v1783 = vadd.f32 %v950, %v1782
        %v1784 = vpop.f32.mrf.mxu0
        %v1785 = vadd.f32 %v950, %v1784
        %1786 = vmatmul.bf16.gmra.mxu0 %v718
        %v1787 = vpop.f32.mrf.mxu0
        %v1788 = vadd.f32 %v950, %v1787
        %v1789 = vpop.f32.mrf.mxu0
        %v1790 = vadd.f32 %v950, %v1789
        %1791 = vmatmul.bf16.gmra.mxu0 %v723
        %v1792 = vpop.f32.mrf.mxu0
        %v1793 = vadd.f32 %v950, %v1792
        %v1794 = vpop.f32.mrf.mxu0
        %v1795 = vadd.f32 %v950, %v1794
        %1796 = vmatmul.bf16.gmra.mxu0 %v728
        %v1797 = vpop.f32.mrf.mxu0
        %v1798 = vadd.f32 %v950, %v1797
        %v1799 = vpop.f32.mrf.mxu0
        %v1800 = vadd.f32 %v950, %v1799
        %1801 = vmatmul.bf16.gmra.mxu0 %v733
        %v1802 = vpop.f32.mrf.mxu0
        %v1803 = vadd.f32 %v950, %v1802
        %v1804 = vpop.f32.mrf.mxu0
        %v1805 = vadd.f32 %v950, %v1804
        %1806 = vmatmul.bf16.gmra.mxu0 %v738
        %v1807 = vpop.f32.mrf.mxu0
        %v1808 = vadd.f32 %v950, %v1807
        %v1809 = vpop.f32.mrf.mxu0
        %v1810 = vadd.f32 %v950, %v1809
        %1811 = vmatmul.bf16.gmra.mxu0 %v743
        %v1812 = vpop.f32.mrf.mxu0
        %v1813 = vadd.f32 %v950, %v1812
        %v1814 = vpop.f32.mrf.mxu0
        %v1815 = vadd.f32 %v950, %v1814
        %1816 = vmatmul.bf16.gmra.mxu0 %v748
        %v1817 = vpop.f32.mrf.mxu0
        %v1818 = vadd.f32 %v950, %v1817
        %v1819 = vpop.f32.mrf.mxu0
        %v1820 = vadd.f32 %v950, %v1819
        %1821 = vmatmul.bf16.gmra.mxu0 %v753
        %v1822 = vpop.f32.mrf.mxu0
        %v1823 = vadd.f32 %v950, %v1822
        %v1824 = vpop.f32.mrf.mxu0
        %v1825 = vadd.f32 %v950, %v1824
        %1826 = vmatmul.bf16.gmra.mxu0 %v758
        %v1827 = vpop.f32.mrf.mxu0
        %v1828 = vadd.f32 %v950, %v1827
        %v1829 = vpop.f32.mrf.mxu0
        %v1830 = vadd.f32 %v950, %v1829
        %1831 = vmatmul.bf16.gmra.mxu0 %v763
        %v1832 = vpop.f32.mrf.mxu0
        %v1833 = vadd.f32 %v950, %v1832
        %v1834 = vpop.f32.mrf.mxu0
        %v1835 = vadd.f32 %v950, %v1834
        %1836 = vmatmul.bf16.gmra.mxu0 %v768
        %v1837 = vpop.f32.mrf.mxu0
        %v1838 = vadd.f32 %v950, %v1837
        %v1839 = vpop.f32.mrf.mxu0
        %v1840 = vadd.f32 %v950, %v1839
        %1841 = vmatmul.bf16.gmra.mxu0 %v773
        %v1842 = vpop.f32.mrf.mxu0
        %v1843 = vadd.f32 %v950, %v1842
        %v1844 = vpop.f32.mrf.mxu0
        %v1845 = vadd.f32 %v950, %v1844
        %1846 = vmatmul.bf16.gmra.mxu0 %v778
        %v1847 = vpop.f32.mrf.mxu0
        %v1848 = vadd.f32 %v950, %v1847
        %v1849 = vpop.f32.mrf.mxu0
        %v1850 = vadd.f32 %v950, %v1849
        %1851 = vmatmul.bf16.gmra.mxu0 %v783
        %v1852 = vpop.f32.mrf.mxu0
        %v1853 = vadd.f32 %v950, %v1852
        %v1854 = vpop.f32.mrf.mxu0
        %v1855 = vadd.f32 %v950, %v1854
        %1856 = vmatmul.bf16.gmra.mxu0 %v788
        %v1857 = vpop.f32.mrf.mxu0
        %v1858 = vadd.f32 %v950, %v1857
        %v1859 = vpop.f32.mrf.mxu0
        %v1860 = vadd.f32 %v950, %v1859
        %1861 = vmatmul.bf16.gmra.mxu0 %v793
        %v1862 = vpop.f32.mrf.mxu0
        %v1863 = vadd.f32 %v950, %v1862
        %v1864 = vpop.f32.mrf.mxu0
        %v1865 = vadd.f32 %v950, %v1864
        %1866 = vmatmul.bf16.gmra.mxu0 %v798
        %v1867 = vpop.f32.mrf.mxu0
        %v1868 = vadd.f32 %v950, %v1867
        %v1869 = vpop.f32.mrf.mxu0
        %v1870 = vadd.f32 %v950, %v1869
        %1871 = vmatmul.bf16.gmra.mxu0 %v803
        %v1872 = vpop.f32.mrf.mxu0
        %v1873 = vadd.f32 %v950, %v1872
        %v1874 = vpop.f32.mrf.mxu0
        %v1875 = vadd.f32 %v950, %v1874
        %1876 = vmatmul.bf16.gmra.mxu0 %v808
        %v1877 = vpop.f32.mrf.mxu0
        %v1878 = vadd.f32 %v950, %v1877
        %v1879 = vpop.f32.mrf.mxu0
        %v1880 = vadd.f32 %v950, %v1879
        %1881 = vmatmul.bf16.gmra.mxu0 %v813
        %v1882 = vpop.f32.mrf.mxu0
        %v1883 = vadd.f32 %v950, %v1882
        %v1884 = vpop.f32.mrf.mxu0
        %v1885 = vadd.f32 %v950, %v1884
        %1886 = vdwg.mxu0
        %1887 = vmatpush.bf16.msra.mxu0 %v1408
        %1888 = vmatpush.bf16.msra.mxu0 %v1404
        %1889 = vmatpush.bf16.msra.mxu0 %v1400
        %1890 = vmatpush.bf16.msra.mxu0 %v1396
        %1891 = vmatpush.bf16.msra.mxu0 %v1392
        %1892 = vmatpush.bf16.msra.mxu0 %v1388
        %1893 = vmatpush.bf16.msra.mxu0 %v1384
        %1894 = vmatpush.bf16.msra.mxu0 %v1380
        %1895 = vmatmul.bf16.gmra.mxu0 %v659
        %v1896 = vpop.f32.mrf.mxu0
        %v1897 = vadd.f32 %v1728, %v1896
        %v1898 = vpop.f32.mrf.mxu0
        %v1899 = vadd.f32 %v1730, %v1898
        %1900 = vmatmul.bf16.gmra.mxu0 %v664
        %v1901 = vpop.f32.mrf.mxu0
        %v1902 = vadd.f32 %v1733, %v1901
        %v1903 = vpop.f32.mrf.mxu0
        %v1904 = vadd.f32 %v1735, %v1903
        %1905 = vmatmul.bf16.gmra.mxu0 %v669
        %v1906 = vpop.f32.mrf.mxu0
        %v1907 = vadd.f32 %v1738, %v1906
        %v1908 = vpop.f32.mrf.mxu0
        %v1909 = vadd.f32 %v1740, %v1908
        %1910 = vmatmul.bf16.gmra.mxu0 %v674
        %v1911 = vpop.f32.mrf.mxu0
        %v1912 = vadd.f32 %v1743, %v1911
        %v1913 = vpop.f32.mrf.mxu0
        %v1914 = vadd.f32 %v1745, %v1913
        %1915 = vmatmul.bf16.gmra.mxu0 %v679
        %v1916 = vpop.f32.mrf.mxu0
        %v1917 = vadd.f32 %v1748, %v1916
        %v1918 = vpop.f32.mrf.mxu0
        %v1919 = vadd.f32 %v1750, %v1918
        %1920 = vmatmul.bf16.gmra.mxu0 %v684
        %v1921 = vpop.f32.mrf.mxu0
        %v1922 = vadd.f32 %v1753, %v1921
        %v1923 = vpop.f32.mrf.mxu0
        %v1924 = vadd.f32 %v1755, %v1923
        %1925 = vmatmul.bf16.gmra.mxu0 %v689
        %v1926 = vpop.f32.mrf.mxu0
        %v1927 = vadd.f32 %v1758, %v1926
        %v1928 = vpop.f32.mrf.mxu0
        %v1929 = vadd.f32 %v1760, %v1928
        %1930 = vmatmul.bf16.gmra.mxu0 %v694
        %v1931 = vpop.f32.mrf.mxu0
        %v1932 = vadd.f32 %v1763, %v1931
        %v1933 = vpop.f32.mrf.mxu0
        %v1934 = vadd.f32 %v1765, %v1933
        %1935 = vmatmul.bf16.gmra.mxu0 %v699
        %v1936 = vpop.f32.mrf.mxu0
        %v1937 = vadd.f32 %v1768, %v1936
        %v1938 = vpop.f32.mrf.mxu0
        %v1939 = vadd.f32 %v1770, %v1938
        %1940 = vmatmul.bf16.gmra.mxu0 %v704
        %v1941 = vpop.f32.mrf.mxu0
        %v1942 = vadd.f32 %v1773, %v1941
        %v1943 = vpop.f32.mrf.mxu0
        %v1944 = vadd.f32 %v1775, %v1943
        %1945 = vmatmul.bf16.gmra.mxu0 %v709
        %v1946 = vpop.f32.mrf.mxu0
        %v1947 = vadd.f32 %v1778, %v1946
        %v1948 = vpop.f32.mrf.mxu0
        %v1949 = vadd.f32 %v1780, %v1948
        %1950 = vmatmul.bf16.gmra.mxu0 %v714
        %v1951 = vpop.f32.mrf.mxu0
        %v1952 = vadd.f32 %v1783, %v1951
        %v1953 = vpop.f32.mrf.mxu0
        %v1954 = vadd.f32 %v1785, %v1953
        %1955 = vmatmul.bf16.gmra.mxu0 %v719
        %v1956 = vpop.f32.mrf.mxu0
        %v1957 = vadd.f32 %v1788, %v1956
        %v1958 = vpop.f32.mrf.mxu0
        %v1959 = vadd.f32 %v1790, %v1958
        %1960 = vmatmul.bf16.gmra.mxu0 %v724
        %v1961 = vpop.f32.mrf.mxu0
        %v1962 = vadd.f32 %v1793, %v1961
        %v1963 = vpop.f32.mrf.mxu0
        %v1964 = vadd.f32 %v1795, %v1963
        %1965 = vmatmul.bf16.gmra.mxu0 %v729
        %v1966 = vpop.f32.mrf.mxu0
        %v1967 = vadd.f32 %v1798, %v1966
        %v1968 = vpop.f32.mrf.mxu0
        %v1969 = vadd.f32 %v1800, %v1968
        %1970 = vmatmul.bf16.gmra.mxu0 %v734
        %v1971 = vpop.f32.mrf.mxu0
        %v1972 = vadd.f32 %v1803, %v1971
        %v1973 = vpop.f32.mrf.mxu0
        %v1974 = vadd.f32 %v1805, %v1973
        %1975 = vmatmul.bf16.gmra.mxu0 %v739
        %v1976 = vpop.f32.mrf.mxu0
        %v1977 = vadd.f32 %v1808, %v1976
        %v1978 = vpop.f32.mrf.mxu0
        %v1979 = vadd.f32 %v1810, %v1978
        %1980 = vmatmul.bf16.gmra.mxu0 %v744
        %v1981 = vpop.f32.mrf.mxu0
        %v1982 = vadd.f32 %v1813, %v1981
        %v1983 = vpop.f32.mrf.mxu0
        %v1984 = vadd.f32 %v1815, %v1983
        %1985 = vmatmul.bf16.gmra.mxu0 %v749
        %v1986 = vpop.f32.mrf.mxu0
        %v1987 = vadd.f32 %v1818, %v1986
        %v1988 = vpop.f32.mrf.mxu0
        %v1989 = vadd.f32 %v1820, %v1988
        %1990 = vmatmul.bf16.gmra.mxu0 %v754
        %v1991 = vpop.f32.mrf.mxu0
        %v1992 = vadd.f32 %v1823, %v1991
        %v1993 = vpop.f32.mrf.mxu0
        %v1994 = vadd.f32 %v1825, %v1993
        %1995 = vmatmul.bf16.gmra.mxu0 %v759
        %v1996 = vpop.f32.mrf.mxu0
        %v1997 = vadd.f32 %v1828, %v1996
        %v1998 = vpop.f32.mrf.mxu0
        %v1999 = vadd.f32 %v1830, %v1998
        %2000 = vmatmul.bf16.gmra.mxu0 %v764
        %v2001 = vpop.f32.mrf.mxu0
        %v2002 = vadd.f32 %v1833, %v2001
        %v2003 = vpop.f32.mrf.mxu0
        %v2004 = vadd.f32 %v1835, %v2003
        %2005 = vmatmul.bf16.gmra.mxu0 %v769
        %v2006 = vpop.f32.mrf.mxu0
        %v2007 = vadd.f32 %v1838, %v2006
        %v2008 = vpop.f32.mrf.mxu0
        %v2009 = vadd.f32 %v1840, %v2008
        %2010 = vmatmul.bf16.gmra.mxu0 %v774
        %v2011 = vpop.f32.mrf.mxu0
        %v2012 = vadd.f32 %v1843, %v2011
        %v2013 = vpop.f32.mrf.mxu0
        %v2014 = vadd.f32 %v1845, %v2013
        %2015 = vmatmul.bf16.gmra.mxu0 %v779
        %v2016 = vpop.f32.mrf.mxu0
        %v2017 = vadd.f32 %v1848, %v2016
        %v2018 = vpop.f32.mrf.mxu0
        %v2019 = vadd.f32 %v1850, %v2018
        %2020 = vmatmul.bf16.gmra.mxu0 %v784
        %v2021 = vpop.f32.mrf.mxu0
        %v2022 = vadd.f32 %v1853, %v2021
        %v2023 = vpop.f32.mrf.mxu0
        %v2024 = vadd.f32 %v1855, %v2023
        %2025 = vmatmul.bf16.gmra.mxu0 %v789
        %v2026 = vpop.f32.mrf.mxu0
        %v2027 = vadd.f32 %v1858, %v2026
        %v2028 = vpop.f32.mrf.mxu0
        %v2029 = vadd.f32 %v1860, %v2028
        %2030 = vmatmul.bf16.gmra.mxu0 %v794
        %v2031 = vpop.f32.mrf.mxu0
        %v2032 = vadd.f32 %v1863, %v2031
        %v2033 = vpop.f32.mrf.mxu0
        %v2034 = vadd.f32 %v1865, %v2033
        %2035 = vmatmul.bf16.gmra.mxu0 %v799
        %v2036 = vpop.f32.mrf.mxu0
        %v2037 = vadd.f32 %v1868, %v2036
        %v2038 = vpop.f32.mrf.mxu0
        %v2039 = vadd.f32 %v1870, %v2038
        %2040 = vmatmul.bf16.gmra.mxu0 %v804
        %v2041 = vpop.f32.mrf.mxu0
        %v2042 = vadd.f32 %v1873, %v2041
        %v2043 = vpop.f32.mrf.mxu0
        %v2044 = vadd.f32 %v1875, %v2043
        %2045 = vmatmul.bf16.gmra.mxu0 %v809
        %v2046 = vpop.f32.mrf.mxu0
        %v2047 = vadd.f32 %v1878, %v2046
        %v2048 = vpop.f32.mrf.mxu0
        %v2049 = vadd.f32 %v1880, %v2048
        %2050 = vmatmul.bf16.gmra.mxu0 %v814
        %v2051 = vpop.f32.mrf.mxu0
        %v2052 = vadd.f32 %v1883, %v2051
        %v2053 = vpop.f32.mrf.mxu0
        %v2054 = vadd.f32 %v1885, %v2053
        %2055 = vdwg.mxu0
        %2056 = vmatpush.bf16.msra.mxu0 %v1440
        %2057 = vmatpush.bf16.msra.mxu0 %v1436
        %2058 = vmatpush.bf16.msra.mxu0 %v1432
        %2059 = vmatpush.bf16.msra.mxu0 %v1428
        %2060 = vmatpush.bf16.msra.mxu0 %v1424
        %2061 = vmatpush.bf16.msra.mxu0 %v1420
        %2062 = vmatpush.bf16.msra.mxu0 %v1416
        %2063 = vmatpush.bf16.msra.mxu0 %v1412
        %2064 = vmatmul.bf16.gmra.mxu0 %v660
        %v2065 = vpop.f32.mrf.mxu0
        %v2066 = vadd.f32 %v1897, %v2065
        %v2067 = vpop.f32.mrf.mxu0
        %v2068 = vadd.f32 %v1899, %v2067
        %2069 = vmatmul.bf16.gmra.mxu0 %v665
        %v2070 = vpop.f32.mrf.mxu0
        %v2071 = vadd.f32 %v1902, %v2070
        %v2072 = vpop.f32.mrf.mxu0
        %v2073 = vadd.f32 %v1904, %v2072
        %2074 = vmatmul.bf16.gmra.mxu0 %v670
        %v2075 = vpop.f32.mrf.mxu0
        %v2076 = vadd.f32 %v1907, %v2075
        %v2077 = vpop.f32.mrf.mxu0
        %v2078 = vadd.f32 %v1909, %v2077
        %2079 = vmatmul.bf16.gmra.mxu0 %v675
        %v2080 = vpop.f32.mrf.mxu0
        %v2081 = vadd.f32 %v1912, %v2080
        %v2082 = vpop.f32.mrf.mxu0
        %v2083 = vadd.f32 %v1914, %v2082
        %2084 = vmatmul.bf16.gmra.mxu0 %v680
        %v2085 = vpop.f32.mrf.mxu0
        %v2086 = vadd.f32 %v1917, %v2085
        %v2087 = vpop.f32.mrf.mxu0
        %v2088 = vadd.f32 %v1919, %v2087
        %2089 = vmatmul.bf16.gmra.mxu0 %v685
        %v2090 = vpop.f32.mrf.mxu0
        %v2091 = vadd.f32 %v1922, %v2090
        %v2092 = vpop.f32.mrf.mxu0
        %v2093 = vadd.f32 %v1924, %v2092
        %2094 = vmatmul.bf16.gmra.mxu0 %v690
        %v2095 = vpop.f32.mrf.mxu0
        %v2096 = vadd.f32 %v1927, %v2095
        %v2097 = vpop.f32.mrf.mxu0
        %v2098 = vadd.f32 %v1929, %v2097
        %2099 = vmatmul.bf16.gmra.mxu0 %v695
        %v2100 = vpop.f32.mrf.mxu0
        %v2101 = vadd.f32 %v1932, %v2100
        %v2102 = vpop.f32.mrf.mxu0
        %v2103 = vadd.f32 %v1934, %v2102
        %2104 = vmatmul.bf16.gmra.mxu0 %v700
        %v2105 = vpop.f32.mrf.mxu0
        %v2106 = vadd.f32 %v1937, %v2105
        %v2107 = vpop.f32.mrf.mxu0
        %v2108 = vadd.f32 %v1939, %v2107
        %2109 = vmatmul.bf16.gmra.mxu0 %v705
        %v2110 = vpop.f32.mrf.mxu0
        %v2111 = vadd.f32 %v1942, %v2110
        %v2112 = vpop.f32.mrf.mxu0
        %v2113 = vadd.f32 %v1944, %v2112
        %2114 = vmatmul.bf16.gmra.mxu0 %v710
        %v2115 = vpop.f32.mrf.mxu0
        %v2116 = vadd.f32 %v1947, %v2115
        %v2117 = vpop.f32.mrf.mxu0
        %v2118 = vadd.f32 %v1949, %v2117
        %2119 = vmatmul.bf16.gmra.mxu0 %v715
        %v2120 = vpop.f32.mrf.mxu0
        %v2121 = vadd.f32 %v1952, %v2120
        %v2122 = vpop.f32.mrf.mxu0
        %v2123 = vadd.f32 %v1954, %v2122
        %2124 = vmatmul.bf16.gmra.mxu0 %v720
        %v2125 = vpop.f32.mrf.mxu0
        %v2126 = vadd.f32 %v1957, %v2125
        %v2127 = vpop.f32.mrf.mxu0
        %v2128 = vadd.f32 %v1959, %v2127
        %2129 = vmatmul.bf16.gmra.mxu0 %v725
        %v2130 = vpop.f32.mrf.mxu0
        %v2131 = vadd.f32 %v1962, %v2130
        %v2132 = vpop.f32.mrf.mxu0
        %v2133 = vadd.f32 %v1964, %v2132
        %2134 = vmatmul.bf16.gmra.mxu0 %v730
        %v2135 = vpop.f32.mrf.mxu0
        %v2136 = vadd.f32 %v1967, %v2135
        %v2137 = vpop.f32.mrf.mxu0
        %v2138 = vadd.f32 %v1969, %v2137
        %2139 = vmatmul.bf16.gmra.mxu0 %v735
        %v2140 = vpop.f32.mrf.mxu0
        %v2141 = vadd.f32 %v1972, %v2140
        %v2142 = vpop.f32.mrf.mxu0
        %v2143 = vadd.f32 %v1974, %v2142
        %2144 = vmatmul.bf16.gmra.mxu0 %v740
        %v2145 = vpop.f32.mrf.mxu0
        %v2146 = vadd.f32 %v1977, %v2145
        %v2147 = vpop.f32.mrf.mxu0
        %v2148 = vadd.f32 %v1979, %v2147
        %2149 = vmatmul.bf16.gmra.mxu0 %v745
        %v2150 = vpop.f32.mrf.mxu0
        %v2151 = vadd.f32 %v1982, %v2150
        %v2152 = vpop.f32.mrf.mxu0
        %v2153 = vadd.f32 %v1984, %v2152
        %2154 = vmatmul.bf16.gmra.mxu0 %v750
        %v2155 = vpop.f32.mrf.mxu0
        %v2156 = vadd.f32 %v1987, %v2155
        %v2157 = vpop.f32.mrf.mxu0
        %v2158 = vadd.f32 %v1989, %v2157
        %2159 = vmatmul.bf16.gmra.mxu0 %v755
        %v2160 = vpop.f32.mrf.mxu0
        %v2161 = vadd.f32 %v1992, %v2160
        %v2162 = vpop.f32.mrf.mxu0
        %v2163 = vadd.f32 %v1994, %v2162
        %2164 = vmatmul.bf16.gmra.mxu0 %v760
        %v2165 = vpop.f32.mrf.mxu0
        %v2166 = vadd.f32 %v1997, %v2165
        %v2167 = vpop.f32.mrf.mxu0
        %v2168 = vadd.f32 %v1999, %v2167
        %2169 = vmatmul.bf16.gmra.mxu0 %v765
        %v2170 = vpop.f32.mrf.mxu0
        %v2171 = vadd.f32 %v2002, %v2170
        %v2172 = vpop.f32.mrf.mxu0
        %v2173 = vadd.f32 %v2004, %v2172
        %2174 = vmatmul.bf16.gmra.mxu0 %v770
        %v2175 = vpop.f32.mrf.mxu0
        %v2176 = vadd.f32 %v2007, %v2175
        %v2177 = vpop.f32.mrf.mxu0
        %v2178 = vadd.f32 %v2009, %v2177
        %2179 = vmatmul.bf16.gmra.mxu0 %v775
        %v2180 = vpop.f32.mrf.mxu0
        %v2181 = vadd.f32 %v2012, %v2180
        %v2182 = vpop.f32.mrf.mxu0
        %v2183 = vadd.f32 %v2014, %v2182
        %2184 = vmatmul.bf16.gmra.mxu0 %v780
        %v2185 = vpop.f32.mrf.mxu0
        %v2186 = vadd.f32 %v2017, %v2185
        %v2187 = vpop.f32.mrf.mxu0
        %v2188 = vadd.f32 %v2019, %v2187
        %2189 = vmatmul.bf16.gmra.mxu0 %v785
        %v2190 = vpop.f32.mrf.mxu0
        %v2191 = vadd.f32 %v2022, %v2190
        %v2192 = vpop.f32.mrf.mxu0
        %v2193 = vadd.f32 %v2024, %v2192
        %2194 = vmatmul.bf16.gmra.mxu0 %v790
        %v2195 = vpop.f32.mrf.mxu0
        %v2196 = vadd.f32 %v2027, %v2195
        %v2197 = vpop.f32.mrf.mxu0
        %v2198 = vadd.f32 %v2029, %v2197
        %2199 = vmatmul.bf16.gmra.mxu0 %v795
        %v2200 = vpop.f32.mrf.mxu0
        %v2201 = vadd.f32 %v2032, %v2200
        %v2202 = vpop.f32.mrf.mxu0
        %v2203 = vadd.f32 %v2034, %v2202
        %2204 = vmatmul.bf16.gmra.mxu0 %v800
        %v2205 = vpop.f32.mrf.mxu0
        %v2206 = vadd.f32 %v2037, %v2205
        %v2207 = vpop.f32.mrf.mxu0
        %v2208 = vadd.f32 %v2039, %v2207
        %2209 = vmatmul.bf16.gmra.mxu0 %v805
        %v2210 = vpop.f32.mrf.mxu0
        %v2211 = vadd.f32 %v2042, %v2210
        %v2212 = vpop.f32.mrf.mxu0
        %v2213 = vadd.f32 %v2044, %v2212
        %2214 = vmatmul.bf16.gmra.mxu0 %v810
        %v2215 = vpop.f32.mrf.mxu0
        %v2216 = vadd.f32 %v2047, %v2215
        %v2217 = vpop.f32.mrf.mxu0
        %v2218 = vadd.f32 %v2049, %v2217
        %2219 = vmatmul.bf16.gmra.mxu0 %v815
        %v2220 = vpop.f32.mrf.mxu0
        %v2221 = vadd.f32 %v2052, %v2220
        %v2222 = vpop.f32.mrf.mxu0
        %v2223 = vadd.f32 %v2054, %v2222
        %2224 = vdwg.mxu0
        %2225 = vmatpush.bf16.msra.mxu0 %v1472
        %2226 = vmatpush.bf16.msra.mxu0 %v1468
        %2227 = vmatpush.bf16.msra.mxu0 %v1464
        %2228 = vmatpush.bf16.msra.mxu0 %v1460
        %2229 = vmatpush.bf16.msra.mxu0 %v1456
        %2230 = vmatpush.bf16.msra.mxu0 %v1452
        %2231 = vmatpush.bf16.msra.mxu0 %v1448
        %2232 = vmatpush.bf16.msra.mxu0 %v1444
        %2233 = vmatmul.bf16.gmra.mxu0 %v661
        %v2234 = vpop.f32.mrf.mxu0
        %v2235 = vadd.f32 %v2066, %v2234
        %v2236 = vpop.f32.mrf.mxu0
        %v2237 = vadd.f32 %v2068, %v2236
        %2238 = vmatmul.bf16.gmra.mxu0 %v666
        %v2239 = vpop.f32.mrf.mxu0
        %v2240 = vadd.f32 %v2071, %v2239
        %v2241 = vpop.f32.mrf.mxu0
        %v2242 = vadd.f32 %v2073, %v2241
        %2243 = vmatmul.bf16.gmra.mxu0 %v671
        %v2244 = vpop.f32.mrf.mxu0
        %v2245 = vadd.f32 %v2076, %v2244
        %v2246 = vpop.f32.mrf.mxu0
        %v2247 = vadd.f32 %v2078, %v2246
        %2248 = vmatmul.bf16.gmra.mxu0 %v676
        %v2249 = vpop.f32.mrf.mxu0
        %v2250 = vadd.f32 %v2081, %v2249
        %v2251 = vpop.f32.mrf.mxu0
        %v2252 = vadd.f32 %v2083, %v2251
        %2253 = vmatmul.bf16.gmra.mxu0 %v681
        %v2254 = vpop.f32.mrf.mxu0
        %v2255 = vadd.f32 %v2086, %v2254
        %v2256 = vpop.f32.mrf.mxu0
        %v2257 = vadd.f32 %v2088, %v2256
        %2258 = vmatmul.bf16.gmra.mxu0 %v686
        %v2259 = vpop.f32.mrf.mxu0
        %v2260 = vadd.f32 %v2091, %v2259
        %v2261 = vpop.f32.mrf.mxu0
        %v2262 = vadd.f32 %v2093, %v2261
        %2263 = vmatmul.bf16.gmra.mxu0 %v691
        %v2264 = vpop.f32.mrf.mxu0
        %v2265 = vadd.f32 %v2096, %v2264
        %v2266 = vpop.f32.mrf.mxu0
        %v2267 = vadd.f32 %v2098, %v2266
        %2268 = vmatmul.bf16.gmra.mxu0 %v696
        %v2269 = vpop.f32.mrf.mxu0
        %v2270 = vadd.f32 %v2101, %v2269
        %v2271 = vpop.f32.mrf.mxu0
        %v2272 = vadd.f32 %v2103, %v2271
        %2273 = vmatmul.bf16.gmra.mxu0 %v701
        %v2274 = vpop.f32.mrf.mxu0
        %v2275 = vadd.f32 %v2106, %v2274
        %v2276 = vpop.f32.mrf.mxu0
        %v2277 = vadd.f32 %v2108, %v2276
        %2278 = vmatmul.bf16.gmra.mxu0 %v706
        %v2279 = vpop.f32.mrf.mxu0
        %v2280 = vadd.f32 %v2111, %v2279
        %v2281 = vpop.f32.mrf.mxu0
        %v2282 = vadd.f32 %v2113, %v2281
        %2283 = vmatmul.bf16.gmra.mxu0 %v711
        %v2284 = vpop.f32.mrf.mxu0
        %v2285 = vadd.f32 %v2116, %v2284
        %v2286 = vpop.f32.mrf.mxu0
        %v2287 = vadd.f32 %v2118, %v2286
        %2288 = vmatmul.bf16.gmra.mxu0 %v716
        %v2289 = vpop.f32.mrf.mxu0
        %v2290 = vadd.f32 %v2121, %v2289
        %v2291 = vpop.f32.mrf.mxu0
        %v2292 = vadd.f32 %v2123, %v2291
        %2293 = vmatmul.bf16.gmra.mxu0 %v721
        %v2294 = vpop.f32.mrf.mxu0
        %v2295 = vadd.f32 %v2126, %v2294
        %v2296 = vpop.f32.mrf.mxu0
        %v2297 = vadd.f32 %v2128, %v2296
        %2298 = vmatmul.bf16.gmra.mxu0 %v726
        %v2299 = vpop.f32.mrf.mxu0
        %v2300 = vadd.f32 %v2131, %v2299
        %v2301 = vpop.f32.mrf.mxu0
        %v2302 = vadd.f32 %v2133, %v2301
        %2303 = vmatmul.bf16.gmra.mxu0 %v731
        %v2304 = vpop.f32.mrf.mxu0
        %v2305 = vadd.f32 %v2136, %v2304
        %v2306 = vpop.f32.mrf.mxu0
        %v2307 = vadd.f32 %v2138, %v2306
        %2308 = vmatmul.bf16.gmra.mxu0 %v736
        %v2309 = vpop.f32.mrf.mxu0
        %v2310 = vadd.f32 %v2141, %v2309
        %v2311 = vpop.f32.mrf.mxu0
        %v2312 = vadd.f32 %v2143, %v2311
        %2313 = vmatmul.bf16.gmra.mxu0 %v741
        %v2314 = vpop.f32.mrf.mxu0
        %v2315 = vadd.f32 %v2146, %v2314
        %v2316 = vpop.f32.mrf.mxu0
        %v2317 = vadd.f32 %v2148, %v2316
        %2318 = vmatmul.bf16.gmra.mxu0 %v746
        %v2319 = vpop.f32.mrf.mxu0
        %v2320 = vadd.f32 %v2151, %v2319
        %v2321 = vpop.f32.mrf.mxu0
        %v2322 = vadd.f32 %v2153, %v2321
        %2323 = vmatmul.bf16.gmra.mxu0 %v751
        %v2324 = vpop.f32.mrf.mxu0
        %v2325 = vadd.f32 %v2156, %v2324
        %v2326 = vpop.f32.mrf.mxu0
        %v2327 = vadd.f32 %v2158, %v2326
        %2328 = vmatmul.bf16.gmra.mxu0 %v756
        %v2329 = vpop.f32.mrf.mxu0
        %v2330 = vadd.f32 %v2161, %v2329
        %v2331 = vpop.f32.mrf.mxu0
        %v2332 = vadd.f32 %v2163, %v2331
        %2333 = vmatmul.bf16.gmra.mxu0 %v761
        %v2334 = vpop.f32.mrf.mxu0
        %v2335 = vadd.f32 %v2166, %v2334
        %v2336 = vpop.f32.mrf.mxu0
        %v2337 = vadd.f32 %v2168, %v2336
        %2338 = vmatmul.bf16.gmra.mxu0 %v766
        %v2339 = vpop.f32.mrf.mxu0
        %v2340 = vadd.f32 %v2171, %v2339
        %v2341 = vpop.f32.mrf.mxu0
        %v2342 = vadd.f32 %v2173, %v2341
        %2343 = vmatmul.bf16.gmra.mxu0 %v771
        %v2344 = vpop.f32.mrf.mxu0
        %v2345 = vadd.f32 %v2176, %v2344
        %v2346 = vpop.f32.mrf.mxu0
        %v2347 = vadd.f32 %v2178, %v2346
        %2348 = vmatmul.bf16.gmra.mxu0 %v776
        %v2349 = vpop.f32.mrf.mxu0
        %v2350 = vadd.f32 %v2181, %v2349
        %v2351 = vpop.f32.mrf.mxu0
        %v2352 = vadd.f32 %v2183, %v2351
        %2353 = vmatmul.bf16.gmra.mxu0 %v781
        %v2354 = vpop.f32.mrf.mxu0
        %v2355 = vadd.f32 %v2186, %v2354
        %v2356 = vpop.f32.mrf.mxu0
        %v2357 = vadd.f32 %v2188, %v2356
        %2358 = vmatmul.bf16.gmra.mxu0 %v786
        %v2359 = vpop.f32.mrf.mxu0
        %v2360 = vadd.f32 %v2191, %v2359
        %v2361 = vpop.f32.mrf.mxu0
        %v2362 = vadd.f32 %v2193, %v2361
        %2363 = vmatmul.bf16.gmra.mxu0 %v791
        %v2364 = vpop.f32.mrf.mxu0
        %v2365 = vadd.f32 %v2196, %v2364
        %v2366 = vpop.f32.mrf.mxu0
        %v2367 = vadd.f32 %v2198, %v2366
        %2368 = vmatmul.bf16.gmra.mxu0 %v796
        %v2369 = vpop.f32.mrf.mxu0
        %v2370 = vadd.f32 %v2201, %v2369
        %v2371 = vpop.f32.mrf.mxu0
        %v2372 = vadd.f32 %v2203, %v2371
        %2373 = vmatmul.bf16.gmra.mxu0 %v801
        %v2374 = vpop.f32.mrf.mxu0
        %v2375 = vadd.f32 %v2206, %v2374
        %v2376 = vpop.f32.mrf.mxu0
        %v2377 = vadd.f32 %v2208, %v2376
        %2378 = vmatmul.bf16.gmra.mxu0 %v806
        %v2379 = vpop.f32.mrf.mxu0
        %v2380 = vadd.f32 %v2211, %v2379
        %v2381 = vpop.f32.mrf.mxu0
        %v2382 = vadd.f32 %v2213, %v2381
        %2383 = vmatmul.bf16.gmra.mxu0 %v811
        %v2384 = vpop.f32.mrf.mxu0
        %v2385 = vadd.f32 %v2216, %v2384
        %v2386 = vpop.f32.mrf.mxu0
        %v2387 = vadd.f32 %v2218, %v2386
        %2388 = vmatmul.bf16.gmra.mxu0 %v816
        %v2389 = vpop.f32.mrf.mxu0
        %v2390 = vadd.f32 %v2221, %v2389
        %v2391 = vpop.f32.mrf.mxu0
        %v2392 = vadd.f32 %v2223, %v2391
        %2393 = vdwg.mxu0
        %2394 = vmatpush.bf16.msra.mxu0 0
        %2395 = vmatpush.bf16.msra.mxu0 0
        %2396 = vmatpush.bf16.msra.mxu0 0
        %2397 = vmatpush.bf16.msra.mxu0 0
        %2398 = vmatpush.bf16.msra.mxu0 0
        %2399 = vmatpush.bf16.msra.mxu0 0
        %2400 = vmatpush.bf16.msra.mxu0 0
        %2401 = vmatpush.bf16.msra.mxu0 %v1707
        %2402 = vmatmul.bf16.gmra.mxu0 %v1610
        %v2403 = vpop.f32.mrf.mxu0
        %v2404 = vadd.f32 %v2235, %v2403
        %v2405 = vpop.f32.mrf.mxu0
        %v2406 = vadd.f32 %v2237, %v2405
        %2407 = vmatmul.bf16.gmra.mxu0 %v1613
        %v2408 = vpop.f32.mrf.mxu0
        %v2409 = vadd.f32 %v2240, %v2408
        %v2410 = vpop.f32.mrf.mxu0
        %v2411 = vadd.f32 %v2242, %v2410
        %2412 = vmatmul.bf16.gmra.mxu0 %v1616
        %v2413 = vpop.f32.mrf.mxu0
        %v2414 = vadd.f32 %v2245, %v2413
        %v2415 = vpop.f32.mrf.mxu0
        %v2416 = vadd.f32 %v2247, %v2415
        %2417 = vmatmul.bf16.gmra.mxu0 %v1619
        %v2418 = vpop.f32.mrf.mxu0
        %v2419 = vadd.f32 %v2250, %v2418
        %v2420 = vpop.f32.mrf.mxu0
        %v2421 = vadd.f32 %v2252, %v2420
        %2422 = vmatmul.bf16.gmra.mxu0 %v1622
        %v2423 = vpop.f32.mrf.mxu0
        %v2424 = vadd.f32 %v2255, %v2423
        %v2425 = vpop.f32.mrf.mxu0
        %v2426 = vadd.f32 %v2257, %v2425
        %2427 = vmatmul.bf16.gmra.mxu0 %v1625
        %v2428 = vpop.f32.mrf.mxu0
        %v2429 = vadd.f32 %v2260, %v2428
        %v2430 = vpop.f32.mrf.mxu0
        %v2431 = vadd.f32 %v2262, %v2430
        %2432 = vmatmul.bf16.gmra.mxu0 %v1628
        %v2433 = vpop.f32.mrf.mxu0
        %v2434 = vadd.f32 %v2265, %v2433
        %v2435 = vpop.f32.mrf.mxu0
        %v2436 = vadd.f32 %v2267, %v2435
        %2437 = vmatmul.bf16.gmra.mxu0 %v1631
        %v2438 = vpop.f32.mrf.mxu0
        %v2439 = vadd.f32 %v2270, %v2438
        %v2440 = vpop.f32.mrf.mxu0
        %v2441 = vadd.f32 %v2272, %v2440
        %2442 = vmatmul.bf16.gmra.mxu0 %v1634
        %v2443 = vpop.f32.mrf.mxu0
        %v2444 = vadd.f32 %v2275, %v2443
        %v2445 = vpop.f32.mrf.mxu0
        %v2446 = vadd.f32 %v2277, %v2445
        %2447 = vmatmul.bf16.gmra.mxu0 %v1637
        %v2448 = vpop.f32.mrf.mxu0
        %v2449 = vadd.f32 %v2280, %v2448
        %v2450 = vpop.f32.mrf.mxu0
        %v2451 = vadd.f32 %v2282, %v2450
        %2452 = vmatmul.bf16.gmra.mxu0 %v1640
        %v2453 = vpop.f32.mrf.mxu0
        %v2454 = vadd.f32 %v2285, %v2453
        %v2455 = vpop.f32.mrf.mxu0
        %v2456 = vadd.f32 %v2287, %v2455
        %2457 = vmatmul.bf16.gmra.mxu0 %v1643
        %v2458 = vpop.f32.mrf.mxu0
        %v2459 = vadd.f32 %v2290, %v2458
        %v2460 = vpop.f32.mrf.mxu0
        %v2461 = vadd.f32 %v2292, %v2460
        %2462 = vmatmul.bf16.gmra.mxu0 %v1646
        %v2463 = vpop.f32.mrf.mxu0
        %v2464 = vadd.f32 %v2295, %v2463
        %v2465 = vpop.f32.mrf.mxu0
        %v2466 = vadd.f32 %v2297, %v2465
        %2467 = vmatmul.bf16.gmra.mxu0 %v1649
        %v2468 = vpop.f32.mrf.mxu0
        %v2469 = vadd.f32 %v2300, %v2468
        %v2470 = vpop.f32.mrf.mxu0
        %v2471 = vadd.f32 %v2302, %v2470
        %2472 = vmatmul.bf16.gmra.mxu0 %v1652
        %v2473 = vpop.f32.mrf.mxu0
        %v2474 = vadd.f32 %v2305, %v2473
        %v2475 = vpop.f32.mrf.mxu0
        %v2476 = vadd.f32 %v2307, %v2475
        %2477 = vmatmul.bf16.gmra.mxu0 %v1655
        %v2478 = vpop.f32.mrf.mxu0
        %v2479 = vadd.f32 %v2310, %v2478
        %v2480 = vpop.f32.mrf.mxu0
        %v2481 = vadd.f32 %v2312, %v2480
        %2482 = vmatmul.bf16.gmra.mxu0 %v1658
        %v2483 = vpop.f32.mrf.mxu0
        %v2484 = vadd.f32 %v2315, %v2483
        %v2485 = vpop.f32.mrf.mxu0
        %v2486 = vadd.f32 %v2317, %v2485
        %2487 = vmatmul.bf16.gmra.mxu0 %v1661
        %v2488 = vpop.f32.mrf.mxu0
        %v2489 = vadd.f32 %v2320, %v2488
        %v2490 = vpop.f32.mrf.mxu0
        %v2491 = vadd.f32 %v2322, %v2490
        %2492 = vmatmul.bf16.gmra.mxu0 %v1664
        %v2493 = vpop.f32.mrf.mxu0
        %v2494 = vadd.f32 %v2325, %v2493
        %v2495 = vpop.f32.mrf.mxu0
        %v2496 = vadd.f32 %v2327, %v2495
        %2497 = vmatmul.bf16.gmra.mxu0 %v1667
        %v2498 = vpop.f32.mrf.mxu0
        %v2499 = vadd.f32 %v2330, %v2498
        %v2500 = vpop.f32.mrf.mxu0
        %v2501 = vadd.f32 %v2332, %v2500
        %2502 = vmatmul.bf16.gmra.mxu0 %v1670
        %v2503 = vpop.f32.mrf.mxu0
        %v2504 = vadd.f32 %v2335, %v2503
        %v2505 = vpop.f32.mrf.mxu0
        %v2506 = vadd.f32 %v2337, %v2505
        %2507 = vmatmul.bf16.gmra.mxu0 %v1673
        %v2508 = vpop.f32.mrf.mxu0
        %v2509 = vadd.f32 %v2340, %v2508
        %v2510 = vpop.f32.mrf.mxu0
        %v2511 = vadd.f32 %v2342, %v2510
        %2512 = vmatmul.bf16.gmra.mxu0 %v1676
        %v2513 = vpop.f32.mrf.mxu0
        %v2514 = vadd.f32 %v2345, %v2513
        %v2515 = vpop.f32.mrf.mxu0
        %v2516 = vadd.f32 %v2347, %v2515
        %2517 = vmatmul.bf16.gmra.mxu0 %v1679
        %v2518 = vpop.f32.mrf.mxu0
        %v2519 = vadd.f32 %v2350, %v2518
        %v2520 = vpop.f32.mrf.mxu0
        %v2521 = vadd.f32 %v2352, %v2520
        %2522 = vmatmul.bf16.gmra.mxu0 %v1682
        %v2523 = vpop.f32.mrf.mxu0
        %v2524 = vadd.f32 %v2355, %v2523
        %v2525 = vpop.f32.mrf.mxu0
        %v2526 = vadd.f32 %v2357, %v2525
        %2527 = vmatmul.bf16.gmra.mxu0 %v1685
        %v2528 = vpop.f32.mrf.mxu0
        %v2529 = vadd.f32 %v2360, %v2528
        %v2530 = vpop.f32.mrf.mxu0
        %v2531 = vadd.f32 %v2362, %v2530
        %2532 = vmatmul.bf16.gmra.mxu0 %v1688
        %v2533 = vpop.f32.mrf.mxu0
        %v2534 = vadd.f32 %v2365, %v2533
        %v2535 = vpop.f32.mrf.mxu0
        %v2536 = vadd.f32 %v2367, %v2535
        %2537 = vmatmul.bf16.gmra.mxu0 %v1691
        %v2538 = vpop.f32.mrf.mxu0
        %v2539 = vadd.f32 %v2370, %v2538
        %v2540 = vpop.f32.mrf.mxu0
        %v2541 = vadd.f32 %v2372, %v2540
        %2542 = vmatmul.bf16.gmra.mxu0 %v1694
        %v2543 = vpop.f32.mrf.mxu0
        %v2544 = vadd.f32 %v2375, %v2543
        %v2545 = vpop.f32.mrf.mxu0
        %v2546 = vadd.f32 %v2377, %v2545
        %2547 = vmatmul.bf16.gmra.mxu0 %v1697
        %v2548 = vpop.f32.mrf.mxu0
        %v2549 = vadd.f32 %v2380, %v2548
        %v2550 = vpop.f32.mrf.mxu0
        %v2551 = vadd.f32 %v2382, %v2550
        %2552 = vmatmul.bf16.gmra.mxu0 %v1700
        %v2553 = vpop.f32.mrf.mxu0
        %v2554 = vadd.f32 %v2385, %v2553
        %v2555 = vpop.f32.mrf.mxu0
        %v2556 = vadd.f32 %v2387, %v2555
        %2557 = vmatmul.bf16.gmra.mxu0 %v1703
        %v2558 = vpop.f32.mrf.mxu0
        %v2559 = vadd.f32 %v2390, %v2558
        %v2560 = vpop.f32.mrf.mxu0
        %v2561 = vadd.f32 %v2392, %v2560
        %2562 = vdwg.mxu0
        %2563 = vmatpush.bf16.msra.mxu0 %v1377
        %2564 = vmatpush.bf16.msra.mxu0 %v1373
        %2565 = vmatpush.bf16.msra.mxu0 %v1369
        %2566 = vmatpush.bf16.msra.mxu0 %v1365
        %2567 = vmatpush.bf16.msra.mxu0 %v1361
        %2568 = vmatpush.bf16.msra.mxu0 %v1357
        %2569 = vmatpush.bf16.msra.mxu0 %v1353
        %2570 = vmatpush.bf16.msra.mxu0 %v1349
        %2571 = vmatmul.bf16.gmra.mxu0 %v658
        %v2572 = vpop.f32.mrf.mxu0
        %v2573 = vadd.f32 %v951, %v2572
        %v2574 = vpop.f32.mrf.mxu0
        %v2575 = vadd.f32 %v951, %v2574
        %2576 = vmatmul.bf16.gmra.mxu0 %v663
        %v2577 = vpop.f32.mrf.mxu0
        %v2578 = vadd.f32 %v951, %v2577
        %v2579 = vpop.f32.mrf.mxu0
        %v2580 = vadd.f32 %v951, %v2579
        %2581 = vmatmul.bf16.gmra.mxu0 %v668
        %v2582 = vpop.f32.mrf.mxu0
        %v2583 = vadd.f32 %v951, %v2582
        %v2584 = vpop.f32.mrf.mxu0
        %v2585 = vadd.f32 %v951, %v2584
        %2586 = vmatmul.bf16.gmra.mxu0 %v673
        %v2587 = vpop.f32.mrf.mxu0
        %v2588 = vadd.f32 %v951, %v2587
        %v2589 = vpop.f32.mrf.mxu0
        %v2590 = vadd.f32 %v951, %v2589
        %2591 = vmatmul.bf16.gmra.mxu0 %v678
        %v2592 = vpop.f32.mrf.mxu0
        %v2593 = vadd.f32 %v951, %v2592
        %v2594 = vpop.f32.mrf.mxu0
        %v2595 = vadd.f32 %v951, %v2594
        %2596 = vmatmul.bf16.gmra.mxu0 %v683
        %v2597 = vpop.f32.mrf.mxu0
        %v2598 = vadd.f32 %v951, %v2597
        %v2599 = vpop.f32.mrf.mxu0
        %v2600 = vadd.f32 %v951, %v2599
        %2601 = vmatmul.bf16.gmra.mxu0 %v688
        %v2602 = vpop.f32.mrf.mxu0
        %v2603 = vadd.f32 %v951, %v2602
        %v2604 = vpop.f32.mrf.mxu0
        %v2605 = vadd.f32 %v951, %v2604
        %2606 = vmatmul.bf16.gmra.mxu0 %v693
        %v2607 = vpop.f32.mrf.mxu0
        %v2608 = vadd.f32 %v951, %v2607
        %v2609 = vpop.f32.mrf.mxu0
        %v2610 = vadd.f32 %v951, %v2609
        %2611 = vmatmul.bf16.gmra.mxu0 %v698
        %v2612 = vpop.f32.mrf.mxu0
        %v2613 = vadd.f32 %v951, %v2612
        %v2614 = vpop.f32.mrf.mxu0
        %v2615 = vadd.f32 %v951, %v2614
        %2616 = vmatmul.bf16.gmra.mxu0 %v703
        %v2617 = vpop.f32.mrf.mxu0
        %v2618 = vadd.f32 %v951, %v2617
        %v2619 = vpop.f32.mrf.mxu0
        %v2620 = vadd.f32 %v951, %v2619
        %2621 = vmatmul.bf16.gmra.mxu0 %v708
        %v2622 = vpop.f32.mrf.mxu0
        %v2623 = vadd.f32 %v951, %v2622
        %v2624 = vpop.f32.mrf.mxu0
        %v2625 = vadd.f32 %v951, %v2624
        %2626 = vmatmul.bf16.gmra.mxu0 %v713
        %v2627 = vpop.f32.mrf.mxu0
        %v2628 = vadd.f32 %v951, %v2627
        %v2629 = vpop.f32.mrf.mxu0
        %v2630 = vadd.f32 %v951, %v2629
        %2631 = vmatmul.bf16.gmra.mxu0 %v718
        %v2632 = vpop.f32.mrf.mxu0
        %v2633 = vadd.f32 %v951, %v2632
        %v2634 = vpop.f32.mrf.mxu0
        %v2635 = vadd.f32 %v951, %v2634
        %2636 = vmatmul.bf16.gmra.mxu0 %v723
        %v2637 = vpop.f32.mrf.mxu0
        %v2638 = vadd.f32 %v951, %v2637
        %v2639 = vpop.f32.mrf.mxu0
        %v2640 = vadd.f32 %v951, %v2639
        %2641 = vmatmul.bf16.gmra.mxu0 %v728
        %v2642 = vpop.f32.mrf.mxu0
        %v2643 = vadd.f32 %v951, %v2642
        %v2644 = vpop.f32.mrf.mxu0
        %v2645 = vadd.f32 %v951, %v2644
        %2646 = vmatmul.bf16.gmra.mxu0 %v733
        %v2647 = vpop.f32.mrf.mxu0
        %v2648 = vadd.f32 %v951, %v2647
        %v2649 = vpop.f32.mrf.mxu0
        %v2650 = vadd.f32 %v951, %v2649
        %2651 = vmatmul.bf16.gmra.mxu0 %v738
        %v2652 = vpop.f32.mrf.mxu0
        %v2653 = vadd.f32 %v951, %v2652
        %v2654 = vpop.f32.mrf.mxu0
        %v2655 = vadd.f32 %v951, %v2654
        %2656 = vmatmul.bf16.gmra.mxu0 %v743
        %v2657 = vpop.f32.mrf.mxu0
        %v2658 = vadd.f32 %v951, %v2657
        %v2659 = vpop.f32.mrf.mxu0
        %v2660 = vadd.f32 %v951, %v2659
        %2661 = vmatmul.bf16.gmra.mxu0 %v748
        %v2662 = vpop.f32.mrf.mxu0
        %v2663 = vadd.f32 %v951, %v2662
        %v2664 = vpop.f32.mrf.mxu0
        %v2665 = vadd.f32 %v951, %v2664
        %2666 = vmatmul.bf16.gmra.mxu0 %v753
        %v2667 = vpop.f32.mrf.mxu0
        %v2668 = vadd.f32 %v951, %v2667
        %v2669 = vpop.f32.mrf.mxu0
        %v2670 = vadd.f32 %v951, %v2669
        %2671 = vmatmul.bf16.gmra.mxu0 %v758
        %v2672 = vpop.f32.mrf.mxu0
        %v2673 = vadd.f32 %v951, %v2672
        %v2674 = vpop.f32.mrf.mxu0
        %v2675 = vadd.f32 %v951, %v2674
        %2676 = vmatmul.bf16.gmra.mxu0 %v763
        %v2677 = vpop.f32.mrf.mxu0
        %v2678 = vadd.f32 %v951, %v2677
        %v2679 = vpop.f32.mrf.mxu0
        %v2680 = vadd.f32 %v951, %v2679
        %2681 = vmatmul.bf16.gmra.mxu0 %v768
        %v2682 = vpop.f32.mrf.mxu0
        %v2683 = vadd.f32 %v951, %v2682
        %v2684 = vpop.f32.mrf.mxu0
        %v2685 = vadd.f32 %v951, %v2684
        %2686 = vmatmul.bf16.gmra.mxu0 %v773
        %v2687 = vpop.f32.mrf.mxu0
        %v2688 = vadd.f32 %v951, %v2687
        %v2689 = vpop.f32.mrf.mxu0
        %v2690 = vadd.f32 %v951, %v2689
        %2691 = vmatmul.bf16.gmra.mxu0 %v778
        %v2692 = vpop.f32.mrf.mxu0
        %v2693 = vadd.f32 %v951, %v2692
        %v2694 = vpop.f32.mrf.mxu0
        %v2695 = vadd.f32 %v951, %v2694
        %2696 = vmatmul.bf16.gmra.mxu0 %v783
        %v2697 = vpop.f32.mrf.mxu0
        %v2698 = vadd.f32 %v951, %v2697
        %v2699 = vpop.f32.mrf.mxu0
        %v2700 = vadd.f32 %v951, %v2699
        %2701 = vmatmul.bf16.gmra.mxu0 %v788
        %v2702 = vpop.f32.mrf.mxu0
        %v2703 = vadd.f32 %v951, %v2702
        %v2704 = vpop.f32.mrf.mxu0
        %v2705 = vadd.f32 %v951, %v2704
        %2706 = vmatmul.bf16.gmra.mxu0 %v793
        %v2707 = vpop.f32.mrf.mxu0
        %v2708 = vadd.f32 %v951, %v2707
        %v2709 = vpop.f32.mrf.mxu0
        %v2710 = vadd.f32 %v951, %v2709
        %2711 = vmatmul.bf16.gmra.mxu0 %v798
        %v2712 = vpop.f32.mrf.mxu0
        %v2713 = vadd.f32 %v951, %v2712
        %v2714 = vpop.f32.mrf.mxu0
        %v2715 = vadd.f32 %v951, %v2714
        %2716 = vmatmul.bf16.gmra.mxu0 %v803
        %v2717 = vpop.f32.mrf.mxu0
        %v2718 = vadd.f32 %v951, %v2717
        %v2719 = vpop.f32.mrf.mxu0
        %v2720 = vadd.f32 %v951, %v2719
        %2721 = vmatmul.bf16.gmra.mxu0 %v808
        %v2722 = vpop.f32.mrf.mxu0
        %v2723 = vadd.f32 %v951, %v2722
        %v2724 = vpop.f32.mrf.mxu0
        %v2725 = vadd.f32 %v951, %v2724
        %2726 = vmatmul.bf16.gmra.mxu0 %v813
        %v2727 = vpop.f32.mrf.mxu0
        %v2728 = vadd.f32 %v951, %v2727
        %v2729 = vpop.f32.mrf.mxu0
        %v2730 = vadd.f32 %v951, %v2729
        %2731 = vdwg.mxu0
        %2732 = vmatpush.bf16.msra.mxu0 %v1409
        %2733 = vmatpush.bf16.msra.mxu0 %v1405
        %2734 = vmatpush.bf16.msra.mxu0 %v1401
        %2735 = vmatpush.bf16.msra.mxu0 %v1397
        %2736 = vmatpush.bf16.msra.mxu0 %v1393
        %2737 = vmatpush.bf16.msra.mxu0 %v1389
        %2738 = vmatpush.bf16.msra.mxu0 %v1385
        %2739 = vmatpush.bf16.msra.mxu0 %v1381
        %2740 = vmatmul.bf16.gmra.mxu0 %v659
        %v2741 = vpop.f32.mrf.mxu0
        %v2742 = vadd.f32 %v2573, %v2741
        %v2743 = vpop.f32.mrf.mxu0
        %v2744 = vadd.f32 %v2575, %v2743
        %2745 = vmatmul.bf16.gmra.mxu0 %v664
        %v2746 = vpop.f32.mrf.mxu0
        %v2747 = vadd.f32 %v2578, %v2746
        %v2748 = vpop.f32.mrf.mxu0
        %v2749 = vadd.f32 %v2580, %v2748
        %2750 = vmatmul.bf16.gmra.mxu0 %v669
        %v2751 = vpop.f32.mrf.mxu0
        %v2752 = vadd.f32 %v2583, %v2751
        %v2753 = vpop.f32.mrf.mxu0
        %v2754 = vadd.f32 %v2585, %v2753
        %2755 = vmatmul.bf16.gmra.mxu0 %v674
        %v2756 = vpop.f32.mrf.mxu0
        %v2757 = vadd.f32 %v2588, %v2756
        %v2758 = vpop.f32.mrf.mxu0
        %v2759 = vadd.f32 %v2590, %v2758
        %2760 = vmatmul.bf16.gmra.mxu0 %v679
        %v2761 = vpop.f32.mrf.mxu0
        %v2762 = vadd.f32 %v2593, %v2761
        %v2763 = vpop.f32.mrf.mxu0
        %v2764 = vadd.f32 %v2595, %v2763
        %2765 = vmatmul.bf16.gmra.mxu0 %v684
        %v2766 = vpop.f32.mrf.mxu0
        %v2767 = vadd.f32 %v2598, %v2766
        %v2768 = vpop.f32.mrf.mxu0
        %v2769 = vadd.f32 %v2600, %v2768
        %2770 = vmatmul.bf16.gmra.mxu0 %v689
        %v2771 = vpop.f32.mrf.mxu0
        %v2772 = vadd.f32 %v2603, %v2771
        %v2773 = vpop.f32.mrf.mxu0
        %v2774 = vadd.f32 %v2605, %v2773
        %2775 = vmatmul.bf16.gmra.mxu0 %v694
        %v2776 = vpop.f32.mrf.mxu0
        %v2777 = vadd.f32 %v2608, %v2776
        %v2778 = vpop.f32.mrf.mxu0
        %v2779 = vadd.f32 %v2610, %v2778
        %2780 = vmatmul.bf16.gmra.mxu0 %v699
        %v2781 = vpop.f32.mrf.mxu0
        %v2782 = vadd.f32 %v2613, %v2781
        %v2783 = vpop.f32.mrf.mxu0
        %v2784 = vadd.f32 %v2615, %v2783
        %2785 = vmatmul.bf16.gmra.mxu0 %v704
        %v2786 = vpop.f32.mrf.mxu0
        %v2787 = vadd.f32 %v2618, %v2786
        %v2788 = vpop.f32.mrf.mxu0
        %v2789 = vadd.f32 %v2620, %v2788
        %2790 = vmatmul.bf16.gmra.mxu0 %v709
        %v2791 = vpop.f32.mrf.mxu0
        %v2792 = vadd.f32 %v2623, %v2791
        %v2793 = vpop.f32.mrf.mxu0
        %v2794 = vadd.f32 %v2625, %v2793
        %2795 = vmatmul.bf16.gmra.mxu0 %v714
        %v2796 = vpop.f32.mrf.mxu0
        %v2797 = vadd.f32 %v2628, %v2796
        %v2798 = vpop.f32.mrf.mxu0
        %v2799 = vadd.f32 %v2630, %v2798
        %2800 = vmatmul.bf16.gmra.mxu0 %v719
        %v2801 = vpop.f32.mrf.mxu0
        %v2802 = vadd.f32 %v2633, %v2801
        %v2803 = vpop.f32.mrf.mxu0
        %v2804 = vadd.f32 %v2635, %v2803
        %2805 = vmatmul.bf16.gmra.mxu0 %v724
        %v2806 = vpop.f32.mrf.mxu0
        %v2807 = vadd.f32 %v2638, %v2806
        %v2808 = vpop.f32.mrf.mxu0
        %v2809 = vadd.f32 %v2640, %v2808
        %2810 = vmatmul.bf16.gmra.mxu0 %v729
        %v2811 = vpop.f32.mrf.mxu0
        %v2812 = vadd.f32 %v2643, %v2811
        %v2813 = vpop.f32.mrf.mxu0
        %v2814 = vadd.f32 %v2645, %v2813
        %2815 = vmatmul.bf16.gmra.mxu0 %v734
        %v2816 = vpop.f32.mrf.mxu0
        %v2817 = vadd.f32 %v2648, %v2816
        %v2818 = vpop.f32.mrf.mxu0
        %v2819 = vadd.f32 %v2650, %v2818
        %2820 = vmatmul.bf16.gmra.mxu0 %v739
        %v2821 = vpop.f32.mrf.mxu0
        %v2822 = vadd.f32 %v2653, %v2821
        %v2823 = vpop.f32.mrf.mxu0
        %v2824 = vadd.f32 %v2655, %v2823
        %2825 = vmatmul.bf16.gmra.mxu0 %v744
        %v2826 = vpop.f32.mrf.mxu0
        %v2827 = vadd.f32 %v2658, %v2826
        %v2828 = vpop.f32.mrf.mxu0
        %v2829 = vadd.f32 %v2660, %v2828
        %2830 = vmatmul.bf16.gmra.mxu0 %v749
        %v2831 = vpop.f32.mrf.mxu0
        %v2832 = vadd.f32 %v2663, %v2831
        %v2833 = vpop.f32.mrf.mxu0
        %v2834 = vadd.f32 %v2665, %v2833
        %2835 = vmatmul.bf16.gmra.mxu0 %v754
        %v2836 = vpop.f32.mrf.mxu0
        %v2837 = vadd.f32 %v2668, %v2836
        %v2838 = vpop.f32.mrf.mxu0
        %v2839 = vadd.f32 %v2670, %v2838
        %2840 = vmatmul.bf16.gmra.mxu0 %v759
        %v2841 = vpop.f32.mrf.mxu0
        %v2842 = vadd.f32 %v2673, %v2841
        %v2843 = vpop.f32.mrf.mxu0
        %v2844 = vadd.f32 %v2675, %v2843
        %2845 = vmatmul.bf16.gmra.mxu0 %v764
        %v2846 = vpop.f32.mrf.mxu0
        %v2847 = vadd.f32 %v2678, %v2846
        %v2848 = vpop.f32.mrf.mxu0
        %v2849 = vadd.f32 %v2680, %v2848
        %2850 = vmatmul.bf16.gmra.mxu0 %v769
        %v2851 = vpop.f32.mrf.mxu0
        %v2852 = vadd.f32 %v2683, %v2851
        %v2853 = vpop.f32.mrf.mxu0
        %v2854 = vadd.f32 %v2685, %v2853
        %2855 = vmatmul.bf16.gmra.mxu0 %v774
        %v2856 = vpop.f32.mrf.mxu0
        %v2857 = vadd.f32 %v2688, %v2856
        %v2858 = vpop.f32.mrf.mxu0
        %v2859 = vadd.f32 %v2690, %v2858
        %2860 = vmatmul.bf16.gmra.mxu0 %v779
        %v2861 = vpop.f32.mrf.mxu0
        %v2862 = vadd.f32 %v2693, %v2861
        %v2863 = vpop.f32.mrf.mxu0
        %v2864 = vadd.f32 %v2695, %v2863
        %2865 = vmatmul.bf16.gmra.mxu0 %v784
        %v2866 = vpop.f32.mrf.mxu0
        %v2867 = vadd.f32 %v2698, %v2866
        %v2868 = vpop.f32.mrf.mxu0
        %v2869 = vadd.f32 %v2700, %v2868
        %2870 = vmatmul.bf16.gmra.mxu0 %v789
        %v2871 = vpop.f32.mrf.mxu0
        %v2872 = vadd.f32 %v2703, %v2871
        %v2873 = vpop.f32.mrf.mxu0
        %v2874 = vadd.f32 %v2705, %v2873
        %2875 = vmatmul.bf16.gmra.mxu0 %v794
        %v2876 = vpop.f32.mrf.mxu0
        %v2877 = vadd.f32 %v2708, %v2876
        %v2878 = vpop.f32.mrf.mxu0
        %v2879 = vadd.f32 %v2710, %v2878
        %2880 = vmatmul.bf16.gmra.mxu0 %v799
        %v2881 = vpop.f32.mrf.mxu0
        %v2882 = vadd.f32 %v2713, %v2881
        %v2883 = vpop.f32.mrf.mxu0
        %v2884 = vadd.f32 %v2715, %v2883
        %2885 = vmatmul.bf16.gmra.mxu0 %v804
        %v2886 = vpop.f32.mrf.mxu0
        %v2887 = vadd.f32 %v2718, %v2886
        %v2888 = vpop.f32.mrf.mxu0
        %v2889 = vadd.f32 %v2720, %v2888
        %2890 = vmatmul.bf16.gmra.mxu0 %v809
        %v2891 = vpop.f32.mrf.mxu0
        %v2892 = vadd.f32 %v2723, %v2891
        %v2893 = vpop.f32.mrf.mxu0
        %v2894 = vadd.f32 %v2725, %v2893
        %2895 = vmatmul.bf16.gmra.mxu0 %v814
        %v2896 = vpop.f32.mrf.mxu0
        %v2897 = vadd.f32 %v2728, %v2896
        %v2898 = vpop.f32.mrf.mxu0
        %v2899 = vadd.f32 %v2730, %v2898
        %2900 = vdwg.mxu0
        %2901 = vmatpush.bf16.msra.mxu0 %v1441
        %2902 = vmatpush.bf16.msra.mxu0 %v1437
        %2903 = vmatpush.bf16.msra.mxu0 %v1433
        %2904 = vmatpush.bf16.msra.mxu0 %v1429
        %2905 = vmatpush.bf16.msra.mxu0 %v1425
        %2906 = vmatpush.bf16.msra.mxu0 %v1421
        %2907 = vmatpush.bf16.msra.mxu0 %v1417
        %2908 = vmatpush.bf16.msra.mxu0 %v1413
        %2909 = vmatmul.bf16.gmra.mxu0 %v660
        %v2910 = vpop.f32.mrf.mxu0
        %v2911 = vadd.f32 %v2742, %v2910
        %v2912 = vpop.f32.mrf.mxu0
        %v2913 = vadd.f32 %v2744, %v2912
        %2914 = vmatmul.bf16.gmra.mxu0 %v665
        %v2915 = vpop.f32.mrf.mxu0
        %v2916 = vadd.f32 %v2747, %v2915
        %v2917 = vpop.f32.mrf.mxu0
        %v2918 = vadd.f32 %v2749, %v2917
        %2919 = vmatmul.bf16.gmra.mxu0 %v670
        %v2920 = vpop.f32.mrf.mxu0
        %v2921 = vadd.f32 %v2752, %v2920
        %v2922 = vpop.f32.mrf.mxu0
        %v2923 = vadd.f32 %v2754, %v2922
        %2924 = vmatmul.bf16.gmra.mxu0 %v675
        %v2925 = vpop.f32.mrf.mxu0
        %v2926 = vadd.f32 %v2757, %v2925
        %v2927 = vpop.f32.mrf.mxu0
        %v2928 = vadd.f32 %v2759, %v2927
        %2929 = vmatmul.bf16.gmra.mxu0 %v680
        %v2930 = vpop.f32.mrf.mxu0
        %v2931 = vadd.f32 %v2762, %v2930
        %v2932 = vpop.f32.mrf.mxu0
        %v2933 = vadd.f32 %v2764, %v2932
        %2934 = vmatmul.bf16.gmra.mxu0 %v685
        %v2935 = vpop.f32.mrf.mxu0
        %v2936 = vadd.f32 %v2767, %v2935
        %v2937 = vpop.f32.mrf.mxu0
        %v2938 = vadd.f32 %v2769, %v2937
        %2939 = vmatmul.bf16.gmra.mxu0 %v690
        %v2940 = vpop.f32.mrf.mxu0
        %v2941 = vadd.f32 %v2772, %v2940
        %v2942 = vpop.f32.mrf.mxu0
        %v2943 = vadd.f32 %v2774, %v2942
        %2944 = vmatmul.bf16.gmra.mxu0 %v695
        %v2945 = vpop.f32.mrf.mxu0
        %v2946 = vadd.f32 %v2777, %v2945
        %v2947 = vpop.f32.mrf.mxu0
        %v2948 = vadd.f32 %v2779, %v2947
        %2949 = vmatmul.bf16.gmra.mxu0 %v700
        %v2950 = vpop.f32.mrf.mxu0
        %v2951 = vadd.f32 %v2782, %v2950
        %v2952 = vpop.f32.mrf.mxu0
        %v2953 = vadd.f32 %v2784, %v2952
        %2954 = vmatmul.bf16.gmra.mxu0 %v705
        %v2955 = vpop.f32.mrf.mxu0
        %v2956 = vadd.f32 %v2787, %v2955
        %v2957 = vpop.f32.mrf.mxu0
        %v2958 = vadd.f32 %v2789, %v2957
        %2959 = vmatmul.bf16.gmra.mxu0 %v710
        %v2960 = vpop.f32.mrf.mxu0
        %v2961 = vadd.f32 %v2792, %v2960
        %v2962 = vpop.f32.mrf.mxu0
        %v2963 = vadd.f32 %v2794, %v2962
        %2964 = vmatmul.bf16.gmra.mxu0 %v715
        %v2965 = vpop.f32.mrf.mxu0
        %v2966 = vadd.f32 %v2797, %v2965
        %v2967 = vpop.f32.mrf.mxu0
        %v2968 = vadd.f32 %v2799, %v2967
        %2969 = vmatmul.bf16.gmra.mxu0 %v720
        %v2970 = vpop.f32.mrf.mxu0
        %v2971 = vadd.f32 %v2802, %v2970
        %v2972 = vpop.f32.mrf.mxu0
        %v2973 = vadd.f32 %v2804, %v2972
        %2974 = vmatmul.bf16.gmra.mxu0 %v725
        %v2975 = vpop.f32.mrf.mxu0
        %v2976 = vadd.f32 %v2807, %v2975
        %v2977 = vpop.f32.mrf.mxu0
        %v2978 = vadd.f32 %v2809, %v2977
        %2979 = vmatmul.bf16.gmra.mxu0 %v730
        %v2980 = vpop.f32.mrf.mxu0
        %v2981 = vadd.f32 %v2812, %v2980
        %v2982 = vpop.f32.mrf.mxu0
        %v2983 = vadd.f32 %v2814, %v2982
        %2984 = vmatmul.bf16.gmra.mxu0 %v735
        %v2985 = vpop.f32.mrf.mxu0
        %v2986 = vadd.f32 %v2817, %v2985
        %v2987 = vpop.f32.mrf.mxu0
        %v2988 = vadd.f32 %v2819, %v2987
        %2989 = vmatmul.bf16.gmra.mxu0 %v740
        %v2990 = vpop.f32.mrf.mxu0
        %v2991 = vadd.f32 %v2822, %v2990
        %v2992 = vpop.f32.mrf.mxu0
        %v2993 = vadd.f32 %v2824, %v2992
        %2994 = vmatmul.bf16.gmra.mxu0 %v745
        %v2995 = vpop.f32.mrf.mxu0
        %v2996 = vadd.f32 %v2827, %v2995
        %v2997 = vpop.f32.mrf.mxu0
        %v2998 = vadd.f32 %v2829, %v2997
        %2999 = vmatmul.bf16.gmra.mxu0 %v750
        %v3000 = vpop.f32.mrf.mxu0
        %v3001 = vadd.f32 %v2832, %v3000
        %v3002 = vpop.f32.mrf.mxu0
        %v3003 = vadd.f32 %v2834, %v3002
        %3004 = vmatmul.bf16.gmra.mxu0 %v755
        %v3005 = vpop.f32.mrf.mxu0
        %v3006 = vadd.f32 %v2837, %v3005
        %v3007 = vpop.f32.mrf.mxu0
        %v3008 = vadd.f32 %v2839, %v3007
        %3009 = vmatmul.bf16.gmra.mxu0 %v760
        %v3010 = vpop.f32.mrf.mxu0
        %v3011 = vadd.f32 %v2842, %v3010
        %v3012 = vpop.f32.mrf.mxu0
        %v3013 = vadd.f32 %v2844, %v3012
        %3014 = vmatmul.bf16.gmra.mxu0 %v765
        %v3015 = vpop.f32.mrf.mxu0
        %v3016 = vadd.f32 %v2847, %v3015
        %v3017 = vpop.f32.mrf.mxu0
        %v3018 = vadd.f32 %v2849, %v3017
        %3019 = vmatmul.bf16.gmra.mxu0 %v770
        %v3020 = vpop.f32.mrf.mxu0
        %v3021 = vadd.f32 %v2852, %v3020
        %v3022 = vpop.f32.mrf.mxu0
        %v3023 = vadd.f32 %v2854, %v3022
        %3024 = vmatmul.bf16.gmra.mxu0 %v775
        %v3025 = vpop.f32.mrf.mxu0
        %v3026 = vadd.f32 %v2857, %v3025
        %v3027 = vpop.f32.mrf.mxu0
        %v3028 = vadd.f32 %v2859, %v3027
        %3029 = vmatmul.bf16.gmra.mxu0 %v780
        %v3030 = vpop.f32.mrf.mxu0
        %v3031 = vadd.f32 %v2862, %v3030
        %v3032 = vpop.f32.mrf.mxu0
        %v3033 = vadd.f32 %v2864, %v3032
        %3034 = vmatmul.bf16.gmra.mxu0 %v785
        %v3035 = vpop.f32.mrf.mxu0
        %v3036 = vadd.f32 %v2867, %v3035
        %v3037 = vpop.f32.mrf.mxu0
        %v3038 = vadd.f32 %v2869, %v3037
        %3039 = vmatmul.bf16.gmra.mxu0 %v790
        %v3040 = vpop.f32.mrf.mxu0
        %v3041 = vadd.f32 %v2872, %v3040
        %v3042 = vpop.f32.mrf.mxu0
        %v3043 = vadd.f32 %v2874, %v3042
        %3044 = vmatmul.bf16.gmra.mxu0 %v795
        %v3045 = vpop.f32.mrf.mxu0
        %v3046 = vadd.f32 %v2877, %v3045
        %v3047 = vpop.f32.mrf.mxu0
        %v3048 = vadd.f32 %v2879, %v3047
        %3049 = vmatmul.bf16.gmra.mxu0 %v800
        %v3050 = vpop.f32.mrf.mxu0
        %v3051 = vadd.f32 %v2882, %v3050
        %v3052 = vpop.f32.mrf.mxu0
        %v3053 = vadd.f32 %v2884, %v3052
        %3054 = vmatmul.bf16.gmra.mxu0 %v805
        %v3055 = vpop.f32.mrf.mxu0
        %v3056 = vadd.f32 %v2887, %v3055
        %v3057 = vpop.f32.mrf.mxu0
        %v3058 = vadd.f32 %v2889, %v3057
        %3059 = vmatmul.bf16.gmra.mxu0 %v810
        %v3060 = vpop.f32.mrf.mxu0
        %v3061 = vadd.f32 %v2892, %v3060
        %v3062 = vpop.f32.mrf.mxu0
        %v3063 = vadd.f32 %v2894, %v3062
        %3064 = vmatmul.bf16.gmra.mxu0 %v815
        %v3065 = vpop.f32.mrf.mxu0
        %v3066 = vadd.f32 %v2897, %v3065
        %v3067 = vpop.f32.mrf.mxu0
        %v3068 = vadd.f32 %v2899, %v3067
        %3069 = vdwg.mxu0
        %3070 = vmatpush.bf16.msra.mxu0 %v1473
        %3071 = vmatpush.bf16.msra.mxu0 %v1469
        %3072 = vmatpush.bf16.msra.mxu0 %v1465
        %3073 = vmatpush.bf16.msra.mxu0 %v1461
        %3074 = vmatpush.bf16.msra.mxu0 %v1457
        %3075 = vmatpush.bf16.msra.mxu0 %v1453
        %3076 = vmatpush.bf16.msra.mxu0 %v1449
        %3077 = vmatpush.bf16.msra.mxu0 %v1445
        %3078 = vmatmul.bf16.gmra.mxu0 %v661
        %v3079 = vpop.f32.mrf.mxu0
        %v3080 = vadd.f32 %v2911, %v3079
        %v3081 = vpop.f32.mrf.mxu0
        %v3082 = vadd.f32 %v2913, %v3081
        %3083 = vmatmul.bf16.gmra.mxu0 %v666
        %v3084 = vpop.f32.mrf.mxu0
        %v3085 = vadd.f32 %v2916, %v3084
        %v3086 = vpop.f32.mrf.mxu0
        %v3087 = vadd.f32 %v2918, %v3086
        %3088 = vmatmul.bf16.gmra.mxu0 %v671
        %v3089 = vpop.f32.mrf.mxu0
        %v3090 = vadd.f32 %v2921, %v3089
        %v3091 = vpop.f32.mrf.mxu0
        %v3092 = vadd.f32 %v2923, %v3091
        %3093 = vmatmul.bf16.gmra.mxu0 %v676
        %v3094 = vpop.f32.mrf.mxu0
        %v3095 = vadd.f32 %v2926, %v3094
        %v3096 = vpop.f32.mrf.mxu0
        %v3097 = vadd.f32 %v2928, %v3096
        %3098 = vmatmul.bf16.gmra.mxu0 %v681
        %v3099 = vpop.f32.mrf.mxu0
        %v3100 = vadd.f32 %v2931, %v3099
        %v3101 = vpop.f32.mrf.mxu0
        %v3102 = vadd.f32 %v2933, %v3101
        %3103 = vmatmul.bf16.gmra.mxu0 %v686
        %v3104 = vpop.f32.mrf.mxu0
        %v3105 = vadd.f32 %v2936, %v3104
        %v3106 = vpop.f32.mrf.mxu0
        %v3107 = vadd.f32 %v2938, %v3106
        %3108 = vmatmul.bf16.gmra.mxu0 %v691
        %v3109 = vpop.f32.mrf.mxu0
        %v3110 = vadd.f32 %v2941, %v3109
        %v3111 = vpop.f32.mrf.mxu0
        %v3112 = vadd.f32 %v2943, %v3111
        %3113 = vmatmul.bf16.gmra.mxu0 %v696
        %v3114 = vpop.f32.mrf.mxu0
        %v3115 = vadd.f32 %v2946, %v3114
        %v3116 = vpop.f32.mrf.mxu0
        %v3117 = vadd.f32 %v2948, %v3116
        %3118 = vmatmul.bf16.gmra.mxu0 %v701
        %v3119 = vpop.f32.mrf.mxu0
        %v3120 = vadd.f32 %v2951, %v3119
        %v3121 = vpop.f32.mrf.mxu0
        %v3122 = vadd.f32 %v2953, %v3121
        %3123 = vmatmul.bf16.gmra.mxu0 %v706
        %v3124 = vpop.f32.mrf.mxu0
        %v3125 = vadd.f32 %v2956, %v3124
        %v3126 = vpop.f32.mrf.mxu0
        %v3127 = vadd.f32 %v2958, %v3126
        %3128 = vmatmul.bf16.gmra.mxu0 %v711
        %v3129 = vpop.f32.mrf.mxu0
        %v3130 = vadd.f32 %v2961, %v3129
        %v3131 = vpop.f32.mrf.mxu0
        %v3132 = vadd.f32 %v2963, %v3131
        %3133 = vmatmul.bf16.gmra.mxu0 %v716
        %v3134 = vpop.f32.mrf.mxu0
        %v3135 = vadd.f32 %v2966, %v3134
        %v3136 = vpop.f32.mrf.mxu0
        %v3137 = vadd.f32 %v2968, %v3136
        %3138 = vmatmul.bf16.gmra.mxu0 %v721
        %v3139 = vpop.f32.mrf.mxu0
        %v3140 = vadd.f32 %v2971, %v3139
        %v3141 = vpop.f32.mrf.mxu0
        %v3142 = vadd.f32 %v2973, %v3141
        %3143 = vmatmul.bf16.gmra.mxu0 %v726
        %v3144 = vpop.f32.mrf.mxu0
        %v3145 = vadd.f32 %v2976, %v3144
        %v3146 = vpop.f32.mrf.mxu0
        %v3147 = vadd.f32 %v2978, %v3146
        %3148 = vmatmul.bf16.gmra.mxu0 %v731
        %v3149 = vpop.f32.mrf.mxu0
        %v3150 = vadd.f32 %v2981, %v3149
        %v3151 = vpop.f32.mrf.mxu0
        %v3152 = vadd.f32 %v2983, %v3151
        %3153 = vmatmul.bf16.gmra.mxu0 %v736
        %v3154 = vpop.f32.mrf.mxu0
        %v3155 = vadd.f32 %v2986, %v3154
        %v3156 = vpop.f32.mrf.mxu0
        %v3157 = vadd.f32 %v2988, %v3156
        %3158 = vmatmul.bf16.gmra.mxu0 %v741
        %v3159 = vpop.f32.mrf.mxu0
        %v3160 = vadd.f32 %v2991, %v3159
        %v3161 = vpop.f32.mrf.mxu0
        %v3162 = vadd.f32 %v2993, %v3161
        %3163 = vmatmul.bf16.gmra.mxu0 %v746
        %v3164 = vpop.f32.mrf.mxu0
        %v3165 = vadd.f32 %v2996, %v3164
        %v3166 = vpop.f32.mrf.mxu0
        %v3167 = vadd.f32 %v2998, %v3166
        %3168 = vmatmul.bf16.gmra.mxu0 %v751
        %v3169 = vpop.f32.mrf.mxu0
        %v3170 = vadd.f32 %v3001, %v3169
        %v3171 = vpop.f32.mrf.mxu0
        %v3172 = vadd.f32 %v3003, %v3171
        %3173 = vmatmul.bf16.gmra.mxu0 %v756
        %v3174 = vpop.f32.mrf.mxu0
        %v3175 = vadd.f32 %v3006, %v3174
        %v3176 = vpop.f32.mrf.mxu0
        %v3177 = vadd.f32 %v3008, %v3176
        %3178 = vmatmul.bf16.gmra.mxu0 %v761
        %v3179 = vpop.f32.mrf.mxu0
        %v3180 = vadd.f32 %v3011, %v3179
        %v3181 = vpop.f32.mrf.mxu0
        %v3182 = vadd.f32 %v3013, %v3181
        %3183 = vmatmul.bf16.gmra.mxu0 %v766
        %v3184 = vpop.f32.mrf.mxu0
        %v3185 = vadd.f32 %v3016, %v3184
        %v3186 = vpop.f32.mrf.mxu0
        %v3187 = vadd.f32 %v3018, %v3186
        %3188 = vmatmul.bf16.gmra.mxu0 %v771
        %v3189 = vpop.f32.mrf.mxu0
        %v3190 = vadd.f32 %v3021, %v3189
        %v3191 = vpop.f32.mrf.mxu0
        %v3192 = vadd.f32 %v3023, %v3191
        %3193 = vmatmul.bf16.gmra.mxu0 %v776
        %v3194 = vpop.f32.mrf.mxu0
        %v3195 = vadd.f32 %v3026, %v3194
        %v3196 = vpop.f32.mrf.mxu0
        %v3197 = vadd.f32 %v3028, %v3196
        %3198 = vmatmul.bf16.gmra.mxu0 %v781
        %v3199 = vpop.f32.mrf.mxu0
        %v3200 = vadd.f32 %v3031, %v3199
        %v3201 = vpop.f32.mrf.mxu0
        %v3202 = vadd.f32 %v3033, %v3201
        %3203 = vmatmul.bf16.gmra.mxu0 %v786
        %v3204 = vpop.f32.mrf.mxu0
        %v3205 = vadd.f32 %v3036, %v3204
        %v3206 = vpop.f32.mrf.mxu0
        %v3207 = vadd.f32 %v3038, %v3206
        %3208 = vmatmul.bf16.gmra.mxu0 %v791
        %v3209 = vpop.f32.mrf.mxu0
        %v3210 = vadd.f32 %v3041, %v3209
        %v3211 = vpop.f32.mrf.mxu0
        %v3212 = vadd.f32 %v3043, %v3211
        %3213 = vmatmul.bf16.gmra.mxu0 %v796
        %v3214 = vpop.f32.mrf.mxu0
        %v3215 = vadd.f32 %v3046, %v3214
        %v3216 = vpop.f32.mrf.mxu0
        %v3217 = vadd.f32 %v3048, %v3216
        %3218 = vmatmul.bf16.gmra.mxu0 %v801
        %v3219 = vpop.f32.mrf.mxu0
        %v3220 = vadd.f32 %v3051, %v3219
        %v3221 = vpop.f32.mrf.mxu0
        %v3222 = vadd.f32 %v3053, %v3221
        %3223 = vmatmul.bf16.gmra.mxu0 %v806
        %v3224 = vpop.f32.mrf.mxu0
        %v3225 = vadd.f32 %v3056, %v3224
        %v3226 = vpop.f32.mrf.mxu0
        %v3227 = vadd.f32 %v3058, %v3226
        %3228 = vmatmul.bf16.gmra.mxu0 %v811
        %v3229 = vpop.f32.mrf.mxu0
        %v3230 = vadd.f32 %v3061, %v3229
        %v3231 = vpop.f32.mrf.mxu0
        %v3232 = vadd.f32 %v3063, %v3231
        %3233 = vmatmul.bf16.gmra.mxu0 %v816
        %v3234 = vpop.f32.mrf.mxu0
        %v3235 = vadd.f32 %v3066, %v3234
        %v3236 = vpop.f32.mrf.mxu0
        %v3237 = vadd.f32 %v3068, %v3236
        %3238 = vdwg.mxu0
        %3239 = vmatpush.bf16.msra.mxu0 0
        %3240 = vmatpush.bf16.msra.mxu0 0
        %3241 = vmatpush.bf16.msra.mxu0 0
        %3242 = vmatpush.bf16.msra.mxu0 0
        %3243 = vmatpush.bf16.msra.mxu0 0
        %3244 = vmatpush.bf16.msra.mxu0 0
        %3245 = vmatpush.bf16.msra.mxu0 0
        %3246 = vmatpush.bf16.msra.mxu0 %v1710
        %3247 = vmatmul.bf16.gmra.mxu0 %v1610
        %v3248 = vpop.f32.mrf.mxu0
        %v3249 = vadd.f32 %v3080, %v3248
        %v3250 = vpop.f32.mrf.mxu0
        %v3251 = vadd.f32 %v3082, %v3250
        %3252 = vmatmul.bf16.gmra.mxu0 %v1613
        %v3253 = vpop.f32.mrf.mxu0
        %v3254 = vadd.f32 %v3085, %v3253
        %v3255 = vpop.f32.mrf.mxu0
        %v3256 = vadd.f32 %v3087, %v3255
        %3257 = vmatmul.bf16.gmra.mxu0 %v1616
        %v3258 = vpop.f32.mrf.mxu0
        %v3259 = vadd.f32 %v3090, %v3258
        %v3260 = vpop.f32.mrf.mxu0
        %v3261 = vadd.f32 %v3092, %v3260
        %3262 = vmatmul.bf16.gmra.mxu0 %v1619
        %v3263 = vpop.f32.mrf.mxu0
        %v3264 = vadd.f32 %v3095, %v3263
        %v3265 = vpop.f32.mrf.mxu0
        %v3266 = vadd.f32 %v3097, %v3265
        %3267 = vmatmul.bf16.gmra.mxu0 %v1622
        %v3268 = vpop.f32.mrf.mxu0
        %v3269 = vadd.f32 %v3100, %v3268
        %v3270 = vpop.f32.mrf.mxu0
        %v3271 = vadd.f32 %v3102, %v3270
        %3272 = vmatmul.bf16.gmra.mxu0 %v1625
        %v3273 = vpop.f32.mrf.mxu0
        %v3274 = vadd.f32 %v3105, %v3273
        %v3275 = vpop.f32.mrf.mxu0
        %v3276 = vadd.f32 %v3107, %v3275
        %3277 = vmatmul.bf16.gmra.mxu0 %v1628
        %v3278 = vpop.f32.mrf.mxu0
        %v3279 = vadd.f32 %v3110, %v3278
        %v3280 = vpop.f32.mrf.mxu0
        %v3281 = vadd.f32 %v3112, %v3280
        %3282 = vmatmul.bf16.gmra.mxu0 %v1631
        %v3283 = vpop.f32.mrf.mxu0
        %v3284 = vadd.f32 %v3115, %v3283
        %v3285 = vpop.f32.mrf.mxu0
        %v3286 = vadd.f32 %v3117, %v3285
        %3287 = vmatmul.bf16.gmra.mxu0 %v1634
        %v3288 = vpop.f32.mrf.mxu0
        %v3289 = vadd.f32 %v3120, %v3288
        %v3290 = vpop.f32.mrf.mxu0
        %v3291 = vadd.f32 %v3122, %v3290
        %3292 = vmatmul.bf16.gmra.mxu0 %v1637
        %v3293 = vpop.f32.mrf.mxu0
        %v3294 = vadd.f32 %v3125, %v3293
        %v3295 = vpop.f32.mrf.mxu0
        %v3296 = vadd.f32 %v3127, %v3295
        %3297 = vmatmul.bf16.gmra.mxu0 %v1640
        %v3298 = vpop.f32.mrf.mxu0
        %v3299 = vadd.f32 %v3130, %v3298
        %v3300 = vpop.f32.mrf.mxu0
        %v3301 = vadd.f32 %v3132, %v3300
        %3302 = vmatmul.bf16.gmra.mxu0 %v1643
        %v3303 = vpop.f32.mrf.mxu0
        %v3304 = vadd.f32 %v3135, %v3303
        %v3305 = vpop.f32.mrf.mxu0
        %v3306 = vadd.f32 %v3137, %v3305
        %3307 = vmatmul.bf16.gmra.mxu0 %v1646
        %v3308 = vpop.f32.mrf.mxu0
        %v3309 = vadd.f32 %v3140, %v3308
        %v3310 = vpop.f32.mrf.mxu0
        %v3311 = vadd.f32 %v3142, %v3310
        %3312 = vmatmul.bf16.gmra.mxu0 %v1649
        %v3313 = vpop.f32.mrf.mxu0
        %v3314 = vadd.f32 %v3145, %v3313
        %v3315 = vpop.f32.mrf.mxu0
        %v3316 = vadd.f32 %v3147, %v3315
        %3317 = vmatmul.bf16.gmra.mxu0 %v1652
        %v3318 = vpop.f32.mrf.mxu0
        %v3319 = vadd.f32 %v3150, %v3318
        %v3320 = vpop.f32.mrf.mxu0
        %v3321 = vadd.f32 %v3152, %v3320
        %3322 = vmatmul.bf16.gmra.mxu0 %v1655
        %v3323 = vpop.f32.mrf.mxu0
        %v3324 = vadd.f32 %v3155, %v3323
        %v3325 = vpop.f32.mrf.mxu0
        %v3326 = vadd.f32 %v3157, %v3325
        %3327 = vmatmul.bf16.gmra.mxu0 %v1658
        %v3328 = vpop.f32.mrf.mxu0
        %v3329 = vadd.f32 %v3160, %v3328
        %v3330 = vpop.f32.mrf.mxu0
        %v3331 = vadd.f32 %v3162, %v3330
        %3332 = vmatmul.bf16.gmra.mxu0 %v1661
        %v3333 = vpop.f32.mrf.mxu0
        %v3334 = vadd.f32 %v3165, %v3333
        %v3335 = vpop.f32.mrf.mxu0
        %v3336 = vadd.f32 %v3167, %v3335
        %3337 = vmatmul.bf16.gmra.mxu0 %v1664
        %v3338 = vpop.f32.mrf.mxu0
        %v3339 = vadd.f32 %v3170, %v3338
        %v3340 = vpop.f32.mrf.mxu0
        %v3341 = vadd.f32 %v3172, %v3340
        %3342 = vmatmul.bf16.gmra.mxu0 %v1667
        %v3343 = vpop.f32.mrf.mxu0
        %v3344 = vadd.f32 %v3175, %v3343
        %v3345 = vpop.f32.mrf.mxu0
        %v3346 = vadd.f32 %v3177, %v3345
        %3347 = vmatmul.bf16.gmra.mxu0 %v1670
        %v3348 = vpop.f32.mrf.mxu0
        %v3349 = vadd.f32 %v3180, %v3348
        %v3350 = vpop.f32.mrf.mxu0
        %v3351 = vadd.f32 %v3182, %v3350
        %3352 = vmatmul.bf16.gmra.mxu0 %v1673
        %v3353 = vpop.f32.mrf.mxu0
        %v3354 = vadd.f32 %v3185, %v3353
        %v3355 = vpop.f32.mrf.mxu0
        %v3356 = vadd.f32 %v3187, %v3355
        %3357 = vmatmul.bf16.gmra.mxu0 %v1676
        %v3358 = vpop.f32.mrf.mxu0
        %v3359 = vadd.f32 %v3190, %v3358
        %v3360 = vpop.f32.mrf.mxu0
        %v3361 = vadd.f32 %v3192, %v3360
        %3362 = vmatmul.bf16.gmra.mxu0 %v1679
        %v3363 = vpop.f32.mrf.mxu0
        %v3364 = vadd.f32 %v3195, %v3363
        %v3365 = vpop.f32.mrf.mxu0
        %v3366 = vadd.f32 %v3197, %v3365
        %3367 = vmatmul.bf16.gmra.mxu0 %v1682
        %v3368 = vpop.f32.mrf.mxu0
        %v3369 = vadd.f32 %v3200, %v3368
        %v3370 = vpop.f32.mrf.mxu0
        %v3371 = vadd.f32 %v3202, %v3370
        %3372 = vmatmul.bf16.gmra.mxu0 %v1685
        %v3373 = vpop.f32.mrf.mxu0
        %v3374 = vadd.f32 %v3205, %v3373
        %v3375 = vpop.f32.mrf.mxu0
        %v3376 = vadd.f32 %v3207, %v3375
        %3377 = vmatmul.bf16.gmra.mxu0 %v1688
        %v3378 = vpop.f32.mrf.mxu0
        %v3379 = vadd.f32 %v3210, %v3378
        %v3380 = vpop.f32.mrf.mxu0
        %v3381 = vadd.f32 %v3212, %v3380
        %3382 = vmatmul.bf16.gmra.mxu0 %v1691
        %v3383 = vpop.f32.mrf.mxu0
        %v3384 = vadd.f32 %v3215, %v3383
        %v3385 = vpop.f32.mrf.mxu0
        %v3386 = vadd.f32 %v3217, %v3385
        %3387 = vmatmul.bf16.gmra.mxu0 %v1694
        %v3388 = vpop.f32.mrf.mxu0
        %v3389 = vadd.f32 %v3220, %v3388
        %v3390 = vpop.f32.mrf.mxu0
        %v3391 = vadd.f32 %v3222, %v3390
        %3392 = vmatmul.bf16.gmra.mxu0 %v1697
        %v3393 = vpop.f32.mrf.mxu0
        %v3394 = vadd.f32 %v3225, %v3393
        %v3395 = vpop.f32.mrf.mxu0
        %v3396 = vadd.f32 %v3227, %v3395
        %3397 = vmatmul.bf16.gmra.mxu0 %v1700
        %v3398 = vpop.f32.mrf.mxu0
        %v3399 = vadd.f32 %v3230, %v3398
        %v3400 = vpop.f32.mrf.mxu0
        %v3401 = vadd.f32 %v3232, %v3400
        %3402 = vmatmul.bf16.gmra.mxu0 %v1703
        %v3403 = vpop.f32.mrf.mxu0
        %v3404 = vadd.f32 %v3235, %v3403
        %v3405 = vpop.f32.mrf.mxu0
        %v3406 = vadd.f32 %v3237, %v3405
        %3407 = vdwg.mxu0
        %3408 = vmatpush.bf16.msra.mxu0 %v1378
        %3409 = vmatpush.bf16.msra.mxu0 %v1374
        %3410 = vmatpush.bf16.msra.mxu0 %v1370
        %3411 = vmatpush.bf16.msra.mxu0 %v1366
        %3412 = vmatpush.bf16.msra.mxu0 %v1362
        %3413 = vmatpush.bf16.msra.mxu0 %v1358
        %3414 = vmatpush.bf16.msra.mxu0 %v1354
        %3415 = vmatpush.bf16.msra.mxu0 %v1350
        %3416 = vmatmul.bf16.gmra.mxu0 %v658
        %v3417 = vpop.f32.mrf.mxu0
        %v3418 = vadd.f32 %v952, %v3417
        %v3419 = vpop.f32.mrf.mxu0
        %v3420 = vadd.f32 %v952, %v3419
        %3421 = vmatmul.bf16.gmra.mxu0 %v663
        %v3422 = vpop.f32.mrf.mxu0
        %v3423 = vadd.f32 %v952, %v3422
        %v3424 = vpop.f32.mrf.mxu0
        %v3425 = vadd.f32 %v952, %v3424
        %3426 = vmatmul.bf16.gmra.mxu0 %v668
        %v3427 = vpop.f32.mrf.mxu0
        %v3428 = vadd.f32 %v952, %v3427
        %v3429 = vpop.f32.mrf.mxu0
        %v3430 = vadd.f32 %v952, %v3429
        %3431 = vmatmul.bf16.gmra.mxu0 %v673
        %v3432 = vpop.f32.mrf.mxu0
        %v3433 = vadd.f32 %v952, %v3432
        %v3434 = vpop.f32.mrf.mxu0
        %v3435 = vadd.f32 %v952, %v3434
        %3436 = vmatmul.bf16.gmra.mxu0 %v678
        %v3437 = vpop.f32.mrf.mxu0
        %v3438 = vadd.f32 %v952, %v3437
        %v3439 = vpop.f32.mrf.mxu0
        %v3440 = vadd.f32 %v952, %v3439
        %3441 = vmatmul.bf16.gmra.mxu0 %v683
        %v3442 = vpop.f32.mrf.mxu0
        %v3443 = vadd.f32 %v952, %v3442
        %v3444 = vpop.f32.mrf.mxu0
        %v3445 = vadd.f32 %v952, %v3444
        %3446 = vmatmul.bf16.gmra.mxu0 %v688
        %v3447 = vpop.f32.mrf.mxu0
        %v3448 = vadd.f32 %v952, %v3447
        %v3449 = vpop.f32.mrf.mxu0
        %v3450 = vadd.f32 %v952, %v3449
        %3451 = vmatmul.bf16.gmra.mxu0 %v693
        %v3452 = vpop.f32.mrf.mxu0
        %v3453 = vadd.f32 %v952, %v3452
        %v3454 = vpop.f32.mrf.mxu0
        %v3455 = vadd.f32 %v952, %v3454
        %3456 = vmatmul.bf16.gmra.mxu0 %v698
        %v3457 = vpop.f32.mrf.mxu0
        %v3458 = vadd.f32 %v952, %v3457
        %v3459 = vpop.f32.mrf.mxu0
        %v3460 = vadd.f32 %v952, %v3459
        %3461 = vmatmul.bf16.gmra.mxu0 %v703
        %v3462 = vpop.f32.mrf.mxu0
        %v3463 = vadd.f32 %v952, %v3462
        %v3464 = vpop.f32.mrf.mxu0
        %v3465 = vadd.f32 %v952, %v3464
        %3466 = vmatmul.bf16.gmra.mxu0 %v708
        %v3467 = vpop.f32.mrf.mxu0
        %v3468 = vadd.f32 %v952, %v3467
        %v3469 = vpop.f32.mrf.mxu0
        %v3470 = vadd.f32 %v952, %v3469
        %3471 = vmatmul.bf16.gmra.mxu0 %v713
        %v3472 = vpop.f32.mrf.mxu0
        %v3473 = vadd.f32 %v952, %v3472
        %v3474 = vpop.f32.mrf.mxu0
        %v3475 = vadd.f32 %v952, %v3474
        %3476 = vmatmul.bf16.gmra.mxu0 %v718
        %v3477 = vpop.f32.mrf.mxu0
        %v3478 = vadd.f32 %v952, %v3477
        %v3479 = vpop.f32.mrf.mxu0
        %v3480 = vadd.f32 %v952, %v3479
        %3481 = vmatmul.bf16.gmra.mxu0 %v723
        %v3482 = vpop.f32.mrf.mxu0
        %v3483 = vadd.f32 %v952, %v3482
        %v3484 = vpop.f32.mrf.mxu0
        %v3485 = vadd.f32 %v952, %v3484
        %3486 = vmatmul.bf16.gmra.mxu0 %v728
        %v3487 = vpop.f32.mrf.mxu0
        %v3488 = vadd.f32 %v952, %v3487
        %v3489 = vpop.f32.mrf.mxu0
        %v3490 = vadd.f32 %v952, %v3489
        %3491 = vmatmul.bf16.gmra.mxu0 %v733
        %v3492 = vpop.f32.mrf.mxu0
        %v3493 = vadd.f32 %v952, %v3492
        %v3494 = vpop.f32.mrf.mxu0
        %v3495 = vadd.f32 %v952, %v3494
        %3496 = vmatmul.bf16.gmra.mxu0 %v738
        %v3497 = vpop.f32.mrf.mxu0
        %v3498 = vadd.f32 %v952, %v3497
        %v3499 = vpop.f32.mrf.mxu0
        %v3500 = vadd.f32 %v952, %v3499
        %3501 = vmatmul.bf16.gmra.mxu0 %v743
        %v3502 = vpop.f32.mrf.mxu0
        %v3503 = vadd.f32 %v952, %v3502
        %v3504 = vpop.f32.mrf.mxu0
        %v3505 = vadd.f32 %v952, %v3504
        %3506 = vmatmul.bf16.gmra.mxu0 %v748
        %v3507 = vpop.f32.mrf.mxu0
        %v3508 = vadd.f32 %v952, %v3507
        %v3509 = vpop.f32.mrf.mxu0
        %v3510 = vadd.f32 %v952, %v3509
        %3511 = vmatmul.bf16.gmra.mxu0 %v753
        %v3512 = vpop.f32.mrf.mxu0
        %v3513 = vadd.f32 %v952, %v3512
        %v3514 = vpop.f32.mrf.mxu0
        %v3515 = vadd.f32 %v952, %v3514
        %3516 = vmatmul.bf16.gmra.mxu0 %v758
        %v3517 = vpop.f32.mrf.mxu0
        %v3518 = vadd.f32 %v952, %v3517
        %v3519 = vpop.f32.mrf.mxu0
        %v3520 = vadd.f32 %v952, %v3519
        %3521 = vmatmul.bf16.gmra.mxu0 %v763
        %v3522 = vpop.f32.mrf.mxu0
        %v3523 = vadd.f32 %v952, %v3522
        %v3524 = vpop.f32.mrf.mxu0
        %v3525 = vadd.f32 %v952, %v3524
        %3526 = vmatmul.bf16.gmra.mxu0 %v768
        %v3527 = vpop.f32.mrf.mxu0
        %v3528 = vadd.f32 %v952, %v3527
        %v3529 = vpop.f32.mrf.mxu0
        %v3530 = vadd.f32 %v952, %v3529
        %3531 = vmatmul.bf16.gmra.mxu0 %v773
        %v3532 = vpop.f32.mrf.mxu0
        %v3533 = vadd.f32 %v952, %v3532
        %v3534 = vpop.f32.mrf.mxu0
        %v3535 = vadd.f32 %v952, %v3534
        %3536 = vmatmul.bf16.gmra.mxu0 %v778
        %v3537 = vpop.f32.mrf.mxu0
        %v3538 = vadd.f32 %v952, %v3537
        %v3539 = vpop.f32.mrf.mxu0
        %v3540 = vadd.f32 %v952, %v3539
        %3541 = vmatmul.bf16.gmra.mxu0 %v783
        %v3542 = vpop.f32.mrf.mxu0
        %v3543 = vadd.f32 %v952, %v3542
        %v3544 = vpop.f32.mrf.mxu0
        %v3545 = vadd.f32 %v952, %v3544
        %3546 = vmatmul.bf16.gmra.mxu0 %v788
        %v3547 = vpop.f32.mrf.mxu0
        %v3548 = vadd.f32 %v952, %v3547
        %v3549 = vpop.f32.mrf.mxu0
        %v3550 = vadd.f32 %v952, %v3549
        %3551 = vmatmul.bf16.gmra.mxu0 %v793
        %v3552 = vpop.f32.mrf.mxu0
        %v3553 = vadd.f32 %v952, %v3552
        %v3554 = vpop.f32.mrf.mxu0
        %v3555 = vadd.f32 %v952, %v3554
        %3556 = vmatmul.bf16.gmra.mxu0 %v798
        %v3557 = vpop.f32.mrf.mxu0
        %v3558 = vadd.f32 %v952, %v3557
        %v3559 = vpop.f32.mrf.mxu0
        %v3560 = vadd.f32 %v952, %v3559
        %3561 = vmatmul.bf16.gmra.mxu0 %v803
        %v3562 = vpop.f32.mrf.mxu0
        %v3563 = vadd.f32 %v952, %v3562
        %v3564 = vpop.f32.mrf.mxu0
        %v3565 = vadd.f32 %v952, %v3564
        %3566 = vmatmul.bf16.gmra.mxu0 %v808
        %v3567 = vpop.f32.mrf.mxu0
        %v3568 = vadd.f32 %v952, %v3567
        %v3569 = vpop.f32.mrf.mxu0
        %v3570 = vadd.f32 %v952, %v3569
        %3571 = vmatmul.bf16.gmra.mxu0 %v813
        %v3572 = vpop.f32.mrf.mxu0
        %v3573 = vadd.f32 %v952, %v3572
        %v3574 = vpop.f32.mrf.mxu0
        %v3575 = vadd.f32 %v952, %v3574
        %3576 = vdwg.mxu0
        %3577 = vmatpush.bf16.msra.mxu0 %v1410
        %3578 = vmatpush.bf16.msra.mxu0 %v1406
        %3579 = vmatpush.bf16.msra.mxu0 %v1402
        %3580 = vmatpush.bf16.msra.mxu0 %v1398
        %3581 = vmatpush.bf16.msra.mxu0 %v1394
        %3582 = vmatpush.bf16.msra.mxu0 %v1390
        %3583 = vmatpush.bf16.msra.mxu0 %v1386
        %3584 = vmatpush.bf16.msra.mxu0 %v1382
        %3585 = vmatmul.bf16.gmra.mxu0 %v659
        %v3586 = vpop.f32.mrf.mxu0
        %v3587 = vadd.f32 %v3418, %v3586
        %v3588 = vpop.f32.mrf.mxu0
        %v3589 = vadd.f32 %v3420, %v3588
        %3590 = vmatmul.bf16.gmra.mxu0 %v664
        %v3591 = vpop.f32.mrf.mxu0
        %v3592 = vadd.f32 %v3423, %v3591
        %v3593 = vpop.f32.mrf.mxu0
        %v3594 = vadd.f32 %v3425, %v3593
        %3595 = vmatmul.bf16.gmra.mxu0 %v669
        %v3596 = vpop.f32.mrf.mxu0
        %v3597 = vadd.f32 %v3428, %v3596
        %v3598 = vpop.f32.mrf.mxu0
        %v3599 = vadd.f32 %v3430, %v3598
        %3600 = vmatmul.bf16.gmra.mxu0 %v674
        %v3601 = vpop.f32.mrf.mxu0
        %v3602 = vadd.f32 %v3433, %v3601
        %v3603 = vpop.f32.mrf.mxu0
        %v3604 = vadd.f32 %v3435, %v3603
        %3605 = vmatmul.bf16.gmra.mxu0 %v679
        %v3606 = vpop.f32.mrf.mxu0
        %v3607 = vadd.f32 %v3438, %v3606
        %v3608 = vpop.f32.mrf.mxu0
        %v3609 = vadd.f32 %v3440, %v3608
        %3610 = vmatmul.bf16.gmra.mxu0 %v684
        %v3611 = vpop.f32.mrf.mxu0
        %v3612 = vadd.f32 %v3443, %v3611
        %v3613 = vpop.f32.mrf.mxu0
        %v3614 = vadd.f32 %v3445, %v3613
        %3615 = vmatmul.bf16.gmra.mxu0 %v689
        %v3616 = vpop.f32.mrf.mxu0
        %v3617 = vadd.f32 %v3448, %v3616
        %v3618 = vpop.f32.mrf.mxu0
        %v3619 = vadd.f32 %v3450, %v3618
        %3620 = vmatmul.bf16.gmra.mxu0 %v694
        %v3621 = vpop.f32.mrf.mxu0
        %v3622 = vadd.f32 %v3453, %v3621
        %v3623 = vpop.f32.mrf.mxu0
        %v3624 = vadd.f32 %v3455, %v3623
        %3625 = vmatmul.bf16.gmra.mxu0 %v699
        %v3626 = vpop.f32.mrf.mxu0
        %v3627 = vadd.f32 %v3458, %v3626
        %v3628 = vpop.f32.mrf.mxu0
        %v3629 = vadd.f32 %v3460, %v3628
        %3630 = vmatmul.bf16.gmra.mxu0 %v704
        %v3631 = vpop.f32.mrf.mxu0
        %v3632 = vadd.f32 %v3463, %v3631
        %v3633 = vpop.f32.mrf.mxu0
        %v3634 = vadd.f32 %v3465, %v3633
        %3635 = vmatmul.bf16.gmra.mxu0 %v709
        %v3636 = vpop.f32.mrf.mxu0
        %v3637 = vadd.f32 %v3468, %v3636
        %v3638 = vpop.f32.mrf.mxu0
        %v3639 = vadd.f32 %v3470, %v3638
        %3640 = vmatmul.bf16.gmra.mxu0 %v714
        %v3641 = vpop.f32.mrf.mxu0
        %v3642 = vadd.f32 %v3473, %v3641
        %v3643 = vpop.f32.mrf.mxu0
        %v3644 = vadd.f32 %v3475, %v3643
        %3645 = vmatmul.bf16.gmra.mxu0 %v719
        %v3646 = vpop.f32.mrf.mxu0
        %v3647 = vadd.f32 %v3478, %v3646
        %v3648 = vpop.f32.mrf.mxu0
        %v3649 = vadd.f32 %v3480, %v3648
        %3650 = vmatmul.bf16.gmra.mxu0 %v724
        %v3651 = vpop.f32.mrf.mxu0
        %v3652 = vadd.f32 %v3483, %v3651
        %v3653 = vpop.f32.mrf.mxu0
        %v3654 = vadd.f32 %v3485, %v3653
        %3655 = vmatmul.bf16.gmra.mxu0 %v729
        %v3656 = vpop.f32.mrf.mxu0
        %v3657 = vadd.f32 %v3488, %v3656
        %v3658 = vpop.f32.mrf.mxu0
        %v3659 = vadd.f32 %v3490, %v3658
        %3660 = vmatmul.bf16.gmra.mxu0 %v734
        %v3661 = vpop.f32.mrf.mxu0
        %v3662 = vadd.f32 %v3493, %v3661
        %v3663 = vpop.f32.mrf.mxu0
        %v3664 = vadd.f32 %v3495, %v3663
        %3665 = vmatmul.bf16.gmra.mxu0 %v739
        %v3666 = vpop.f32.mrf.mxu0
        %v3667 = vadd.f32 %v3498, %v3666
        %v3668 = vpop.f32.mrf.mxu0
        %v3669 = vadd.f32 %v3500, %v3668
        %3670 = vmatmul.bf16.gmra.mxu0 %v744
        %v3671 = vpop.f32.mrf.mxu0
        %v3672 = vadd.f32 %v3503, %v3671
        %v3673 = vpop.f32.mrf.mxu0
        %v3674 = vadd.f32 %v3505, %v3673
        %3675 = vmatmul.bf16.gmra.mxu0 %v749
        %v3676 = vpop.f32.mrf.mxu0
        %v3677 = vadd.f32 %v3508, %v3676
        %v3678 = vpop.f32.mrf.mxu0
        %v3679 = vadd.f32 %v3510, %v3678
        %3680 = vmatmul.bf16.gmra.mxu0 %v754
        %v3681 = vpop.f32.mrf.mxu0
        %v3682 = vadd.f32 %v3513, %v3681
        %v3683 = vpop.f32.mrf.mxu0
        %v3684 = vadd.f32 %v3515, %v3683
        %3685 = vmatmul.bf16.gmra.mxu0 %v759
        %v3686 = vpop.f32.mrf.mxu0
        %v3687 = vadd.f32 %v3518, %v3686
        %v3688 = vpop.f32.mrf.mxu0
        %v3689 = vadd.f32 %v3520, %v3688
        %3690 = vmatmul.bf16.gmra.mxu0 %v764
        %v3691 = vpop.f32.mrf.mxu0
        %v3692 = vadd.f32 %v3523, %v3691
        %v3693 = vpop.f32.mrf.mxu0
        %v3694 = vadd.f32 %v3525, %v3693
        %3695 = vmatmul.bf16.gmra.mxu0 %v769
        %v3696 = vpop.f32.mrf.mxu0
        %v3697 = vadd.f32 %v3528, %v3696
        %v3698 = vpop.f32.mrf.mxu0
        %v3699 = vadd.f32 %v3530, %v3698
        %3700 = vmatmul.bf16.gmra.mxu0 %v774
        %v3701 = vpop.f32.mrf.mxu0
        %v3702 = vadd.f32 %v3533, %v3701
        %v3703 = vpop.f32.mrf.mxu0
        %v3704 = vadd.f32 %v3535, %v3703
        %3705 = vmatmul.bf16.gmra.mxu0 %v779
        %v3706 = vpop.f32.mrf.mxu0
        %v3707 = vadd.f32 %v3538, %v3706
        %v3708 = vpop.f32.mrf.mxu0
        %v3709 = vadd.f32 %v3540, %v3708
        %3710 = vmatmul.bf16.gmra.mxu0 %v784
        %v3711 = vpop.f32.mrf.mxu0
        %v3712 = vadd.f32 %v3543, %v3711
        %v3713 = vpop.f32.mrf.mxu0
        %v3714 = vadd.f32 %v3545, %v3713
        %3715 = vmatmul.bf16.gmra.mxu0 %v789
        %v3716 = vpop.f32.mrf.mxu0
        %v3717 = vadd.f32 %v3548, %v3716
        %v3718 = vpop.f32.mrf.mxu0
        %v3719 = vadd.f32 %v3550, %v3718
        %3720 = vmatmul.bf16.gmra.mxu0 %v794
        %v3721 = vpop.f32.mrf.mxu0
        %v3722 = vadd.f32 %v3553, %v3721
        %v3723 = vpop.f32.mrf.mxu0
        %v3724 = vadd.f32 %v3555, %v3723
        %3725 = vmatmul.bf16.gmra.mxu0 %v799
        %v3726 = vpop.f32.mrf.mxu0
        %v3727 = vadd.f32 %v3558, %v3726
        %v3728 = vpop.f32.mrf.mxu0
        %v3729 = vadd.f32 %v3560, %v3728
        %3730 = vmatmul.bf16.gmra.mxu0 %v804
        %v3731 = vpop.f32.mrf.mxu0
        %v3732 = vadd.f32 %v3563, %v3731
        %v3733 = vpop.f32.mrf.mxu0
        %v3734 = vadd.f32 %v3565, %v3733
        %3735 = vmatmul.bf16.gmra.mxu0 %v809
        %v3736 = vpop.f32.mrf.mxu0
        %v3737 = vadd.f32 %v3568, %v3736
        %v3738 = vpop.f32.mrf.mxu0
        %v3739 = vadd.f32 %v3570, %v3738
        %3740 = vmatmul.bf16.gmra.mxu0 %v814
        %v3741 = vpop.f32.mrf.mxu0
        %v3742 = vadd.f32 %v3573, %v3741
        %v3743 = vpop.f32.mrf.mxu0
        %v3744 = vadd.f32 %v3575, %v3743
        %3745 = vdwg.mxu0
        %3746 = vmatpush.bf16.msra.mxu0 %v1442
        %3747 = vmatpush.bf16.msra.mxu0 %v1438
        %3748 = vmatpush.bf16.msra.mxu0 %v1434
        %3749 = vmatpush.bf16.msra.mxu0 %v1430
        %3750 = vmatpush.bf16.msra.mxu0 %v1426
        %3751 = vmatpush.bf16.msra.mxu0 %v1422
        %3752 = vmatpush.bf16.msra.mxu0 %v1418
        %3753 = vmatpush.bf16.msra.mxu0 %v1414
        %3754 = vmatmul.bf16.gmra.mxu0 %v660
        %v3755 = vpop.f32.mrf.mxu0
        %v3756 = vadd.f32 %v3587, %v3755
        %v3757 = vpop.f32.mrf.mxu0
        %v3758 = vadd.f32 %v3589, %v3757
        %3759 = vmatmul.bf16.gmra.mxu0 %v665
        %v3760 = vpop.f32.mrf.mxu0
        %v3761 = vadd.f32 %v3592, %v3760
        %v3762 = vpop.f32.mrf.mxu0
        %v3763 = vadd.f32 %v3594, %v3762
        %3764 = vmatmul.bf16.gmra.mxu0 %v670
        %v3765 = vpop.f32.mrf.mxu0
        %v3766 = vadd.f32 %v3597, %v3765
        %v3767 = vpop.f32.mrf.mxu0
        %v3768 = vadd.f32 %v3599, %v3767
        %3769 = vmatmul.bf16.gmra.mxu0 %v675
        %v3770 = vpop.f32.mrf.mxu0
        %v3771 = vadd.f32 %v3602, %v3770
        %v3772 = vpop.f32.mrf.mxu0
        %v3773 = vadd.f32 %v3604, %v3772
        %3774 = vmatmul.bf16.gmra.mxu0 %v680
        %v3775 = vpop.f32.mrf.mxu0
        %v3776 = vadd.f32 %v3607, %v3775
        %v3777 = vpop.f32.mrf.mxu0
        %v3778 = vadd.f32 %v3609, %v3777
        %3779 = vmatmul.bf16.gmra.mxu0 %v685
        %v3780 = vpop.f32.mrf.mxu0
        %v3781 = vadd.f32 %v3612, %v3780
        %v3782 = vpop.f32.mrf.mxu0
        %v3783 = vadd.f32 %v3614, %v3782
        %3784 = vmatmul.bf16.gmra.mxu0 %v690
        %v3785 = vpop.f32.mrf.mxu0
        %v3786 = vadd.f32 %v3617, %v3785
        %v3787 = vpop.f32.mrf.mxu0
        %v3788 = vadd.f32 %v3619, %v3787
        %3789 = vmatmul.bf16.gmra.mxu0 %v695
        %v3790 = vpop.f32.mrf.mxu0
        %v3791 = vadd.f32 %v3622, %v3790
        %v3792 = vpop.f32.mrf.mxu0
        %v3793 = vadd.f32 %v3624, %v3792
        %3794 = vmatmul.bf16.gmra.mxu0 %v700
        %v3795 = vpop.f32.mrf.mxu0
        %v3796 = vadd.f32 %v3627, %v3795
        %v3797 = vpop.f32.mrf.mxu0
        %v3798 = vadd.f32 %v3629, %v3797
        %3799 = vmatmul.bf16.gmra.mxu0 %v705
        %v3800 = vpop.f32.mrf.mxu0
        %v3801 = vadd.f32 %v3632, %v3800
        %v3802 = vpop.f32.mrf.mxu0
        %v3803 = vadd.f32 %v3634, %v3802
        %3804 = vmatmul.bf16.gmra.mxu0 %v710
        %v3805 = vpop.f32.mrf.mxu0
        %v3806 = vadd.f32 %v3637, %v3805
        %v3807 = vpop.f32.mrf.mxu0
        %v3808 = vadd.f32 %v3639, %v3807
        %3809 = vmatmul.bf16.gmra.mxu0 %v715
        %v3810 = vpop.f32.mrf.mxu0
        %v3811 = vadd.f32 %v3642, %v3810
        %v3812 = vpop.f32.mrf.mxu0
        %v3813 = vadd.f32 %v3644, %v3812
        %3814 = vmatmul.bf16.gmra.mxu0 %v720
        %v3815 = vpop.f32.mrf.mxu0
        %v3816 = vadd.f32 %v3647, %v3815
        %v3817 = vpop.f32.mrf.mxu0
        %v3818 = vadd.f32 %v3649, %v3817
        %3819 = vmatmul.bf16.gmra.mxu0 %v725
        %v3820 = vpop.f32.mrf.mxu0
        %v3821 = vadd.f32 %v3652, %v3820
        %v3822 = vpop.f32.mrf.mxu0
        %v3823 = vadd.f32 %v3654, %v3822
        %3824 = vmatmul.bf16.gmra.mxu0 %v730
        %v3825 = vpop.f32.mrf.mxu0
        %v3826 = vadd.f32 %v3657, %v3825
        %v3827 = vpop.f32.mrf.mxu0
        %v3828 = vadd.f32 %v3659, %v3827
        %3829 = vmatmul.bf16.gmra.mxu0 %v735
        %v3830 = vpop.f32.mrf.mxu0
        %v3831 = vadd.f32 %v3662, %v3830
        %v3832 = vpop.f32.mrf.mxu0
        %v3833 = vadd.f32 %v3664, %v3832
        %3834 = vmatmul.bf16.gmra.mxu0 %v740
        %v3835 = vpop.f32.mrf.mxu0
        %v3836 = vadd.f32 %v3667, %v3835
        %v3837 = vpop.f32.mrf.mxu0
        %v3838 = vadd.f32 %v3669, %v3837
        %3839 = vmatmul.bf16.gmra.mxu0 %v745
        %v3840 = vpop.f32.mrf.mxu0
        %v3841 = vadd.f32 %v3672, %v3840
        %v3842 = vpop.f32.mrf.mxu0
        %v3843 = vadd.f32 %v3674, %v3842
        %3844 = vmatmul.bf16.gmra.mxu0 %v750
        %v3845 = vpop.f32.mrf.mxu0
        %v3846 = vadd.f32 %v3677, %v3845
        %v3847 = vpop.f32.mrf.mxu0
        %v3848 = vadd.f32 %v3679, %v3847
        %3849 = vmatmul.bf16.gmra.mxu0 %v755
        %v3850 = vpop.f32.mrf.mxu0
        %v3851 = vadd.f32 %v3682, %v3850
        %v3852 = vpop.f32.mrf.mxu0
        %v3853 = vadd.f32 %v3684, %v3852
        %3854 = vmatmul.bf16.gmra.mxu0 %v760
        %v3855 = vpop.f32.mrf.mxu0
        %v3856 = vadd.f32 %v3687, %v3855
        %v3857 = vpop.f32.mrf.mxu0
        %v3858 = vadd.f32 %v3689, %v3857
        %3859 = vmatmul.bf16.gmra.mxu0 %v765
        %v3860 = vpop.f32.mrf.mxu0
        %v3861 = vadd.f32 %v3692, %v3860
        %v3862 = vpop.f32.mrf.mxu0
        %v3863 = vadd.f32 %v3694, %v3862
        %3864 = vmatmul.bf16.gmra.mxu0 %v770
        %v3865 = vpop.f32.mrf.mxu0
        %v3866 = vadd.f32 %v3697, %v3865
        %v3867 = vpop.f32.mrf.mxu0
        %v3868 = vadd.f32 %v3699, %v3867
        %3869 = vmatmul.bf16.gmra.mxu0 %v775
        %v3870 = vpop.f32.mrf.mxu0
        %v3871 = vadd.f32 %v3702, %v3870
        %v3872 = vpop.f32.mrf.mxu0
        %v3873 = vadd.f32 %v3704, %v3872
        %3874 = vmatmul.bf16.gmra.mxu0 %v780
        %v3875 = vpop.f32.mrf.mxu0
        %v3876 = vadd.f32 %v3707, %v3875
        %v3877 = vpop.f32.mrf.mxu0
        %v3878 = vadd.f32 %v3709, %v3877
        %3879 = vmatmul.bf16.gmra.mxu0 %v785
        %v3880 = vpop.f32.mrf.mxu0
        %v3881 = vadd.f32 %v3712, %v3880
        %v3882 = vpop.f32.mrf.mxu0
        %v3883 = vadd.f32 %v3714, %v3882
        %3884 = vmatmul.bf16.gmra.mxu0 %v790
        %v3885 = vpop.f32.mrf.mxu0
        %v3886 = vadd.f32 %v3717, %v3885
        %v3887 = vpop.f32.mrf.mxu0
        %v3888 = vadd.f32 %v3719, %v3887
        %3889 = vmatmul.bf16.gmra.mxu0 %v795
        %v3890 = vpop.f32.mrf.mxu0
        %v3891 = vadd.f32 %v3722, %v3890
        %v3892 = vpop.f32.mrf.mxu0
        %v3893 = vadd.f32 %v3724, %v3892
        %3894 = vmatmul.bf16.gmra.mxu0 %v800
        %v3895 = vpop.f32.mrf.mxu0
        %v3896 = vadd.f32 %v3727, %v3895
        %v3897 = vpop.f32.mrf.mxu0
        %v3898 = vadd.f32 %v3729, %v3897
        %3899 = vmatmul.bf16.gmra.mxu0 %v805
        %v3900 = vpop.f32.mrf.mxu0
        %v3901 = vadd.f32 %v3732, %v3900
        %v3902 = vpop.f32.mrf.mxu0
        %v3903 = vadd.f32 %v3734, %v3902
        %3904 = vmatmul.bf16.gmra.mxu0 %v810
        %v3905 = vpop.f32.mrf.mxu0
        %v3906 = vadd.f32 %v3737, %v3905
        %v3907 = vpop.f32.mrf.mxu0
        %v3908 = vadd.f32 %v3739, %v3907
        %3909 = vmatmul.bf16.gmra.mxu0 %v815
        %v3910 = vpop.f32.mrf.mxu0
        %v3911 = vadd.f32 %v3742, %v3910
        %v3912 = vpop.f32.mrf.mxu0
        %v3913 = vadd.f32 %v3744, %v3912
        %3914 = vdwg.mxu0
        %3915 = vmatpush.bf16.msra.mxu0 %v1474
        %3916 = vmatpush.bf16.msra.mxu0 %v1470
        %3917 = vmatpush.bf16.msra.mxu0 %v1466
        %3918 = vmatpush.bf16.msra.mxu0 %v1462
        %3919 = vmatpush.bf16.msra.mxu0 %v1458
        %3920 = vmatpush.bf16.msra.mxu0 %v1454
        %3921 = vmatpush.bf16.msra.mxu0 %v1450
        %3922 = vmatpush.bf16.msra.mxu0 %v1446
        %3923 = vmatmul.bf16.gmra.mxu0 %v661
        %v3924 = vpop.f32.mrf.mxu0
        %v3925 = vadd.f32 %v3756, %v3924
        %v3926 = vpop.f32.mrf.mxu0
        %v3927 = vadd.f32 %v3758, %v3926
        %3928 = vmatmul.bf16.gmra.mxu0 %v666
        %v3929 = vpop.f32.mrf.mxu0
        %v3930 = vadd.f32 %v3761, %v3929
        %v3931 = vpop.f32.mrf.mxu0
        %v3932 = vadd.f32 %v3763, %v3931
        %3933 = vmatmul.bf16.gmra.mxu0 %v671
        %v3934 = vpop.f32.mrf.mxu0
        %v3935 = vadd.f32 %v3766, %v3934
        %v3936 = vpop.f32.mrf.mxu0
        %v3937 = vadd.f32 %v3768, %v3936
        %3938 = vmatmul.bf16.gmra.mxu0 %v676
        %v3939 = vpop.f32.mrf.mxu0
        %v3940 = vadd.f32 %v3771, %v3939
        %v3941 = vpop.f32.mrf.mxu0
        %v3942 = vadd.f32 %v3773, %v3941
        %3943 = vmatmul.bf16.gmra.mxu0 %v681
        %v3944 = vpop.f32.mrf.mxu0
        %v3945 = vadd.f32 %v3776, %v3944
        %v3946 = vpop.f32.mrf.mxu0
        %v3947 = vadd.f32 %v3778, %v3946
        %3948 = vmatmul.bf16.gmra.mxu0 %v686
        %v3949 = vpop.f32.mrf.mxu0
        %v3950 = vadd.f32 %v3781, %v3949
        %v3951 = vpop.f32.mrf.mxu0
        %v3952 = vadd.f32 %v3783, %v3951
        %3953 = vmatmul.bf16.gmra.mxu0 %v691
        %v3954 = vpop.f32.mrf.mxu0
        %v3955 = vadd.f32 %v3786, %v3954
        %v3956 = vpop.f32.mrf.mxu0
        %v3957 = vadd.f32 %v3788, %v3956
        %3958 = vmatmul.bf16.gmra.mxu0 %v696
        %v3959 = vpop.f32.mrf.mxu0
        %v3960 = vadd.f32 %v3791, %v3959
        %v3961 = vpop.f32.mrf.mxu0
        %v3962 = vadd.f32 %v3793, %v3961
        %3963 = vmatmul.bf16.gmra.mxu0 %v701
        %v3964 = vpop.f32.mrf.mxu0
        %v3965 = vadd.f32 %v3796, %v3964
        %v3966 = vpop.f32.mrf.mxu0
        %v3967 = vadd.f32 %v3798, %v3966
        %3968 = vmatmul.bf16.gmra.mxu0 %v706
        %v3969 = vpop.f32.mrf.mxu0
        %v3970 = vadd.f32 %v3801, %v3969
        %v3971 = vpop.f32.mrf.mxu0
        %v3972 = vadd.f32 %v3803, %v3971
        %3973 = vmatmul.bf16.gmra.mxu0 %v711
        %v3974 = vpop.f32.mrf.mxu0
        %v3975 = vadd.f32 %v3806, %v3974
        %v3976 = vpop.f32.mrf.mxu0
        %v3977 = vadd.f32 %v3808, %v3976
        %3978 = vmatmul.bf16.gmra.mxu0 %v716
        %v3979 = vpop.f32.mrf.mxu0
        %v3980 = vadd.f32 %v3811, %v3979
        %v3981 = vpop.f32.mrf.mxu0
        %v3982 = vadd.f32 %v3813, %v3981
        %3983 = vmatmul.bf16.gmra.mxu0 %v721
        %v3984 = vpop.f32.mrf.mxu0
        %v3985 = vadd.f32 %v3816, %v3984
        %v3986 = vpop.f32.mrf.mxu0
        %v3987 = vadd.f32 %v3818, %v3986
        %3988 = vmatmul.bf16.gmra.mxu0 %v726
        %v3989 = vpop.f32.mrf.mxu0
        %v3990 = vadd.f32 %v3821, %v3989
        %v3991 = vpop.f32.mrf.mxu0
        %v3992 = vadd.f32 %v3823, %v3991
        %3993 = vmatmul.bf16.gmra.mxu0 %v731
        %v3994 = vpop.f32.mrf.mxu0
        %v3995 = vadd.f32 %v3826, %v3994
        %v3996 = vpop.f32.mrf.mxu0
        %v3997 = vadd.f32 %v3828, %v3996
        %3998 = vmatmul.bf16.gmra.mxu0 %v736
        %v3999 = vpop.f32.mrf.mxu0
        %v4000 = vadd.f32 %v3831, %v3999
        %v4001 = vpop.f32.mrf.mxu0
        %v4002 = vadd.f32 %v3833, %v4001
        %4003 = vmatmul.bf16.gmra.mxu0 %v741
        %v4004 = vpop.f32.mrf.mxu0
        %v4005 = vadd.f32 %v3836, %v4004
        %v4006 = vpop.f32.mrf.mxu0
        %v4007 = vadd.f32 %v3838, %v4006
        %4008 = vmatmul.bf16.gmra.mxu0 %v746
        %v4009 = vpop.f32.mrf.mxu0
        %v4010 = vadd.f32 %v3841, %v4009
        %v4011 = vpop.f32.mrf.mxu0
        %v4012 = vadd.f32 %v3843, %v4011
        %4013 = vmatmul.bf16.gmra.mxu0 %v751
        %v4014 = vpop.f32.mrf.mxu0
        %v4015 = vadd.f32 %v3846, %v4014
        %v4016 = vpop.f32.mrf.mxu0
        %v4017 = vadd.f32 %v3848, %v4016
        %4018 = vmatmul.bf16.gmra.mxu0 %v756
        %v4019 = vpop.f32.mrf.mxu0
        %v4020 = vadd.f32 %v3851, %v4019
        %v4021 = vpop.f32.mrf.mxu0
        %v4022 = vadd.f32 %v3853, %v4021
        %4023 = vmatmul.bf16.gmra.mxu0 %v761
        %v4024 = vpop.f32.mrf.mxu0
        %v4025 = vadd.f32 %v3856, %v4024
        %v4026 = vpop.f32.mrf.mxu0
        %v4027 = vadd.f32 %v3858, %v4026
        %4028 = vmatmul.bf16.gmra.mxu0 %v766
        %v4029 = vpop.f32.mrf.mxu0
        %v4030 = vadd.f32 %v3861, %v4029
        %v4031 = vpop.f32.mrf.mxu0
        %v4032 = vadd.f32 %v3863, %v4031
        %4033 = vmatmul.bf16.gmra.mxu0 %v771
        %v4034 = vpop.f32.mrf.mxu0
        %v4035 = vadd.f32 %v3866, %v4034
        %v4036 = vpop.f32.mrf.mxu0
        %v4037 = vadd.f32 %v3868, %v4036
        %4038 = vmatmul.bf16.gmra.mxu0 %v776
        %v4039 = vpop.f32.mrf.mxu0
        %v4040 = vadd.f32 %v3871, %v4039
        %v4041 = vpop.f32.mrf.mxu0
        %v4042 = vadd.f32 %v3873, %v4041
        %4043 = vmatmul.bf16.gmra.mxu0 %v781
        %v4044 = vpop.f32.mrf.mxu0
        %v4045 = vadd.f32 %v3876, %v4044
        %v4046 = vpop.f32.mrf.mxu0
        %v4047 = vadd.f32 %v3878, %v4046
        %4048 = vmatmul.bf16.gmra.mxu0 %v786
        %v4049 = vpop.f32.mrf.mxu0
        %v4050 = vadd.f32 %v3881, %v4049
        %v4051 = vpop.f32.mrf.mxu0
        %v4052 = vadd.f32 %v3883, %v4051
        %4053 = vmatmul.bf16.gmra.mxu0 %v791
        %v4054 = vpop.f32.mrf.mxu0
        %v4055 = vadd.f32 %v3886, %v4054
        %v4056 = vpop.f32.mrf.mxu0
        %v4057 = vadd.f32 %v3888, %v4056
        %4058 = vmatmul.bf16.gmra.mxu0 %v796
        %v4059 = vpop.f32.mrf.mxu0
        %v4060 = vadd.f32 %v3891, %v4059
        %v4061 = vpop.f32.mrf.mxu0
        %v4062 = vadd.f32 %v3893, %v4061
        %4063 = vmatmul.bf16.gmra.mxu0 %v801
        %v4064 = vpop.f32.mrf.mxu0
        %v4065 = vadd.f32 %v3896, %v4064
        %v4066 = vpop.f32.mrf.mxu0
        %v4067 = vadd.f32 %v3898, %v4066
        %4068 = vmatmul.bf16.gmra.mxu0 %v806
        %v4069 = vpop.f32.mrf.mxu0
        %v4070 = vadd.f32 %v3901, %v4069
        %v4071 = vpop.f32.mrf.mxu0
        %v4072 = vadd.f32 %v3903, %v4071
        %4073 = vmatmul.bf16.gmra.mxu0 %v811
        %v4074 = vpop.f32.mrf.mxu0
        %v4075 = vadd.f32 %v3906, %v4074
        %v4076 = vpop.f32.mrf.mxu0
        %v4077 = vadd.f32 %v3908, %v4076
        %4078 = vmatmul.bf16.gmra.mxu0 %v816
        %v4079 = vpop.f32.mrf.mxu0
        %v4080 = vadd.f32 %v3911, %v4079
        %v4081 = vpop.f32.mrf.mxu0
        %v4082 = vadd.f32 %v3913, %v4081
        %4083 = vdwg.mxu0
        %4084 = vmatpush.bf16.msra.mxu0 0
        %4085 = vmatpush.bf16.msra.mxu0 0
        %4086 = vmatpush.bf16.msra.mxu0 0
        %4087 = vmatpush.bf16.msra.mxu0 0
        %4088 = vmatpush.bf16.msra.mxu0 0
        %4089 = vmatpush.bf16.msra.mxu0 0
        %4090 = vmatpush.bf16.msra.mxu0 0
        %4091 = vmatpush.bf16.msra.mxu0 %v1713
        %4092 = vmatmul.bf16.gmra.mxu0 %v1610
        %v4093 = vpop.f32.mrf.mxu0
        %v4094 = vadd.f32 %v3925, %v4093
        %v4095 = vpop.f32.mrf.mxu0
        %v4096 = vadd.f32 %v3927, %v4095
        %4097 = vmatmul.bf16.gmra.mxu0 %v1613
        %v4098 = vpop.f32.mrf.mxu0
        %v4099 = vadd.f32 %v3930, %v4098
        %v4100 = vpop.f32.mrf.mxu0
        %v4101 = vadd.f32 %v3932, %v4100
        %4102 = vmatmul.bf16.gmra.mxu0 %v1616
        %v4103 = vpop.f32.mrf.mxu0
        %v4104 = vadd.f32 %v3935, %v4103
        %v4105 = vpop.f32.mrf.mxu0
        %v4106 = vadd.f32 %v3937, %v4105
        %4107 = vmatmul.bf16.gmra.mxu0 %v1619
        %v4108 = vpop.f32.mrf.mxu0
        %v4109 = vadd.f32 %v3940, %v4108
        %v4110 = vpop.f32.mrf.mxu0
        %v4111 = vadd.f32 %v3942, %v4110
        %4112 = vmatmul.bf16.gmra.mxu0 %v1622
        %v4113 = vpop.f32.mrf.mxu0
        %v4114 = vadd.f32 %v3945, %v4113
        %v4115 = vpop.f32.mrf.mxu0
        %v4116 = vadd.f32 %v3947, %v4115
        %4117 = vmatmul.bf16.gmra.mxu0 %v1625
        %v4118 = vpop.f32.mrf.mxu0
        %v4119 = vadd.f32 %v3950, %v4118
        %v4120 = vpop.f32.mrf.mxu0
        %v4121 = vadd.f32 %v3952, %v4120
        %4122 = vmatmul.bf16.gmra.mxu0 %v1628
        %v4123 = vpop.f32.mrf.mxu0
        %v4124 = vadd.f32 %v3955, %v4123
        %v4125 = vpop.f32.mrf.mxu0
        %v4126 = vadd.f32 %v3957, %v4125
        %4127 = vmatmul.bf16.gmra.mxu0 %v1631
        %v4128 = vpop.f32.mrf.mxu0
        %v4129 = vadd.f32 %v3960, %v4128
        %v4130 = vpop.f32.mrf.mxu0
        %v4131 = vadd.f32 %v3962, %v4130
        %4132 = vmatmul.bf16.gmra.mxu0 %v1634
        %v4133 = vpop.f32.mrf.mxu0
        %v4134 = vadd.f32 %v3965, %v4133
        %v4135 = vpop.f32.mrf.mxu0
        %v4136 = vadd.f32 %v3967, %v4135
        %4137 = vmatmul.bf16.gmra.mxu0 %v1637
        %v4138 = vpop.f32.mrf.mxu0
        %v4139 = vadd.f32 %v3970, %v4138
        %v4140 = vpop.f32.mrf.mxu0
        %v4141 = vadd.f32 %v3972, %v4140
        %4142 = vmatmul.bf16.gmra.mxu0 %v1640
        %v4143 = vpop.f32.mrf.mxu0
        %v4144 = vadd.f32 %v3975, %v4143
        %v4145 = vpop.f32.mrf.mxu0
        %v4146 = vadd.f32 %v3977, %v4145
        %4147 = vmatmul.bf16.gmra.mxu0 %v1643
        %v4148 = vpop.f32.mrf.mxu0
        %v4149 = vadd.f32 %v3980, %v4148
        %v4150 = vpop.f32.mrf.mxu0
        %v4151 = vadd.f32 %v3982, %v4150
        %4152 = vmatmul.bf16.gmra.mxu0 %v1646
        %v4153 = vpop.f32.mrf.mxu0
        %v4154 = vadd.f32 %v3985, %v4153
        %v4155 = vpop.f32.mrf.mxu0
        %v4156 = vadd.f32 %v3987, %v4155
        %4157 = vmatmul.bf16.gmra.mxu0 %v1649
        %v4158 = vpop.f32.mrf.mxu0
        %v4159 = vadd.f32 %v3990, %v4158
        %v4160 = vpop.f32.mrf.mxu0
        %v4161 = vadd.f32 %v3992, %v4160
        %4162 = vmatmul.bf16.gmra.mxu0 %v1652
        %v4163 = vpop.f32.mrf.mxu0
        %v4164 = vadd.f32 %v3995, %v4163
        %v4165 = vpop.f32.mrf.mxu0
        %v4166 = vadd.f32 %v3997, %v4165
        %4167 = vmatmul.bf16.gmra.mxu0 %v1655
        %v4168 = vpop.f32.mrf.mxu0
        %v4169 = vadd.f32 %v4000, %v4168
        %v4170 = vpop.f32.mrf.mxu0
        %v4171 = vadd.f32 %v4002, %v4170
        %4172 = vmatmul.bf16.gmra.mxu0 %v1658
        %v4173 = vpop.f32.mrf.mxu0
        %v4174 = vadd.f32 %v4005, %v4173
        %v4175 = vpop.f32.mrf.mxu0
        %v4176 = vadd.f32 %v4007, %v4175
        %4177 = vmatmul.bf16.gmra.mxu0 %v1661
        %v4178 = vpop.f32.mrf.mxu0
        %v4179 = vadd.f32 %v4010, %v4178
        %v4180 = vpop.f32.mrf.mxu0
        %v4181 = vadd.f32 %v4012, %v4180
        %4182 = vmatmul.bf16.gmra.mxu0 %v1664
        %v4183 = vpop.f32.mrf.mxu0
        %v4184 = vadd.f32 %v4015, %v4183
        %v4185 = vpop.f32.mrf.mxu0
        %v4186 = vadd.f32 %v4017, %v4185
        %4187 = vmatmul.bf16.gmra.mxu0 %v1667
        %v4188 = vpop.f32.mrf.mxu0
        %v4189 = vadd.f32 %v4020, %v4188
        %v4190 = vpop.f32.mrf.mxu0
        %v4191 = vadd.f32 %v4022, %v4190
        %4192 = vmatmul.bf16.gmra.mxu0 %v1670
        %v4193 = vpop.f32.mrf.mxu0
        %v4194 = vadd.f32 %v4025, %v4193
        %v4195 = vpop.f32.mrf.mxu0
        %v4196 = vadd.f32 %v4027, %v4195
        %4197 = vmatmul.bf16.gmra.mxu0 %v1673
        %v4198 = vpop.f32.mrf.mxu0
        %v4199 = vadd.f32 %v4030, %v4198
        %v4200 = vpop.f32.mrf.mxu0
        %v4201 = vadd.f32 %v4032, %v4200
        %4202 = vmatmul.bf16.gmra.mxu0 %v1676
        %v4203 = vpop.f32.mrf.mxu0
        %v4204 = vadd.f32 %v4035, %v4203
        %v4205 = vpop.f32.mrf.mxu0
        %v4206 = vadd.f32 %v4037, %v4205
        %4207 = vmatmul.bf16.gmra.mxu0 %v1679
        %v4208 = vpop.f32.mrf.mxu0
        %v4209 = vadd.f32 %v4040, %v4208
        %v4210 = vpop.f32.mrf.mxu0
        %v4211 = vadd.f32 %v4042, %v4210
        %4212 = vmatmul.bf16.gmra.mxu0 %v1682
        %v4213 = vpop.f32.mrf.mxu0
        %v4214 = vadd.f32 %v4045, %v4213
        %v4215 = vpop.f32.mrf.mxu0
        %v4216 = vadd.f32 %v4047, %v4215
        %4217 = vmatmul.bf16.gmra.mxu0 %v1685
        %v4218 = vpop.f32.mrf.mxu0
        %v4219 = vadd.f32 %v4050, %v4218
        %v4220 = vpop.f32.mrf.mxu0
        %v4221 = vadd.f32 %v4052, %v4220
        %4222 = vmatmul.bf16.gmra.mxu0 %v1688
        %v4223 = vpop.f32.mrf.mxu0
        %v4224 = vadd.f32 %v4055, %v4223
        %v4225 = vpop.f32.mrf.mxu0
        %v4226 = vadd.f32 %v4057, %v4225
        %4227 = vmatmul.bf16.gmra.mxu0 %v1691
        %v4228 = vpop.f32.mrf.mxu0
        %v4229 = vadd.f32 %v4060, %v4228
        %v4230 = vpop.f32.mrf.mxu0
        %v4231 = vadd.f32 %v4062, %v4230
        %4232 = vmatmul.bf16.gmra.mxu0 %v1694
        %v4233 = vpop.f32.mrf.mxu0
        %v4234 = vadd.f32 %v4065, %v4233
        %v4235 = vpop.f32.mrf.mxu0
        %v4236 = vadd.f32 %v4067, %v4235
        %4237 = vmatmul.bf16.gmra.mxu0 %v1697
        %v4238 = vpop.f32.mrf.mxu0
        %v4239 = vadd.f32 %v4070, %v4238
        %v4240 = vpop.f32.mrf.mxu0
        %v4241 = vadd.f32 %v4072, %v4240
        %4242 = vmatmul.bf16.gmra.mxu0 %v1700
        %v4243 = vpop.f32.mrf.mxu0
        %v4244 = vadd.f32 %v4075, %v4243
        %v4245 = vpop.f32.mrf.mxu0
        %v4246 = vadd.f32 %v4077, %v4245
        %4247 = vmatmul.bf16.gmra.mxu0 %v1703
        %v4248 = vpop.f32.mrf.mxu0
        %v4249 = vadd.f32 %v4080, %v4248
        %v4250 = vpop.f32.mrf.mxu0
        %v4251 = vadd.f32 %v4082, %v4250
        %4252 = vdwg.mxu0
        %4253 = vmatpush.bf16.msra.mxu0 %v1379
        %4254 = vmatpush.bf16.msra.mxu0 %v1375
        %4255 = vmatpush.bf16.msra.mxu0 %v1371
        %4256 = vmatpush.bf16.msra.mxu0 %v1367
        %4257 = vmatpush.bf16.msra.mxu0 %v1363
        %4258 = vmatpush.bf16.msra.mxu0 %v1359
        %4259 = vmatpush.bf16.msra.mxu0 %v1355
        %4260 = vmatpush.bf16.msra.mxu0 %v1351
        %4261 = vmatmul.bf16.gmra.mxu0 %v658
        %v4262 = vpop.f32.mrf.mxu0
        %v4263 = vadd.f32 %v953, %v4262
        %v4264 = vpop.f32.mrf.mxu0
        %v4265 = vadd.f32 %v953, %v4264
        %4266 = vmatmul.bf16.gmra.mxu0 %v663
        %v4267 = vpop.f32.mrf.mxu0
        %v4268 = vadd.f32 %v953, %v4267
        %v4269 = vpop.f32.mrf.mxu0
        %v4270 = vadd.f32 %v953, %v4269
        %4271 = vmatmul.bf16.gmra.mxu0 %v668
        %v4272 = vpop.f32.mrf.mxu0
        %v4273 = vadd.f32 %v953, %v4272
        %v4274 = vpop.f32.mrf.mxu0
        %v4275 = vadd.f32 %v953, %v4274
        %4276 = vmatmul.bf16.gmra.mxu0 %v673
        %v4277 = vpop.f32.mrf.mxu0
        %v4278 = vadd.f32 %v953, %v4277
        %v4279 = vpop.f32.mrf.mxu0
        %v4280 = vadd.f32 %v953, %v4279
        %4281 = vmatmul.bf16.gmra.mxu0 %v678
        %v4282 = vpop.f32.mrf.mxu0
        %v4283 = vadd.f32 %v953, %v4282
        %v4284 = vpop.f32.mrf.mxu0
        %v4285 = vadd.f32 %v953, %v4284
        %4286 = vmatmul.bf16.gmra.mxu0 %v683
        %v4287 = vpop.f32.mrf.mxu0
        %v4288 = vadd.f32 %v953, %v4287
        %v4289 = vpop.f32.mrf.mxu0
        %v4290 = vadd.f32 %v953, %v4289
        %4291 = vmatmul.bf16.gmra.mxu0 %v688
        %v4292 = vpop.f32.mrf.mxu0
        %v4293 = vadd.f32 %v953, %v4292
        %v4294 = vpop.f32.mrf.mxu0
        %v4295 = vadd.f32 %v953, %v4294
        %4296 = vmatmul.bf16.gmra.mxu0 %v693
        %v4297 = vpop.f32.mrf.mxu0
        %v4298 = vadd.f32 %v953, %v4297
        %v4299 = vpop.f32.mrf.mxu0
        %v4300 = vadd.f32 %v953, %v4299
        %4301 = vmatmul.bf16.gmra.mxu0 %v698
        %v4302 = vpop.f32.mrf.mxu0
        %v4303 = vadd.f32 %v953, %v4302
        %v4304 = vpop.f32.mrf.mxu0
        %v4305 = vadd.f32 %v953, %v4304
        %4306 = vmatmul.bf16.gmra.mxu0 %v703
        %v4307 = vpop.f32.mrf.mxu0
        %v4308 = vadd.f32 %v953, %v4307
        %v4309 = vpop.f32.mrf.mxu0
        %v4310 = vadd.f32 %v953, %v4309
        %4311 = vmatmul.bf16.gmra.mxu0 %v708
        %v4312 = vpop.f32.mrf.mxu0
        %v4313 = vadd.f32 %v953, %v4312
        %v4314 = vpop.f32.mrf.mxu0
        %v4315 = vadd.f32 %v953, %v4314
        %4316 = vmatmul.bf16.gmra.mxu0 %v713
        %v4317 = vpop.f32.mrf.mxu0
        %v4318 = vadd.f32 %v953, %v4317
        %v4319 = vpop.f32.mrf.mxu0
        %v4320 = vadd.f32 %v953, %v4319
        %4321 = vmatmul.bf16.gmra.mxu0 %v718
        %v4322 = vpop.f32.mrf.mxu0
        %v4323 = vadd.f32 %v953, %v4322
        %v4324 = vpop.f32.mrf.mxu0
        %v4325 = vadd.f32 %v953, %v4324
        %4326 = vmatmul.bf16.gmra.mxu0 %v723
        %v4327 = vpop.f32.mrf.mxu0
        %v4328 = vadd.f32 %v953, %v4327
        %v4329 = vpop.f32.mrf.mxu0
        %v4330 = vadd.f32 %v953, %v4329
        %4331 = vmatmul.bf16.gmra.mxu0 %v728
        %v4332 = vpop.f32.mrf.mxu0
        %v4333 = vadd.f32 %v953, %v4332
        %v4334 = vpop.f32.mrf.mxu0
        %v4335 = vadd.f32 %v953, %v4334
        %4336 = vmatmul.bf16.gmra.mxu0 %v733
        %v4337 = vpop.f32.mrf.mxu0
        %v4338 = vadd.f32 %v953, %v4337
        %v4339 = vpop.f32.mrf.mxu0
        %v4340 = vadd.f32 %v953, %v4339
        %4341 = vmatmul.bf16.gmra.mxu0 %v738
        %v4342 = vpop.f32.mrf.mxu0
        %v4343 = vadd.f32 %v953, %v4342
        %v4344 = vpop.f32.mrf.mxu0
        %v4345 = vadd.f32 %v953, %v4344
        %4346 = vmatmul.bf16.gmra.mxu0 %v743
        %v4347 = vpop.f32.mrf.mxu0
        %v4348 = vadd.f32 %v953, %v4347
        %v4349 = vpop.f32.mrf.mxu0
        %v4350 = vadd.f32 %v953, %v4349
        %4351 = vmatmul.bf16.gmra.mxu0 %v748
        %v4352 = vpop.f32.mrf.mxu0
        %v4353 = vadd.f32 %v953, %v4352
        %v4354 = vpop.f32.mrf.mxu0
        %v4355 = vadd.f32 %v953, %v4354
        %4356 = vmatmul.bf16.gmra.mxu0 %v753
        %v4357 = vpop.f32.mrf.mxu0
        %v4358 = vadd.f32 %v953, %v4357
        %v4359 = vpop.f32.mrf.mxu0
        %v4360 = vadd.f32 %v953, %v4359
        %4361 = vmatmul.bf16.gmra.mxu0 %v758
        %v4362 = vpop.f32.mrf.mxu0
        %v4363 = vadd.f32 %v953, %v4362
        %v4364 = vpop.f32.mrf.mxu0
        %v4365 = vadd.f32 %v953, %v4364
        %4366 = vmatmul.bf16.gmra.mxu0 %v763
        %v4367 = vpop.f32.mrf.mxu0
        %v4368 = vadd.f32 %v953, %v4367
        %v4369 = vpop.f32.mrf.mxu0
        %v4370 = vadd.f32 %v953, %v4369
        %4371 = vmatmul.bf16.gmra.mxu0 %v768
        %v4372 = vpop.f32.mrf.mxu0
        %v4373 = vadd.f32 %v953, %v4372
        %v4374 = vpop.f32.mrf.mxu0
        %v4375 = vadd.f32 %v953, %v4374
        %4376 = vmatmul.bf16.gmra.mxu0 %v773
        %v4377 = vpop.f32.mrf.mxu0
        %v4378 = vadd.f32 %v953, %v4377
        %v4379 = vpop.f32.mrf.mxu0
        %v4380 = vadd.f32 %v953, %v4379
        %4381 = vmatmul.bf16.gmra.mxu0 %v778
        %v4382 = vpop.f32.mrf.mxu0
        %v4383 = vadd.f32 %v953, %v4382
        %v4384 = vpop.f32.mrf.mxu0
        %v4385 = vadd.f32 %v953, %v4384
        %4386 = vmatmul.bf16.gmra.mxu0 %v783
        %v4387 = vpop.f32.mrf.mxu0
        %v4388 = vadd.f32 %v953, %v4387
        %v4389 = vpop.f32.mrf.mxu0
        %v4390 = vadd.f32 %v953, %v4389
        %4391 = vmatmul.bf16.gmra.mxu0 %v788
        %v4392 = vpop.f32.mrf.mxu0
        %v4393 = vadd.f32 %v953, %v4392
        %v4394 = vpop.f32.mrf.mxu0
        %v4395 = vadd.f32 %v953, %v4394
        %4396 = vmatmul.bf16.gmra.mxu0 %v793
        %v4397 = vpop.f32.mrf.mxu0
        %v4398 = vadd.f32 %v953, %v4397
        %v4399 = vpop.f32.mrf.mxu0
        %v4400 = vadd.f32 %v953, %v4399
        %4401 = vmatmul.bf16.gmra.mxu0 %v798
        %v4402 = vpop.f32.mrf.mxu0
        %v4403 = vadd.f32 %v953, %v4402
        %v4404 = vpop.f32.mrf.mxu0
        %v4405 = vadd.f32 %v953, %v4404
        %4406 = vmatmul.bf16.gmra.mxu0 %v803
        %v4407 = vpop.f32.mrf.mxu0
        %v4408 = vadd.f32 %v953, %v4407
        %v4409 = vpop.f32.mrf.mxu0
        %v4410 = vadd.f32 %v953, %v4409
        %4411 = vmatmul.bf16.gmra.mxu0 %v808
        %v4412 = vpop.f32.mrf.mxu0
        %v4413 = vadd.f32 %v953, %v4412
        %v4414 = vpop.f32.mrf.mxu0
        %v4415 = vadd.f32 %v953, %v4414
        %4416 = vmatmul.bf16.gmra.mxu0 %v813
        %v4417 = vpop.f32.mrf.mxu0
        %v4418 = vadd.f32 %v953, %v4417
        %v4419 = vpop.f32.mrf.mxu0
        %v4420 = vadd.f32 %v953, %v4419
        %4421 = vdwg.mxu0
        %4422 = vmatpush.bf16.msra.mxu0 %v1411
        %4423 = vmatpush.bf16.msra.mxu0 %v1407
        %4424 = vmatpush.bf16.msra.mxu0 %v1403
        %4425 = vmatpush.bf16.msra.mxu0 %v1399
        %4426 = vmatpush.bf16.msra.mxu0 %v1395
        %4427 = vmatpush.bf16.msra.mxu0 %v1391
        %4428 = vmatpush.bf16.msra.mxu0 %v1387
        %4429 = vmatpush.bf16.msra.mxu0 %v1383
        %4430 = vmatmul.bf16.gmra.mxu0 %v659
        %v4431 = vpop.f32.mrf.mxu0
        %v4432 = vadd.f32 %v4263, %v4431
        %v4433 = vpop.f32.mrf.mxu0
        %v4434 = vadd.f32 %v4265, %v4433
        %4435 = vmatmul.bf16.gmra.mxu0 %v664
        %v4436 = vpop.f32.mrf.mxu0
        %v4437 = vadd.f32 %v4268, %v4436
        %v4438 = vpop.f32.mrf.mxu0
        %v4439 = vadd.f32 %v4270, %v4438
        %4440 = vmatmul.bf16.gmra.mxu0 %v669
        %v4441 = vpop.f32.mrf.mxu0
        %v4442 = vadd.f32 %v4273, %v4441
        %v4443 = vpop.f32.mrf.mxu0
        %v4444 = vadd.f32 %v4275, %v4443
        %4445 = vmatmul.bf16.gmra.mxu0 %v674
        %v4446 = vpop.f32.mrf.mxu0
        %v4447 = vadd.f32 %v4278, %v4446
        %v4448 = vpop.f32.mrf.mxu0
        %v4449 = vadd.f32 %v4280, %v4448
        %4450 = vmatmul.bf16.gmra.mxu0 %v679
        %v4451 = vpop.f32.mrf.mxu0
        %v4452 = vadd.f32 %v4283, %v4451
        %v4453 = vpop.f32.mrf.mxu0
        %v4454 = vadd.f32 %v4285, %v4453
        %4455 = vmatmul.bf16.gmra.mxu0 %v684
        %v4456 = vpop.f32.mrf.mxu0
        %v4457 = vadd.f32 %v4288, %v4456
        %v4458 = vpop.f32.mrf.mxu0
        %v4459 = vadd.f32 %v4290, %v4458
        %4460 = vmatmul.bf16.gmra.mxu0 %v689
        %v4461 = vpop.f32.mrf.mxu0
        %v4462 = vadd.f32 %v4293, %v4461
        %v4463 = vpop.f32.mrf.mxu0
        %v4464 = vadd.f32 %v4295, %v4463
        %4465 = vmatmul.bf16.gmra.mxu0 %v694
        %v4466 = vpop.f32.mrf.mxu0
        %v4467 = vadd.f32 %v4298, %v4466
        %v4468 = vpop.f32.mrf.mxu0
        %v4469 = vadd.f32 %v4300, %v4468
        %4470 = vmatmul.bf16.gmra.mxu0 %v699
        %v4471 = vpop.f32.mrf.mxu0
        %v4472 = vadd.f32 %v4303, %v4471
        %v4473 = vpop.f32.mrf.mxu0
        %v4474 = vadd.f32 %v4305, %v4473
        %4475 = vmatmul.bf16.gmra.mxu0 %v704
        %v4476 = vpop.f32.mrf.mxu0
        %v4477 = vadd.f32 %v4308, %v4476
        %v4478 = vpop.f32.mrf.mxu0
        %v4479 = vadd.f32 %v4310, %v4478
        %4480 = vmatmul.bf16.gmra.mxu0 %v709
        %v4481 = vpop.f32.mrf.mxu0
        %v4482 = vadd.f32 %v4313, %v4481
        %v4483 = vpop.f32.mrf.mxu0
        %v4484 = vadd.f32 %v4315, %v4483
        %4485 = vmatmul.bf16.gmra.mxu0 %v714
        %v4486 = vpop.f32.mrf.mxu0
        %v4487 = vadd.f32 %v4318, %v4486
        %v4488 = vpop.f32.mrf.mxu0
        %v4489 = vadd.f32 %v4320, %v4488
        %4490 = vmatmul.bf16.gmra.mxu0 %v719
        %v4491 = vpop.f32.mrf.mxu0
        %v4492 = vadd.f32 %v4323, %v4491
        %v4493 = vpop.f32.mrf.mxu0
        %v4494 = vadd.f32 %v4325, %v4493
        %4495 = vmatmul.bf16.gmra.mxu0 %v724
        %v4496 = vpop.f32.mrf.mxu0
        %v4497 = vadd.f32 %v4328, %v4496
        %v4498 = vpop.f32.mrf.mxu0
        %v4499 = vadd.f32 %v4330, %v4498
        %4500 = vmatmul.bf16.gmra.mxu0 %v729
        %v4501 = vpop.f32.mrf.mxu0
        %v4502 = vadd.f32 %v4333, %v4501
        %v4503 = vpop.f32.mrf.mxu0
        %v4504 = vadd.f32 %v4335, %v4503
        %4505 = vmatmul.bf16.gmra.mxu0 %v734
        %v4506 = vpop.f32.mrf.mxu0
        %v4507 = vadd.f32 %v4338, %v4506
        %v4508 = vpop.f32.mrf.mxu0
        %v4509 = vadd.f32 %v4340, %v4508
        %4510 = vmatmul.bf16.gmra.mxu0 %v739
        %v4511 = vpop.f32.mrf.mxu0
        %v4512 = vadd.f32 %v4343, %v4511
        %v4513 = vpop.f32.mrf.mxu0
        %v4514 = vadd.f32 %v4345, %v4513
        %4515 = vmatmul.bf16.gmra.mxu0 %v744
        %v4516 = vpop.f32.mrf.mxu0
        %v4517 = vadd.f32 %v4348, %v4516
        %v4518 = vpop.f32.mrf.mxu0
        %v4519 = vadd.f32 %v4350, %v4518
        %4520 = vmatmul.bf16.gmra.mxu0 %v749
        %v4521 = vpop.f32.mrf.mxu0
        %v4522 = vadd.f32 %v4353, %v4521
        %v4523 = vpop.f32.mrf.mxu0
        %v4524 = vadd.f32 %v4355, %v4523
        %4525 = vmatmul.bf16.gmra.mxu0 %v754
        %v4526 = vpop.f32.mrf.mxu0
        %v4527 = vadd.f32 %v4358, %v4526
        %v4528 = vpop.f32.mrf.mxu0
        %v4529 = vadd.f32 %v4360, %v4528
        %4530 = vmatmul.bf16.gmra.mxu0 %v759
        %v4531 = vpop.f32.mrf.mxu0
        %v4532 = vadd.f32 %v4363, %v4531
        %v4533 = vpop.f32.mrf.mxu0
        %v4534 = vadd.f32 %v4365, %v4533
        %4535 = vmatmul.bf16.gmra.mxu0 %v764
        %v4536 = vpop.f32.mrf.mxu0
        %v4537 = vadd.f32 %v4368, %v4536
        %v4538 = vpop.f32.mrf.mxu0
        %v4539 = vadd.f32 %v4370, %v4538
        %4540 = vmatmul.bf16.gmra.mxu0 %v769
        %v4541 = vpop.f32.mrf.mxu0
        %v4542 = vadd.f32 %v4373, %v4541
        %v4543 = vpop.f32.mrf.mxu0
        %v4544 = vadd.f32 %v4375, %v4543
        %4545 = vmatmul.bf16.gmra.mxu0 %v774
        %v4546 = vpop.f32.mrf.mxu0
        %v4547 = vadd.f32 %v4378, %v4546
        %v4548 = vpop.f32.mrf.mxu0
        %v4549 = vadd.f32 %v4380, %v4548
        %4550 = vmatmul.bf16.gmra.mxu0 %v779
        %v4551 = vpop.f32.mrf.mxu0
        %v4552 = vadd.f32 %v4383, %v4551
        %v4553 = vpop.f32.mrf.mxu0
        %v4554 = vadd.f32 %v4385, %v4553
        %4555 = vmatmul.bf16.gmra.mxu0 %v784
        %v4556 = vpop.f32.mrf.mxu0
        %v4557 = vadd.f32 %v4388, %v4556
        %v4558 = vpop.f32.mrf.mxu0
        %v4559 = vadd.f32 %v4390, %v4558
        %4560 = vmatmul.bf16.gmra.mxu0 %v789
        %v4561 = vpop.f32.mrf.mxu0
        %v4562 = vadd.f32 %v4393, %v4561
        %v4563 = vpop.f32.mrf.mxu0
        %v4564 = vadd.f32 %v4395, %v4563
        %4565 = vmatmul.bf16.gmra.mxu0 %v794
        %v4566 = vpop.f32.mrf.mxu0
        %v4567 = vadd.f32 %v4398, %v4566
        %v4568 = vpop.f32.mrf.mxu0
        %v4569 = vadd.f32 %v4400, %v4568
        %4570 = vmatmul.bf16.gmra.mxu0 %v799
        %v4571 = vpop.f32.mrf.mxu0
        %v4572 = vadd.f32 %v4403, %v4571
        %v4573 = vpop.f32.mrf.mxu0
        %v4574 = vadd.f32 %v4405, %v4573
        %4575 = vmatmul.bf16.gmra.mxu0 %v804
        %v4576 = vpop.f32.mrf.mxu0
        %v4577 = vadd.f32 %v4408, %v4576
        %v4578 = vpop.f32.mrf.mxu0
        %v4579 = vadd.f32 %v4410, %v4578
        %4580 = vmatmul.bf16.gmra.mxu0 %v809
        %v4581 = vpop.f32.mrf.mxu0
        %v4582 = vadd.f32 %v4413, %v4581
        %v4583 = vpop.f32.mrf.mxu0
        %v4584 = vadd.f32 %v4415, %v4583
        %4585 = vmatmul.bf16.gmra.mxu0 %v814
        %v4586 = vpop.f32.mrf.mxu0
        %v4587 = vadd.f32 %v4418, %v4586
        %v4588 = vpop.f32.mrf.mxu0
        %v4589 = vadd.f32 %v4420, %v4588
        %4590 = vdwg.mxu0
        %4591 = vmatpush.bf16.msra.mxu0 %v1443
        %4592 = vmatpush.bf16.msra.mxu0 %v1439
        %4593 = vmatpush.bf16.msra.mxu0 %v1435
        %4594 = vmatpush.bf16.msra.mxu0 %v1431
        %4595 = vmatpush.bf16.msra.mxu0 %v1427
        %4596 = vmatpush.bf16.msra.mxu0 %v1423
        %4597 = vmatpush.bf16.msra.mxu0 %v1419
        %4598 = vmatpush.bf16.msra.mxu0 %v1415
        %4599 = vmatmul.bf16.gmra.mxu0 %v660
        %v4600 = vpop.f32.mrf.mxu0
        %v4601 = vadd.f32 %v4432, %v4600
        %v4602 = vpop.f32.mrf.mxu0
        %v4603 = vadd.f32 %v4434, %v4602
        %4604 = vmatmul.bf16.gmra.mxu0 %v665
        %v4605 = vpop.f32.mrf.mxu0
        %v4606 = vadd.f32 %v4437, %v4605
        %v4607 = vpop.f32.mrf.mxu0
        %v4608 = vadd.f32 %v4439, %v4607
        %4609 = vmatmul.bf16.gmra.mxu0 %v670
        %v4610 = vpop.f32.mrf.mxu0
        %v4611 = vadd.f32 %v4442, %v4610
        %v4612 = vpop.f32.mrf.mxu0
        %v4613 = vadd.f32 %v4444, %v4612
        %4614 = vmatmul.bf16.gmra.mxu0 %v675
        %v4615 = vpop.f32.mrf.mxu0
        %v4616 = vadd.f32 %v4447, %v4615
        %v4617 = vpop.f32.mrf.mxu0
        %v4618 = vadd.f32 %v4449, %v4617
        %4619 = vmatmul.bf16.gmra.mxu0 %v680
        %v4620 = vpop.f32.mrf.mxu0
        %v4621 = vadd.f32 %v4452, %v4620
        %v4622 = vpop.f32.mrf.mxu0
        %v4623 = vadd.f32 %v4454, %v4622
        %4624 = vmatmul.bf16.gmra.mxu0 %v685
        %v4625 = vpop.f32.mrf.mxu0
        %v4626 = vadd.f32 %v4457, %v4625
        %v4627 = vpop.f32.mrf.mxu0
        %v4628 = vadd.f32 %v4459, %v4627
        %4629 = vmatmul.bf16.gmra.mxu0 %v690
        %v4630 = vpop.f32.mrf.mxu0
        %v4631 = vadd.f32 %v4462, %v4630
        %v4632 = vpop.f32.mrf.mxu0
        %v4633 = vadd.f32 %v4464, %v4632
        %4634 = vmatmul.bf16.gmra.mxu0 %v695
        %v4635 = vpop.f32.mrf.mxu0
        %v4636 = vadd.f32 %v4467, %v4635
        %v4637 = vpop.f32.mrf.mxu0
        %v4638 = vadd.f32 %v4469, %v4637
        %4639 = vmatmul.bf16.gmra.mxu0 %v700
        %v4640 = vpop.f32.mrf.mxu0
        %v4641 = vadd.f32 %v4472, %v4640
        %v4642 = vpop.f32.mrf.mxu0
        %v4643 = vadd.f32 %v4474, %v4642
        %4644 = vmatmul.bf16.gmra.mxu0 %v705
        %v4645 = vpop.f32.mrf.mxu0
        %v4646 = vadd.f32 %v4477, %v4645
        %v4647 = vpop.f32.mrf.mxu0
        %v4648 = vadd.f32 %v4479, %v4647
        %4649 = vmatmul.bf16.gmra.mxu0 %v710
        %v4650 = vpop.f32.mrf.mxu0
        %v4651 = vadd.f32 %v4482, %v4650
        %v4652 = vpop.f32.mrf.mxu0
        %v4653 = vadd.f32 %v4484, %v4652
        %4654 = vmatmul.bf16.gmra.mxu0 %v715
        %v4655 = vpop.f32.mrf.mxu0
        %v4656 = vadd.f32 %v4487, %v4655
        %v4657 = vpop.f32.mrf.mxu0
        %v4658 = vadd.f32 %v4489, %v4657
        %4659 = vmatmul.bf16.gmra.mxu0 %v720
        %v4660 = vpop.f32.mrf.mxu0
        %v4661 = vadd.f32 %v4492, %v4660
        %v4662 = vpop.f32.mrf.mxu0
        %v4663 = vadd.f32 %v4494, %v4662
        %4664 = vmatmul.bf16.gmra.mxu0 %v725
        %v4665 = vpop.f32.mrf.mxu0
        %v4666 = vadd.f32 %v4497, %v4665
        %v4667 = vpop.f32.mrf.mxu0
        %v4668 = vadd.f32 %v4499, %v4667
        %4669 = vmatmul.bf16.gmra.mxu0 %v730
        %v4670 = vpop.f32.mrf.mxu0
        %v4671 = vadd.f32 %v4502, %v4670
        %v4672 = vpop.f32.mrf.mxu0
        %v4673 = vadd.f32 %v4504, %v4672
        %4674 = vmatmul.bf16.gmra.mxu0 %v735
        %v4675 = vpop.f32.mrf.mxu0
        %v4676 = vadd.f32 %v4507, %v4675
        %v4677 = vpop.f32.mrf.mxu0
        %v4678 = vadd.f32 %v4509, %v4677
        %4679 = vmatmul.bf16.gmra.mxu0 %v740
        %v4680 = vpop.f32.mrf.mxu0
        %v4681 = vadd.f32 %v4512, %v4680
        %v4682 = vpop.f32.mrf.mxu0
        %v4683 = vadd.f32 %v4514, %v4682
        %4684 = vmatmul.bf16.gmra.mxu0 %v745
        %v4685 = vpop.f32.mrf.mxu0
        %v4686 = vadd.f32 %v4517, %v4685
        %v4687 = vpop.f32.mrf.mxu0
        %v4688 = vadd.f32 %v4519, %v4687
        %4689 = vmatmul.bf16.gmra.mxu0 %v750
        %v4690 = vpop.f32.mrf.mxu0
        %v4691 = vadd.f32 %v4522, %v4690
        %v4692 = vpop.f32.mrf.mxu0
        %v4693 = vadd.f32 %v4524, %v4692
        %4694 = vmatmul.bf16.gmra.mxu0 %v755
        %v4695 = vpop.f32.mrf.mxu0
        %v4696 = vadd.f32 %v4527, %v4695
        %v4697 = vpop.f32.mrf.mxu0
        %v4698 = vadd.f32 %v4529, %v4697
        %4699 = vmatmul.bf16.gmra.mxu0 %v760
        %v4700 = vpop.f32.mrf.mxu0
        %v4701 = vadd.f32 %v4532, %v4700
        %v4702 = vpop.f32.mrf.mxu0
        %v4703 = vadd.f32 %v4534, %v4702
        %4704 = vmatmul.bf16.gmra.mxu0 %v765
        %v4705 = vpop.f32.mrf.mxu0
        %v4706 = vadd.f32 %v4537, %v4705
        %v4707 = vpop.f32.mrf.mxu0
        %v4708 = vadd.f32 %v4539, %v4707
        %4709 = vmatmul.bf16.gmra.mxu0 %v770
        %v4710 = vpop.f32.mrf.mxu0
        %v4711 = vadd.f32 %v4542, %v4710
        %v4712 = vpop.f32.mrf.mxu0
        %v4713 = vadd.f32 %v4544, %v4712
        %4714 = vmatmul.bf16.gmra.mxu0 %v775
        %v4715 = vpop.f32.mrf.mxu0
        %v4716 = vadd.f32 %v4547, %v4715
        %v4717 = vpop.f32.mrf.mxu0
        %v4718 = vadd.f32 %v4549, %v4717
        %4719 = vmatmul.bf16.gmra.mxu0 %v780
        %v4720 = vpop.f32.mrf.mxu0
        %v4721 = vadd.f32 %v4552, %v4720
        %v4722 = vpop.f32.mrf.mxu0
        %v4723 = vadd.f32 %v4554, %v4722
        %4724 = vmatmul.bf16.gmra.mxu0 %v785
        %v4725 = vpop.f32.mrf.mxu0
        %v4726 = vadd.f32 %v4557, %v4725
        %v4727 = vpop.f32.mrf.mxu0
        %v4728 = vadd.f32 %v4559, %v4727
        %4729 = vmatmul.bf16.gmra.mxu0 %v790
        %v4730 = vpop.f32.mrf.mxu0
        %v4731 = vadd.f32 %v4562, %v4730
        %v4732 = vpop.f32.mrf.mxu0
        %v4733 = vadd.f32 %v4564, %v4732
        %4734 = vmatmul.bf16.gmra.mxu0 %v795
        %v4735 = vpop.f32.mrf.mxu0
        %v4736 = vadd.f32 %v4567, %v4735
        %v4737 = vpop.f32.mrf.mxu0
        %v4738 = vadd.f32 %v4569, %v4737
        %4739 = vmatmul.bf16.gmra.mxu0 %v800
        %v4740 = vpop.f32.mrf.mxu0
        %v4741 = vadd.f32 %v4572, %v4740
        %v4742 = vpop.f32.mrf.mxu0
        %v4743 = vadd.f32 %v4574, %v4742
        %4744 = vmatmul.bf16.gmra.mxu0 %v805
        %v4745 = vpop.f32.mrf.mxu0
        %v4746 = vadd.f32 %v4577, %v4745
        %v4747 = vpop.f32.mrf.mxu0
        %v4748 = vadd.f32 %v4579, %v4747
        %4749 = vmatmul.bf16.gmra.mxu0 %v810
        %v4750 = vpop.f32.mrf.mxu0
        %v4751 = vadd.f32 %v4582, %v4750
        %v4752 = vpop.f32.mrf.mxu0
        %v4753 = vadd.f32 %v4584, %v4752
        %4754 = vmatmul.bf16.gmra.mxu0 %v815
        %v4755 = vpop.f32.mrf.mxu0
        %v4756 = vadd.f32 %v4587, %v4755
        %v4757 = vpop.f32.mrf.mxu0
        %v4758 = vadd.f32 %v4589, %v4757
        %4759 = vdwg.mxu0
        %4760 = vmatpush.bf16.msra.mxu0 %v1475
        %4761 = vmatpush.bf16.msra.mxu0 %v1471
        %4762 = vmatpush.bf16.msra.mxu0 %v1467
        %4763 = vmatpush.bf16.msra.mxu0 %v1463
        %4764 = vmatpush.bf16.msra.mxu0 %v1459
        %4765 = vmatpush.bf16.msra.mxu0 %v1455
        %4766 = vmatpush.bf16.msra.mxu0 %v1451
        %4767 = vmatpush.bf16.msra.mxu0 %v1447
        %4768 = vmatmul.bf16.gmra.mxu0 %v661
        %v4769 = vpop.f32.mrf.mxu0
        %v4770 = vadd.f32 %v4601, %v4769
        %v4771 = vpop.f32.mrf.mxu0
        %v4772 = vadd.f32 %v4603, %v4771
        %4773 = vmatmul.bf16.gmra.mxu0 %v666
        %v4774 = vpop.f32.mrf.mxu0
        %v4775 = vadd.f32 %v4606, %v4774
        %v4776 = vpop.f32.mrf.mxu0
        %v4777 = vadd.f32 %v4608, %v4776
        %4778 = vmatmul.bf16.gmra.mxu0 %v671
        %v4779 = vpop.f32.mrf.mxu0
        %v4780 = vadd.f32 %v4611, %v4779
        %v4781 = vpop.f32.mrf.mxu0
        %v4782 = vadd.f32 %v4613, %v4781
        %4783 = vmatmul.bf16.gmra.mxu0 %v676
        %v4784 = vpop.f32.mrf.mxu0
        %v4785 = vadd.f32 %v4616, %v4784
        %v4786 = vpop.f32.mrf.mxu0
        %v4787 = vadd.f32 %v4618, %v4786
        %4788 = vmatmul.bf16.gmra.mxu0 %v681
        %v4789 = vpop.f32.mrf.mxu0
        %v4790 = vadd.f32 %v4621, %v4789
        %v4791 = vpop.f32.mrf.mxu0
        %v4792 = vadd.f32 %v4623, %v4791
        %4793 = vmatmul.bf16.gmra.mxu0 %v686
        %v4794 = vpop.f32.mrf.mxu0
        %v4795 = vadd.f32 %v4626, %v4794
        %v4796 = vpop.f32.mrf.mxu0
        %v4797 = vadd.f32 %v4628, %v4796
        %4798 = vmatmul.bf16.gmra.mxu0 %v691
        %v4799 = vpop.f32.mrf.mxu0
        %v4800 = vadd.f32 %v4631, %v4799
        %v4801 = vpop.f32.mrf.mxu0
        %v4802 = vadd.f32 %v4633, %v4801
        %4803 = vmatmul.bf16.gmra.mxu0 %v696
        %v4804 = vpop.f32.mrf.mxu0
        %v4805 = vadd.f32 %v4636, %v4804
        %v4806 = vpop.f32.mrf.mxu0
        %v4807 = vadd.f32 %v4638, %v4806
        %4808 = vmatmul.bf16.gmra.mxu0 %v701
        %v4809 = vpop.f32.mrf.mxu0
        %v4810 = vadd.f32 %v4641, %v4809
        %v4811 = vpop.f32.mrf.mxu0
        %v4812 = vadd.f32 %v4643, %v4811
        %4813 = vmatmul.bf16.gmra.mxu0 %v706
        %v4814 = vpop.f32.mrf.mxu0
        %v4815 = vadd.f32 %v4646, %v4814
        %v4816 = vpop.f32.mrf.mxu0
        %v4817 = vadd.f32 %v4648, %v4816
        %4818 = vmatmul.bf16.gmra.mxu0 %v711
        %v4819 = vpop.f32.mrf.mxu0
        %v4820 = vadd.f32 %v4651, %v4819
        %v4821 = vpop.f32.mrf.mxu0
        %v4822 = vadd.f32 %v4653, %v4821
        %4823 = vmatmul.bf16.gmra.mxu0 %v716
        %v4824 = vpop.f32.mrf.mxu0
        %v4825 = vadd.f32 %v4656, %v4824
        %v4826 = vpop.f32.mrf.mxu0
        %v4827 = vadd.f32 %v4658, %v4826
        %4828 = vmatmul.bf16.gmra.mxu0 %v721
        %v4829 = vpop.f32.mrf.mxu0
        %v4830 = vadd.f32 %v4661, %v4829
        %v4831 = vpop.f32.mrf.mxu0
        %v4832 = vadd.f32 %v4663, %v4831
        %4833 = vmatmul.bf16.gmra.mxu0 %v726
        %v4834 = vpop.f32.mrf.mxu0
        %v4835 = vadd.f32 %v4666, %v4834
        %v4836 = vpop.f32.mrf.mxu0
        %v4837 = vadd.f32 %v4668, %v4836
        %4838 = vmatmul.bf16.gmra.mxu0 %v731
        %v4839 = vpop.f32.mrf.mxu0
        %v4840 = vadd.f32 %v4671, %v4839
        %v4841 = vpop.f32.mrf.mxu0
        %v4842 = vadd.f32 %v4673, %v4841
        %4843 = vmatmul.bf16.gmra.mxu0 %v736
        %v4844 = vpop.f32.mrf.mxu0
        %v4845 = vadd.f32 %v4676, %v4844
        %v4846 = vpop.f32.mrf.mxu0
        %v4847 = vadd.f32 %v4678, %v4846
        %4848 = vmatmul.bf16.gmra.mxu0 %v741
        %v4849 = vpop.f32.mrf.mxu0
        %v4850 = vadd.f32 %v4681, %v4849
        %v4851 = vpop.f32.mrf.mxu0
        %v4852 = vadd.f32 %v4683, %v4851
        %4853 = vmatmul.bf16.gmra.mxu0 %v746
        %v4854 = vpop.f32.mrf.mxu0
        %v4855 = vadd.f32 %v4686, %v4854
        %v4856 = vpop.f32.mrf.mxu0
        %v4857 = vadd.f32 %v4688, %v4856
        %4858 = vmatmul.bf16.gmra.mxu0 %v751
        %v4859 = vpop.f32.mrf.mxu0
        %v4860 = vadd.f32 %v4691, %v4859
        %v4861 = vpop.f32.mrf.mxu0
        %v4862 = vadd.f32 %v4693, %v4861
        %4863 = vmatmul.bf16.gmra.mxu0 %v756
        %v4864 = vpop.f32.mrf.mxu0
        %v4865 = vadd.f32 %v4696, %v4864
        %v4866 = vpop.f32.mrf.mxu0
        %v4867 = vadd.f32 %v4698, %v4866
        %4868 = vmatmul.bf16.gmra.mxu0 %v761
        %v4869 = vpop.f32.mrf.mxu0
        %v4870 = vadd.f32 %v4701, %v4869
        %v4871 = vpop.f32.mrf.mxu0
        %v4872 = vadd.f32 %v4703, %v4871
        %4873 = vmatmul.bf16.gmra.mxu0 %v766
        %v4874 = vpop.f32.mrf.mxu0
        %v4875 = vadd.f32 %v4706, %v4874
        %v4876 = vpop.f32.mrf.mxu0
        %v4877 = vadd.f32 %v4708, %v4876
        %4878 = vmatmul.bf16.gmra.mxu0 %v771
        %v4879 = vpop.f32.mrf.mxu0
        %v4880 = vadd.f32 %v4711, %v4879
        %v4881 = vpop.f32.mrf.mxu0
        %v4882 = vadd.f32 %v4713, %v4881
        %4883 = vmatmul.bf16.gmra.mxu0 %v776
        %v4884 = vpop.f32.mrf.mxu0
        %v4885 = vadd.f32 %v4716, %v4884
        %v4886 = vpop.f32.mrf.mxu0
        %v4887 = vadd.f32 %v4718, %v4886
        %4888 = vmatmul.bf16.gmra.mxu0 %v781
        %v4889 = vpop.f32.mrf.mxu0
        %v4890 = vadd.f32 %v4721, %v4889
        %v4891 = vpop.f32.mrf.mxu0
        %v4892 = vadd.f32 %v4723, %v4891
        %4893 = vmatmul.bf16.gmra.mxu0 %v786
        %v4894 = vpop.f32.mrf.mxu0
        %v4895 = vadd.f32 %v4726, %v4894
        %v4896 = vpop.f32.mrf.mxu0
        %v4897 = vadd.f32 %v4728, %v4896
        %4898 = vmatmul.bf16.gmra.mxu0 %v791
        %v4899 = vpop.f32.mrf.mxu0
        %v4900 = vadd.f32 %v4731, %v4899
        %v4901 = vpop.f32.mrf.mxu0
        %v4902 = vadd.f32 %v4733, %v4901
        %4903 = vmatmul.bf16.gmra.mxu0 %v796
        %v4904 = vpop.f32.mrf.mxu0
        %v4905 = vadd.f32 %v4736, %v4904
        %v4906 = vpop.f32.mrf.mxu0
        %v4907 = vadd.f32 %v4738, %v4906
        %4908 = vmatmul.bf16.gmra.mxu0 %v801
        %v4909 = vpop.f32.mrf.mxu0
        %v4910 = vadd.f32 %v4741, %v4909
        %v4911 = vpop.f32.mrf.mxu0
        %v4912 = vadd.f32 %v4743, %v4911
        %4913 = vmatmul.bf16.gmra.mxu0 %v806
        %v4914 = vpop.f32.mrf.mxu0
        %v4915 = vadd.f32 %v4746, %v4914
        %v4916 = vpop.f32.mrf.mxu0
        %v4917 = vadd.f32 %v4748, %v4916
        %4918 = vmatmul.bf16.gmra.mxu0 %v811
        %v4919 = vpop.f32.mrf.mxu0
        %v4920 = vadd.f32 %v4751, %v4919
        %v4921 = vpop.f32.mrf.mxu0
        %v4922 = vadd.f32 %v4753, %v4921
        %4923 = vmatmul.bf16.gmra.mxu0 %v816
        %v4924 = vpop.f32.mrf.mxu0
        %v4925 = vadd.f32 %v4756, %v4924
        %v4926 = vpop.f32.mrf.mxu0
        %v4927 = vadd.f32 %v4758, %v4926
        %4928 = vdwg.mxu0
        %4929 = vmatpush.bf16.msra.mxu0 0
        %4930 = vmatpush.bf16.msra.mxu0 0
        %4931 = vmatpush.bf16.msra.mxu0 0
        %4932 = vmatpush.bf16.msra.mxu0 0
        %4933 = vmatpush.bf16.msra.mxu0 0
        %4934 = vmatpush.bf16.msra.mxu0 0
        %4935 = vmatpush.bf16.msra.mxu0 0
        %4936 = vmatpush.bf16.msra.mxu0 %v1716
        %4937 = vmatmul.bf16.gmra.mxu0 %v1610
        %v4938 = vpop.f32.mrf.mxu0
        %v4939 = vadd.f32 %v4770, %v4938
        %v4940 = vpop.f32.mrf.mxu0
        %v4941 = vadd.f32 %v4772, %v4940
        %4942 = vmatmul.bf16.gmra.mxu0 %v1613
        %v4943 = vpop.f32.mrf.mxu0
        %v4944 = vadd.f32 %v4775, %v4943
        %v4945 = vpop.f32.mrf.mxu0
        %v4946 = vadd.f32 %v4777, %v4945
        %4947 = vmatmul.bf16.gmra.mxu0 %v1616
        %v4948 = vpop.f32.mrf.mxu0
        %v4949 = vadd.f32 %v4780, %v4948
        %v4950 = vpop.f32.mrf.mxu0
        %v4951 = vadd.f32 %v4782, %v4950
        %4952 = vmatmul.bf16.gmra.mxu0 %v1619
        %v4953 = vpop.f32.mrf.mxu0
        %v4954 = vadd.f32 %v4785, %v4953
        %v4955 = vpop.f32.mrf.mxu0
        %v4956 = vadd.f32 %v4787, %v4955
        %4957 = vmatmul.bf16.gmra.mxu0 %v1622
        %v4958 = vpop.f32.mrf.mxu0
        %v4959 = vadd.f32 %v4790, %v4958
        %v4960 = vpop.f32.mrf.mxu0
        %v4961 = vadd.f32 %v4792, %v4960
        %4962 = vmatmul.bf16.gmra.mxu0 %v1625
        %v4963 = vpop.f32.mrf.mxu0
        %v4964 = vadd.f32 %v4795, %v4963
        %v4965 = vpop.f32.mrf.mxu0
        %v4966 = vadd.f32 %v4797, %v4965
        %4967 = vmatmul.bf16.gmra.mxu0 %v1628
        %v4968 = vpop.f32.mrf.mxu0
        %v4969 = vadd.f32 %v4800, %v4968
        %v4970 = vpop.f32.mrf.mxu0
        %v4971 = vadd.f32 %v4802, %v4970
        %4972 = vmatmul.bf16.gmra.mxu0 %v1631
        %v4973 = vpop.f32.mrf.mxu0
        %v4974 = vadd.f32 %v4805, %v4973
        %v4975 = vpop.f32.mrf.mxu0
        %v4976 = vadd.f32 %v4807, %v4975
        %4977 = vmatmul.bf16.gmra.mxu0 %v1634
        %v4978 = vpop.f32.mrf.mxu0
        %v4979 = vadd.f32 %v4810, %v4978
        %v4980 = vpop.f32.mrf.mxu0
        %v4981 = vadd.f32 %v4812, %v4980
        %4982 = vmatmul.bf16.gmra.mxu0 %v1637
        %v4983 = vpop.f32.mrf.mxu0
        %v4984 = vadd.f32 %v4815, %v4983
        %v4985 = vpop.f32.mrf.mxu0
        %v4986 = vadd.f32 %v4817, %v4985
        %4987 = vmatmul.bf16.gmra.mxu0 %v1640
        %v4988 = vpop.f32.mrf.mxu0
        %v4989 = vadd.f32 %v4820, %v4988
        %v4990 = vpop.f32.mrf.mxu0
        %v4991 = vadd.f32 %v4822, %v4990
        %4992 = vmatmul.bf16.gmra.mxu0 %v1643
        %v4993 = vpop.f32.mrf.mxu0
        %v4994 = vadd.f32 %v4825, %v4993
        %v4995 = vpop.f32.mrf.mxu0
        %v4996 = vadd.f32 %v4827, %v4995
        %4997 = vmatmul.bf16.gmra.mxu0 %v1646
        %v4998 = vpop.f32.mrf.mxu0
        %v4999 = vadd.f32 %v4830, %v4998
        %v5000 = vpop.f32.mrf.mxu0
        %v5001 = vadd.f32 %v4832, %v5000
        %5002 = vmatmul.bf16.gmra.mxu0 %v1649
        %v5003 = vpop.f32.mrf.mxu0
        %v5004 = vadd.f32 %v4835, %v5003
        %v5005 = vpop.f32.mrf.mxu0
        %v5006 = vadd.f32 %v4837, %v5005
        %5007 = vmatmul.bf16.gmra.mxu0 %v1652
        %v5008 = vpop.f32.mrf.mxu0
        %v5009 = vadd.f32 %v4840, %v5008
        %v5010 = vpop.f32.mrf.mxu0
        %v5011 = vadd.f32 %v4842, %v5010
        %5012 = vmatmul.bf16.gmra.mxu0 %v1655
        %v5013 = vpop.f32.mrf.mxu0
        %v5014 = vadd.f32 %v4845, %v5013
        %v5015 = vpop.f32.mrf.mxu0
        %v5016 = vadd.f32 %v4847, %v5015
        %5017 = vmatmul.bf16.gmra.mxu0 %v1658
        %v5018 = vpop.f32.mrf.mxu0
        %v5019 = vadd.f32 %v4850, %v5018
        %v5020 = vpop.f32.mrf.mxu0
        %v5021 = vadd.f32 %v4852, %v5020
        %5022 = vmatmul.bf16.gmra.mxu0 %v1661
        %v5023 = vpop.f32.mrf.mxu0
        %v5024 = vadd.f32 %v4855, %v5023
        %v5025 = vpop.f32.mrf.mxu0
        %v5026 = vadd.f32 %v4857, %v5025
        %5027 = vmatmul.bf16.gmra.mxu0 %v1664
        %v5028 = vpop.f32.mrf.mxu0
        %v5029 = vadd.f32 %v4860, %v5028
        %v5030 = vpop.f32.mrf.mxu0
        %v5031 = vadd.f32 %v4862, %v5030
        %5032 = vmatmul.bf16.gmra.mxu0 %v1667
        %v5033 = vpop.f32.mrf.mxu0
        %v5034 = vadd.f32 %v4865, %v5033
        %v5035 = vpop.f32.mrf.mxu0
        %v5036 = vadd.f32 %v4867, %v5035
        %5037 = vmatmul.bf16.gmra.mxu0 %v1670
        %v5038 = vpop.f32.mrf.mxu0
        %v5039 = vadd.f32 %v4870, %v5038
        %v5040 = vpop.f32.mrf.mxu0
        %v5041 = vadd.f32 %v4872, %v5040
        %5042 = vmatmul.bf16.gmra.mxu0 %v1673
        %v5043 = vpop.f32.mrf.mxu0
        %v5044 = vadd.f32 %v4875, %v5043
        %v5045 = vpop.f32.mrf.mxu0
        %v5046 = vadd.f32 %v4877, %v5045
        %5047 = vmatmul.bf16.gmra.mxu0 %v1676
        %v5048 = vpop.f32.mrf.mxu0
        %v5049 = vadd.f32 %v4880, %v5048
        %v5050 = vpop.f32.mrf.mxu0
        %v5051 = vadd.f32 %v4882, %v5050
        %5052 = vmatmul.bf16.gmra.mxu0 %v1679
        %v5053 = vpop.f32.mrf.mxu0
        %v5054 = vadd.f32 %v4885, %v5053
        %v5055 = vpop.f32.mrf.mxu0
        %v5056 = vadd.f32 %v4887, %v5055
        %5057 = vmatmul.bf16.gmra.mxu0 %v1682
        %v5058 = vpop.f32.mrf.mxu0
        %v5059 = vadd.f32 %v4890, %v5058
        %v5060 = vpop.f32.mrf.mxu0
        %v5061 = vadd.f32 %v4892, %v5060
        %5062 = vmatmul.bf16.gmra.mxu0 %v1685
        %v5063 = vpop.f32.mrf.mxu0
        %v5064 = vadd.f32 %v4895, %v5063
        %v5065 = vpop.f32.mrf.mxu0
        %v5066 = vadd.f32 %v4897, %v5065
        %5067 = vmatmul.bf16.gmra.mxu0 %v1688
        %v5068 = vpop.f32.mrf.mxu0
        %v5069 = vadd.f32 %v4900, %v5068
        %v5070 = vpop.f32.mrf.mxu0
        %v5071 = vadd.f32 %v4902, %v5070
        %5072 = vmatmul.bf16.gmra.mxu0 %v1691
        %v5073 = vpop.f32.mrf.mxu0
        %v5074 = vadd.f32 %v4905, %v5073
        %v5075 = vpop.f32.mrf.mxu0
        %v5076 = vadd.f32 %v4907, %v5075
        %5077 = vmatmul.bf16.gmra.mxu0 %v1694
        %v5078 = vpop.f32.mrf.mxu0
        %v5079 = vadd.f32 %v4910, %v5078
        %v5080 = vpop.f32.mrf.mxu0
        %v5081 = vadd.f32 %v4912, %v5080
        %5082 = vmatmul.bf16.gmra.mxu0 %v1697
        %v5083 = vpop.f32.mrf.mxu0
        %v5084 = vadd.f32 %v4915, %v5083
        %v5085 = vpop.f32.mrf.mxu0
        %v5086 = vadd.f32 %v4917, %v5085
        %5087 = vmatmul.bf16.gmra.mxu0 %v1700
        %v5088 = vpop.f32.mrf.mxu0
        %v5089 = vadd.f32 %v4920, %v5088
        %v5090 = vpop.f32.mrf.mxu0
        %v5091 = vadd.f32 %v4922, %v5090
        %5092 = vmatmul.bf16.gmra.mxu0 %v1703
        %v5093 = vpop.f32.mrf.mxu0
        %v5094 = vadd.f32 %v4925, %v5093
        %v5095 = vpop.f32.mrf.mxu0
        %v5096 = vadd.f32 %v4927, %v5095
        %5097 = vdwg.mxu0
        %v5098 = vmax.f32 %v2404, 0.0
        %v5099 = vmax.f32 %v3249, 0.0
        %v5100 = vmax.f32 %v4094, 0.0
        %v5101 = vmax.f32 %v4939, 0.0
        %v5102 = vmax.f32 %v2406, 0.0
        %v5103 = vmax.f32 %v3251, 0.0
        %v5104 = vmax.f32 %v4096, 0.0
        %v5105 = vmax.f32 %v4941, 0.0
        %v5106 = vmax.f32 %v2409, 0.0
        %v5107 = vmax.f32 %v3254, 0.0
        %v5108 = vmax.f32 %v4099, 0.0
        %v5109 = vmax.f32 %v4944, 0.0
        %v5110 = vmax.f32 %v2411, 0.0
        %v5111 = vmax.f32 %v3256, 0.0
        %v5112 = vmax.f32 %v4101, 0.0
        %v5113 = vmax.f32 %v4946, 0.0
        %v5114 = vmax.f32 %v2414, 0.0
        %v5115 = vmax.f32 %v3259, 0.0
        %v5116 = vmax.f32 %v4104, 0.0
        %v5117 = vmax.f32 %v4949, 0.0
        %v5118 = vmax.f32 %v2416, 0.0
        %v5119 = vmax.f32 %v3261, 0.0
        %v5120 = vmax.f32 %v4106, 0.0
        %v5121 = vmax.f32 %v4951, 0.0
        %v5122 = vmax.f32 %v2419, 0.0
        %v5123 = vmax.f32 %v3264, 0.0
        %v5124 = vmax.f32 %v4109, 0.0
        %v5125 = vmax.f32 %v4954, 0.0
        %v5126 = vmax.f32 %v2421, 0.0
        %v5127 = vmax.f32 %v3266, 0.0
        %v5128 = vmax.f32 %v4111, 0.0
        %v5129 = vmax.f32 %v4956, 0.0
        %v5130 = vmax.f32 %v2424, 0.0
        %v5131 = vmax.f32 %v3269, 0.0
        %v5132 = vmax.f32 %v4114, 0.0
        %v5133 = vmax.f32 %v4959, 0.0
        %v5134 = vmax.f32 %v2426, 0.0
        %v5135 = vmax.f32 %v3271, 0.0
        %v5136 = vmax.f32 %v4116, 0.0
        %v5137 = vmax.f32 %v4961, 0.0
        %v5138 = vmax.f32 %v2429, 0.0
        %v5139 = vmax.f32 %v3274, 0.0
        %v5140 = vmax.f32 %v4119, 0.0
        %v5141 = vmax.f32 %v4964, 0.0
        %v5142 = vmax.f32 %v2431, 0.0
        %v5143 = vmax.f32 %v3276, 0.0
        %v5144 = vmax.f32 %v4121, 0.0
        %v5145 = vmax.f32 %v4966, 0.0
        %v5146 = vmax.f32 %v2434, 0.0
        %v5147 = vmax.f32 %v3279, 0.0
        %v5148 = vmax.f32 %v4124, 0.0
        %v5149 = vmax.f32 %v4969, 0.0
        %v5150 = vmax.f32 %v2436, 0.0
        %v5151 = vmax.f32 %v3281, 0.0
        %v5152 = vmax.f32 %v4126, 0.0
        %v5153 = vmax.f32 %v4971, 0.0
        %v5154 = vmax.f32 %v2439, 0.0
        %v5155 = vmax.f32 %v3284, 0.0
        %v5156 = vmax.f32 %v4129, 0.0
        %v5157 = vmax.f32 %v4974, 0.0
        %v5158 = vmax.f32 %v2441, 0.0
        %v5159 = vmax.f32 %v3286, 0.0
        %v5160 = vmax.f32 %v4131, 0.0
        %v5161 = vmax.f32 %v4976, 0.0
        %v5162 = vmax.f32 %v2444, 0.0
        %v5163 = vmax.f32 %v3289, 0.0
        %v5164 = vmax.f32 %v4134, 0.0
        %v5165 = vmax.f32 %v4979, 0.0
        %v5166 = vmax.f32 %v2446, 0.0
        %v5167 = vmax.f32 %v3291, 0.0
        %v5168 = vmax.f32 %v4136, 0.0
        %v5169 = vmax.f32 %v4981, 0.0
        %v5170 = vmax.f32 %v2449, 0.0
        %v5171 = vmax.f32 %v3294, 0.0
        %v5172 = vmax.f32 %v4139, 0.0
        %v5173 = vmax.f32 %v4984, 0.0
        %v5174 = vmax.f32 %v2451, 0.0
        %v5175 = vmax.f32 %v3296, 0.0
        %v5176 = vmax.f32 %v4141, 0.0
        %v5177 = vmax.f32 %v4986, 0.0
        %v5178 = vmax.f32 %v2454, 0.0
        %v5179 = vmax.f32 %v3299, 0.0
        %v5180 = vmax.f32 %v4144, 0.0
        %v5181 = vmax.f32 %v4989, 0.0
        %v5182 = vmax.f32 %v2456, 0.0
        %v5183 = vmax.f32 %v3301, 0.0
        %v5184 = vmax.f32 %v4146, 0.0
        %v5185 = vmax.f32 %v4991, 0.0
        %v5186 = vmax.f32 %v2459, 0.0
        %v5187 = vmax.f32 %v3304, 0.0
        %v5188 = vmax.f32 %v4149, 0.0
        %v5189 = vmax.f32 %v4994, 0.0
        %v5190 = vmax.f32 %v2461, 0.0
        %v5191 = vmax.f32 %v3306, 0.0
        %v5192 = vmax.f32 %v4151, 0.0
        %v5193 = vmax.f32 %v4996, 0.0
        %v5194 = vmax.f32 %v2464, 0.0
        %v5195 = vmax.f32 %v3309, 0.0
        %v5196 = vmax.f32 %v4154, 0.0
        %v5197 = vmax.f32 %v4999, 0.0
        %v5198 = vmax.f32 %v2466, 0.0
        %v5199 = vmax.f32 %v3311, 0.0
        %v5200 = vmax.f32 %v4156, 0.0
        %v5201 = vmax.f32 %v5001, 0.0
        %v5202 = vmax.f32 %v2469, 0.0
        %v5203 = vmax.f32 %v3314, 0.0
        %v5204 = vmax.f32 %v4159, 0.0
        %v5205 = vmax.f32 %v5004, 0.0
        %v5206 = vmax.f32 %v2471, 0.0
        %v5207 = vmax.f32 %v3316, 0.0
        %v5208 = vmax.f32 %v4161, 0.0
        %v5209 = vmax.f32 %v5006, 0.0
        %v5210 = vmax.f32 %v2474, 0.0
        %v5211 = vmax.f32 %v3319, 0.0
        %v5212 = vmax.f32 %v4164, 0.0
        %v5213 = vmax.f32 %v5009, 0.0
        %v5214 = vmax.f32 %v2476, 0.0
        %v5215 = vmax.f32 %v3321, 0.0
        %v5216 = vmax.f32 %v4166, 0.0
        %v5217 = vmax.f32 %v5011, 0.0
        %v5218 = vmax.f32 %v2479, 0.0
        %v5219 = vmax.f32 %v3324, 0.0
        %v5220 = vmax.f32 %v4169, 0.0
        %v5221 = vmax.f32 %v5014, 0.0
        %v5222 = vmax.f32 %v2481, 0.0
        %v5223 = vmax.f32 %v3326, 0.0
        %v5224 = vmax.f32 %v4171, 0.0
        %v5225 = vmax.f32 %v5016, 0.0
        %v5226 = vmax.f32 %v2484, 0.0
        %v5227 = vmax.f32 %v3329, 0.0
        %v5228 = vmax.f32 %v4174, 0.0
        %v5229 = vmax.f32 %v5019, 0.0
        %v5230 = vmax.f32 %v2486, 0.0
        %v5231 = vmax.f32 %v3331, 0.0
        %v5232 = vmax.f32 %v4176, 0.0
        %v5233 = vmax.f32 %v5021, 0.0
        %v5234 = vmax.f32 %v2489, 0.0
        %v5235 = vmax.f32 %v3334, 0.0
        %v5236 = vmax.f32 %v4179, 0.0
        %v5237 = vmax.f32 %v5024, 0.0
        %v5238 = vmax.f32 %v2491, 0.0
        %v5239 = vmax.f32 %v3336, 0.0
        %v5240 = vmax.f32 %v4181, 0.0
        %v5241 = vmax.f32 %v5026, 0.0
        %v5242 = vmax.f32 %v2494, 0.0
        %v5243 = vmax.f32 %v3339, 0.0
        %v5244 = vmax.f32 %v4184, 0.0
        %v5245 = vmax.f32 %v5029, 0.0
        %v5246 = vmax.f32 %v2496, 0.0
        %v5247 = vmax.f32 %v3341, 0.0
        %v5248 = vmax.f32 %v4186, 0.0
        %v5249 = vmax.f32 %v5031, 0.0
        %v5250 = vmax.f32 %v2499, 0.0
        %v5251 = vmax.f32 %v3344, 0.0
        %v5252 = vmax.f32 %v4189, 0.0
        %v5253 = vmax.f32 %v5034, 0.0
        %v5254 = vmax.f32 %v2501, 0.0
        %v5255 = vmax.f32 %v3346, 0.0
        %v5256 = vmax.f32 %v4191, 0.0
        %v5257 = vmax.f32 %v5036, 0.0
        %v5258 = vmax.f32 %v2504, 0.0
        %v5259 = vmax.f32 %v3349, 0.0
        %v5260 = vmax.f32 %v4194, 0.0
        %v5261 = vmax.f32 %v5039, 0.0
        %v5262 = vmax.f32 %v2506, 0.0
        %v5263 = vmax.f32 %v3351, 0.0
        %v5264 = vmax.f32 %v4196, 0.0
        %v5265 = vmax.f32 %v5041, 0.0
        %v5266 = vmax.f32 %v2509, 0.0
        %v5267 = vmax.f32 %v3354, 0.0
        %v5268 = vmax.f32 %v4199, 0.0
        %v5269 = vmax.f32 %v5044, 0.0
        %v5270 = vmax.f32 %v2511, 0.0
        %v5271 = vmax.f32 %v3356, 0.0
        %v5272 = vmax.f32 %v4201, 0.0
        %v5273 = vmax.f32 %v5046, 0.0
        %v5274 = vmax.f32 %v2514, 0.0
        %v5275 = vmax.f32 %v3359, 0.0
        %v5276 = vmax.f32 %v4204, 0.0
        %v5277 = vmax.f32 %v5049, 0.0
        %v5278 = vmax.f32 %v2516, 0.0
        %v5279 = vmax.f32 %v3361, 0.0
        %v5280 = vmax.f32 %v4206, 0.0
        %v5281 = vmax.f32 %v5051, 0.0
        %v5282 = vmax.f32 %v2519, 0.0
        %v5283 = vmax.f32 %v3364, 0.0
        %v5284 = vmax.f32 %v4209, 0.0
        %v5285 = vmax.f32 %v5054, 0.0
        %v5286 = vmax.f32 %v2521, 0.0
        %v5287 = vmax.f32 %v3366, 0.0
        %v5288 = vmax.f32 %v4211, 0.0
        %v5289 = vmax.f32 %v5056, 0.0
        %v5290 = vmax.f32 %v2524, 0.0
        %v5291 = vmax.f32 %v3369, 0.0
        %v5292 = vmax.f32 %v4214, 0.0
        %v5293 = vmax.f32 %v5059, 0.0
        %v5294 = vmax.f32 %v2526, 0.0
        %v5295 = vmax.f32 %v3371, 0.0
        %v5296 = vmax.f32 %v4216, 0.0
        %v5297 = vmax.f32 %v5061, 0.0
        %v5298 = vmax.f32 %v2529, 0.0
        %v5299 = vmax.f32 %v3374, 0.0
        %v5300 = vmax.f32 %v4219, 0.0
        %v5301 = vmax.f32 %v5064, 0.0
        %v5302 = vmax.f32 %v2531, 0.0
        %v5303 = vmax.f32 %v3376, 0.0
        %v5304 = vmax.f32 %v4221, 0.0
        %v5305 = vmax.f32 %v5066, 0.0
        %v5306 = vmax.f32 %v2534, 0.0
        %v5307 = vmax.f32 %v3379, 0.0
        %v5308 = vmax.f32 %v4224, 0.0
        %v5309 = vmax.f32 %v5069, 0.0
        %v5310 = vmax.f32 %v2536, 0.0
        %v5311 = vmax.f32 %v3381, 0.0
        %v5312 = vmax.f32 %v4226, 0.0
        %v5313 = vmax.f32 %v5071, 0.0
        %v5314 = vmax.f32 %v2539, 0.0
        %v5315 = vmax.f32 %v3384, 0.0
        %v5316 = vmax.f32 %v4229, 0.0
        %v5317 = vmax.f32 %v5074, 0.0
        %v5318 = vmax.f32 %v2541, 0.0
        %v5319 = vmax.f32 %v3386, 0.0
        %v5320 = vmax.f32 %v4231, 0.0
        %v5321 = vmax.f32 %v5076, 0.0
        %v5322 = vmax.f32 %v2544, 0.0
        %v5323 = vmax.f32 %v3389, 0.0
        %v5324 = vmax.f32 %v4234, 0.0
        %v5325 = vmax.f32 %v5079, 0.0
        %v5326 = vmax.f32 %v2546, 0.0
        %v5327 = vmax.f32 %v3391, 0.0
        %v5328 = vmax.f32 %v4236, 0.0
        %v5329 = vmax.f32 %v5081, 0.0
        %v5330 = vmax.f32 %v2549, 0.0
        %v5331 = vmax.f32 %v3394, 0.0
        %v5332 = vmax.f32 %v4239, 0.0
        %v5333 = vmax.f32 %v5084, 0.0
        %v5334 = vmax.f32 %v2551, 0.0
        %v5335 = vmax.f32 %v3396, 0.0
        %v5336 = vmax.f32 %v4241, 0.0
        %v5337 = vmax.f32 %v5086, 0.0
        %v5338 = vmax.f32 %v2554, 0.0
        %v5339 = vmax.f32 %v3399, 0.0
        %v5340 = vmax.f32 %v4244, 0.0
        %v5341 = vmax.f32 %v5089, 0.0
        %v5342 = vmax.f32 %v2556, 0.0
        %v5343 = vmax.f32 %v3401, 0.0
        %v5344 = vmax.f32 %v4246, 0.0
        %v5345 = vmax.f32 %v5091, 0.0
        %v5346 = vmax.f32 %v2559, 0.0
        %v5347 = vmax.f32 %v3404, 0.0
        %v5348 = vmax.f32 %v4249, 0.0
        %v5349 = vmax.f32 %v5094, 0.0
        %v5350 = vmax.f32 %v2561, 0.0
        %v5351 = vmax.f32 %v3406, 0.0
        %v5352 = vmax.f32 %v4251, 0.0
        %v5353 = vmax.f32 %v5096, 0.0
        %s5354 = smul.u32 %s22, 512
        %v5355 = vlaneseq
        %v5356 = vshrl.u32 %v5355, 7
        %v5357 = vadd.s32 %v5356, 8
        %v5358 = vadd.s32 %v5356, 16
        %v5359 = vadd.s32 %v5356, 24
        %v5360 = vadd.s32 %v5356, 32
        %v5361 = vadd.s32 %v5356, 40
        %v5362 = vadd.s32 %v5356, 48
        %v5363 = vadd.s32 %v5356, 56
        %v5364 = vadd.s32 %v5356, 64
        %v5365 = vadd.s32 %v5356, 72
        %v5366 = vadd.s32 %v5356, 80
        %v5367 = vadd.s32 %v5356, 88
        %v5368 = vadd.s32 %v5356, 96
        %v5369 = vadd.s32 %v5356, 104
        %v5370 = vadd.s32 %v5356, 112
        %v5371 = vadd.s32 %v5356, 120
        %v5372 = vadd.s32 %v5356, 128
        %v5373 = vadd.s32 %v5356, 136
        %v5374 = vadd.s32 %v5356, 144
        %v5375 = vadd.s32 %v5356, 152
        %v5376 = vadd.s32 %v5356, 160
        %v5377 = vadd.s32 %v5356, 168
        %v5378 = vadd.s32 %v5356, 176
        %v5379 = vadd.s32 %v5356, 184
        %v5380 = vadd.s32 %v5356, 192
        %v5381 = vadd.s32 %v5356, 200
        %v5382 = vadd.s32 %v5356, 208
        %v5383 = vadd.s32 %v5356, 216
        %v5384 = vadd.s32 %v5356, 224
        %v5385 = vadd.s32 %v5356, 232
        %v5386 = vadd.s32 %v5356, 240
        %v5387 = vadd.s32 %v5356, 248
        %v5388 = vadd.s32 %v5356, 256
        %v5389 = vadd.s32 %v5356, 264
        %v5390 = vadd.s32 %v5356, 272
        %v5391 = vadd.s32 %v5356, 280
        %v5392 = vadd.s32 %v5356, 288
        %v5393 = vadd.s32 %v5356, 296
        %v5394 = vadd.s32 %v5356, 304
        %v5395 = vadd.s32 %v5356, 312
        %v5396 = vadd.s32 %v5356, 320
        %v5397 = vadd.s32 %v5356, 328
        %v5398 = vadd.s32 %v5356, 336
        %v5399 = vadd.s32 %v5356, 344
        %v5400 = vadd.s32 %v5356, 352
        %v5401 = vadd.s32 %v5356, 360
        %v5402 = vadd.s32 %v5356, 368
        %v5403 = vadd.s32 %v5356, 376
        %v5404 = vadd.s32 %v5356, 384
        %v5405 = vadd.s32 %v5356, 392
        %v5406 = vadd.s32 %v5356, 400
        %v5407 = vadd.s32 %v5356, 408
        %v5408 = vadd.s32 %v5356, 416
        %v5409 = vadd.s32 %v5356, 424
        %v5410 = vadd.s32 %v5356, 432
        %v5411 = vadd.s32 %v5356, 440
        %v5412 = vadd.s32 %v5356, 448
        %v5413 = vadd.s32 %v5356, 456
        %v5414 = vadd.s32 %v5356, 464
        %v5415 = vadd.s32 %v5356, 472
        %v5416 = vadd.s32 %v5356, 480
        %v5417 = vadd.s32 %v5356, 488
        %v5418 = vadd.s32 %v5356, 496
        %v5419 = vadd.s32 %v5356, 504
        %v5420 = vstv %s5354
        %v5421 = vadd.s32 %v5420, %v5356
        %v5422 = vadd.s32 %v5420, %v5357
        %v5423 = vadd.s32 %v5420, %v5358
        %v5424 = vadd.s32 %v5420, %v5359
        %v5425 = vadd.s32 %v5420, %v5360
        %v5426 = vadd.s32 %v5420, %v5361
        %v5427 = vadd.s32 %v5420, %v5362
        %v5428 = vadd.s32 %v5420, %v5363
        %v5429 = vadd.s32 %v5420, %v5364
        %v5430 = vadd.s32 %v5420, %v5365
        %v5431 = vadd.s32 %v5420, %v5366
        %v5432 = vadd.s32 %v5420, %v5367
        %v5433 = vadd.s32 %v5420, %v5368
        %v5434 = vadd.s32 %v5420, %v5369
        %v5435 = vadd.s32 %v5420, %v5370
        %v5436 = vadd.s32 %v5420, %v5371
        %v5437 = vadd.s32 %v5420, %v5372
        %v5438 = vadd.s32 %v5420, %v5373
        %v5439 = vadd.s32 %v5420, %v5374
        %v5440 = vadd.s32 %v5420, %v5375
        %v5441 = vadd.s32 %v5420, %v5376
        %v5442 = vadd.s32 %v5420, %v5377
        %v5443 = vadd.s32 %v5420, %v5378
        %v5444 = vadd.s32 %v5420, %v5379
        %v5445 = vadd.s32 %v5420, %v5380
        %v5446 = vadd.s32 %v5420, %v5381
        %v5447 = vadd.s32 %v5420, %v5382
        %v5448 = vadd.s32 %v5420, %v5383
        %v5449 = vadd.s32 %v5420, %v5384
        %v5450 = vadd.s32 %v5420, %v5385
        %v5451 = vadd.s32 %v5420, %v5386
        %v5452 = vadd.s32 %v5420, %v5387
        %v5453 = vadd.s32 %v5420, %v5388
        %v5454 = vadd.s32 %v5420, %v5389
        %v5455 = vadd.s32 %v5420, %v5390
        %v5456 = vadd.s32 %v5420, %v5391
        %v5457 = vadd.s32 %v5420, %v5392
        %v5458 = vadd.s32 %v5420, %v5393
        %v5459 = vadd.s32 %v5420, %v5394
        %v5460 = vadd.s32 %v5420, %v5395
        %v5461 = vadd.s32 %v5420, %v5396
        %v5462 = vadd.s32 %v5420, %v5397
        %v5463 = vadd.s32 %v5420, %v5398
        %v5464 = vadd.s32 %v5420, %v5399
        %v5465 = vadd.s32 %v5420, %v5400
        %v5466 = vadd.s32 %v5420, %v5401
        %v5467 = vadd.s32 %v5420, %v5402
        %v5468 = vadd.s32 %v5420, %v5403
        %v5469 = vadd.s32 %v5420, %v5404
        %v5470 = vadd.s32 %v5420, %v5405
        %v5471 = vadd.s32 %v5420, %v5406
        %v5472 = vadd.s32 %v5420, %v5407
        %v5473 = vadd.s32 %v5420, %v5408
        %v5474 = vadd.s32 %v5420, %v5409
        %v5475 = vadd.s32 %v5420, %v5410
        %v5476 = vadd.s32 %v5420, %v5411
        %v5477 = vadd.s32 %v5420, %v5412
        %v5478 = vadd.s32 %v5420, %v5413
        %v5479 = vadd.s32 %v5420, %v5414
        %v5480 = vadd.s32 %v5420, %v5415
        %v5481 = vadd.s32 %v5420, %v5416
        %v5482 = vadd.s32 %v5420, %v5417
        %v5483 = vadd.s32 %v5420, %v5418
        %v5484 = vadd.s32 %v5420, %v5419
        %v5485 = vstv %s325
        %vm5486 = vcmp.lt.s32.totalorder %v5421, %v5485
        %vm5487 = vcmp.lt.s32.totalorder %v5422, %v5485
        %vm5488 = vcmp.lt.s32.totalorder %v5423, %v5485
        %vm5489 = vcmp.lt.s32.totalorder %v5424, %v5485
        %vm5490 = vcmp.lt.s32.totalorder %v5425, %v5485
        %vm5491 = vcmp.lt.s32.totalorder %v5426, %v5485
        %vm5492 = vcmp.lt.s32.totalorder %v5427, %v5485
        %vm5493 = vcmp.lt.s32.totalorder %v5428, %v5485
        %vm5494 = vcmp.lt.s32.totalorder %v5429, %v5485
        %vm5495 = vcmp.lt.s32.totalorder %v5430, %v5485
        %vm5496 = vcmp.lt.s32.totalorder %v5431, %v5485
        %vm5497 = vcmp.lt.s32.totalorder %v5432, %v5485
        %vm5498 = vcmp.lt.s32.totalorder %v5433, %v5485
        %vm5499 = vcmp.lt.s32.totalorder %v5434, %v5485
        %vm5500 = vcmp.lt.s32.totalorder %v5435, %v5485
        %vm5501 = vcmp.lt.s32.totalorder %v5436, %v5485
        %vm5502 = vcmp.lt.s32.totalorder %v5437, %v5485
        %vm5503 = vcmp.lt.s32.totalorder %v5438, %v5485
        %vm5504 = vcmp.lt.s32.totalorder %v5439, %v5485
        %vm5505 = vcmp.lt.s32.totalorder %v5440, %v5485
        %vm5506 = vcmp.lt.s32.totalorder %v5441, %v5485
        %vm5507 = vcmp.lt.s32.totalorder %v5442, %v5485
        %vm5508 = vcmp.lt.s32.totalorder %v5443, %v5485
        %vm5509 = vcmp.lt.s32.totalorder %v5444, %v5485
        %vm5510 = vcmp.lt.s32.totalorder %v5445, %v5485
        %vm5511 = vcmp.lt.s32.totalorder %v5446, %v5485
        %vm5512 = vcmp.lt.s32.totalorder %v5447, %v5485
        %vm5513 = vcmp.lt.s32.totalorder %v5448, %v5485
        %vm5514 = vcmp.lt.s32.totalorder %v5449, %v5485
        %vm5515 = vcmp.lt.s32.totalorder %v5450, %v5485
        %vm5516 = vcmp.lt.s32.totalorder %v5451, %v5485
        %vm5517 = vcmp.lt.s32.totalorder %v5452, %v5485
        %vm5518 = vcmp.lt.s32.totalorder %v5453, %v5485
        %vm5519 = vcmp.lt.s32.totalorder %v5454, %v5485
        %vm5520 = vcmp.lt.s32.totalorder %v5455, %v5485
        %vm5521 = vcmp.lt.s32.totalorder %v5456, %v5485
        %vm5522 = vcmp.lt.s32.totalorder %v5457, %v5485
        %vm5523 = vcmp.lt.s32.totalorder %v5458, %v5485
        %vm5524 = vcmp.lt.s32.totalorder %v5459, %v5485
        %vm5525 = vcmp.lt.s32.totalorder %v5460, %v5485
        %vm5526 = vcmp.lt.s32.totalorder %v5461, %v5485
        %vm5527 = vcmp.lt.s32.totalorder %v5462, %v5485
        %vm5528 = vcmp.lt.s32.totalorder %v5463, %v5485
        %vm5529 = vcmp.lt.s32.totalorder %v5464, %v5485
        %vm5530 = vcmp.lt.s32.totalorder %v5465, %v5485
        %vm5531 = vcmp.lt.s32.totalorder %v5466, %v5485
        %vm5532 = vcmp.lt.s32.totalorder %v5467, %v5485
        %vm5533 = vcmp.lt.s32.totalorder %v5468, %v5485
        %vm5534 = vcmp.lt.s32.totalorder %v5469, %v5485
        %vm5535 = vcmp.lt.s32.totalorder %v5470, %v5485
        %vm5536 = vcmp.lt.s32.totalorder %v5471, %v5485
        %vm5537 = vcmp.lt.s32.totalorder %v5472, %v5485
        %vm5538 = vcmp.lt.s32.totalorder %v5473, %v5485
        %vm5539 = vcmp.lt.s32.totalorder %v5474, %v5485
        %vm5540 = vcmp.lt.s32.totalorder %v5475, %v5485
        %vm5541 = vcmp.lt.s32.totalorder %v5476, %v5485
        %vm5542 = vcmp.lt.s32.totalorder %v5477, %v5485
        %vm5543 = vcmp.lt.s32.totalorder %v5478, %v5485
        %vm5544 = vcmp.lt.s32.totalorder %v5479, %v5485
        %vm5545 = vcmp.lt.s32.totalorder %v5480, %v5485
        %vm5546 = vcmp.lt.s32.totalorder %v5481, %v5485
        %vm5547 = vcmp.lt.s32.totalorder %v5482, %v5485
        %vm5548 = vcmp.lt.s32.totalorder %v5483, %v5485
        %vm5549 = vcmp.lt.s32.totalorder %v5484, %v5485
        %v5550 = vsel %vm5486, 1, 0
        %v5551 = vsel %vm5487, 1, 0
        %v5552 = vsel %vm5488, 1, 0
        %v5553 = vsel %vm5489, 1, 0
        %v5554 = vsel %vm5490, 1, 0
        %v5555 = vsel %vm5491, 1, 0
        %v5556 = vsel %vm5492, 1, 0
        %v5557 = vsel %vm5493, 1, 0
        %v5558 = vsel %vm5494, 1, 0
        %v5559 = vsel %vm5495, 1, 0
        %v5560 = vsel %vm5496, 1, 0
        %v5561 = vsel %vm5497, 1, 0
        %v5562 = vsel %vm5498, 1, 0
        %v5563 = vsel %vm5499, 1, 0
        %v5564 = vsel %vm5500, 1, 0
        %v5565 = vsel %vm5501, 1, 0
        %v5566 = vsel %vm5502, 1, 0
        %v5567 = vsel %vm5503, 1, 0
        %v5568 = vsel %vm5504, 1, 0
        %v5569 = vsel %vm5505, 1, 0
        %v5570 = vsel %vm5506, 1, 0
        %v5571 = vsel %vm5507, 1, 0
        %v5572 = vsel %vm5508, 1, 0
        %v5573 = vsel %vm5509, 1, 0
        %v5574 = vsel %vm5510, 1, 0
        %v5575 = vsel %vm5511, 1, 0
        %v5576 = vsel %vm5512, 1, 0
        %v5577 = vsel %vm5513, 1, 0
        %v5578 = vsel %vm5514, 1, 0
        %v5579 = vsel %vm5515, 1, 0
        %v5580 = vsel %vm5516, 1, 0
        %v5581 = vsel %vm5517, 1, 0
        %v5582 = vsel %vm5518, 1, 0
        %v5583 = vsel %vm5519, 1, 0
        %v5584 = vsel %vm5520, 1, 0
        %v5585 = vsel %vm5521, 1, 0
        %v5586 = vsel %vm5522, 1, 0
        %v5587 = vsel %vm5523, 1, 0
        %v5588 = vsel %vm5524, 1, 0
        %v5589 = vsel %vm5525, 1, 0
        %v5590 = vsel %vm5526, 1, 0
        %v5591 = vsel %vm5527, 1, 0
        %v5592 = vsel %vm5528, 1, 0
        %v5593 = vsel %vm5529, 1, 0
        %v5594 = vsel %vm5530, 1, 0
        %v5595 = vsel %vm5531, 1, 0
        %v5596 = vsel %vm5532, 1, 0
        %v5597 = vsel %vm5533, 1, 0
        %v5598 = vsel %vm5534, 1, 0
        %v5599 = vsel %vm5535, 1, 0
        %v5600 = vsel %vm5536, 1, 0
        %v5601 = vsel %vm5537, 1, 0
        %v5602 = vsel %vm5538, 1, 0
        %v5603 = vsel %vm5539, 1, 0
        %v5604 = vsel %vm5540, 1, 0
        %v5605 = vsel %vm5541, 1, 0
        %v5606 = vsel %vm5542, 1, 0
        %v5607 = vsel %vm5543, 1, 0
        %v5608 = vsel %vm5544, 1, 0
        %v5609 = vsel %vm5545, 1, 0
        %v5610 = vsel %vm5546, 1, 0
        %v5611 = vsel %vm5547, 1, 0
        %v5612 = vsel %vm5548, 1, 0
        %v5613 = vsel %vm5549, 1, 0
        %vm5614 = vcmp.eq.s32.totalorder %v5550, 1
        %vm5615 = vcmp.eq.s32.totalorder %v5551, 1
        %vm5616 = vcmp.eq.s32.totalorder %v5552, 1
        %vm5617 = vcmp.eq.s32.totalorder %v5553, 1
        %vm5618 = vcmp.eq.s32.totalorder %v5554, 1
        %vm5619 = vcmp.eq.s32.totalorder %v5555, 1
        %vm5620 = vcmp.eq.s32.totalorder %v5556, 1
        %vm5621 = vcmp.eq.s32.totalorder %v5557, 1
        %vm5622 = vcmp.eq.s32.totalorder %v5558, 1
        %vm5623 = vcmp.eq.s32.totalorder %v5559, 1
        %vm5624 = vcmp.eq.s32.totalorder %v5560, 1
        %vm5625 = vcmp.eq.s32.totalorder %v5561, 1
        %vm5626 = vcmp.eq.s32.totalorder %v5562, 1
        %vm5627 = vcmp.eq.s32.totalorder %v5563, 1
        %vm5628 = vcmp.eq.s32.totalorder %v5564, 1
        %vm5629 = vcmp.eq.s32.totalorder %v5565, 1
        %vm5630 = vcmp.eq.s32.totalorder %v5566, 1
        %vm5631 = vcmp.eq.s32.totalorder %v5567, 1
        %vm5632 = vcmp.eq.s32.totalorder %v5568, 1
        %vm5633 = vcmp.eq.s32.totalorder %v5569, 1
        %vm5634 = vcmp.eq.s32.totalorder %v5570, 1
        %vm5635 = vcmp.eq.s32.totalorder %v5571, 1
        %vm5636 = vcmp.eq.s32.totalorder %v5572, 1
        %vm5637 = vcmp.eq.s32.totalorder %v5573, 1
        %vm5638 = vcmp.eq.s32.totalorder %v5574, 1
        %vm5639 = vcmp.eq.s32.totalorder %v5575, 1
        %vm5640 = vcmp.eq.s32.totalorder %v5576, 1
        %vm5641 = vcmp.eq.s32.totalorder %v5577, 1
        %vm5642 = vcmp.eq.s32.totalorder %v5578, 1
        %vm5643 = vcmp.eq.s32.totalorder %v5579, 1
        %vm5644 = vcmp.eq.s32.totalorder %v5580, 1
        %vm5645 = vcmp.eq.s32.totalorder %v5581, 1
        %vm5646 = vcmp.eq.s32.totalorder %v5582, 1
        %vm5647 = vcmp.eq.s32.totalorder %v5583, 1
        %vm5648 = vcmp.eq.s32.totalorder %v5584, 1
        %vm5649 = vcmp.eq.s32.totalorder %v5585, 1
        %vm5650 = vcmp.eq.s32.totalorder %v5586, 1
        %vm5651 = vcmp.eq.s32.totalorder %v5587, 1
        %vm5652 = vcmp.eq.s32.totalorder %v5588, 1
        %vm5653 = vcmp.eq.s32.totalorder %v5589, 1
        %vm5654 = vcmp.eq.s32.totalorder %v5590, 1
        %vm5655 = vcmp.eq.s32.totalorder %v5591, 1
        %vm5656 = vcmp.eq.s32.totalorder %v5592, 1
        %vm5657 = vcmp.eq.s32.totalorder %v5593, 1
        %vm5658 = vcmp.eq.s32.totalorder %v5594, 1
        %vm5659 = vcmp.eq.s32.totalorder %v5595, 1
        %vm5660 = vcmp.eq.s32.totalorder %v5596, 1
        %vm5661 = vcmp.eq.s32.totalorder %v5597, 1
        %vm5662 = vcmp.eq.s32.totalorder %v5598, 1
        %vm5663 = vcmp.eq.s32.totalorder %v5599, 1
        %vm5664 = vcmp.eq.s32.totalorder %v5600, 1
        %vm5665 = vcmp.eq.s32.totalorder %v5601, 1
        %vm5666 = vcmp.eq.s32.totalorder %v5602, 1
        %vm5667 = vcmp.eq.s32.totalorder %v5603, 1
        %vm5668 = vcmp.eq.s32.totalorder %v5604, 1
        %vm5669 = vcmp.eq.s32.totalorder %v5605, 1
        %vm5670 = vcmp.eq.s32.totalorder %v5606, 1
        %vm5671 = vcmp.eq.s32.totalorder %v5607, 1
        %vm5672 = vcmp.eq.s32.totalorder %v5608, 1
        %vm5673 = vcmp.eq.s32.totalorder %v5609, 1
        %vm5674 = vcmp.eq.s32.totalorder %v5610, 1
        %vm5675 = vcmp.eq.s32.totalorder %v5611, 1
        %vm5676 = vcmp.eq.s32.totalorder %v5612, 1
        %vm5677 = vcmp.eq.s32.totalorder %v5613, 1
        %v5678 = vsel %vm5614, %v5098, 0.0
        %v5679 = vsel %vm5614, %v5099, 0.0
        %v5680 = vsel %vm5614, %v5100, 0.0
        %v5681 = vsel %vm5614, %v5101, 0.0
        %v5682 = vsel %vm5615, %v5102, 0.0
        %v5683 = vsel %vm5615, %v5103, 0.0
        %v5684 = vsel %vm5615, %v5104, 0.0
        %v5685 = vsel %vm5615, %v5105, 0.0
        %v5686 = vsel %vm5616, %v5106, 0.0
        %v5687 = vsel %vm5616, %v5107, 0.0
        %v5688 = vsel %vm5616, %v5108, 0.0
        %v5689 = vsel %vm5616, %v5109, 0.0
        %v5690 = vsel %vm5617, %v5110, 0.0
        %v5691 = vsel %vm5617, %v5111, 0.0
        %v5692 = vsel %vm5617, %v5112, 0.0
        %v5693 = vsel %vm5617, %v5113, 0.0
        %v5694 = vsel %vm5618, %v5114, 0.0
        %v5695 = vsel %vm5618, %v5115, 0.0
        %v5696 = vsel %vm5618, %v5116, 0.0
        %v5697 = vsel %vm5618, %v5117, 0.0
        %v5698 = vsel %vm5619, %v5118, 0.0
        %v5699 = vsel %vm5619, %v5119, 0.0
        %v5700 = vsel %vm5619, %v5120, 0.0
        %v5701 = vsel %vm5619, %v5121, 0.0
        %v5702 = vsel %vm5620, %v5122, 0.0
        %v5703 = vsel %vm5620, %v5123, 0.0
        %v5704 = vsel %vm5620, %v5124, 0.0
        %v5705 = vsel %vm5620, %v5125, 0.0
        %v5706 = vsel %vm5621, %v5126, 0.0
        %v5707 = vsel %vm5621, %v5127, 0.0
        %v5708 = vsel %vm5621, %v5128, 0.0
        %v5709 = vsel %vm5621, %v5129, 0.0
        %v5710 = vsel %vm5622, %v5130, 0.0
        %v5711 = vsel %vm5622, %v5131, 0.0
        %v5712 = vsel %vm5622, %v5132, 0.0
        %v5713 = vsel %vm5622, %v5133, 0.0
        %v5714 = vsel %vm5623, %v5134, 0.0
        %v5715 = vsel %vm5623, %v5135, 0.0
        %v5716 = vsel %vm5623, %v5136, 0.0
        %v5717 = vsel %vm5623, %v5137, 0.0
        %v5718 = vsel %vm5624, %v5138, 0.0
        %v5719 = vsel %vm5624, %v5139, 0.0
        %v5720 = vsel %vm5624, %v5140, 0.0
        %v5721 = vsel %vm5624, %v5141, 0.0
        %v5722 = vsel %vm5625, %v5142, 0.0
        %v5723 = vsel %vm5625, %v5143, 0.0
        %v5724 = vsel %vm5625, %v5144, 0.0
        %v5725 = vsel %vm5625, %v5145, 0.0
        %v5726 = vsel %vm5626, %v5146, 0.0
        %v5727 = vsel %vm5626, %v5147, 0.0
        %v5728 = vsel %vm5626, %v5148, 0.0
        %v5729 = vsel %vm5626, %v5149, 0.0
        %v5730 = vsel %vm5627, %v5150, 0.0
        %v5731 = vsel %vm5627, %v5151, 0.0
        %v5732 = vsel %vm5627, %v5152, 0.0
        %v5733 = vsel %vm5627, %v5153, 0.0
        %v5734 = vsel %vm5628, %v5154, 0.0
        %v5735 = vsel %vm5628, %v5155, 0.0
        %v5736 = vsel %vm5628, %v5156, 0.0
        %v5737 = vsel %vm5628, %v5157, 0.0
        %v5738 = vsel %vm5629, %v5158, 0.0
        %v5739 = vsel %vm5629, %v5159, 0.0
        %v5740 = vsel %vm5629, %v5160, 0.0
        %v5741 = vsel %vm5629, %v5161, 0.0
        %v5742 = vsel %vm5630, %v5162, 0.0
        %v5743 = vsel %vm5630, %v5163, 0.0
        %v5744 = vsel %vm5630, %v5164, 0.0
        %v5745 = vsel %vm5630, %v5165, 0.0
        %v5746 = vsel %vm5631, %v5166, 0.0
        %v5747 = vsel %vm5631, %v5167, 0.0
        %v5748 = vsel %vm5631, %v5168, 0.0
        %v5749 = vsel %vm5631, %v5169, 0.0
        %v5750 = vsel %vm5632, %v5170, 0.0
        %v5751 = vsel %vm5632, %v5171, 0.0
        %v5752 = vsel %vm5632, %v5172, 0.0
        %v5753 = vsel %vm5632, %v5173, 0.0
        %v5754 = vsel %vm5633, %v5174, 0.0
        %v5755 = vsel %vm5633, %v5175, 0.0
        %v5756 = vsel %vm5633, %v5176, 0.0
        %v5757 = vsel %vm5633, %v5177, 0.0
        %v5758 = vsel %vm5634, %v5178, 0.0
        %v5759 = vsel %vm5634, %v5179, 0.0
        %v5760 = vsel %vm5634, %v5180, 0.0
        %v5761 = vsel %vm5634, %v5181, 0.0
        %v5762 = vsel %vm5635, %v5182, 0.0
        %v5763 = vsel %vm5635, %v5183, 0.0
        %v5764 = vsel %vm5635, %v5184, 0.0
        %v5765 = vsel %vm5635, %v5185, 0.0
        %v5766 = vsel %vm5636, %v5186, 0.0
        %v5767 = vsel %vm5636, %v5187, 0.0
        %v5768 = vsel %vm5636, %v5188, 0.0
        %v5769 = vsel %vm5636, %v5189, 0.0
        %v5770 = vsel %vm5637, %v5190, 0.0
        %v5771 = vsel %vm5637, %v5191, 0.0
        %v5772 = vsel %vm5637, %v5192, 0.0
        %v5773 = vsel %vm5637, %v5193, 0.0
        %v5774 = vsel %vm5638, %v5194, 0.0
        %v5775 = vsel %vm5638, %v5195, 0.0
        %v5776 = vsel %vm5638, %v5196, 0.0
        %v5777 = vsel %vm5638, %v5197, 0.0
        %v5778 = vsel %vm5639, %v5198, 0.0
        %v5779 = vsel %vm5639, %v5199, 0.0
        %v5780 = vsel %vm5639, %v5200, 0.0
        %v5781 = vsel %vm5639, %v5201, 0.0
        %v5782 = vsel %vm5640, %v5202, 0.0
        %v5783 = vsel %vm5640, %v5203, 0.0
        %v5784 = vsel %vm5640, %v5204, 0.0
        %v5785 = vsel %vm5640, %v5205, 0.0
        %v5786 = vsel %vm5641, %v5206, 0.0
        %v5787 = vsel %vm5641, %v5207, 0.0
        %v5788 = vsel %vm5641, %v5208, 0.0
        %v5789 = vsel %vm5641, %v5209, 0.0
        %v5790 = vsel %vm5642, %v5210, 0.0
        %v5791 = vsel %vm5642, %v5211, 0.0
        %v5792 = vsel %vm5642, %v5212, 0.0
        %v5793 = vsel %vm5642, %v5213, 0.0
        %v5794 = vsel %vm5643, %v5214, 0.0
        %v5795 = vsel %vm5643, %v5215, 0.0
        %v5796 = vsel %vm5643, %v5216, 0.0
        %v5797 = vsel %vm5643, %v5217, 0.0
        %v5798 = vsel %vm5644, %v5218, 0.0
        %v5799 = vsel %vm5644, %v5219, 0.0
        %v5800 = vsel %vm5644, %v5220, 0.0
        %v5801 = vsel %vm5644, %v5221, 0.0
        %v5802 = vsel %vm5645, %v5222, 0.0
        %v5803 = vsel %vm5645, %v5223, 0.0
        %v5804 = vsel %vm5645, %v5224, 0.0
        %v5805 = vsel %vm5645, %v5225, 0.0
        %v5806 = vsel %vm5646, %v5226, 0.0
        %v5807 = vsel %vm5646, %v5227, 0.0
        %v5808 = vsel %vm5646, %v5228, 0.0
        %v5809 = vsel %vm5646, %v5229, 0.0
        %v5810 = vsel %vm5647, %v5230, 0.0
        %v5811 = vsel %vm5647, %v5231, 0.0
        %v5812 = vsel %vm5647, %v5232, 0.0
        %v5813 = vsel %vm5647, %v5233, 0.0
        %v5814 = vsel %vm5648, %v5234, 0.0
        %v5815 = vsel %vm5648, %v5235, 0.0
        %v5816 = vsel %vm5648, %v5236, 0.0
        %v5817 = vsel %vm5648, %v5237, 0.0
        %v5818 = vsel %vm5649, %v5238, 0.0
        %v5819 = vsel %vm5649, %v5239, 0.0
        %v5820 = vsel %vm5649, %v5240, 0.0
        %v5821 = vsel %vm5649, %v5241, 0.0
        %v5822 = vsel %vm5650, %v5242, 0.0
        %v5823 = vsel %vm5650, %v5243, 0.0
        %v5824 = vsel %vm5650, %v5244, 0.0
        %v5825 = vsel %vm5650, %v5245, 0.0
        %v5826 = vsel %vm5651, %v5246, 0.0
        %v5827 = vsel %vm5651, %v5247, 0.0
        %v5828 = vsel %vm5651, %v5248, 0.0
        %v5829 = vsel %vm5651, %v5249, 0.0
        %v5830 = vsel %vm5652, %v5250, 0.0
        %v5831 = vsel %vm5652, %v5251, 0.0
        %v5832 = vsel %vm5652, %v5252, 0.0
        %v5833 = vsel %vm5652, %v5253, 0.0
        %v5834 = vsel %vm5653, %v5254, 0.0
        %v5835 = vsel %vm5653, %v5255, 0.0
        %v5836 = vsel %vm5653, %v5256, 0.0
        %v5837 = vsel %vm5653, %v5257, 0.0
        %v5838 = vsel %vm5654, %v5258, 0.0
        %v5839 = vsel %vm5654, %v5259, 0.0
        %v5840 = vsel %vm5654, %v5260, 0.0
        %v5841 = vsel %vm5654, %v5261, 0.0
        %v5842 = vsel %vm5655, %v5262, 0.0
        %v5843 = vsel %vm5655, %v5263, 0.0
        %v5844 = vsel %vm5655, %v5264, 0.0
        %v5845 = vsel %vm5655, %v5265, 0.0
        %v5846 = vsel %vm5656, %v5266, 0.0
        %v5847 = vsel %vm5656, %v5267, 0.0
        %v5848 = vsel %vm5656, %v5268, 0.0
        %v5849 = vsel %vm5656, %v5269, 0.0
        %v5850 = vsel %vm5657, %v5270, 0.0
        %v5851 = vsel %vm5657, %v5271, 0.0
        %v5852 = vsel %vm5657, %v5272, 0.0
        %v5853 = vsel %vm5657, %v5273, 0.0
        %v5854 = vsel %vm5658, %v5274, 0.0
        %v5855 = vsel %vm5658, %v5275, 0.0
        %v5856 = vsel %vm5658, %v5276, 0.0
        %v5857 = vsel %vm5658, %v5277, 0.0
        %v5858 = vsel %vm5659, %v5278, 0.0
        %v5859 = vsel %vm5659, %v5279, 0.0
        %v5860 = vsel %vm5659, %v5280, 0.0
        %v5861 = vsel %vm5659, %v5281, 0.0
        %v5862 = vsel %vm5660, %v5282, 0.0
        %v5863 = vsel %vm5660, %v5283, 0.0
        %v5864 = vsel %vm5660, %v5284, 0.0
        %v5865 = vsel %vm5660, %v5285, 0.0
        %v5866 = vsel %vm5661, %v5286, 0.0
        %v5867 = vsel %vm5661, %v5287, 0.0
        %v5868 = vsel %vm5661, %v5288, 0.0
        %v5869 = vsel %vm5661, %v5289, 0.0
        %v5870 = vsel %vm5662, %v5290, 0.0
        %v5871 = vsel %vm5662, %v5291, 0.0
        %v5872 = vsel %vm5662, %v5292, 0.0
        %v5873 = vsel %vm5662, %v5293, 0.0
        %v5874 = vsel %vm5663, %v5294, 0.0
        %v5875 = vsel %vm5663, %v5295, 0.0
        %v5876 = vsel %vm5663, %v5296, 0.0
        %v5877 = vsel %vm5663, %v5297, 0.0
        %v5878 = vsel %vm5664, %v5298, 0.0
        %v5879 = vsel %vm5664, %v5299, 0.0
        %v5880 = vsel %vm5664, %v5300, 0.0
        %v5881 = vsel %vm5664, %v5301, 0.0
        %v5882 = vsel %vm5665, %v5302, 0.0
        %v5883 = vsel %vm5665, %v5303, 0.0
        %v5884 = vsel %vm5665, %v5304, 0.0
        %v5885 = vsel %vm5665, %v5305, 0.0
        %v5886 = vsel %vm5666, %v5306, 0.0
        %v5887 = vsel %vm5666, %v5307, 0.0
        %v5888 = vsel %vm5666, %v5308, 0.0
        %v5889 = vsel %vm5666, %v5309, 0.0
        %v5890 = vsel %vm5667, %v5310, 0.0
        %v5891 = vsel %vm5667, %v5311, 0.0
        %v5892 = vsel %vm5667, %v5312, 0.0
        %v5893 = vsel %vm5667, %v5313, 0.0
        %v5894 = vsel %vm5668, %v5314, 0.0
        %v5895 = vsel %vm5668, %v5315, 0.0
        %v5896 = vsel %vm5668, %v5316, 0.0
        %v5897 = vsel %vm5668, %v5317, 0.0
        %v5898 = vsel %vm5669, %v5318, 0.0
        %v5899 = vsel %vm5669, %v5319, 0.0
        %v5900 = vsel %vm5669, %v5320, 0.0
        %v5901 = vsel %vm5669, %v5321, 0.0
        %v5902 = vsel %vm5670, %v5322, 0.0
        %v5903 = vsel %vm5670, %v5323, 0.0
        %v5904 = vsel %vm5670, %v5324, 0.0
        %v5905 = vsel %vm5670, %v5325, 0.0
        %v5906 = vsel %vm5671, %v5326, 0.0
        %v5907 = vsel %vm5671, %v5327, 0.0
        %v5908 = vsel %vm5671, %v5328, 0.0
        %v5909 = vsel %vm5671, %v5329, 0.0
        %v5910 = vsel %vm5672, %v5330, 0.0
        %v5911 = vsel %vm5672, %v5331, 0.0
        %v5912 = vsel %vm5672, %v5332, 0.0
        %v5913 = vsel %vm5672, %v5333, 0.0
        %v5914 = vsel %vm5673, %v5334, 0.0
        %v5915 = vsel %vm5673, %v5335, 0.0
        %v5916 = vsel %vm5673, %v5336, 0.0
        %v5917 = vsel %vm5673, %v5337, 0.0
        %v5918 = vsel %vm5674, %v5338, 0.0
        %v5919 = vsel %vm5674, %v5339, 0.0
        %v5920 = vsel %vm5674, %v5340, 0.0
        %v5921 = vsel %vm5674, %v5341, 0.0
        %v5922 = vsel %vm5675, %v5342, 0.0
        %v5923 = vsel %vm5675, %v5343, 0.0
        %v5924 = vsel %vm5675, %v5344, 0.0
        %v5925 = vsel %vm5675, %v5345, 0.0
        %v5926 = vsel %vm5676, %v5346, 0.0
        %v5927 = vsel %vm5676, %v5347, 0.0
        %v5928 = vsel %vm5676, %v5348, 0.0
        %v5929 = vsel %vm5676, %v5349, 0.0
        %v5930 = vsel %vm5677, %v5350, 0.0
        %v5931 = vsel %vm5677, %v5351, 0.0
        %v5932 = vsel %vm5677, %v5352, 0.0
        %v5933 = vsel %vm5677, %v5353, 0.0
        %v5934 = vpack.c.bf16 %v5682, %v5678
        %v5935 = vpack.c.bf16 %v5683, %v5679
        %v5936 = vpack.c.bf16 %v5684, %v5680
        %v5937 = vpack.c.bf16 %v5685, %v5681
        %v5938 = vpack.c.bf16 %v5690, %v5686
        %v5939 = vpack.c.bf16 %v5691, %v5687
        %v5940 = vpack.c.bf16 %v5692, %v5688
        %v5941 = vpack.c.bf16 %v5693, %v5689
        %v5942 = vpack.c.bf16 %v5698, %v5694
        %v5943 = vpack.c.bf16 %v5699, %v5695
        %v5944 = vpack.c.bf16 %v5700, %v5696
        %v5945 = vpack.c.bf16 %v5701, %v5697
        %v5946 = vpack.c.bf16 %v5706, %v5702
        %v5947 = vpack.c.bf16 %v5707, %v5703
        %v5948 = vpack.c.bf16 %v5708, %v5704
        %v5949 = vpack.c.bf16 %v5709, %v5705
        %v5950 = vpack.c.bf16 %v5714, %v5710
        %v5951 = vpack.c.bf16 %v5715, %v5711
        %v5952 = vpack.c.bf16 %v5716, %v5712
        %v5953 = vpack.c.bf16 %v5717, %v5713
        %v5954 = vpack.c.bf16 %v5722, %v5718
        %v5955 = vpack.c.bf16 %v5723, %v5719
        %v5956 = vpack.c.bf16 %v5724, %v5720
        %v5957 = vpack.c.bf16 %v5725, %v5721
        %v5958 = vpack.c.bf16 %v5730, %v5726
        %v5959 = vpack.c.bf16 %v5731, %v5727
        %v5960 = vpack.c.bf16 %v5732, %v5728
        %v5961 = vpack.c.bf16 %v5733, %v5729
        %v5962 = vpack.c.bf16 %v5738, %v5734
        %v5963 = vpack.c.bf16 %v5739, %v5735
        %v5964 = vpack.c.bf16 %v5740, %v5736
        %v5965 = vpack.c.bf16 %v5741, %v5737
        %v5966 = vpack.c.bf16 %v5746, %v5742
        %v5967 = vpack.c.bf16 %v5747, %v5743
        %v5968 = vpack.c.bf16 %v5748, %v5744
        %v5969 = vpack.c.bf16 %v5749, %v5745
        %v5970 = vpack.c.bf16 %v5754, %v5750
        %v5971 = vpack.c.bf16 %v5755, %v5751
        %v5972 = vpack.c.bf16 %v5756, %v5752
        %v5973 = vpack.c.bf16 %v5757, %v5753
        %v5974 = vpack.c.bf16 %v5762, %v5758
        %v5975 = vpack.c.bf16 %v5763, %v5759
        %v5976 = vpack.c.bf16 %v5764, %v5760
        %v5977 = vpack.c.bf16 %v5765, %v5761
        %v5978 = vpack.c.bf16 %v5770, %v5766
        %v5979 = vpack.c.bf16 %v5771, %v5767
        %v5980 = vpack.c.bf16 %v5772, %v5768
        %v5981 = vpack.c.bf16 %v5773, %v5769
        %v5982 = vpack.c.bf16 %v5778, %v5774
        %v5983 = vpack.c.bf16 %v5779, %v5775
        %v5984 = vpack.c.bf16 %v5780, %v5776
        %v5985 = vpack.c.bf16 %v5781, %v5777
        %v5986 = vpack.c.bf16 %v5786, %v5782
        %v5987 = vpack.c.bf16 %v5787, %v5783
        %v5988 = vpack.c.bf16 %v5788, %v5784
        %v5989 = vpack.c.bf16 %v5789, %v5785
        %v5990 = vpack.c.bf16 %v5794, %v5790
        %v5991 = vpack.c.bf16 %v5795, %v5791
        %v5992 = vpack.c.bf16 %v5796, %v5792
        %v5993 = vpack.c.bf16 %v5797, %v5793
        %v5994 = vpack.c.bf16 %v5802, %v5798
        %v5995 = vpack.c.bf16 %v5803, %v5799
        %v5996 = vpack.c.bf16 %v5804, %v5800
        %v5997 = vpack.c.bf16 %v5805, %v5801
        %v5998 = vpack.c.bf16 %v5810, %v5806
        %v5999 = vpack.c.bf16 %v5811, %v5807
        %v6000 = vpack.c.bf16 %v5812, %v5808
        %v6001 = vpack.c.bf16 %v5813, %v5809
        %v6002 = vpack.c.bf16 %v5818, %v5814
        %v6003 = vpack.c.bf16 %v5819, %v5815
        %v6004 = vpack.c.bf16 %v5820, %v5816
        %v6005 = vpack.c.bf16 %v5821, %v5817
        %v6006 = vpack.c.bf16 %v5826, %v5822
        %v6007 = vpack.c.bf16 %v5827, %v5823
        %v6008 = vpack.c.bf16 %v5828, %v5824
        %v6009 = vpack.c.bf16 %v5829, %v5825
        %v6010 = vpack.c.bf16 %v5834, %v5830
        %v6011 = vpack.c.bf16 %v5835, %v5831
        %v6012 = vpack.c.bf16 %v5836, %v5832
        %v6013 = vpack.c.bf16 %v5837, %v5833
        %v6014 = vpack.c.bf16 %v5842, %v5838
        %v6015 = vpack.c.bf16 %v5843, %v5839
        %v6016 = vpack.c.bf16 %v5844, %v5840
        %v6017 = vpack.c.bf16 %v5845, %v5841
        %v6018 = vpack.c.bf16 %v5850, %v5846
        %v6019 = vpack.c.bf16 %v5851, %v5847
        %v6020 = vpack.c.bf16 %v5852, %v5848
        %v6021 = vpack.c.bf16 %v5853, %v5849
        %v6022 = vpack.c.bf16 %v5858, %v5854
        %v6023 = vpack.c.bf16 %v5859, %v5855
        %v6024 = vpack.c.bf16 %v5860, %v5856
        %v6025 = vpack.c.bf16 %v5861, %v5857
        %v6026 = vpack.c.bf16 %v5866, %v5862
        %v6027 = vpack.c.bf16 %v5867, %v5863
        %v6028 = vpack.c.bf16 %v5868, %v5864
        %v6029 = vpack.c.bf16 %v5869, %v5865
        %v6030 = vpack.c.bf16 %v5874, %v5870
        %v6031 = vpack.c.bf16 %v5875, %v5871
        %v6032 = vpack.c.bf16 %v5876, %v5872
        %v6033 = vpack.c.bf16 %v5877, %v5873
        %v6034 = vpack.c.bf16 %v5882, %v5878
        %v6035 = vpack.c.bf16 %v5883, %v5879
        %v6036 = vpack.c.bf16 %v5884, %v5880
        %v6037 = vpack.c.bf16 %v5885, %v5881
        %v6038 = vpack.c.bf16 %v5890, %v5886
        %v6039 = vpack.c.bf16 %v5891, %v5887
        %v6040 = vpack.c.bf16 %v5892, %v5888
        %v6041 = vpack.c.bf16 %v5893, %v5889
        %v6042 = vpack.c.bf16 %v5898, %v5894
        %v6043 = vpack.c.bf16 %v5899, %v5895
        %v6044 = vpack.c.bf16 %v5900, %v5896
        %v6045 = vpack.c.bf16 %v5901, %v5897
        %v6046 = vpack.c.bf16 %v5906, %v5902
        %v6047 = vpack.c.bf16 %v5907, %v5903
        %v6048 = vpack.c.bf16 %v5908, %v5904
        %v6049 = vpack.c.bf16 %v5909, %v5905
        %v6050 = vpack.c.bf16 %v5914, %v5910
        %v6051 = vpack.c.bf16 %v5915, %v5911
        %v6052 = vpack.c.bf16 %v5916, %v5912
        %v6053 = vpack.c.bf16 %v5917, %v5913
        %v6054 = vpack.c.bf16 %v5922, %v5918
        %v6055 = vpack.c.bf16 %v5923, %v5919
        %v6056 = vpack.c.bf16 %v5924, %v5920
        %v6057 = vpack.c.bf16 %v5925, %v5921
        %v6058 = vpack.c.bf16 %v5930, %v5926
        %v6059 = vpack.c.bf16 %v5931, %v5927
        %v6060 = vpack.c.bf16 %v5932, %v5928
        %v6061 = vpack.c.bf16 %v5933, %v5929
        %v6062 = vld [vmem:[%s4] sm:$0xff]
        %v6063 = vld [vmem:[%s4 + $0x8] sm:$0xff]
        %v6064 = vld [vmem:[%s4 + $0x10] sm:$0xff]
        %v6065 = vld [vmem:[%s4 + $0x18] sm:$0xff]
        %v6066 = vld [vmem:[%s4 + $0x20] sm:$0xff]
        %v6067 = vld [vmem:[%s4 + $0x28] sm:$0xff]
        %v6068 = vld [vmem:[%s4 + $0x30] sm:$0xff]
        %v6069 = vld [vmem:[%s4 + $0x38] sm:$0xff]
        %v6070 = vld [vmem:[%s4 + $0x40] sm:$0xff]
        %v6071 = vld [vmem:[%s4 + $0x48] sm:$0xff]
        %v6072 = vld [vmem:[%s4 + $0x50] sm:$0xff]
        %v6073 = vld [vmem:[%s4 + $0x58] sm:$0xff]
        %v6074 = vld [vmem:[%s4 + $0x60] sm:$0xff]
        %v6075 = vld [vmem:[%s4 + $0x68] sm:$0xff]
        %v6076 = vld [vmem:[%s4 + $0x70] sm:$0xff]
        %v6077 = vld [vmem:[%s4 + $0x78] sm:$0xff]
        %v6078 = vld [vmem:[%s4 + $0x80] sm:$0xff]
        %v6079 = vld [vmem:[%s4 + $0x88] sm:$0xff]
        %v6080 = vld [vmem:[%s4 + $0x90] sm:$0xff]
        %v6081 = vld [vmem:[%s4 + $0x98] sm:$0xff]
        %v6082 = vld [vmem:[%s4 + $0xa0] sm:$0xff]
        %v6083 = vld [vmem:[%s4 + $0xa8] sm:$0xff]
        %v6084 = vld [vmem:[%s4 + $0xb0] sm:$0xff]
        %v6085 = vld [vmem:[%s4 + $0xb8] sm:$0xff]
        %v6086 = vld [vmem:[%s4 + $0xc0] sm:$0xff]
        %v6087 = vld [vmem:[%s4 + $0xc8] sm:$0xff]
        %v6088 = vld [vmem:[%s4 + $0xd0] sm:$0xff]
        %v6089 = vld [vmem:[%s4 + $0xd8] sm:$0xff]
        %v6090 = vld [vmem:[%s4 + $0xe0] sm:$0xff]
        %v6091 = vld [vmem:[%s4 + $0xe8] sm:$0xff]
        %v6092 = vld [vmem:[%s4 + $0xf0] sm:$0xff]
        %v6093 = vld [vmem:[%s4 + $0xf8] sm:$0xff]
        %v6094 = vld [vmem:[%s4 + $0x100] sm:$0xff]
        %v6095 = vld [vmem:[%s4 + $0x108] sm:$0xff]
        %v6096 = vld [vmem:[%s4 + $0x110] sm:$0xff]
        %v6097 = vld [vmem:[%s4 + $0x118] sm:$0xff]
        %v6098 = vld [vmem:[%s4 + $0x120] sm:$0xff]
        %v6099 = vld [vmem:[%s4 + $0x128] sm:$0xff]
        %v6100 = vld [vmem:[%s4 + $0x130] sm:$0xff]
        %v6101 = vld [vmem:[%s4 + $0x138] sm:$0xff]
        %v6102 = vld [vmem:[%s4 + $0x140] sm:$0xff]
        %v6103 = vld [vmem:[%s4 + $0x148] sm:$0xff]
        %v6104 = vld [vmem:[%s4 + $0x150] sm:$0xff]
        %v6105 = vld [vmem:[%s4 + $0x158] sm:$0xff]
        %v6106 = vld [vmem:[%s4 + $0x160] sm:$0xff]
        %v6107 = vld [vmem:[%s4 + $0x168] sm:$0xff]
        %v6108 = vld [vmem:[%s4 + $0x170] sm:$0xff]
        %v6109 = vld [vmem:[%s4 + $0x178] sm:$0xff]
        %v6110 = vld [vmem:[%s4 + $0x180] sm:$0xff]
        %v6111 = vld [vmem:[%s4 + $0x188] sm:$0xff]
        %v6112 = vld [vmem:[%s4 + $0x190] sm:$0xff]
        %v6113 = vld [vmem:[%s4 + $0x198] sm:$0xff]
        %v6114 = vld [vmem:[%s4 + $0x1a0] sm:$0xff]
        %v6115 = vld [vmem:[%s4 + $0x1a8] sm:$0xff]
        %v6116 = vld [vmem:[%s4 + $0x1b0] sm:$0xff]
        %v6117 = vld [vmem:[%s4 + $0x1b8] sm:$0xff]
        %v6118 = vld [vmem:[%s4 + $0x1c0] sm:$0xff]
        %v6119 = vld [vmem:[%s4 + $0x1c8] sm:$0xff]
        %v6120 = vld [vmem:[%s4 + $0x1d0] sm:$0xff]
        %v6121 = vld [vmem:[%s4 + $0x1d8] sm:$0xff]
        %v6122 = vld [vmem:[%s4 + $0x1e0] sm:$0xff]
        %v6123 = vld [vmem:[%s4 + $0x1e8] sm:$0xff]
        %v6124 = vld [vmem:[%s4 + $0x1f0] sm:$0xff]
        %v6125 = vld [vmem:[%s4 + $0x1f8] sm:$0xff]
        %v6126 = vld [vmem:[%s5] sm:$0x3]
        %v6128 = vperm.slane %v6126, 0
        %v6129 = vperm.slane %v6126, 1
        %v6196 = vunpack.c.l.b16 %v6062
        %v6197 = vunpack.c.h.b16 %v6062
        %v6198 = vunpack.c.l.b16 %v6063
        %v6199 = vunpack.c.h.b16 %v6063
        %v6200 = vunpack.c.l.b16 %v6064
        %v6201 = vunpack.c.h.b16 %v6064
        %v6202 = vunpack.c.l.b16 %v6065
        %v6203 = vunpack.c.h.b16 %v6065
        %v6204 = vunpack.c.l.b16 %v6066
        %v6205 = vunpack.c.h.b16 %v6066
        %v6206 = vunpack.c.l.b16 %v6067
        %v6207 = vunpack.c.h.b16 %v6067
        %v6208 = vunpack.c.l.b16 %v6068
        %v6209 = vunpack.c.h.b16 %v6068
        %v6210 = vunpack.c.l.b16 %v6069
        %v6211 = vunpack.c.h.b16 %v6069
        %v6212 = vunpack.c.l.b16 %v6070
        %v6213 = vunpack.c.h.b16 %v6070
        %v6214 = vunpack.c.l.b16 %v6071
        %v6215 = vunpack.c.h.b16 %v6071
        %v6216 = vunpack.c.l.b16 %v6072
        %v6217 = vunpack.c.h.b16 %v6072
        %v6218 = vunpack.c.l.b16 %v6073
        %v6219 = vunpack.c.h.b16 %v6073
        %v6220 = vunpack.c.l.b16 %v6074
        %v6221 = vunpack.c.h.b16 %v6074
        %v6222 = vunpack.c.l.b16 %v6075
        %v6223 = vunpack.c.h.b16 %v6075
        %v6224 = vunpack.c.l.b16 %v6076
        %v6225 = vunpack.c.h.b16 %v6076
        %v6226 = vunpack.c.l.b16 %v6077
        %v6227 = vunpack.c.h.b16 %v6077
        %v6228 = vunpack.c.l.b16 %v6078
        %v6229 = vunpack.c.h.b16 %v6078
        %v6230 = vunpack.c.l.b16 %v6079
        %v6231 = vunpack.c.h.b16 %v6079
        %v6232 = vunpack.c.l.b16 %v6080
        %v6233 = vunpack.c.h.b16 %v6080
        %v6234 = vunpack.c.l.b16 %v6081
        %v6235 = vunpack.c.h.b16 %v6081
        %v6236 = vunpack.c.l.b16 %v6082
        %v6237 = vunpack.c.h.b16 %v6082
        %v6238 = vunpack.c.l.b16 %v6083
        %v6239 = vunpack.c.h.b16 %v6083
        %v6240 = vunpack.c.l.b16 %v6084
        %v6241 = vunpack.c.h.b16 %v6084
        %v6242 = vunpack.c.l.b16 %v6085
        %v6243 = vunpack.c.h.b16 %v6085
        %v6244 = vunpack.c.l.b16 %v6086
        %v6245 = vunpack.c.h.b16 %v6086
        %v6246 = vunpack.c.l.b16 %v6087
        %v6247 = vunpack.c.h.b16 %v6087
        %v6248 = vunpack.c.l.b16 %v6088
        %v6249 = vunpack.c.h.b16 %v6088
        %v6250 = vunpack.c.l.b16 %v6089
        %v6251 = vunpack.c.h.b16 %v6089
        %v6252 = vunpack.c.l.b16 %v6090
        %v6253 = vunpack.c.h.b16 %v6090
        %v6254 = vunpack.c.l.b16 %v6091
        %v6255 = vunpack.c.h.b16 %v6091
        %v6256 = vunpack.c.l.b16 %v6092
        %v6257 = vunpack.c.h.b16 %v6092
        %v6258 = vunpack.c.l.b16 %v6093
        %v6259 = vunpack.c.h.b16 %v6093
        %v6260 = vunpack.c.l.b16 %v6094
        %v6261 = vunpack.c.h.b16 %v6094
        %v6262 = vunpack.c.l.b16 %v6095
        %v6263 = vunpack.c.h.b16 %v6095
        %v6264 = vunpack.c.l.b16 %v6096
        %v6265 = vunpack.c.h.b16 %v6096
        %v6266 = vunpack.c.l.b16 %v6097
        %v6267 = vunpack.c.h.b16 %v6097
        %v6268 = vunpack.c.l.b16 %v6098
        %v6269 = vunpack.c.h.b16 %v6098
        %v6270 = vunpack.c.l.b16 %v6099
        %v6271 = vunpack.c.h.b16 %v6099
        %v6272 = vunpack.c.l.b16 %v6100
        %v6273 = vunpack.c.h.b16 %v6100
        %v6274 = vunpack.c.l.b16 %v6101
        %v6275 = vunpack.c.h.b16 %v6101
        %v6276 = vunpack.c.l.b16 %v6102
        %v6277 = vunpack.c.h.b16 %v6102
        %v6278 = vunpack.c.l.b16 %v6103
        %v6279 = vunpack.c.h.b16 %v6103
        %v6280 = vunpack.c.l.b16 %v6104
        %v6281 = vunpack.c.h.b16 %v6104
        %v6282 = vunpack.c.l.b16 %v6105
        %v6283 = vunpack.c.h.b16 %v6105
        %v6284 = vunpack.c.l.b16 %v6106
        %v6285 = vunpack.c.h.b16 %v6106
        %v6286 = vunpack.c.l.b16 %v6107
        %v6287 = vunpack.c.h.b16 %v6107
        %v6288 = vunpack.c.l.b16 %v6108
        %v6289 = vunpack.c.h.b16 %v6108
        %v6290 = vunpack.c.l.b16 %v6109
        %v6291 = vunpack.c.h.b16 %v6109
        %v6292 = vunpack.c.l.b16 %v6110
        %v6293 = vunpack.c.h.b16 %v6110
        %v6294 = vunpack.c.l.b16 %v6111
        %v6295 = vunpack.c.h.b16 %v6111
        %v6296 = vunpack.c.l.b16 %v6112
        %v6297 = vunpack.c.h.b16 %v6112
        %v6298 = vunpack.c.l.b16 %v6113
        %v6299 = vunpack.c.h.b16 %v6113
        %v6300 = vunpack.c.l.b16 %v6114
        %v6301 = vunpack.c.h.b16 %v6114
        %v6302 = vunpack.c.l.b16 %v6115
        %v6303 = vunpack.c.h.b16 %v6115
        %v6304 = vunpack.c.l.b16 %v6116
        %v6305 = vunpack.c.h.b16 %v6116
        %v6306 = vunpack.c.l.b16 %v6117
        %v6307 = vunpack.c.h.b16 %v6117
        %v6308 = vunpack.c.l.b16 %v6118
        %v6309 = vunpack.c.h.b16 %v6118
        %v6310 = vunpack.c.l.b16 %v6119
        %v6311 = vunpack.c.h.b16 %v6119
        %v6312 = vunpack.c.l.b16 %v6120
        %v6313 = vunpack.c.h.b16 %v6120
        %v6314 = vunpack.c.l.b16 %v6121
        %v6315 = vunpack.c.h.b16 %v6121
        %v6316 = vunpack.c.l.b16 %v6122
        %v6317 = vunpack.c.h.b16 %v6122
        %v6318 = vunpack.c.l.b16 %v6123
        %v6319 = vunpack.c.h.b16 %v6123
        %v6320 = vunpack.c.l.b16 %v6124
        %v6321 = vunpack.c.h.b16 %v6124
        %v6322 = vunpack.c.l.b16 %v6125
        %v6323 = vunpack.c.h.b16 %v6125
        %v6324 = vpack.c.b16 %v6198, %v6196
        %v6325 = vpack.c.b16 %v6199, %v6197
        %v6326 = vpack.c.b16 %v6202, %v6200
        %v6327 = vpack.c.b16 %v6203, %v6201
        %v6328 = vpack.c.b16 %v6206, %v6204
        %v6329 = vpack.c.b16 %v6207, %v6205
        %v6330 = vpack.c.b16 %v6210, %v6208
        %v6331 = vpack.c.b16 %v6211, %v6209
        %v6332 = vpack.c.b16 %v6214, %v6212
        %v6333 = vpack.c.b16 %v6215, %v6213
        %v6334 = vpack.c.b16 %v6218, %v6216
        %v6335 = vpack.c.b16 %v6219, %v6217
        %v6336 = vpack.c.b16 %v6222, %v6220
        %v6337 = vpack.c.b16 %v6223, %v6221
        %v6338 = vpack.c.b16 %v6226, %v6224
        %v6339 = vpack.c.b16 %v6227, %v6225
        %v6340 = vpack.c.b16 %v6230, %v6228
        %v6341 = vpack.c.b16 %v6231, %v6229
        %v6342 = vpack.c.b16 %v6234, %v6232
        %v6343 = vpack.c.b16 %v6235, %v6233
        %v6344 = vpack.c.b16 %v6238, %v6236
        %v6345 = vpack.c.b16 %v6239, %v6237
        %v6346 = vpack.c.b16 %v6242, %v6240
        %v6347 = vpack.c.b16 %v6243, %v6241
        %v6348 = vpack.c.b16 %v6246, %v6244
        %v6349 = vpack.c.b16 %v6247, %v6245
        %v6350 = vpack.c.b16 %v6250, %v6248
        %v6351 = vpack.c.b16 %v6251, %v6249
        %v6352 = vpack.c.b16 %v6254, %v6252
        %v6353 = vpack.c.b16 %v6255, %v6253
        %v6354 = vpack.c.b16 %v6258, %v6256
        %v6355 = vpack.c.b16 %v6259, %v6257
        %v6356 = vpack.c.b16 %v6262, %v6260
        %v6357 = vpack.c.b16 %v6263, %v6261
        %v6358 = vpack.c.b16 %v6266, %v6264
        %v6359 = vpack.c.b16 %v6267, %v6265
        %v6360 = vpack.c.b16 %v6270, %v6268
        %v6361 = vpack.c.b16 %v6271, %v6269
        %v6362 = vpack.c.b16 %v6274, %v6272
        %v6363 = vpack.c.b16 %v6275, %v6273
        %v6364 = vpack.c.b16 %v6278, %v6276
        %v6365 = vpack.c.b16 %v6279, %v6277
        %v6366 = vpack.c.b16 %v6282, %v6280
        %v6367 = vpack.c.b16 %v6283, %v6281
        %v6368 = vpack.c.b16 %v6286, %v6284
        %v6369 = vpack.c.b16 %v6287, %v6285
        %v6370 = vpack.c.b16 %v6290, %v6288
        %v6371 = vpack.c.b16 %v6291, %v6289
        %v6372 = vpack.c.b16 %v6294, %v6292
        %v6373 = vpack.c.b16 %v6295, %v6293
        %v6374 = vpack.c.b16 %v6298, %v6296
        %v6375 = vpack.c.b16 %v6299, %v6297
        %v6376 = vpack.c.b16 %v6302, %v6300
        %v6377 = vpack.c.b16 %v6303, %v6301
        %v6378 = vpack.c.b16 %v6306, %v6304
        %v6379 = vpack.c.b16 %v6307, %v6305
        %v6380 = vpack.c.b16 %v6310, %v6308
        %v6381 = vpack.c.b16 %v6311, %v6309
        %v6382 = vpack.c.b16 %v6314, %v6312
        %v6383 = vpack.c.b16 %v6315, %v6313
        %v6384 = vpack.c.b16 %v6318, %v6316
        %v6385 = vpack.c.b16 %v6319, %v6317
        %v6386 = vpack.c.b16 %v6322, %v6320
        %v6387 = vpack.c.b16 %v6323, %v6321
        %6452 = vmatpush.bf16.msra.mxu0 %v6338
        %6453 = vmatpush.bf16.msra.mxu0 %v6336
        %6454 = vmatpush.bf16.msra.mxu0 %v6334
        %6455 = vmatpush.bf16.msra.mxu0 %v6332
        %6456 = vmatpush.bf16.msra.mxu0 %v6330
        %6457 = vmatpush.bf16.msra.mxu0 %v6328
        %6458 = vmatpush.bf16.msra.mxu0 %v6326
        %6459 = vmatpush.bf16.msra.mxu0 %v6324
        %6460 = vmatmul.bf16.gmra.mxu0 %v5934
        %v6461 = vpop.f32.mrf.mxu0
        %v6462 = vadd.f32 %v6128, %v6461
        %v6463 = vpop.f32.mrf.mxu0
        %v6464 = vadd.f32 %v6128, %v6463
        %6465 = vmatmul.bf16.gmra.mxu0 %v5938
        %v6466 = vpop.f32.mrf.mxu0
        %v6467 = vadd.f32 %v6128, %v6466
        %v6468 = vpop.f32.mrf.mxu0
        %v6469 = vadd.f32 %v6128, %v6468
        %6470 = vmatmul.bf16.gmra.mxu0 %v5942
        %v6471 = vpop.f32.mrf.mxu0
        %v6472 = vadd.f32 %v6128, %v6471
        %v6473 = vpop.f32.mrf.mxu0
        %v6474 = vadd.f32 %v6128, %v6473
        %6475 = vmatmul.bf16.gmra.mxu0 %v5946
        %v6476 = vpop.f32.mrf.mxu0
        %v6477 = vadd.f32 %v6128, %v6476
        %v6478 = vpop.f32.mrf.mxu0
        %v6479 = vadd.f32 %v6128, %v6478
        %6480 = vmatmul.bf16.gmra.mxu0 %v5950
        %v6481 = vpop.f32.mrf.mxu0
        %v6482 = vadd.f32 %v6128, %v6481
        %v6483 = vpop.f32.mrf.mxu0
        %v6484 = vadd.f32 %v6128, %v6483
        %6485 = vmatmul.bf16.gmra.mxu0 %v5954
        %v6486 = vpop.f32.mrf.mxu0
        %v6487 = vadd.f32 %v6128, %v6486
        %v6488 = vpop.f32.mrf.mxu0
        %v6489 = vadd.f32 %v6128, %v6488
        %6490 = vmatmul.bf16.gmra.mxu0 %v5958
        %v6491 = vpop.f32.mrf.mxu0
        %v6492 = vadd.f32 %v6128, %v6491
        %v6493 = vpop.f32.mrf.mxu0
        %v6494 = vadd.f32 %v6128, %v6493
        %6495 = vmatmul.bf16.gmra.mxu0 %v5962
        %v6496 = vpop.f32.mrf.mxu0
        %v6497 = vadd.f32 %v6128, %v6496
        %v6498 = vpop.f32.mrf.mxu0
        %v6499 = vadd.f32 %v6128, %v6498
        %6500 = vmatmul.bf16.gmra.mxu0 %v5966
        %v6501 = vpop.f32.mrf.mxu0
        %v6502 = vadd.f32 %v6128, %v6501
        %v6503 = vpop.f32.mrf.mxu0
        %v6504 = vadd.f32 %v6128, %v6503
        %6505 = vmatmul.bf16.gmra.mxu0 %v5970
        %v6506 = vpop.f32.mrf.mxu0
        %v6507 = vadd.f32 %v6128, %v6506
        %v6508 = vpop.f32.mrf.mxu0
        %v6509 = vadd.f32 %v6128, %v6508
        %6510 = vmatmul.bf16.gmra.mxu0 %v5974
        %v6511 = vpop.f32.mrf.mxu0
        %v6512 = vadd.f32 %v6128, %v6511
        %v6513 = vpop.f32.mrf.mxu0
        %v6514 = vadd.f32 %v6128, %v6513
        %6515 = vmatmul.bf16.gmra.mxu0 %v5978
        %v6516 = vpop.f32.mrf.mxu0
        %v6517 = vadd.f32 %v6128, %v6516
        %v6518 = vpop.f32.mrf.mxu0
        %v6519 = vadd.f32 %v6128, %v6518
        %6520 = vmatmul.bf16.gmra.mxu0 %v5982
        %v6521 = vpop.f32.mrf.mxu0
        %v6522 = vadd.f32 %v6128, %v6521
        %v6523 = vpop.f32.mrf.mxu0
        %v6524 = vadd.f32 %v6128, %v6523
        %6525 = vmatmul.bf16.gmra.mxu0 %v5986
        %v6526 = vpop.f32.mrf.mxu0
        %v6527 = vadd.f32 %v6128, %v6526
        %v6528 = vpop.f32.mrf.mxu0
        %v6529 = vadd.f32 %v6128, %v6528
        %6530 = vmatmul.bf16.gmra.mxu0 %v5990
        %v6531 = vpop.f32.mrf.mxu0
        %v6532 = vadd.f32 %v6128, %v6531
        %v6533 = vpop.f32.mrf.mxu0
        %v6534 = vadd.f32 %v6128, %v6533
        %6535 = vmatmul.bf16.gmra.mxu0 %v5994
        %v6536 = vpop.f32.mrf.mxu0
        %v6537 = vadd.f32 %v6128, %v6536
        %v6538 = vpop.f32.mrf.mxu0
        %v6539 = vadd.f32 %v6128, %v6538
        %6540 = vmatmul.bf16.gmra.mxu0 %v5998
        %v6541 = vpop.f32.mrf.mxu0
        %v6542 = vadd.f32 %v6128, %v6541
        %v6543 = vpop.f32.mrf.mxu0
        %v6544 = vadd.f32 %v6128, %v6543
        %6545 = vmatmul.bf16.gmra.mxu0 %v6002
        %v6546 = vpop.f32.mrf.mxu0
        %v6547 = vadd.f32 %v6128, %v6546
        %v6548 = vpop.f32.mrf.mxu0
        %v6549 = vadd.f32 %v6128, %v6548
        %6550 = vmatmul.bf16.gmra.mxu0 %v6006
        %v6551 = vpop.f32.mrf.mxu0
        %v6552 = vadd.f32 %v6128, %v6551
        %v6553 = vpop.f32.mrf.mxu0
        %v6554 = vadd.f32 %v6128, %v6553
        %6555 = vmatmul.bf16.gmra.mxu0 %v6010
        %v6556 = vpop.f32.mrf.mxu0
        %v6557 = vadd.f32 %v6128, %v6556
        %v6558 = vpop.f32.mrf.mxu0
        %v6559 = vadd.f32 %v6128, %v6558
        %6560 = vmatmul.bf16.gmra.mxu0 %v6014
        %v6561 = vpop.f32.mrf.mxu0
        %v6562 = vadd.f32 %v6128, %v6561
        %v6563 = vpop.f32.mrf.mxu0
        %v6564 = vadd.f32 %v6128, %v6563
        %6565 = vmatmul.bf16.gmra.mxu0 %v6018
        %v6566 = vpop.f32.mrf.mxu0
        %v6567 = vadd.f32 %v6128, %v6566
        %v6568 = vpop.f32.mrf.mxu0
        %v6569 = vadd.f32 %v6128, %v6568
        %6570 = vmatmul.bf16.gmra.mxu0 %v6022
        %v6571 = vpop.f32.mrf.mxu0
        %v6572 = vadd.f32 %v6128, %v6571
        %v6573 = vpop.f32.mrf.mxu0
        %v6574 = vadd.f32 %v6128, %v6573
        %6575 = vmatmul.bf16.gmra.mxu0 %v6026
        %v6576 = vpop.f32.mrf.mxu0
        %v6577 = vadd.f32 %v6128, %v6576
        %v6578 = vpop.f32.mrf.mxu0
        %v6579 = vadd.f32 %v6128, %v6578
        %6580 = vmatmul.bf16.gmra.mxu0 %v6030
        %v6581 = vpop.f32.mrf.mxu0
        %v6582 = vadd.f32 %v6128, %v6581
        %v6583 = vpop.f32.mrf.mxu0
        %v6584 = vadd.f32 %v6128, %v6583
        %6585 = vmatmul.bf16.gmra.mxu0 %v6034
        %v6586 = vpop.f32.mrf.mxu0
        %v6587 = vadd.f32 %v6128, %v6586
        %v6588 = vpop.f32.mrf.mxu0
        %v6589 = vadd.f32 %v6128, %v6588
        %6590 = vmatmul.bf16.gmra.mxu0 %v6038
        %v6591 = vpop.f32.mrf.mxu0
        %v6592 = vadd.f32 %v6128, %v6591
        %v6593 = vpop.f32.mrf.mxu0
        %v6594 = vadd.f32 %v6128, %v6593
        %6595 = vmatmul.bf16.gmra.mxu0 %v6042
        %v6596 = vpop.f32.mrf.mxu0
        %v6597 = vadd.f32 %v6128, %v6596
        %v6598 = vpop.f32.mrf.mxu0
        %v6599 = vadd.f32 %v6128, %v6598
        %6600 = vmatmul.bf16.gmra.mxu0 %v6046
        %v6601 = vpop.f32.mrf.mxu0
        %v6602 = vadd.f32 %v6128, %v6601
        %v6603 = vpop.f32.mrf.mxu0
        %v6604 = vadd.f32 %v6128, %v6603
        %6605 = vmatmul.bf16.gmra.mxu0 %v6050
        %v6606 = vpop.f32.mrf.mxu0
        %v6607 = vadd.f32 %v6128, %v6606
        %v6608 = vpop.f32.mrf.mxu0
        %v6609 = vadd.f32 %v6128, %v6608
        %6610 = vmatmul.bf16.gmra.mxu0 %v6054
        %v6611 = vpop.f32.mrf.mxu0
        %v6612 = vadd.f32 %v6128, %v6611
        %v6613 = vpop.f32.mrf.mxu0
        %v6614 = vadd.f32 %v6128, %v6613
        %6615 = vmatmul.bf16.gmra.mxu0 %v6058
        %v6616 = vpop.f32.mrf.mxu0
        %v6617 = vadd.f32 %v6128, %v6616
        %v6618 = vpop.f32.mrf.mxu0
        %v6619 = vadd.f32 %v6128, %v6618
        %6620 = vdwg.mxu0
        %6621 = vmatpush.bf16.msra.mxu0 %v6354
        %6622 = vmatpush.bf16.msra.mxu0 %v6352
        %6623 = vmatpush.bf16.msra.mxu0 %v6350
        %6624 = vmatpush.bf16.msra.mxu0 %v6348
        %6625 = vmatpush.bf16.msra.mxu0 %v6346
        %6626 = vmatpush.bf16.msra.mxu0 %v6344
        %6627 = vmatpush.bf16.msra.mxu0 %v6342
        %6628 = vmatpush.bf16.msra.mxu0 %v6340
        %6629 = vmatmul.bf16.gmra.mxu0 %v5935
        %v6630 = vpop.f32.mrf.mxu0
        %v6631 = vadd.f32 %v6462, %v6630
        %v6632 = vpop.f32.mrf.mxu0
        %v6633 = vadd.f32 %v6464, %v6632
        %6634 = vmatmul.bf16.gmra.mxu0 %v5939
        %v6635 = vpop.f32.mrf.mxu0
        %v6636 = vadd.f32 %v6467, %v6635
        %v6637 = vpop.f32.mrf.mxu0
        %v6638 = vadd.f32 %v6469, %v6637
        %6639 = vmatmul.bf16.gmra.mxu0 %v5943
        %v6640 = vpop.f32.mrf.mxu0
        %v6641 = vadd.f32 %v6472, %v6640
        %v6642 = vpop.f32.mrf.mxu0
        %v6643 = vadd.f32 %v6474, %v6642
        %6644 = vmatmul.bf16.gmra.mxu0 %v5947
        %v6645 = vpop.f32.mrf.mxu0
        %v6646 = vadd.f32 %v6477, %v6645
        %v6647 = vpop.f32.mrf.mxu0
        %v6648 = vadd.f32 %v6479, %v6647
        %6649 = vmatmul.bf16.gmra.mxu0 %v5951
        %v6650 = vpop.f32.mrf.mxu0
        %v6651 = vadd.f32 %v6482, %v6650
        %v6652 = vpop.f32.mrf.mxu0
        %v6653 = vadd.f32 %v6484, %v6652
        %6654 = vmatmul.bf16.gmra.mxu0 %v5955
        %v6655 = vpop.f32.mrf.mxu0
        %v6656 = vadd.f32 %v6487, %v6655
        %v6657 = vpop.f32.mrf.mxu0
        %v6658 = vadd.f32 %v6489, %v6657
        %6659 = vmatmul.bf16.gmra.mxu0 %v5959
        %v6660 = vpop.f32.mrf.mxu0
        %v6661 = vadd.f32 %v6492, %v6660
        %v6662 = vpop.f32.mrf.mxu0
        %v6663 = vadd.f32 %v6494, %v6662
        %6664 = vmatmul.bf16.gmra.mxu0 %v5963
        %v6665 = vpop.f32.mrf.mxu0
        %v6666 = vadd.f32 %v6497, %v6665
        %v6667 = vpop.f32.mrf.mxu0
        %v6668 = vadd.f32 %v6499, %v6667
        %6669 = vmatmul.bf16.gmra.mxu0 %v5967
        %v6670 = vpop.f32.mrf.mxu0
        %v6671 = vadd.f32 %v6502, %v6670
        %v6672 = vpop.f32.mrf.mxu0
        %v6673 = vadd.f32 %v6504, %v6672
        %6674 = vmatmul.bf16.gmra.mxu0 %v5971
        %v6675 = vpop.f32.mrf.mxu0
        %v6676 = vadd.f32 %v6507, %v6675
        %v6677 = vpop.f32.mrf.mxu0
        %v6678 = vadd.f32 %v6509, %v6677
        %6679 = vmatmul.bf16.gmra.mxu0 %v5975
        %v6680 = vpop.f32.mrf.mxu0
        %v6681 = vadd.f32 %v6512, %v6680
        %v6682 = vpop.f32.mrf.mxu0
        %v6683 = vadd.f32 %v6514, %v6682
        %6684 = vmatmul.bf16.gmra.mxu0 %v5979
        %v6685 = vpop.f32.mrf.mxu0
        %v6686 = vadd.f32 %v6517, %v6685
        %v6687 = vpop.f32.mrf.mxu0
        %v6688 = vadd.f32 %v6519, %v6687
        %6689 = vmatmul.bf16.gmra.mxu0 %v5983
        %v6690 = vpop.f32.mrf.mxu0
        %v6691 = vadd.f32 %v6522, %v6690
        %v6692 = vpop.f32.mrf.mxu0
        %v6693 = vadd.f32 %v6524, %v6692
        %6694 = vmatmul.bf16.gmra.mxu0 %v5987
        %v6695 = vpop.f32.mrf.mxu0
        %v6696 = vadd.f32 %v6527, %v6695
        %v6697 = vpop.f32.mrf.mxu0
        %v6698 = vadd.f32 %v6529, %v6697
        %6699 = vmatmul.bf16.gmra.mxu0 %v5991
        %v6700 = vpop.f32.mrf.mxu0
        %v6701 = vadd.f32 %v6532, %v6700
        %v6702 = vpop.f32.mrf.mxu0
        %v6703 = vadd.f32 %v6534, %v6702
        %6704 = vmatmul.bf16.gmra.mxu0 %v5995
        %v6705 = vpop.f32.mrf.mxu0
        %v6706 = vadd.f32 %v6537, %v6705
        %v6707 = vpop.f32.mrf.mxu0
        %v6708 = vadd.f32 %v6539, %v6707
        %6709 = vmatmul.bf16.gmra.mxu0 %v5999
        %v6710 = vpop.f32.mrf.mxu0
        %v6711 = vadd.f32 %v6542, %v6710
        %v6712 = vpop.f32.mrf.mxu0
        %v6713 = vadd.f32 %v6544, %v6712
        %6714 = vmatmul.bf16.gmra.mxu0 %v6003
        %v6715 = vpop.f32.mrf.mxu0
        %v6716 = vadd.f32 %v6547, %v6715
        %v6717 = vpop.f32.mrf.mxu0
        %v6718 = vadd.f32 %v6549, %v6717
        %6719 = vmatmul.bf16.gmra.mxu0 %v6007
        %v6720 = vpop.f32.mrf.mxu0
        %v6721 = vadd.f32 %v6552, %v6720
        %v6722 = vpop.f32.mrf.mxu0
        %v6723 = vadd.f32 %v6554, %v6722
        %6724 = vmatmul.bf16.gmra.mxu0 %v6011
        %v6725 = vpop.f32.mrf.mxu0
        %v6726 = vadd.f32 %v6557, %v6725
        %v6727 = vpop.f32.mrf.mxu0
        %v6728 = vadd.f32 %v6559, %v6727
        %6729 = vmatmul.bf16.gmra.mxu0 %v6015
        %v6730 = vpop.f32.mrf.mxu0
        %v6731 = vadd.f32 %v6562, %v6730
        %v6732 = vpop.f32.mrf.mxu0
        %v6733 = vadd.f32 %v6564, %v6732
        %6734 = vmatmul.bf16.gmra.mxu0 %v6019
        %v6735 = vpop.f32.mrf.mxu0
        %v6736 = vadd.f32 %v6567, %v6735
        %v6737 = vpop.f32.mrf.mxu0
        %v6738 = vadd.f32 %v6569, %v6737
        %6739 = vmatmul.bf16.gmra.mxu0 %v6023
        %v6740 = vpop.f32.mrf.mxu0
        %v6741 = vadd.f32 %v6572, %v6740
        %v6742 = vpop.f32.mrf.mxu0
        %v6743 = vadd.f32 %v6574, %v6742
        %6744 = vmatmul.bf16.gmra.mxu0 %v6027
        %v6745 = vpop.f32.mrf.mxu0
        %v6746 = vadd.f32 %v6577, %v6745
        %v6747 = vpop.f32.mrf.mxu0
        %v6748 = vadd.f32 %v6579, %v6747
        %6749 = vmatmul.bf16.gmra.mxu0 %v6031
        %v6750 = vpop.f32.mrf.mxu0
        %v6751 = vadd.f32 %v6582, %v6750
        %v6752 = vpop.f32.mrf.mxu0
        %v6753 = vadd.f32 %v6584, %v6752
        %6754 = vmatmul.bf16.gmra.mxu0 %v6035
        %v6755 = vpop.f32.mrf.mxu0
        %v6756 = vadd.f32 %v6587, %v6755
        %v6757 = vpop.f32.mrf.mxu0
        %v6758 = vadd.f32 %v6589, %v6757
        %6759 = vmatmul.bf16.gmra.mxu0 %v6039
        %v6760 = vpop.f32.mrf.mxu0
        %v6761 = vadd.f32 %v6592, %v6760
        %v6762 = vpop.f32.mrf.mxu0
        %v6763 = vadd.f32 %v6594, %v6762
        %6764 = vmatmul.bf16.gmra.mxu0 %v6043
        %v6765 = vpop.f32.mrf.mxu0
        %v6766 = vadd.f32 %v6597, %v6765
        %v6767 = vpop.f32.mrf.mxu0
        %v6768 = vadd.f32 %v6599, %v6767
        %6769 = vmatmul.bf16.gmra.mxu0 %v6047
        %v6770 = vpop.f32.mrf.mxu0
        %v6771 = vadd.f32 %v6602, %v6770
        %v6772 = vpop.f32.mrf.mxu0
        %v6773 = vadd.f32 %v6604, %v6772
        %6774 = vmatmul.bf16.gmra.mxu0 %v6051
        %v6775 = vpop.f32.mrf.mxu0
        %v6776 = vadd.f32 %v6607, %v6775
        %v6777 = vpop.f32.mrf.mxu0
        %v6778 = vadd.f32 %v6609, %v6777
        %6779 = vmatmul.bf16.gmra.mxu0 %v6055
        %v6780 = vpop.f32.mrf.mxu0
        %v6781 = vadd.f32 %v6612, %v6780
        %v6782 = vpop.f32.mrf.mxu0
        %v6783 = vadd.f32 %v6614, %v6782
        %6784 = vmatmul.bf16.gmra.mxu0 %v6059
        %v6785 = vpop.f32.mrf.mxu0
        %v6786 = vadd.f32 %v6617, %v6785
        %v6787 = vpop.f32.mrf.mxu0
        %v6788 = vadd.f32 %v6619, %v6787
        %6789 = vdwg.mxu0
        %6790 = vmatpush.bf16.msra.mxu0 %v6370
        %6791 = vmatpush.bf16.msra.mxu0 %v6368
        %6792 = vmatpush.bf16.msra.mxu0 %v6366
        %6793 = vmatpush.bf16.msra.mxu0 %v6364
        %6794 = vmatpush.bf16.msra.mxu0 %v6362
        %6795 = vmatpush.bf16.msra.mxu0 %v6360
        %6796 = vmatpush.bf16.msra.mxu0 %v6358
        %6797 = vmatpush.bf16.msra.mxu0 %v6356
        %6798 = vmatmul.bf16.gmra.mxu0 %v5936
        %v6799 = vpop.f32.mrf.mxu0
        %v6800 = vadd.f32 %v6631, %v6799
        %v6801 = vpop.f32.mrf.mxu0
        %v6802 = vadd.f32 %v6633, %v6801
        %6803 = vmatmul.bf16.gmra.mxu0 %v5940
        %v6804 = vpop.f32.mrf.mxu0
        %v6805 = vadd.f32 %v6636, %v6804
        %v6806 = vpop.f32.mrf.mxu0
        %v6807 = vadd.f32 %v6638, %v6806
        %6808 = vmatmul.bf16.gmra.mxu0 %v5944
        %v6809 = vpop.f32.mrf.mxu0
        %v6810 = vadd.f32 %v6641, %v6809
        %v6811 = vpop.f32.mrf.mxu0
        %v6812 = vadd.f32 %v6643, %v6811
        %6813 = vmatmul.bf16.gmra.mxu0 %v5948
        %v6814 = vpop.f32.mrf.mxu0
        %v6815 = vadd.f32 %v6646, %v6814
        %v6816 = vpop.f32.mrf.mxu0
        %v6817 = vadd.f32 %v6648, %v6816
        %6818 = vmatmul.bf16.gmra.mxu0 %v5952
        %v6819 = vpop.f32.mrf.mxu0
        %v6820 = vadd.f32 %v6651, %v6819
        %v6821 = vpop.f32.mrf.mxu0
        %v6822 = vadd.f32 %v6653, %v6821
        %6823 = vmatmul.bf16.gmra.mxu0 %v5956
        %v6824 = vpop.f32.mrf.mxu0
        %v6825 = vadd.f32 %v6656, %v6824
        %v6826 = vpop.f32.mrf.mxu0
        %v6827 = vadd.f32 %v6658, %v6826
        %6828 = vmatmul.bf16.gmra.mxu0 %v5960
        %v6829 = vpop.f32.mrf.mxu0
        %v6830 = vadd.f32 %v6661, %v6829
        %v6831 = vpop.f32.mrf.mxu0
        %v6832 = vadd.f32 %v6663, %v6831
        %6833 = vmatmul.bf16.gmra.mxu0 %v5964
        %v6834 = vpop.f32.mrf.mxu0
        %v6835 = vadd.f32 %v6666, %v6834
        %v6836 = vpop.f32.mrf.mxu0
        %v6837 = vadd.f32 %v6668, %v6836
        %6838 = vmatmul.bf16.gmra.mxu0 %v5968
        %v6839 = vpop.f32.mrf.mxu0
        %v6840 = vadd.f32 %v6671, %v6839
        %v6841 = vpop.f32.mrf.mxu0
        %v6842 = vadd.f32 %v6673, %v6841
        %6843 = vmatmul.bf16.gmra.mxu0 %v5972
        %v6844 = vpop.f32.mrf.mxu0
        %v6845 = vadd.f32 %v6676, %v6844
        %v6846 = vpop.f32.mrf.mxu0
        %v6847 = vadd.f32 %v6678, %v6846
        %6848 = vmatmul.bf16.gmra.mxu0 %v5976
        %v6849 = vpop.f32.mrf.mxu0
        %v6850 = vadd.f32 %v6681, %v6849
        %v6851 = vpop.f32.mrf.mxu0
        %v6852 = vadd.f32 %v6683, %v6851
        %6853 = vmatmul.bf16.gmra.mxu0 %v5980
        %v6854 = vpop.f32.mrf.mxu0
        %v6855 = vadd.f32 %v6686, %v6854
        %v6856 = vpop.f32.mrf.mxu0
        %v6857 = vadd.f32 %v6688, %v6856
        %6858 = vmatmul.bf16.gmra.mxu0 %v5984
        %v6859 = vpop.f32.mrf.mxu0
        %v6860 = vadd.f32 %v6691, %v6859
        %v6861 = vpop.f32.mrf.mxu0
        %v6862 = vadd.f32 %v6693, %v6861
        %6863 = vmatmul.bf16.gmra.mxu0 %v5988
        %v6864 = vpop.f32.mrf.mxu0
        %v6865 = vadd.f32 %v6696, %v6864
        %v6866 = vpop.f32.mrf.mxu0
        %v6867 = vadd.f32 %v6698, %v6866
        %6868 = vmatmul.bf16.gmra.mxu0 %v5992
        %v6869 = vpop.f32.mrf.mxu0
        %v6870 = vadd.f32 %v6701, %v6869
        %v6871 = vpop.f32.mrf.mxu0
        %v6872 = vadd.f32 %v6703, %v6871
        %6873 = vmatmul.bf16.gmra.mxu0 %v5996
        %v6874 = vpop.f32.mrf.mxu0
        %v6875 = vadd.f32 %v6706, %v6874
        %v6876 = vpop.f32.mrf.mxu0
        %v6877 = vadd.f32 %v6708, %v6876
        %6878 = vmatmul.bf16.gmra.mxu0 %v6000
        %v6879 = vpop.f32.mrf.mxu0
        %v6880 = vadd.f32 %v6711, %v6879
        %v6881 = vpop.f32.mrf.mxu0
        %v6882 = vadd.f32 %v6713, %v6881
        %6883 = vmatmul.bf16.gmra.mxu0 %v6004
        %v6884 = vpop.f32.mrf.mxu0
        %v6885 = vadd.f32 %v6716, %v6884
        %v6886 = vpop.f32.mrf.mxu0
        %v6887 = vadd.f32 %v6718, %v6886
        %6888 = vmatmul.bf16.gmra.mxu0 %v6008
        %v6889 = vpop.f32.mrf.mxu0
        %v6890 = vadd.f32 %v6721, %v6889
        %v6891 = vpop.f32.mrf.mxu0
        %v6892 = vadd.f32 %v6723, %v6891
        %6893 = vmatmul.bf16.gmra.mxu0 %v6012
        %v6894 = vpop.f32.mrf.mxu0
        %v6895 = vadd.f32 %v6726, %v6894
        %v6896 = vpop.f32.mrf.mxu0
        %v6897 = vadd.f32 %v6728, %v6896
        %6898 = vmatmul.bf16.gmra.mxu0 %v6016
        %v6899 = vpop.f32.mrf.mxu0
        %v6900 = vadd.f32 %v6731, %v6899
        %v6901 = vpop.f32.mrf.mxu0
        %v6902 = vadd.f32 %v6733, %v6901
        %6903 = vmatmul.bf16.gmra.mxu0 %v6020
        %v6904 = vpop.f32.mrf.mxu0
        %v6905 = vadd.f32 %v6736, %v6904
        %v6906 = vpop.f32.mrf.mxu0
        %v6907 = vadd.f32 %v6738, %v6906
        %6908 = vmatmul.bf16.gmra.mxu0 %v6024
        %v6909 = vpop.f32.mrf.mxu0
        %v6910 = vadd.f32 %v6741, %v6909
        %v6911 = vpop.f32.mrf.mxu0
        %v6912 = vadd.f32 %v6743, %v6911
        %6913 = vmatmul.bf16.gmra.mxu0 %v6028
        %v6914 = vpop.f32.mrf.mxu0
        %v6915 = vadd.f32 %v6746, %v6914
        %v6916 = vpop.f32.mrf.mxu0
        %v6917 = vadd.f32 %v6748, %v6916
        %6918 = vmatmul.bf16.gmra.mxu0 %v6032
        %v6919 = vpop.f32.mrf.mxu0
        %v6920 = vadd.f32 %v6751, %v6919
        %v6921 = vpop.f32.mrf.mxu0
        %v6922 = vadd.f32 %v6753, %v6921
        %6923 = vmatmul.bf16.gmra.mxu0 %v6036
        %v6924 = vpop.f32.mrf.mxu0
        %v6925 = vadd.f32 %v6756, %v6924
        %v6926 = vpop.f32.mrf.mxu0
        %v6927 = vadd.f32 %v6758, %v6926
        %6928 = vmatmul.bf16.gmra.mxu0 %v6040
        %v6929 = vpop.f32.mrf.mxu0
        %v6930 = vadd.f32 %v6761, %v6929
        %v6931 = vpop.f32.mrf.mxu0
        %v6932 = vadd.f32 %v6763, %v6931
        %6933 = vmatmul.bf16.gmra.mxu0 %v6044
        %v6934 = vpop.f32.mrf.mxu0
        %v6935 = vadd.f32 %v6766, %v6934
        %v6936 = vpop.f32.mrf.mxu0
        %v6937 = vadd.f32 %v6768, %v6936
        %6938 = vmatmul.bf16.gmra.mxu0 %v6048
        %v6939 = vpop.f32.mrf.mxu0
        %v6940 = vadd.f32 %v6771, %v6939
        %v6941 = vpop.f32.mrf.mxu0
        %v6942 = vadd.f32 %v6773, %v6941
        %6943 = vmatmul.bf16.gmra.mxu0 %v6052
        %v6944 = vpop.f32.mrf.mxu0
        %v6945 = vadd.f32 %v6776, %v6944
        %v6946 = vpop.f32.mrf.mxu0
        %v6947 = vadd.f32 %v6778, %v6946
        %6948 = vmatmul.bf16.gmra.mxu0 %v6056
        %v6949 = vpop.f32.mrf.mxu0
        %v6950 = vadd.f32 %v6781, %v6949
        %v6951 = vpop.f32.mrf.mxu0
        %v6952 = vadd.f32 %v6783, %v6951
        %6953 = vmatmul.bf16.gmra.mxu0 %v6060
        %v6954 = vpop.f32.mrf.mxu0
        %v6955 = vadd.f32 %v6786, %v6954
        %v6956 = vpop.f32.mrf.mxu0
        %v6957 = vadd.f32 %v6788, %v6956
        %6958 = vdwg.mxu0
        %6959 = vmatpush.bf16.msra.mxu0 %v6386
        %6960 = vmatpush.bf16.msra.mxu0 %v6384
        %6961 = vmatpush.bf16.msra.mxu0 %v6382
        %6962 = vmatpush.bf16.msra.mxu0 %v6380
        %6963 = vmatpush.bf16.msra.mxu0 %v6378
        %6964 = vmatpush.bf16.msra.mxu0 %v6376
        %6965 = vmatpush.bf16.msra.mxu0 %v6374
        %6966 = vmatpush.bf16.msra.mxu0 %v6372
        %6967 = vmatmul.bf16.gmra.mxu0 %v5937
        %v6968 = vpop.f32.mrf.mxu0
        %v6969 = vadd.f32 %v6800, %v6968
        %v6970 = vpop.f32.mrf.mxu0
        %v6971 = vadd.f32 %v6802, %v6970
        %6972 = vmatmul.bf16.gmra.mxu0 %v5941
        %v6973 = vpop.f32.mrf.mxu0
        %v6974 = vadd.f32 %v6805, %v6973
        %v6975 = vpop.f32.mrf.mxu0
        %v6976 = vadd.f32 %v6807, %v6975
        %6977 = vmatmul.bf16.gmra.mxu0 %v5945
        %v6978 = vpop.f32.mrf.mxu0
        %v6979 = vadd.f32 %v6810, %v6978
        %v6980 = vpop.f32.mrf.mxu0
        %v6981 = vadd.f32 %v6812, %v6980
        %6982 = vmatmul.bf16.gmra.mxu0 %v5949
        %v6983 = vpop.f32.mrf.mxu0
        %v6984 = vadd.f32 %v6815, %v6983
        %v6985 = vpop.f32.mrf.mxu0
        %v6986 = vadd.f32 %v6817, %v6985
        %6987 = vmatmul.bf16.gmra.mxu0 %v5953
        %v6988 = vpop.f32.mrf.mxu0
        %v6989 = vadd.f32 %v6820, %v6988
        %v6990 = vpop.f32.mrf.mxu0
        %v6991 = vadd.f32 %v6822, %v6990
        %6992 = vmatmul.bf16.gmra.mxu0 %v5957
        %v6993 = vpop.f32.mrf.mxu0
        %v6994 = vadd.f32 %v6825, %v6993
        %v6995 = vpop.f32.mrf.mxu0
        %v6996 = vadd.f32 %v6827, %v6995
        %6997 = vmatmul.bf16.gmra.mxu0 %v5961
        %v6998 = vpop.f32.mrf.mxu0
        %v6999 = vadd.f32 %v6830, %v6998
        %v7000 = vpop.f32.mrf.mxu0
        %v7001 = vadd.f32 %v6832, %v7000
        %7002 = vmatmul.bf16.gmra.mxu0 %v5965
        %v7003 = vpop.f32.mrf.mxu0
        %v7004 = vadd.f32 %v6835, %v7003
        %v7005 = vpop.f32.mrf.mxu0
        %v7006 = vadd.f32 %v6837, %v7005
        %7007 = vmatmul.bf16.gmra.mxu0 %v5969
        %v7008 = vpop.f32.mrf.mxu0
        %v7009 = vadd.f32 %v6840, %v7008
        %v7010 = vpop.f32.mrf.mxu0
        %v7011 = vadd.f32 %v6842, %v7010
        %7012 = vmatmul.bf16.gmra.mxu0 %v5973
        %v7013 = vpop.f32.mrf.mxu0
        %v7014 = vadd.f32 %v6845, %v7013
        %v7015 = vpop.f32.mrf.mxu0
        %v7016 = vadd.f32 %v6847, %v7015
        %7017 = vmatmul.bf16.gmra.mxu0 %v5977
        %v7018 = vpop.f32.mrf.mxu0
        %v7019 = vadd.f32 %v6850, %v7018
        %v7020 = vpop.f32.mrf.mxu0
        %v7021 = vadd.f32 %v6852, %v7020
        %7022 = vmatmul.bf16.gmra.mxu0 %v5981
        %v7023 = vpop.f32.mrf.mxu0
        %v7024 = vadd.f32 %v6855, %v7023
        %v7025 = vpop.f32.mrf.mxu0
        %v7026 = vadd.f32 %v6857, %v7025
        %7027 = vmatmul.bf16.gmra.mxu0 %v5985
        %v7028 = vpop.f32.mrf.mxu0
        %v7029 = vadd.f32 %v6860, %v7028
        %v7030 = vpop.f32.mrf.mxu0
        %v7031 = vadd.f32 %v6862, %v7030
        %7032 = vmatmul.bf16.gmra.mxu0 %v5989
        %v7033 = vpop.f32.mrf.mxu0
        %v7034 = vadd.f32 %v6865, %v7033
        %v7035 = vpop.f32.mrf.mxu0
        %v7036 = vadd.f32 %v6867, %v7035
        %7037 = vmatmul.bf16.gmra.mxu0 %v5993
        %v7038 = vpop.f32.mrf.mxu0
        %v7039 = vadd.f32 %v6870, %v7038
        %v7040 = vpop.f32.mrf.mxu0
        %v7041 = vadd.f32 %v6872, %v7040
        %7042 = vmatmul.bf16.gmra.mxu0 %v5997
        %v7043 = vpop.f32.mrf.mxu0
        %v7044 = vadd.f32 %v6875, %v7043
        %v7045 = vpop.f32.mrf.mxu0
        %v7046 = vadd.f32 %v6877, %v7045
        %7047 = vmatmul.bf16.gmra.mxu0 %v6001
        %v7048 = vpop.f32.mrf.mxu0
        %v7049 = vadd.f32 %v6880, %v7048
        %v7050 = vpop.f32.mrf.mxu0
        %v7051 = vadd.f32 %v6882, %v7050
        %7052 = vmatmul.bf16.gmra.mxu0 %v6005
        %v7053 = vpop.f32.mrf.mxu0
        %v7054 = vadd.f32 %v6885, %v7053
        %v7055 = vpop.f32.mrf.mxu0
        %v7056 = vadd.f32 %v6887, %v7055
        %7057 = vmatmul.bf16.gmra.mxu0 %v6009
        %v7058 = vpop.f32.mrf.mxu0
        %v7059 = vadd.f32 %v6890, %v7058
        %v7060 = vpop.f32.mrf.mxu0
        %v7061 = vadd.f32 %v6892, %v7060
        %7062 = vmatmul.bf16.gmra.mxu0 %v6013
        %v7063 = vpop.f32.mrf.mxu0
        %v7064 = vadd.f32 %v6895, %v7063
        %v7065 = vpop.f32.mrf.mxu0
        %v7066 = vadd.f32 %v6897, %v7065
        %7067 = vmatmul.bf16.gmra.mxu0 %v6017
        %v7068 = vpop.f32.mrf.mxu0
        %v7069 = vadd.f32 %v6900, %v7068
        %v7070 = vpop.f32.mrf.mxu0
        %v7071 = vadd.f32 %v6902, %v7070
        %7072 = vmatmul.bf16.gmra.mxu0 %v6021
        %v7073 = vpop.f32.mrf.mxu0
        %v7074 = vadd.f32 %v6905, %v7073
        %v7075 = vpop.f32.mrf.mxu0
        %v7076 = vadd.f32 %v6907, %v7075
        %7077 = vmatmul.bf16.gmra.mxu0 %v6025
        %v7078 = vpop.f32.mrf.mxu0
        %v7079 = vadd.f32 %v6910, %v7078
        %v7080 = vpop.f32.mrf.mxu0
        %v7081 = vadd.f32 %v6912, %v7080
        %7082 = vmatmul.bf16.gmra.mxu0 %v6029
        %v7083 = vpop.f32.mrf.mxu0
        %v7084 = vadd.f32 %v6915, %v7083
        %v7085 = vpop.f32.mrf.mxu0
        %v7086 = vadd.f32 %v6917, %v7085
        %7087 = vmatmul.bf16.gmra.mxu0 %v6033
        %v7088 = vpop.f32.mrf.mxu0
        %v7089 = vadd.f32 %v6920, %v7088
        %v7090 = vpop.f32.mrf.mxu0
        %v7091 = vadd.f32 %v6922, %v7090
        %7092 = vmatmul.bf16.gmra.mxu0 %v6037
        %v7093 = vpop.f32.mrf.mxu0
        %v7094 = vadd.f32 %v6925, %v7093
        %v7095 = vpop.f32.mrf.mxu0
        %v7096 = vadd.f32 %v6927, %v7095
        %7097 = vmatmul.bf16.gmra.mxu0 %v6041
        %v7098 = vpop.f32.mrf.mxu0
        %v7099 = vadd.f32 %v6930, %v7098
        %v7100 = vpop.f32.mrf.mxu0
        %v7101 = vadd.f32 %v6932, %v7100
        %7102 = vmatmul.bf16.gmra.mxu0 %v6045
        %v7103 = vpop.f32.mrf.mxu0
        %v7104 = vadd.f32 %v6935, %v7103
        %v7105 = vpop.f32.mrf.mxu0
        %v7106 = vadd.f32 %v6937, %v7105
        %7107 = vmatmul.bf16.gmra.mxu0 %v6049
        %v7108 = vpop.f32.mrf.mxu0
        %v7109 = vadd.f32 %v6940, %v7108
        %v7110 = vpop.f32.mrf.mxu0
        %v7111 = vadd.f32 %v6942, %v7110
        %7112 = vmatmul.bf16.gmra.mxu0 %v6053
        %v7113 = vpop.f32.mrf.mxu0
        %v7114 = vadd.f32 %v6945, %v7113
        %v7115 = vpop.f32.mrf.mxu0
        %v7116 = vadd.f32 %v6947, %v7115
        %7117 = vmatmul.bf16.gmra.mxu0 %v6057
        %v7118 = vpop.f32.mrf.mxu0
        %v7119 = vadd.f32 %v6950, %v7118
        %v7120 = vpop.f32.mrf.mxu0
        %v7121 = vadd.f32 %v6952, %v7120
        %7122 = vmatmul.bf16.gmra.mxu0 %v6061
        %v7123 = vpop.f32.mrf.mxu0
        %v7124 = vadd.f32 %v6955, %v7123
        %v7125 = vpop.f32.mrf.mxu0
        %v7126 = vadd.f32 %v6957, %v7125
        %7127 = vdwg.mxu0
        %7128 = vmatpush.bf16.msra.mxu0 %v6339
        %7129 = vmatpush.bf16.msra.mxu0 %v6337
        %7130 = vmatpush.bf16.msra.mxu0 %v6335
        %7131 = vmatpush.bf16.msra.mxu0 %v6333
        %7132 = vmatpush.bf16.msra.mxu0 %v6331
        %7133 = vmatpush.bf16.msra.mxu0 %v6329
        %7134 = vmatpush.bf16.msra.mxu0 %v6327
        %7135 = vmatpush.bf16.msra.mxu0 %v6325
        %7136 = vmatmul.bf16.gmra.mxu0 %v5934
        %v7137 = vpop.f32.mrf.mxu0
        %v7138 = vadd.f32 %v6129, %v7137
        %v7139 = vpop.f32.mrf.mxu0
        %v7140 = vadd.f32 %v6129, %v7139
        %7141 = vmatmul.bf16.gmra.mxu0 %v5938
        %v7142 = vpop.f32.mrf.mxu0
        %v7143 = vadd.f32 %v6129, %v7142
        %v7144 = vpop.f32.mrf.mxu0
        %v7145 = vadd.f32 %v6129, %v7144
        %7146 = vmatmul.bf16.gmra.mxu0 %v5942
        %v7147 = vpop.f32.mrf.mxu0
        %v7148 = vadd.f32 %v6129, %v7147
        %v7149 = vpop.f32.mrf.mxu0
        %v7150 = vadd.f32 %v6129, %v7149
        %7151 = vmatmul.bf16.gmra.mxu0 %v5946
        %v7152 = vpop.f32.mrf.mxu0
        %v7153 = vadd.f32 %v6129, %v7152
        %v7154 = vpop.f32.mrf.mxu0
        %v7155 = vadd.f32 %v6129, %v7154
        %7156 = vmatmul.bf16.gmra.mxu0 %v5950
        %v7157 = vpop.f32.mrf.mxu0
        %v7158 = vadd.f32 %v6129, %v7157
        %v7159 = vpop.f32.mrf.mxu0
        %v7160 = vadd.f32 %v6129, %v7159
        %7161 = vmatmul.bf16.gmra.mxu0 %v5954
        %v7162 = vpop.f32.mrf.mxu0
        %v7163 = vadd.f32 %v6129, %v7162
        %v7164 = vpop.f32.mrf.mxu0
        %v7165 = vadd.f32 %v6129, %v7164
        %7166 = vmatmul.bf16.gmra.mxu0 %v5958
        %v7167 = vpop.f32.mrf.mxu0
        %v7168 = vadd.f32 %v6129, %v7167
        %v7169 = vpop.f32.mrf.mxu0
        %v7170 = vadd.f32 %v6129, %v7169
        %7171 = vmatmul.bf16.gmra.mxu0 %v5962
        %v7172 = vpop.f32.mrf.mxu0
        %v7173 = vadd.f32 %v6129, %v7172
        %v7174 = vpop.f32.mrf.mxu0
        %v7175 = vadd.f32 %v6129, %v7174
        %7176 = vmatmul.bf16.gmra.mxu0 %v5966
        %v7177 = vpop.f32.mrf.mxu0
        %v7178 = vadd.f32 %v6129, %v7177
        %v7179 = vpop.f32.mrf.mxu0
        %v7180 = vadd.f32 %v6129, %v7179
        %7181 = vmatmul.bf16.gmra.mxu0 %v5970
        %v7182 = vpop.f32.mrf.mxu0
        %v7183 = vadd.f32 %v6129, %v7182
        %v7184 = vpop.f32.mrf.mxu0
        %v7185 = vadd.f32 %v6129, %v7184
        %7186 = vmatmul.bf16.gmra.mxu0 %v5974
        %v7187 = vpop.f32.mrf.mxu0
        %v7188 = vadd.f32 %v6129, %v7187
        %v7189 = vpop.f32.mrf.mxu0
        %v7190 = vadd.f32 %v6129, %v7189
        %7191 = vmatmul.bf16.gmra.mxu0 %v5978
        %v7192 = vpop.f32.mrf.mxu0
        %v7193 = vadd.f32 %v6129, %v7192
        %v7194 = vpop.f32.mrf.mxu0
        %v7195 = vadd.f32 %v6129, %v7194
        %7196 = vmatmul.bf16.gmra.mxu0 %v5982
        %v7197 = vpop.f32.mrf.mxu0
        %v7198 = vadd.f32 %v6129, %v7197
        %v7199 = vpop.f32.mrf.mxu0
        %v7200 = vadd.f32 %v6129, %v7199
        %7201 = vmatmul.bf16.gmra.mxu0 %v5986
        %v7202 = vpop.f32.mrf.mxu0
        %v7203 = vadd.f32 %v6129, %v7202
        %v7204 = vpop.f32.mrf.mxu0
        %v7205 = vadd.f32 %v6129, %v7204
        %7206 = vmatmul.bf16.gmra.mxu0 %v5990
        %v7207 = vpop.f32.mrf.mxu0
        %v7208 = vadd.f32 %v6129, %v7207
        %v7209 = vpop.f32.mrf.mxu0
        %v7210 = vadd.f32 %v6129, %v7209
        %7211 = vmatmul.bf16.gmra.mxu0 %v5994
        %v7212 = vpop.f32.mrf.mxu0
        %v7213 = vadd.f32 %v6129, %v7212
        %v7214 = vpop.f32.mrf.mxu0
        %v7215 = vadd.f32 %v6129, %v7214
        %7216 = vmatmul.bf16.gmra.mxu0 %v5998
        %v7217 = vpop.f32.mrf.mxu0
        %v7218 = vadd.f32 %v6129, %v7217
        %v7219 = vpop.f32.mrf.mxu0
        %v7220 = vadd.f32 %v6129, %v7219
        %7221 = vmatmul.bf16.gmra.mxu0 %v6002
        %v7222 = vpop.f32.mrf.mxu0
        %v7223 = vadd.f32 %v6129, %v7222
        %v7224 = vpop.f32.mrf.mxu0
        %v7225 = vadd.f32 %v6129, %v7224
        %7226 = vmatmul.bf16.gmra.mxu0 %v6006
        %v7227 = vpop.f32.mrf.mxu0
        %v7228 = vadd.f32 %v6129, %v7227
        %v7229 = vpop.f32.mrf.mxu0
        %v7230 = vadd.f32 %v6129, %v7229
        %7231 = vmatmul.bf16.gmra.mxu0 %v6010
        %v7232 = vpop.f32.mrf.mxu0
        %v7233 = vadd.f32 %v6129, %v7232
        %v7234 = vpop.f32.mrf.mxu0
        %v7235 = vadd.f32 %v6129, %v7234
        %7236 = vmatmul.bf16.gmra.mxu0 %v6014
        %v7237 = vpop.f32.mrf.mxu0
        %v7238 = vadd.f32 %v6129, %v7237
        %v7239 = vpop.f32.mrf.mxu0
        %v7240 = vadd.f32 %v6129, %v7239
        %7241 = vmatmul.bf16.gmra.mxu0 %v6018
        %v7242 = vpop.f32.mrf.mxu0
        %v7243 = vadd.f32 %v6129, %v7242
        %v7244 = vpop.f32.mrf.mxu0
        %v7245 = vadd.f32 %v6129, %v7244
        %7246 = vmatmul.bf16.gmra.mxu0 %v6022
        %v7247 = vpop.f32.mrf.mxu0
        %v7248 = vadd.f32 %v6129, %v7247
        %v7249 = vpop.f32.mrf.mxu0
        %v7250 = vadd.f32 %v6129, %v7249
        %7251 = vmatmul.bf16.gmra.mxu0 %v6026
        %v7252 = vpop.f32.mrf.mxu0
        %v7253 = vadd.f32 %v6129, %v7252
        %v7254 = vpop.f32.mrf.mxu0
        %v7255 = vadd.f32 %v6129, %v7254
        %7256 = vmatmul.bf16.gmra.mxu0 %v6030
        %v7257 = vpop.f32.mrf.mxu0
        %v7258 = vadd.f32 %v6129, %v7257
        %v7259 = vpop.f32.mrf.mxu0
        %v7260 = vadd.f32 %v6129, %v7259
        %7261 = vmatmul.bf16.gmra.mxu0 %v6034
        %v7262 = vpop.f32.mrf.mxu0
        %v7263 = vadd.f32 %v6129, %v7262
        %v7264 = vpop.f32.mrf.mxu0
        %v7265 = vadd.f32 %v6129, %v7264
        %7266 = vmatmul.bf16.gmra.mxu0 %v6038
        %v7267 = vpop.f32.mrf.mxu0
        %v7268 = vadd.f32 %v6129, %v7267
        %v7269 = vpop.f32.mrf.mxu0
        %v7270 = vadd.f32 %v6129, %v7269
        %7271 = vmatmul.bf16.gmra.mxu0 %v6042
        %v7272 = vpop.f32.mrf.mxu0
        %v7273 = vadd.f32 %v6129, %v7272
        %v7274 = vpop.f32.mrf.mxu0
        %v7275 = vadd.f32 %v6129, %v7274
        %7276 = vmatmul.bf16.gmra.mxu0 %v6046
        %v7277 = vpop.f32.mrf.mxu0
        %v7278 = vadd.f32 %v6129, %v7277
        %v7279 = vpop.f32.mrf.mxu0
        %v7280 = vadd.f32 %v6129, %v7279
        %7281 = vmatmul.bf16.gmra.mxu0 %v6050
        %v7282 = vpop.f32.mrf.mxu0
        %v7283 = vadd.f32 %v6129, %v7282
        %v7284 = vpop.f32.mrf.mxu0
        %v7285 = vadd.f32 %v6129, %v7284
        %7286 = vmatmul.bf16.gmra.mxu0 %v6054
        %v7287 = vpop.f32.mrf.mxu0
        %v7288 = vadd.f32 %v6129, %v7287
        %v7289 = vpop.f32.mrf.mxu0
        %v7290 = vadd.f32 %v6129, %v7289
        %7291 = vmatmul.bf16.gmra.mxu0 %v6058
        %v7292 = vpop.f32.mrf.mxu0
        %v7293 = vadd.f32 %v6129, %v7292
        %v7294 = vpop.f32.mrf.mxu0
        %v7295 = vadd.f32 %v6129, %v7294
        %7296 = vdwg.mxu0
        %7297 = vmatpush.bf16.msra.mxu0 %v6355
        %7298 = vmatpush.bf16.msra.mxu0 %v6353
        %7299 = vmatpush.bf16.msra.mxu0 %v6351
        %7300 = vmatpush.bf16.msra.mxu0 %v6349
        %7301 = vmatpush.bf16.msra.mxu0 %v6347
        %7302 = vmatpush.bf16.msra.mxu0 %v6345
        %7303 = vmatpush.bf16.msra.mxu0 %v6343
        %7304 = vmatpush.bf16.msra.mxu0 %v6341
        %7305 = vmatmul.bf16.gmra.mxu0 %v5935
        %v7306 = vpop.f32.mrf.mxu0
        %v7307 = vadd.f32 %v7138, %v7306
        %v7308 = vpop.f32.mrf.mxu0
        %v7309 = vadd.f32 %v7140, %v7308
        %7310 = vmatmul.bf16.gmra.mxu0 %v5939
        %v7311 = vpop.f32.mrf.mxu0
        %v7312 = vadd.f32 %v7143, %v7311
        %v7313 = vpop.f32.mrf.mxu0
        %v7314 = vadd.f32 %v7145, %v7313
        %7315 = vmatmul.bf16.gmra.mxu0 %v5943
        %v7316 = vpop.f32.mrf.mxu0
        %v7317 = vadd.f32 %v7148, %v7316
        %v7318 = vpop.f32.mrf.mxu0
        %v7319 = vadd.f32 %v7150, %v7318
        %7320 = vmatmul.bf16.gmra.mxu0 %v5947
        %v7321 = vpop.f32.mrf.mxu0
        %v7322 = vadd.f32 %v7153, %v7321
        %v7323 = vpop.f32.mrf.mxu0
        %v7324 = vadd.f32 %v7155, %v7323
        %7325 = vmatmul.bf16.gmra.mxu0 %v5951
        %v7326 = vpop.f32.mrf.mxu0
        %v7327 = vadd.f32 %v7158, %v7326
        %v7328 = vpop.f32.mrf.mxu0
        %v7329 = vadd.f32 %v7160, %v7328
        %7330 = vmatmul.bf16.gmra.mxu0 %v5955
        %v7331 = vpop.f32.mrf.mxu0
        %v7332 = vadd.f32 %v7163, %v7331
        %v7333 = vpop.f32.mrf.mxu0
        %v7334 = vadd.f32 %v7165, %v7333
        %7335 = vmatmul.bf16.gmra.mxu0 %v5959
        %v7336 = vpop.f32.mrf.mxu0
        %v7337 = vadd.f32 %v7168, %v7336
        %v7338 = vpop.f32.mrf.mxu0
        %v7339 = vadd.f32 %v7170, %v7338
        %7340 = vmatmul.bf16.gmra.mxu0 %v5963
        %v7341 = vpop.f32.mrf.mxu0
        %v7342 = vadd.f32 %v7173, %v7341
        %v7343 = vpop.f32.mrf.mxu0
        %v7344 = vadd.f32 %v7175, %v7343
        %7345 = vmatmul.bf16.gmra.mxu0 %v5967
        %v7346 = vpop.f32.mrf.mxu0
        %v7347 = vadd.f32 %v7178, %v7346
        %v7348 = vpop.f32.mrf.mxu0
        %v7349 = vadd.f32 %v7180, %v7348
        %7350 = vmatmul.bf16.gmra.mxu0 %v5971
        %v7351 = vpop.f32.mrf.mxu0
        %v7352 = vadd.f32 %v7183, %v7351
        %v7353 = vpop.f32.mrf.mxu0
        %v7354 = vadd.f32 %v7185, %v7353
        %7355 = vmatmul.bf16.gmra.mxu0 %v5975
        %v7356 = vpop.f32.mrf.mxu0
        %v7357 = vadd.f32 %v7188, %v7356
        %v7358 = vpop.f32.mrf.mxu0
        %v7359 = vadd.f32 %v7190, %v7358
        %7360 = vmatmul.bf16.gmra.mxu0 %v5979
        %v7361 = vpop.f32.mrf.mxu0
        %v7362 = vadd.f32 %v7193, %v7361
        %v7363 = vpop.f32.mrf.mxu0
        %v7364 = vadd.f32 %v7195, %v7363
        %7365 = vmatmul.bf16.gmra.mxu0 %v5983
        %v7366 = vpop.f32.mrf.mxu0
        %v7367 = vadd.f32 %v7198, %v7366
        %v7368 = vpop.f32.mrf.mxu0
        %v7369 = vadd.f32 %v7200, %v7368
        %7370 = vmatmul.bf16.gmra.mxu0 %v5987
        %v7371 = vpop.f32.mrf.mxu0
        %v7372 = vadd.f32 %v7203, %v7371
        %v7373 = vpop.f32.mrf.mxu0
        %v7374 = vadd.f32 %v7205, %v7373
        %7375 = vmatmul.bf16.gmra.mxu0 %v5991
        %v7376 = vpop.f32.mrf.mxu0
        %v7377 = vadd.f32 %v7208, %v7376
        %v7378 = vpop.f32.mrf.mxu0
        %v7379 = vadd.f32 %v7210, %v7378
        %7380 = vmatmul.bf16.gmra.mxu0 %v5995
        %v7381 = vpop.f32.mrf.mxu0
        %v7382 = vadd.f32 %v7213, %v7381
        %v7383 = vpop.f32.mrf.mxu0
        %v7384 = vadd.f32 %v7215, %v7383
        %7385 = vmatmul.bf16.gmra.mxu0 %v5999
        %v7386 = vpop.f32.mrf.mxu0
        %v7387 = vadd.f32 %v7218, %v7386
        %v7388 = vpop.f32.mrf.mxu0
        %v7389 = vadd.f32 %v7220, %v7388
        %7390 = vmatmul.bf16.gmra.mxu0 %v6003
        %v7391 = vpop.f32.mrf.mxu0
        %v7392 = vadd.f32 %v7223, %v7391
        %v7393 = vpop.f32.mrf.mxu0
        %v7394 = vadd.f32 %v7225, %v7393
        %7395 = vmatmul.bf16.gmra.mxu0 %v6007
        %v7396 = vpop.f32.mrf.mxu0
        %v7397 = vadd.f32 %v7228, %v7396
        %v7398 = vpop.f32.mrf.mxu0
        %v7399 = vadd.f32 %v7230, %v7398
        %7400 = vmatmul.bf16.gmra.mxu0 %v6011
        %v7401 = vpop.f32.mrf.mxu0
        %v7402 = vadd.f32 %v7233, %v7401
        %v7403 = vpop.f32.mrf.mxu0
        %v7404 = vadd.f32 %v7235, %v7403
        %7405 = vmatmul.bf16.gmra.mxu0 %v6015
        %v7406 = vpop.f32.mrf.mxu0
        %v7407 = vadd.f32 %v7238, %v7406
        %v7408 = vpop.f32.mrf.mxu0
        %v7409 = vadd.f32 %v7240, %v7408
        %7410 = vmatmul.bf16.gmra.mxu0 %v6019
        %v7411 = vpop.f32.mrf.mxu0
        %v7412 = vadd.f32 %v7243, %v7411
        %v7413 = vpop.f32.mrf.mxu0
        %v7414 = vadd.f32 %v7245, %v7413
        %7415 = vmatmul.bf16.gmra.mxu0 %v6023
        %v7416 = vpop.f32.mrf.mxu0
        %v7417 = vadd.f32 %v7248, %v7416
        %v7418 = vpop.f32.mrf.mxu0
        %v7419 = vadd.f32 %v7250, %v7418
        %7420 = vmatmul.bf16.gmra.mxu0 %v6027
        %v7421 = vpop.f32.mrf.mxu0
        %v7422 = vadd.f32 %v7253, %v7421
        %v7423 = vpop.f32.mrf.mxu0
        %v7424 = vadd.f32 %v7255, %v7423
        %7425 = vmatmul.bf16.gmra.mxu0 %v6031
        %v7426 = vpop.f32.mrf.mxu0
        %v7427 = vadd.f32 %v7258, %v7426
        %v7428 = vpop.f32.mrf.mxu0
        %v7429 = vadd.f32 %v7260, %v7428
        %7430 = vmatmul.bf16.gmra.mxu0 %v6035
        %v7431 = vpop.f32.mrf.mxu0
        %v7432 = vadd.f32 %v7263, %v7431
        %v7433 = vpop.f32.mrf.mxu0
        %v7434 = vadd.f32 %v7265, %v7433
        %7435 = vmatmul.bf16.gmra.mxu0 %v6039
        %v7436 = vpop.f32.mrf.mxu0
        %v7437 = vadd.f32 %v7268, %v7436
        %v7438 = vpop.f32.mrf.mxu0
        %v7439 = vadd.f32 %v7270, %v7438
        %7440 = vmatmul.bf16.gmra.mxu0 %v6043
        %v7441 = vpop.f32.mrf.mxu0
        %v7442 = vadd.f32 %v7273, %v7441
        %v7443 = vpop.f32.mrf.mxu0
        %v7444 = vadd.f32 %v7275, %v7443
        %7445 = vmatmul.bf16.gmra.mxu0 %v6047
        %v7446 = vpop.f32.mrf.mxu0
        %v7447 = vadd.f32 %v7278, %v7446
        %v7448 = vpop.f32.mrf.mxu0
        %v7449 = vadd.f32 %v7280, %v7448
        %7450 = vmatmul.bf16.gmra.mxu0 %v6051
        %v7451 = vpop.f32.mrf.mxu0
        %v7452 = vadd.f32 %v7283, %v7451
        %v7453 = vpop.f32.mrf.mxu0
        %v7454 = vadd.f32 %v7285, %v7453
        %7455 = vmatmul.bf16.gmra.mxu0 %v6055
        %v7456 = vpop.f32.mrf.mxu0
        %v7457 = vadd.f32 %v7288, %v7456
        %v7458 = vpop.f32.mrf.mxu0
        %v7459 = vadd.f32 %v7290, %v7458
        %7460 = vmatmul.bf16.gmra.mxu0 %v6059
        %v7461 = vpop.f32.mrf.mxu0
        %v7462 = vadd.f32 %v7293, %v7461
        %v7463 = vpop.f32.mrf.mxu0
        %v7464 = vadd.f32 %v7295, %v7463
        %7465 = vdwg.mxu0
        %7466 = vmatpush.bf16.msra.mxu0 %v6371
        %7467 = vmatpush.bf16.msra.mxu0 %v6369
        %7468 = vmatpush.bf16.msra.mxu0 %v6367
        %7469 = vmatpush.bf16.msra.mxu0 %v6365
        %7470 = vmatpush.bf16.msra.mxu0 %v6363
        %7471 = vmatpush.bf16.msra.mxu0 %v6361
        %7472 = vmatpush.bf16.msra.mxu0 %v6359
        %7473 = vmatpush.bf16.msra.mxu0 %v6357
        %7474 = vmatmul.bf16.gmra.mxu0 %v5936
        %v7475 = vpop.f32.mrf.mxu0
        %v7476 = vadd.f32 %v7307, %v7475
        %v7477 = vpop.f32.mrf.mxu0
        %v7478 = vadd.f32 %v7309, %v7477
        %7479 = vmatmul.bf16.gmra.mxu0 %v5940
        %v7480 = vpop.f32.mrf.mxu0
        %v7481 = vadd.f32 %v7312, %v7480
        %v7482 = vpop.f32.mrf.mxu0
        %v7483 = vadd.f32 %v7314, %v7482
        %7484 = vmatmul.bf16.gmra.mxu0 %v5944
        %v7485 = vpop.f32.mrf.mxu0
        %v7486 = vadd.f32 %v7317, %v7485
        %v7487 = vpop.f32.mrf.mxu0
        %v7488 = vadd.f32 %v7319, %v7487
        %7489 = vmatmul.bf16.gmra.mxu0 %v5948
        %v7490 = vpop.f32.mrf.mxu0
        %v7491 = vadd.f32 %v7322, %v7490
        %v7492 = vpop.f32.mrf.mxu0
        %v7493 = vadd.f32 %v7324, %v7492
        %7494 = vmatmul.bf16.gmra.mxu0 %v5952
        %v7495 = vpop.f32.mrf.mxu0
        %v7496 = vadd.f32 %v7327, %v7495
        %v7497 = vpop.f32.mrf.mxu0
        %v7498 = vadd.f32 %v7329, %v7497
        %7499 = vmatmul.bf16.gmra.mxu0 %v5956
        %v7500 = vpop.f32.mrf.mxu0
        %v7501 = vadd.f32 %v7332, %v7500
        %v7502 = vpop.f32.mrf.mxu0
        %v7503 = vadd.f32 %v7334, %v7502
        %7504 = vmatmul.bf16.gmra.mxu0 %v5960
        %v7505 = vpop.f32.mrf.mxu0
        %v7506 = vadd.f32 %v7337, %v7505
        %v7507 = vpop.f32.mrf.mxu0
        %v7508 = vadd.f32 %v7339, %v7507
        %7509 = vmatmul.bf16.gmra.mxu0 %v5964
        %v7510 = vpop.f32.mrf.mxu0
        %v7511 = vadd.f32 %v7342, %v7510
        %v7512 = vpop.f32.mrf.mxu0
        %v7513 = vadd.f32 %v7344, %v7512
        %7514 = vmatmul.bf16.gmra.mxu0 %v5968
        %v7515 = vpop.f32.mrf.mxu0
        %v7516 = vadd.f32 %v7347, %v7515
        %v7517 = vpop.f32.mrf.mxu0
        %v7518 = vadd.f32 %v7349, %v7517
        %7519 = vmatmul.bf16.gmra.mxu0 %v5972
        %v7520 = vpop.f32.mrf.mxu0
        %v7521 = vadd.f32 %v7352, %v7520
        %v7522 = vpop.f32.mrf.mxu0
        %v7523 = vadd.f32 %v7354, %v7522
        %7524 = vmatmul.bf16.gmra.mxu0 %v5976
        %v7525 = vpop.f32.mrf.mxu0
        %v7526 = vadd.f32 %v7357, %v7525
        %v7527 = vpop.f32.mrf.mxu0
        %v7528 = vadd.f32 %v7359, %v7527
        %7529 = vmatmul.bf16.gmra.mxu0 %v5980
        %v7530 = vpop.f32.mrf.mxu0
        %v7531 = vadd.f32 %v7362, %v7530
        %v7532 = vpop.f32.mrf.mxu0
        %v7533 = vadd.f32 %v7364, %v7532
        %7534 = vmatmul.bf16.gmra.mxu0 %v5984
        %v7535 = vpop.f32.mrf.mxu0
        %v7536 = vadd.f32 %v7367, %v7535
        %v7537 = vpop.f32.mrf.mxu0
        %v7538 = vadd.f32 %v7369, %v7537
        %7539 = vmatmul.bf16.gmra.mxu0 %v5988
        %v7540 = vpop.f32.mrf.mxu0
        %v7541 = vadd.f32 %v7372, %v7540
        %v7542 = vpop.f32.mrf.mxu0
        %v7543 = vadd.f32 %v7374, %v7542
        %7544 = vmatmul.bf16.gmra.mxu0 %v5992
        %v7545 = vpop.f32.mrf.mxu0
        %v7546 = vadd.f32 %v7377, %v7545
        %v7547 = vpop.f32.mrf.mxu0
        %v7548 = vadd.f32 %v7379, %v7547
        %7549 = vmatmul.bf16.gmra.mxu0 %v5996
        %v7550 = vpop.f32.mrf.mxu0
        %v7551 = vadd.f32 %v7382, %v7550
        %v7552 = vpop.f32.mrf.mxu0
        %v7553 = vadd.f32 %v7384, %v7552
        %7554 = vmatmul.bf16.gmra.mxu0 %v6000
        %v7555 = vpop.f32.mrf.mxu0
        %v7556 = vadd.f32 %v7387, %v7555
        %v7557 = vpop.f32.mrf.mxu0
        %v7558 = vadd.f32 %v7389, %v7557
        %7559 = vmatmul.bf16.gmra.mxu0 %v6004
        %v7560 = vpop.f32.mrf.mxu0
        %v7561 = vadd.f32 %v7392, %v7560
        %v7562 = vpop.f32.mrf.mxu0
        %v7563 = vadd.f32 %v7394, %v7562
        %7564 = vmatmul.bf16.gmra.mxu0 %v6008
        %v7565 = vpop.f32.mrf.mxu0
        %v7566 = vadd.f32 %v7397, %v7565
        %v7567 = vpop.f32.mrf.mxu0
        %v7568 = vadd.f32 %v7399, %v7567
        %7569 = vmatmul.bf16.gmra.mxu0 %v6012
        %v7570 = vpop.f32.mrf.mxu0
        %v7571 = vadd.f32 %v7402, %v7570
        %v7572 = vpop.f32.mrf.mxu0
        %v7573 = vadd.f32 %v7404, %v7572
        %7574 = vmatmul.bf16.gmra.mxu0 %v6016
        %v7575 = vpop.f32.mrf.mxu0
        %v7576 = vadd.f32 %v7407, %v7575
        %v7577 = vpop.f32.mrf.mxu0
        %v7578 = vadd.f32 %v7409, %v7577
        %7579 = vmatmul.bf16.gmra.mxu0 %v6020
        %v7580 = vpop.f32.mrf.mxu0
        %v7581 = vadd.f32 %v7412, %v7580
        %v7582 = vpop.f32.mrf.mxu0
        %v7583 = vadd.f32 %v7414, %v7582
        %7584 = vmatmul.bf16.gmra.mxu0 %v6024
        %v7585 = vpop.f32.mrf.mxu0
        %v7586 = vadd.f32 %v7417, %v7585
        %v7587 = vpop.f32.mrf.mxu0
        %v7588 = vadd.f32 %v7419, %v7587
        %7589 = vmatmul.bf16.gmra.mxu0 %v6028
        %v7590 = vpop.f32.mrf.mxu0
        %v7591 = vadd.f32 %v7422, %v7590
        %v7592 = vpop.f32.mrf.mxu0
        %v7593 = vadd.f32 %v7424, %v7592
        %7594 = vmatmul.bf16.gmra.mxu0 %v6032
        %v7595 = vpop.f32.mrf.mxu0
        %v7596 = vadd.f32 %v7427, %v7595
        %v7597 = vpop.f32.mrf.mxu0
        %v7598 = vadd.f32 %v7429, %v7597
        %7599 = vmatmul.bf16.gmra.mxu0 %v6036
        %v7600 = vpop.f32.mrf.mxu0
        %v7601 = vadd.f32 %v7432, %v7600
        %v7602 = vpop.f32.mrf.mxu0
        %v7603 = vadd.f32 %v7434, %v7602
        %7604 = vmatmul.bf16.gmra.mxu0 %v6040
        %v7605 = vpop.f32.mrf.mxu0
        %v7606 = vadd.f32 %v7437, %v7605
        %v7607 = vpop.f32.mrf.mxu0
        %v7608 = vadd.f32 %v7439, %v7607
        %7609 = vmatmul.bf16.gmra.mxu0 %v6044
        %v7610 = vpop.f32.mrf.mxu0
        %v7611 = vadd.f32 %v7442, %v7610
        %v7612 = vpop.f32.mrf.mxu0
        %v7613 = vadd.f32 %v7444, %v7612
        %7614 = vmatmul.bf16.gmra.mxu0 %v6048
        %v7615 = vpop.f32.mrf.mxu0
        %v7616 = vadd.f32 %v7447, %v7615
        %v7617 = vpop.f32.mrf.mxu0
        %v7618 = vadd.f32 %v7449, %v7617
        %7619 = vmatmul.bf16.gmra.mxu0 %v6052
        %v7620 = vpop.f32.mrf.mxu0
        %v7621 = vadd.f32 %v7452, %v7620
        %v7622 = vpop.f32.mrf.mxu0
        %v7623 = vadd.f32 %v7454, %v7622
        %7624 = vmatmul.bf16.gmra.mxu0 %v6056
        %v7625 = vpop.f32.mrf.mxu0
        %v7626 = vadd.f32 %v7457, %v7625
        %v7627 = vpop.f32.mrf.mxu0
        %v7628 = vadd.f32 %v7459, %v7627
        %7629 = vmatmul.bf16.gmra.mxu0 %v6060
        %v7630 = vpop.f32.mrf.mxu0
        %v7631 = vadd.f32 %v7462, %v7630
        %v7632 = vpop.f32.mrf.mxu0
        %v7633 = vadd.f32 %v7464, %v7632
        %7634 = vdwg.mxu0
        %7635 = vmatpush.bf16.msra.mxu0 %v6387
        %7636 = vmatpush.bf16.msra.mxu0 %v6385
        %7637 = vmatpush.bf16.msra.mxu0 %v6383
        %7638 = vmatpush.bf16.msra.mxu0 %v6381
        %7639 = vmatpush.bf16.msra.mxu0 %v6379
        %7640 = vmatpush.bf16.msra.mxu0 %v6377
        %7641 = vmatpush.bf16.msra.mxu0 %v6375
        %7642 = vmatpush.bf16.msra.mxu0 %v6373
        %7643 = vmatmul.bf16.gmra.mxu0 %v5937
        %v7644 = vpop.f32.mrf.mxu0
        %v7645 = vadd.f32 %v7476, %v7644
        %v7646 = vpop.f32.mrf.mxu0
        %v7647 = vadd.f32 %v7478, %v7646
        %7648 = vmatmul.bf16.gmra.mxu0 %v5941
        %v7649 = vpop.f32.mrf.mxu0
        %v7650 = vadd.f32 %v7481, %v7649
        %v7651 = vpop.f32.mrf.mxu0
        %v7652 = vadd.f32 %v7483, %v7651
        %7653 = vmatmul.bf16.gmra.mxu0 %v5945
        %v7654 = vpop.f32.mrf.mxu0
        %v7655 = vadd.f32 %v7486, %v7654
        %v7656 = vpop.f32.mrf.mxu0
        %v7657 = vadd.f32 %v7488, %v7656
        %7658 = vmatmul.bf16.gmra.mxu0 %v5949
        %v7659 = vpop.f32.mrf.mxu0
        %v7660 = vadd.f32 %v7491, %v7659
        %v7661 = vpop.f32.mrf.mxu0
        %v7662 = vadd.f32 %v7493, %v7661
        %7663 = vmatmul.bf16.gmra.mxu0 %v5953
        %v7664 = vpop.f32.mrf.mxu0
        %v7665 = vadd.f32 %v7496, %v7664
        %v7666 = vpop.f32.mrf.mxu0
        %v7667 = vadd.f32 %v7498, %v7666
        %7668 = vmatmul.bf16.gmra.mxu0 %v5957
        %v7669 = vpop.f32.mrf.mxu0
        %v7670 = vadd.f32 %v7501, %v7669
        %v7671 = vpop.f32.mrf.mxu0
        %v7672 = vadd.f32 %v7503, %v7671
        %7673 = vmatmul.bf16.gmra.mxu0 %v5961
        %v7674 = vpop.f32.mrf.mxu0
        %v7675 = vadd.f32 %v7506, %v7674
        %v7676 = vpop.f32.mrf.mxu0
        %v7677 = vadd.f32 %v7508, %v7676
        %7678 = vmatmul.bf16.gmra.mxu0 %v5965
        %v7679 = vpop.f32.mrf.mxu0
        %v7680 = vadd.f32 %v7511, %v7679
        %v7681 = vpop.f32.mrf.mxu0
        %v7682 = vadd.f32 %v7513, %v7681
        %7683 = vmatmul.bf16.gmra.mxu0 %v5969
        %v7684 = vpop.f32.mrf.mxu0
        %v7685 = vadd.f32 %v7516, %v7684
        %v7686 = vpop.f32.mrf.mxu0
        %v7687 = vadd.f32 %v7518, %v7686
        %7688 = vmatmul.bf16.gmra.mxu0 %v5973
        %v7689 = vpop.f32.mrf.mxu0
        %v7690 = vadd.f32 %v7521, %v7689
        %v7691 = vpop.f32.mrf.mxu0
        %v7692 = vadd.f32 %v7523, %v7691
        %7693 = vmatmul.bf16.gmra.mxu0 %v5977
        %v7694 = vpop.f32.mrf.mxu0
        %v7695 = vadd.f32 %v7526, %v7694
        %v7696 = vpop.f32.mrf.mxu0
        %v7697 = vadd.f32 %v7528, %v7696
        %7698 = vmatmul.bf16.gmra.mxu0 %v5981
        %v7699 = vpop.f32.mrf.mxu0
        %v7700 = vadd.f32 %v7531, %v7699
        %v7701 = vpop.f32.mrf.mxu0
        %v7702 = vadd.f32 %v7533, %v7701
        %7703 = vmatmul.bf16.gmra.mxu0 %v5985
        %v7704 = vpop.f32.mrf.mxu0
        %v7705 = vadd.f32 %v7536, %v7704
        %v7706 = vpop.f32.mrf.mxu0
        %v7707 = vadd.f32 %v7538, %v7706
        %7708 = vmatmul.bf16.gmra.mxu0 %v5989
        %v7709 = vpop.f32.mrf.mxu0
        %v7710 = vadd.f32 %v7541, %v7709
        %v7711 = vpop.f32.mrf.mxu0
        %v7712 = vadd.f32 %v7543, %v7711
        %7713 = vmatmul.bf16.gmra.mxu0 %v5993
        %v7714 = vpop.f32.mrf.mxu0
        %v7715 = vadd.f32 %v7546, %v7714
        %v7716 = vpop.f32.mrf.mxu0
        %v7717 = vadd.f32 %v7548, %v7716
        %7718 = vmatmul.bf16.gmra.mxu0 %v5997
        %v7719 = vpop.f32.mrf.mxu0
        %v7720 = vadd.f32 %v7551, %v7719
        %v7721 = vpop.f32.mrf.mxu0
        %v7722 = vadd.f32 %v7553, %v7721
        %7723 = vmatmul.bf16.gmra.mxu0 %v6001
        %v7724 = vpop.f32.mrf.mxu0
        %v7725 = vadd.f32 %v7556, %v7724
        %v7726 = vpop.f32.mrf.mxu0
        %v7727 = vadd.f32 %v7558, %v7726
        %7728 = vmatmul.bf16.gmra.mxu0 %v6005
        %v7729 = vpop.f32.mrf.mxu0
        %v7730 = vadd.f32 %v7561, %v7729
        %v7731 = vpop.f32.mrf.mxu0
        %v7732 = vadd.f32 %v7563, %v7731
        %7733 = vmatmul.bf16.gmra.mxu0 %v6009
        %v7734 = vpop.f32.mrf.mxu0
        %v7735 = vadd.f32 %v7566, %v7734
        %v7736 = vpop.f32.mrf.mxu0
        %v7737 = vadd.f32 %v7568, %v7736
        %7738 = vmatmul.bf16.gmra.mxu0 %v6013
        %v7739 = vpop.f32.mrf.mxu0
        %v7740 = vadd.f32 %v7571, %v7739
        %v7741 = vpop.f32.mrf.mxu0
        %v7742 = vadd.f32 %v7573, %v7741
        %7743 = vmatmul.bf16.gmra.mxu0 %v6017
        %v7744 = vpop.f32.mrf.mxu0
        %v7745 = vadd.f32 %v7576, %v7744
        %v7746 = vpop.f32.mrf.mxu0
        %v7747 = vadd.f32 %v7578, %v7746
        %7748 = vmatmul.bf16.gmra.mxu0 %v6021
        %v7749 = vpop.f32.mrf.mxu0
        %v7750 = vadd.f32 %v7581, %v7749
        %v7751 = vpop.f32.mrf.mxu0
        %v7752 = vadd.f32 %v7583, %v7751
        %7753 = vmatmul.bf16.gmra.mxu0 %v6025
        %v7754 = vpop.f32.mrf.mxu0
        %v7755 = vadd.f32 %v7586, %v7754
        %v7756 = vpop.f32.mrf.mxu0
        %v7757 = vadd.f32 %v7588, %v7756
        %7758 = vmatmul.bf16.gmra.mxu0 %v6029
        %v7759 = vpop.f32.mrf.mxu0
        %v7760 = vadd.f32 %v7591, %v7759
        %v7761 = vpop.f32.mrf.mxu0
        %v7762 = vadd.f32 %v7593, %v7761
        %7763 = vmatmul.bf16.gmra.mxu0 %v6033
        %v7764 = vpop.f32.mrf.mxu0
        %v7765 = vadd.f32 %v7596, %v7764
        %v7766 = vpop.f32.mrf.mxu0
        %v7767 = vadd.f32 %v7598, %v7766
        %7768 = vmatmul.bf16.gmra.mxu0 %v6037
        %v7769 = vpop.f32.mrf.mxu0
        %v7770 = vadd.f32 %v7601, %v7769
        %v7771 = vpop.f32.mrf.mxu0
        %v7772 = vadd.f32 %v7603, %v7771
        %7773 = vmatmul.bf16.gmra.mxu0 %v6041
        %v7774 = vpop.f32.mrf.mxu0
        %v7775 = vadd.f32 %v7606, %v7774
        %v7776 = vpop.f32.mrf.mxu0
        %v7777 = vadd.f32 %v7608, %v7776
        %7778 = vmatmul.bf16.gmra.mxu0 %v6045
        %v7779 = vpop.f32.mrf.mxu0
        %v7780 = vadd.f32 %v7611, %v7779
        %v7781 = vpop.f32.mrf.mxu0
        %v7782 = vadd.f32 %v7613, %v7781
        %7783 = vmatmul.bf16.gmra.mxu0 %v6049
        %v7784 = vpop.f32.mrf.mxu0
        %v7785 = vadd.f32 %v7616, %v7784
        %v7786 = vpop.f32.mrf.mxu0
        %v7787 = vadd.f32 %v7618, %v7786
        %7788 = vmatmul.bf16.gmra.mxu0 %v6053
        %v7789 = vpop.f32.mrf.mxu0
        %v7790 = vadd.f32 %v7621, %v7789
        %v7791 = vpop.f32.mrf.mxu0
        %v7792 = vadd.f32 %v7623, %v7791
        %7793 = vmatmul.bf16.gmra.mxu0 %v6057
        %v7794 = vpop.f32.mrf.mxu0
        %v7795 = vadd.f32 %v7626, %v7794
        %v7796 = vpop.f32.mrf.mxu0
        %v7797 = vadd.f32 %v7628, %v7796
        %7798 = vmatmul.bf16.gmra.mxu0 %v6061
        %v7799 = vpop.f32.mrf.mxu0
        %v7800 = vadd.f32 %v7631, %v7799
        %v7801 = vpop.f32.mrf.mxu0
        %v7802 = vadd.f32 %v7633, %v7801
        %7803 = vdwg.mxu0
        %v7804 = vtanh.pop %v6969
        %v7805 = vtanh.pop %v7645
        %v7806 = vtanh.pop %v6971
        %v7807 = vtanh.pop %v7647
        %v7808 = vtanh.pop %v6974
        %v7809 = vtanh.pop %v7650
        %v7810 = vtanh.pop %v6976
        %v7811 = vtanh.pop %v7652
        %v7812 = vtanh.pop %v6979
        %v7813 = vtanh.pop %v7655
        %v7814 = vtanh.pop %v6981
        %v7815 = vtanh.pop %v7657
        %v7816 = vtanh.pop %v6984
        %v7817 = vtanh.pop %v7660
        %v7818 = vtanh.pop %v6986
        %v7819 = vtanh.pop %v7662
        %v7820 = vtanh.pop %v6989
        %v7821 = vtanh.pop %v7665
        %v7822 = vtanh.pop %v6991
        %v7823 = vtanh.pop %v7667
        %v7824 = vtanh.pop %v6994
        %v7825 = vtanh.pop %v7670
        %v7826 = vtanh.pop %v6996
        %v7827 = vtanh.pop %v7672
        %v7828 = vtanh.pop %v6999
        %v7829 = vtanh.pop %v7675
        %v7830 = vtanh.pop %v7001
        %v7831 = vtanh.pop %v7677
        %v7832 = vtanh.pop %v7004
        %v7833 = vtanh.pop %v7680
        %v7834 = vtanh.pop %v7006
        %v7835 = vtanh.pop %v7682
        %v7836 = vtanh.pop %v7009
        %v7837 = vtanh.pop %v7685
        %v7838 = vtanh.pop %v7011
        %v7839 = vtanh.pop %v7687
        %v7840 = vtanh.pop %v7014
        %v7841 = vtanh.pop %v7690
        %v7842 = vtanh.pop %v7016
        %v7843 = vtanh.pop %v7692
        %v7844 = vtanh.pop %v7019
        %v7845 = vtanh.pop %v7695
        %v7846 = vtanh.pop %v7021
        %v7847 = vtanh.pop %v7697
        %v7848 = vtanh.pop %v7024
        %v7849 = vtanh.pop %v7700
        %v7850 = vtanh.pop %v7026
        %v7851 = vtanh.pop %v7702
        %v7852 = vtanh.pop %v7029
        %v7853 = vtanh.pop %v7705
        %v7854 = vtanh.pop %v7031
        %v7855 = vtanh.pop %v7707
        %v7856 = vtanh.pop %v7034
        %v7857 = vtanh.pop %v7710
        %v7858 = vtanh.pop %v7036
        %v7859 = vtanh.pop %v7712
        %v7860 = vtanh.pop %v7039
        %v7861 = vtanh.pop %v7715
        %v7862 = vtanh.pop %v7041
        %v7863 = vtanh.pop %v7717
        %v7864 = vtanh.pop %v7044
        %v7865 = vtanh.pop %v7720
        %v7866 = vtanh.pop %v7046
        %v7867 = vtanh.pop %v7722
        %v7868 = vtanh.pop %v7049
        %v7869 = vtanh.pop %v7725
        %v7870 = vtanh.pop %v7051
        %v7871 = vtanh.pop %v7727
        %v7872 = vtanh.pop %v7054
        %v7873 = vtanh.pop %v7730
        %v7874 = vtanh.pop %v7056
        %v7875 = vtanh.pop %v7732
        %v7876 = vtanh.pop %v7059
        %v7877 = vtanh.pop %v7735
        %v7878 = vtanh.pop %v7061
        %v7879 = vtanh.pop %v7737
        %v7880 = vtanh.pop %v7064
        %v7881 = vtanh.pop %v7740
        %v7882 = vtanh.pop %v7066
        %v7883 = vtanh.pop %v7742
        %v7884 = vtanh.pop %v7069
        %v7885 = vtanh.pop %v7745
        %v7886 = vtanh.pop %v7071
        %v7887 = vtanh.pop %v7747
        %v7888 = vtanh.pop %v7074
        %v7889 = vtanh.pop %v7750
        %v7890 = vtanh.pop %v7076
        %v7891 = vtanh.pop %v7752
        %v7892 = vtanh.pop %v7079
        %v7893 = vtanh.pop %v7755
        %v7894 = vtanh.pop %v7081
        %v7895 = vtanh.pop %v7757
        %v7896 = vtanh.pop %v7084
        %v7897 = vtanh.pop %v7760
        %v7898 = vtanh.pop %v7086
        %v7899 = vtanh.pop %v7762
        %v7900 = vtanh.pop %v7089
        %v7901 = vtanh.pop %v7765
        %v7902 = vtanh.pop %v7091
        %v7903 = vtanh.pop %v7767
        %v7904 = vtanh.pop %v7094
        %v7905 = vtanh.pop %v7770
        %v7906 = vtanh.pop %v7096
        %v7907 = vtanh.pop %v7772
        %v7908 = vtanh.pop %v7099
        %v7909 = vtanh.pop %v7775
        %v7910 = vtanh.pop %v7101
        %v7911 = vtanh.pop %v7777
        %v7912 = vtanh.pop %v7104
        %v7913 = vtanh.pop %v7780
        %v7914 = vtanh.pop %v7106
        %v7915 = vtanh.pop %v7782
        %v7916 = vtanh.pop %v7109
        %v7917 = vtanh.pop %v7785
        %v7918 = vtanh.pop %v7111
        %v7919 = vtanh.pop %v7787
        %v7920 = vtanh.pop %v7114
        %v7921 = vtanh.pop %v7790
        %v7922 = vtanh.pop %v7116
        %v7923 = vtanh.pop %v7792
        %v7924 = vtanh.pop %v7119
        %v7925 = vtanh.pop %v7795
        %v7926 = vtanh.pop %v7121
        %v7927 = vtanh.pop %v7797
        %v7928 = vtanh.pop %v7124
        %v7929 = vtanh.pop %v7800
        %v7930 = vtanh.pop %v7126
        %v7931 = vtanh.pop %v7802
        %v7932 = vld [vmem:[%s6] sm:$0x3]
        %v7934 = vperm.slane %v7932, 0
        %v7935 = vperm.slane %v7932, 1
        %v7938 = vmul.f32 %v7804, %v7934
        %v7939 = vmul.f32 %v7805, %v7935
        %v7940 = vmul.f32 %v7806, %v7934
        %v7941 = vmul.f32 %v7807, %v7935
        %v7942 = vmul.f32 %v7808, %v7934
        %v7943 = vmul.f32 %v7809, %v7935
        %v7944 = vmul.f32 %v7810, %v7934
        %v7945 = vmul.f32 %v7811, %v7935
        %v7946 = vmul.f32 %v7812, %v7934
        %v7947 = vmul.f32 %v7813, %v7935
        %v7948 = vmul.f32 %v7814, %v7934
        %v7949 = vmul.f32 %v7815, %v7935
        %v7950 = vmul.f32 %v7816, %v7934
        %v7951 = vmul.f32 %v7817, %v7935
        %v7952 = vmul.f32 %v7818, %v7934
        %v7953 = vmul.f32 %v7819, %v7935
        %v7954 = vmul.f32 %v7820, %v7934
        %v7955 = vmul.f32 %v7821, %v7935
        %v7956 = vmul.f32 %v7822, %v7934
        %v7957 = vmul.f32 %v7823, %v7935
        %v7958 = vmul.f32 %v7824, %v7934
        %v7959 = vmul.f32 %v7825, %v7935
        %v7960 = vmul.f32 %v7826, %v7934
        %v7961 = vmul.f32 %v7827, %v7935
        %v7962 = vmul.f32 %v7828, %v7934
        %v7963 = vmul.f32 %v7829, %v7935
        %v7964 = vmul.f32 %v7830, %v7934
        %v7965 = vmul.f32 %v7831, %v7935
        %v7966 = vmul.f32 %v7832, %v7934
        %v7967 = vmul.f32 %v7833, %v7935
        %v7968 = vmul.f32 %v7834, %v7934
        %v7969 = vmul.f32 %v7835, %v7935
        %v7970 = vmul.f32 %v7836, %v7934
        %v7971 = vmul.f32 %v7837, %v7935
        %v7972 = vmul.f32 %v7838, %v7934
        %v7973 = vmul.f32 %v7839, %v7935
        %v7974 = vmul.f32 %v7840, %v7934
        %v7975 = vmul.f32 %v7841, %v7935
        %v7976 = vmul.f32 %v7842, %v7934
        %v7977 = vmul.f32 %v7843, %v7935
        %v7978 = vmul.f32 %v7844, %v7934
        %v7979 = vmul.f32 %v7845, %v7935
        %v7980 = vmul.f32 %v7846, %v7934
        %v7981 = vmul.f32 %v7847, %v7935
        %v7982 = vmul.f32 %v7848, %v7934
        %v7983 = vmul.f32 %v7849, %v7935
        %v7984 = vmul.f32 %v7850, %v7934
        %v7985 = vmul.f32 %v7851, %v7935
        %v7986 = vmul.f32 %v7852, %v7934
        %v7987 = vmul.f32 %v7853, %v7935
        %v7988 = vmul.f32 %v7854, %v7934
        %v7989 = vmul.f32 %v7855, %v7935
        %v7990 = vmul.f32 %v7856, %v7934
        %v7991 = vmul.f32 %v7857, %v7935
        %v7992 = vmul.f32 %v7858, %v7934
        %v7993 = vmul.f32 %v7859, %v7935
        %v7994 = vmul.f32 %v7860, %v7934
        %v7995 = vmul.f32 %v7861, %v7935
        %v7996 = vmul.f32 %v7862, %v7934
        %v7997 = vmul.f32 %v7863, %v7935
        %v7998 = vmul.f32 %v7864, %v7934
        %v7999 = vmul.f32 %v7865, %v7935
        %v8000 = vmul.f32 %v7866, %v7934
        %v8001 = vmul.f32 %v7867, %v7935
        %v8002 = vmul.f32 %v7868, %v7934
        %v8003 = vmul.f32 %v7869, %v7935
        %v8004 = vmul.f32 %v7870, %v7934
        %v8005 = vmul.f32 %v7871, %v7935
        %v8006 = vmul.f32 %v7872, %v7934
        %v8007 = vmul.f32 %v7873, %v7935
        %v8008 = vmul.f32 %v7874, %v7934
        %v8009 = vmul.f32 %v7875, %v7935
        %v8010 = vmul.f32 %v7876, %v7934
        %v8011 = vmul.f32 %v7877, %v7935
        %v8012 = vmul.f32 %v7878, %v7934
        %v8013 = vmul.f32 %v7879, %v7935
        %v8014 = vmul.f32 %v7880, %v7934
        %v8015 = vmul.f32 %v7881, %v7935
        %v8016 = vmul.f32 %v7882, %v7934
        %v8017 = vmul.f32 %v7883, %v7935
        %v8018 = vmul.f32 %v7884, %v7934
        %v8019 = vmul.f32 %v7885, %v7935
        %v8020 = vmul.f32 %v7886, %v7934
        %v8021 = vmul.f32 %v7887, %v7935
        %v8022 = vmul.f32 %v7888, %v7934
        %v8023 = vmul.f32 %v7889, %v7935
        %v8024 = vmul.f32 %v7890, %v7934
        %v8025 = vmul.f32 %v7891, %v7935
        %v8026 = vmul.f32 %v7892, %v7934
        %v8027 = vmul.f32 %v7893, %v7935
        %v8028 = vmul.f32 %v7894, %v7934
        %v8029 = vmul.f32 %v7895, %v7935
        %v8030 = vmul.f32 %v7896, %v7934
        %v8031 = vmul.f32 %v7897, %v7935
        %v8032 = vmul.f32 %v7898, %v7934
        %v8033 = vmul.f32 %v7899, %v7935
        %v8034 = vmul.f32 %v7900, %v7934
        %v8035 = vmul.f32 %v7901, %v7935
        %v8036 = vmul.f32 %v7902, %v7934
        %v8037 = vmul.f32 %v7903, %v7935
        %v8038 = vmul.f32 %v7904, %v7934
        %v8039 = vmul.f32 %v7905, %v7935
        %v8040 = vmul.f32 %v7906, %v7934
        %v8041 = vmul.f32 %v7907, %v7935
        %v8042 = vmul.f32 %v7908, %v7934
        %v8043 = vmul.f32 %v7909, %v7935
        %v8044 = vmul.f32 %v7910, %v7934
        %v8045 = vmul.f32 %v7911, %v7935
        %v8046 = vmul.f32 %v7912, %v7934
        %v8047 = vmul.f32 %v7913, %v7935
        %v8048 = vmul.f32 %v7914, %v7934
        %v8049 = vmul.f32 %v7915, %v7935
        %v8050 = vmul.f32 %v7916, %v7934
        %v8051 = vmul.f32 %v7917, %v7935
        %v8052 = vmul.f32 %v7918, %v7934
        %v8053 = vmul.f32 %v7919, %v7935
        %v8054 = vmul.f32 %v7920, %v7934
        %v8055 = vmul.f32 %v7921, %v7935
        %v8056 = vmul.f32 %v7922, %v7934
        %v8057 = vmul.f32 %v7923, %v7935
        %v8058 = vmul.f32 %v7924, %v7934
        %v8059 = vmul.f32 %v7925, %v7935
        %v8060 = vmul.f32 %v7926, %v7934
        %v8061 = vmul.f32 %v7927, %v7935
        %v8062 = vmul.f32 %v7928, %v7934
        %v8063 = vmul.f32 %v7929, %v7935
        %v8064 = vmul.f32 %v7930, %v7934
        %v8065 = vmul.f32 %v7931, %v7935
        %v8066 = vadd.f32 %v7938, %v7939
        %8067 = vadd.xlane.f32.xlu0 %v8066
        %v8068 = vpop.xlane.xlu0 %8067
        %v8069 = vadd.f32 %v7940, %v7941
        %8070 = vadd.xlane.f32.xlu0 %v8069
        %v8071 = vpop.xlane.xlu0 %8070
        %v8072 = vadd.f32 %v7942, %v7943
        %8073 = vadd.xlane.f32.xlu0 %v8072
        %v8074 = vpop.xlane.xlu0 %8073
        %v8075 = vadd.f32 %v7944, %v7945
        %8076 = vadd.xlane.f32.xlu0 %v8075
        %v8077 = vpop.xlane.xlu0 %8076
        %v8078 = vadd.f32 %v7946, %v7947
        %8079 = vadd.xlane.f32.xlu0 %v8078
        %v8080 = vpop.xlane.xlu0 %8079
        %v8081 = vadd.f32 %v7948, %v7949
        %8082 = vadd.xlane.f32.xlu0 %v8081
        %v8083 = vpop.xlane.xlu0 %8082
        %v8084 = vadd.f32 %v7950, %v7951
        %8085 = vadd.xlane.f32.xlu0 %v8084
        %v8086 = vpop.xlane.xlu0 %8085
        %v8087 = vadd.f32 %v7952, %v7953
        %8088 = vadd.xlane.f32.xlu0 %v8087
        %v8089 = vpop.xlane.xlu0 %8088
        %v8090 = vadd.f32 %v7954, %v7955
        %8091 = vadd.xlane.f32.xlu0 %v8090
        %v8092 = vpop.xlane.xlu0 %8091
        %v8093 = vadd.f32 %v7956, %v7957
        %8094 = vadd.xlane.f32.xlu0 %v8093
        %v8095 = vpop.xlane.xlu0 %8094
        %v8096 = vadd.f32 %v7958, %v7959
        %8097 = vadd.xlane.f32.xlu0 %v8096
        %v8098 = vpop.xlane.xlu0 %8097
        %v8099 = vadd.f32 %v7960, %v7961
        %8100 = vadd.xlane.f32.xlu0 %v8099
        %v8101 = vpop.xlane.xlu0 %8100
        %v8102 = vadd.f32 %v7962, %v7963
        %8103 = vadd.xlane.f32.xlu0 %v8102
        %v8104 = vpop.xlane.xlu0 %8103
        %v8105 = vadd.f32 %v7964, %v7965
        %8106 = vadd.xlane.f32.xlu0 %v8105
        %v8107 = vpop.xlane.xlu0 %8106
        %v8108 = vadd.f32 %v7966, %v7967
        %8109 = vadd.xlane.f32.xlu0 %v8108
        %v8110 = vpop.xlane.xlu0 %8109
        %v8111 = vadd.f32 %v7968, %v7969
        %8112 = vadd.xlane.f32.xlu0 %v8111
        %v8113 = vpop.xlane.xlu0 %8112
        %v8114 = vadd.f32 %v7970, %v7971
        %8115 = vadd.xlane.f32.xlu0 %v8114
        %v8116 = vpop.xlane.xlu0 %8115
        %v8117 = vadd.f32 %v7972, %v7973
        %8118 = vadd.xlane.f32.xlu0 %v8117
        %v8119 = vpop.xlane.xlu0 %8118
        %v8120 = vadd.f32 %v7974, %v7975
        %8121 = vadd.xlane.f32.xlu0 %v8120
        %v8122 = vpop.xlane.xlu0 %8121
        %v8123 = vadd.f32 %v7976, %v7977
        %8124 = vadd.xlane.f32.xlu0 %v8123
        %v8125 = vpop.xlane.xlu0 %8124
        %v8126 = vadd.f32 %v7978, %v7979
        %8127 = vadd.xlane.f32.xlu0 %v8126
        %v8128 = vpop.xlane.xlu0 %8127
        %v8129 = vadd.f32 %v7980, %v7981
        %8130 = vadd.xlane.f32.xlu0 %v8129
        %v8131 = vpop.xlane.xlu0 %8130
        %v8132 = vadd.f32 %v7982, %v7983
        %8133 = vadd.xlane.f32.xlu0 %v8132
        %v8134 = vpop.xlane.xlu0 %8133
        %v8135 = vadd.f32 %v7984, %v7985
        %8136 = vadd.xlane.f32.xlu0 %v8135
        %v8137 = vpop.xlane.xlu0 %8136
        %v8138 = vadd.f32 %v7986, %v7987
        %8139 = vadd.xlane.f32.xlu0 %v8138
        %v8140 = vpop.xlane.xlu0 %8139
        %v8141 = vadd.f32 %v7988, %v7989
        %8142 = vadd.xlane.f32.xlu0 %v8141
        %v8143 = vpop.xlane.xlu0 %8142
        %v8144 = vadd.f32 %v7990, %v7991
        %8145 = vadd.xlane.f32.xlu0 %v8144
        %v8146 = vpop.xlane.xlu0 %8145
        %v8147 = vadd.f32 %v7992, %v7993
        %8148 = vadd.xlane.f32.xlu0 %v8147
        %v8149 = vpop.xlane.xlu0 %8148
        %v8150 = vadd.f32 %v7994, %v7995
        %8151 = vadd.xlane.f32.xlu0 %v8150
        %v8152 = vpop.xlane.xlu0 %8151
        %v8153 = vadd.f32 %v7996, %v7997
        %8154 = vadd.xlane.f32.xlu0 %v8153
        %v8155 = vpop.xlane.xlu0 %8154
        %v8156 = vadd.f32 %v7998, %v7999
        %8157 = vadd.xlane.f32.xlu0 %v8156
        %v8158 = vpop.xlane.xlu0 %8157
        %v8159 = vadd.f32 %v8000, %v8001
        %8160 = vadd.xlane.f32.xlu0 %v8159
        %v8161 = vpop.xlane.xlu0 %8160
        %v8162 = vadd.f32 %v8002, %v8003
        %8163 = vadd.xlane.f32.xlu0 %v8162
        %v8164 = vpop.xlane.xlu0 %8163
        %v8165 = vadd.f32 %v8004, %v8005
        %8166 = vadd.xlane.f32.xlu0 %v8165
        %v8167 = vpop.xlane.xlu0 %8166
        %v8168 = vadd.f32 %v8006, %v8007
        %8169 = vadd.xlane.f32.xlu0 %v8168
        %v8170 = vpop.xlane.xlu0 %8169
        %v8171 = vadd.f32 %v8008, %v8009
        %8172 = vadd.xlane.f32.xlu0 %v8171
        %v8173 = vpop.xlane.xlu0 %8172
        %v8174 = vadd.f32 %v8010, %v8011
        %8175 = vadd.xlane.f32.xlu0 %v8174
        %v8176 = vpop.xlane.xlu0 %8175
        %v8177 = vadd.f32 %v8012, %v8013
        %8178 = vadd.xlane.f32.xlu0 %v8177
        %v8179 = vpop.xlane.xlu0 %8178
        %v8180 = vadd.f32 %v8014, %v8015
        %8181 = vadd.xlane.f32.xlu0 %v8180
        %v8182 = vpop.xlane.xlu0 %8181
        %v8183 = vadd.f32 %v8016, %v8017
        %8184 = vadd.xlane.f32.xlu0 %v8183
        %v8185 = vpop.xlane.xlu0 %8184
        %v8186 = vadd.f32 %v8018, %v8019
        %8187 = vadd.xlane.f32.xlu0 %v8186
        %v8188 = vpop.xlane.xlu0 %8187
        %v8189 = vadd.f32 %v8020, %v8021
        %8190 = vadd.xlane.f32.xlu0 %v8189
        %v8191 = vpop.xlane.xlu0 %8190
        %v8192 = vadd.f32 %v8022, %v8023
        %8193 = vadd.xlane.f32.xlu0 %v8192
        %v8194 = vpop.xlane.xlu0 %8193
        %v8195 = vadd.f32 %v8024, %v8025
        %8196 = vadd.xlane.f32.xlu0 %v8195
        %v8197 = vpop.xlane.xlu0 %8196
        %v8198 = vadd.f32 %v8026, %v8027
        %8199 = vadd.xlane.f32.xlu0 %v8198
        %v8200 = vpop.xlane.xlu0 %8199
        %v8201 = vadd.f32 %v8028, %v8029
        %8202 = vadd.xlane.f32.xlu0 %v8201
        %v8203 = vpop.xlane.xlu0 %8202
        %v8204 = vadd.f32 %v8030, %v8031
        %8205 = vadd.xlane.f32.xlu0 %v8204
        %v8206 = vpop.xlane.xlu0 %8205
        %v8207 = vadd.f32 %v8032, %v8033
        %8208 = vadd.xlane.f32.xlu0 %v8207
        %v8209 = vpop.xlane.xlu0 %8208
        %v8210 = vadd.f32 %v8034, %v8035
        %8211 = vadd.xlane.f32.xlu0 %v8210
        %v8212 = vpop.xlane.xlu0 %8211
        %v8213 = vadd.f32 %v8036, %v8037
        %8214 = vadd.xlane.f32.xlu0 %v8213
        %v8215 = vpop.xlane.xlu0 %8214
        %v8216 = vadd.f32 %v8038, %v8039
        %8217 = vadd.xlane.f32.xlu0 %v8216
        %v8218 = vpop.xlane.xlu0 %8217
        %v8219 = vadd.f32 %v8040, %v8041
        %8220 = vadd.xlane.f32.xlu0 %v8219
        %v8221 = vpop.xlane.xlu0 %8220
        %v8222 = vadd.f32 %v8042, %v8043
        %8223 = vadd.xlane.f32.xlu0 %v8222
        %v8224 = vpop.xlane.xlu0 %8223
        %v8225 = vadd.f32 %v8044, %v8045
        %8226 = vadd.xlane.f32.xlu0 %v8225
        %v8227 = vpop.xlane.xlu0 %8226
        %v8228 = vadd.f32 %v8046, %v8047
        %8229 = vadd.xlane.f32.xlu0 %v8228
        %v8230 = vpop.xlane.xlu0 %8229
        %v8231 = vadd.f32 %v8048, %v8049
        %8232 = vadd.xlane.f32.xlu0 %v8231
        %v8233 = vpop.xlane.xlu0 %8232
        %v8234 = vadd.f32 %v8050, %v8051
        %8235 = vadd.xlane.f32.xlu0 %v8234
        %v8236 = vpop.xlane.xlu0 %8235
        %v8237 = vadd.f32 %v8052, %v8053
        %8238 = vadd.xlane.f32.xlu0 %v8237
        %v8239 = vpop.xlane.xlu0 %8238
        %v8240 = vadd.f32 %v8054, %v8055
        %8241 = vadd.xlane.f32.xlu0 %v8240
        %v8242 = vpop.xlane.xlu0 %8241
        %v8243 = vadd.f32 %v8056, %v8057
        %8244 = vadd.xlane.f32.xlu0 %v8243
        %v8245 = vpop.xlane.xlu0 %8244
        %v8246 = vadd.f32 %v8058, %v8059
        %8247 = vadd.xlane.f32.xlu0 %v8246
        %v8248 = vpop.xlane.xlu0 %8247
        %v8249 = vadd.f32 %v8060, %v8061
        %8250 = vadd.xlane.f32.xlu0 %v8249
        %v8251 = vpop.xlane.xlu0 %8250
        %v8252 = vadd.f32 %v8062, %v8063
        %8253 = vadd.xlane.f32.xlu0 %v8252
        %v8254 = vpop.xlane.xlu0 %8253
        %v8255 = vadd.f32 %v8064, %v8065
        %8256 = vadd.xlane.f32.xlu0 %v8255
        %v8257 = vpop.xlane.xlu0 %8256
        %v8258 = vsel %vm5486, %v8068, -inf
        %v8259 = vsel %vm5487, %v8071, -inf
        %v8260 = vsel %vm5488, %v8074, -inf
        %v8261 = vsel %vm5489, %v8077, -inf
        %v8262 = vsel %vm5490, %v8080, -inf
        %v8263 = vsel %vm5491, %v8083, -inf
        %v8264 = vsel %vm5492, %v8086, -inf
        %v8265 = vsel %vm5493, %v8089, -inf
        %v8266 = vsel %vm5494, %v8092, -inf
        %v8267 = vsel %vm5495, %v8095, -inf
        %v8268 = vsel %vm5496, %v8098, -inf
        %v8269 = vsel %vm5497, %v8101, -inf
        %v8270 = vsel %vm5498, %v8104, -inf
        %v8271 = vsel %vm5499, %v8107, -inf
        %v8272 = vsel %vm5500, %v8110, -inf
        %v8273 = vsel %vm5501, %v8113, -inf
        %v8274 = vsel %vm5502, %v8116, -inf
        %v8275 = vsel %vm5503, %v8119, -inf
        %v8276 = vsel %vm5504, %v8122, -inf
        %v8277 = vsel %vm5505, %v8125, -inf
        %v8278 = vsel %vm5506, %v8128, -inf
        %v8279 = vsel %vm5507, %v8131, -inf
        %v8280 = vsel %vm5508, %v8134, -inf
        %v8281 = vsel %vm5509, %v8137, -inf
        %v8282 = vsel %vm5510, %v8140, -inf
        %v8283 = vsel %vm5511, %v8143, -inf
        %v8284 = vsel %vm5512, %v8146, -inf
        %v8285 = vsel %vm5513, %v8149, -inf
        %v8286 = vsel %vm5514, %v8152, -inf
        %v8287 = vsel %vm5515, %v8155, -inf
        %v8288 = vsel %vm5516, %v8158, -inf
        %v8289 = vsel %vm5517, %v8161, -inf
        %v8290 = vsel %vm5518, %v8164, -inf
        %v8291 = vsel %vm5519, %v8167, -inf
        %v8292 = vsel %vm5520, %v8170, -inf
        %v8293 = vsel %vm5521, %v8173, -inf
        %v8294 = vsel %vm5522, %v8176, -inf
        %v8295 = vsel %vm5523, %v8179, -inf
        %v8296 = vsel %vm5524, %v8182, -inf
        %v8297 = vsel %vm5525, %v8185, -inf
        %v8298 = vsel %vm5526, %v8188, -inf
        %v8299 = vsel %vm5527, %v8191, -inf
        %v8300 = vsel %vm5528, %v8194, -inf
        %v8301 = vsel %vm5529, %v8197, -inf
        %v8302 = vsel %vm5530, %v8200, -inf
        %v8303 = vsel %vm5531, %v8203, -inf
        %v8304 = vsel %vm5532, %v8206, -inf
        %v8305 = vsel %vm5533, %v8209, -inf
        %v8306 = vsel %vm5534, %v8212, -inf
        %v8307 = vsel %vm5535, %v8215, -inf
        %v8308 = vsel %vm5536, %v8218, -inf
        %v8309 = vsel %vm5537, %v8221, -inf
        %v8310 = vsel %vm5538, %v8224, -inf
        %v8311 = vsel %vm5539, %v8227, -inf
        %v8312 = vsel %vm5540, %v8230, -inf
        %v8313 = vsel %vm5541, %v8233, -inf
        %v8314 = vsel %vm5542, %v8236, -inf
        %v8315 = vsel %vm5543, %v8239, -inf
        %v8316 = vsel %vm5544, %v8242, -inf
        %v8317 = vsel %vm5545, %v8245, -inf
        %v8318 = vsel %vm5546, %v8248, -inf
        %v8319 = vsel %vm5547, %v8251, -inf
        %v8320 = vsel %vm5548, %v8254, -inf
        %v8321 = vsel %vm5549, %v8257, -inf
        %v8322 = vld [vmem:[#allocation2] sm:$0x1]
        %v8323 = vmax.f32 %v8258, %v8262
        %v8324 = vmax.f32 %v8259, %v8263
        %v8325 = vmax.f32 %v8260, %v8264
        %v8326 = vmax.f32 %v8261, %v8265
        %v8327 = vmax.f32 %v8323, %v8266
        %v8328 = vmax.f32 %v8324, %v8267
        %v8329 = vmax.f32 %v8325, %v8268
        %v8330 = vmax.f32 %v8326, %v8269
        %v8331 = vmax.f32 %v8327, %v8270
        %v8332 = vmax.f32 %v8328, %v8271
        %v8333 = vmax.f32 %v8329, %v8272
        %v8334 = vmax.f32 %v8330, %v8273
        %v8335 = vmax.f32 %v8331, %v8274
        %v8336 = vmax.f32 %v8332, %v8275
        %v8337 = vmax.f32 %v8333, %v8276
        %v8338 = vmax.f32 %v8334, %v8277
        %v8339 = vmax.f32 %v8335, %v8278
        %v8340 = vmax.f32 %v8336, %v8279
        %v8341 = vmax.f32 %v8337, %v8280
        %v8342 = vmax.f32 %v8338, %v8281
        %v8343 = vmax.f32 %v8339, %v8282
        %v8344 = vmax.f32 %v8340, %v8283
        %v8345 = vmax.f32 %v8341, %v8284
        %v8346 = vmax.f32 %v8342, %v8285
        %v8347 = vmax.f32 %v8343, %v8286
        %v8348 = vmax.f32 %v8344, %v8287
        %v8349 = vmax.f32 %v8345, %v8288
        %v8350 = vmax.f32 %v8346, %v8289
        %v8351 = vmax.f32 %v8347, %v8290
        %v8352 = vmax.f32 %v8348, %v8291
        %v8353 = vmax.f32 %v8349, %v8292
        %v8354 = vmax.f32 %v8350, %v8293
        %v8355 = vmax.f32 %v8351, %v8294
        %v8356 = vmax.f32 %v8352, %v8295
        %v8357 = vmax.f32 %v8353, %v8296
        %v8358 = vmax.f32 %v8354, %v8297
        %v8359 = vmax.f32 %v8355, %v8298
        %v8360 = vmax.f32 %v8356, %v8299
        %v8361 = vmax.f32 %v8357, %v8300
        %v8362 = vmax.f32 %v8358, %v8301
        %v8363 = vmax.f32 %v8359, %v8302
        %v8364 = vmax.f32 %v8360, %v8303
        %v8365 = vmax.f32 %v8361, %v8304
        %v8366 = vmax.f32 %v8362, %v8305
        %v8367 = vmax.f32 %v8363, %v8306
        %v8368 = vmax.f32 %v8364, %v8307
        %v8369 = vmax.f32 %v8365, %v8308
        %v8370 = vmax.f32 %v8366, %v8309
        %v8371 = vmax.f32 %v8367, %v8310
        %v8372 = vmax.f32 %v8368, %v8311
        %v8373 = vmax.f32 %v8369, %v8312
        %v8374 = vmax.f32 %v8370, %v8313
        %v8375 = vmax.f32 %v8371, %v8314
        %v8376 = vmax.f32 %v8372, %v8315
        %v8377 = vmax.f32 %v8373, %v8316
        %v8378 = vmax.f32 %v8374, %v8317
        %v8379 = vmax.f32 %v8375, %v8318
        %v8380 = vmax.f32 %v8376, %v8319
        %v8381 = vmax.f32 %v8377, %v8320
        %v8382 = vmax.f32 %v8378, %v8321
        %v8383 = vmax.f32 %v8379, %v8380
        %v8384 = vmax.f32 %v8381, %v8382
        %v8385 = vmax.f32 %v8383, %v8384
        %v8386 = vrot.slane %v8385, 4
        %v8387 = vmax.f32 %v8385, %v8386
        %v8388 = vrot.slane %v8387, 2
        %v8389 = vmax.f32 %v8387, %v8388
        %v8390 = vrot.slane %v8389, 1
        %v8391 = vmax.f32 %v8389, %v8390
        %s8392 = vtos %v8391
        %v8393 = vstv %s8392
        %v8394 = vmax.f32 %v8322, %v8393
        %v8395 = vsub.f32 %v8322, %v8394
        %v8396 = vmul.f32 %v8395, 1.442695
        %v8397 = vpow.pop %v8396
        %v8399 = vperm.slane %v8394, 0
        %v8401 = vsub.f32 %v8258, %v8399
        %v8402 = vsub.f32 %v8259, %v8399
        %v8403 = vsub.f32 %v8260, %v8399
        %v8404 = vsub.f32 %v8261, %v8399
        %v8405 = vsub.f32 %v8262, %v8399
        %v8406 = vsub.f32 %v8263, %v8399
        %v8407 = vsub.f32 %v8264, %v8399
        %v8408 = vsub.f32 %v8265, %v8399
        %v8409 = vsub.f32 %v8266, %v8399
        %v8410 = vsub.f32 %v8267, %v8399
        %v8411 = vsub.f32 %v8268, %v8399
        %v8412 = vsub.f32 %v8269, %v8399
        %v8413 = vsub.f32 %v8270, %v8399
        %v8414 = vsub.f32 %v8271, %v8399
        %v8415 = vsub.f32 %v8272, %v8399
        %v8416 = vsub.f32 %v8273, %v8399
        %v8417 = vsub.f32 %v8274, %v8399
        %v8418 = vsub.f32 %v8275, %v8399
        %v8419 = vsub.f32 %v8276, %v8399
        %v8420 = vsub.f32 %v8277, %v8399
        %v8421 = vsub.f32 %v8278, %v8399
        %v8422 = vsub.f32 %v8279, %v8399
        %v8423 = vsub.f32 %v8280, %v8399
        %v8424 = vsub.f32 %v8281, %v8399
        %v8425 = vsub.f32 %v8282, %v8399
        %v8426 = vsub.f32 %v8283, %v8399
        %v8427 = vsub.f32 %v8284, %v8399
        %v8428 = vsub.f32 %v8285, %v8399
        %v8429 = vsub.f32 %v8286, %v8399
        %v8430 = vsub.f32 %v8287, %v8399
        %v8431 = vsub.f32 %v8288, %v8399
        %v8432 = vsub.f32 %v8289, %v8399
        %v8433 = vsub.f32 %v8290, %v8399
        %v8434 = vsub.f32 %v8291, %v8399
        %v8435 = vsub.f32 %v8292, %v8399
        %v8436 = vsub.f32 %v8293, %v8399
        %v8437 = vsub.f32 %v8294, %v8399
        %v8438 = vsub.f32 %v8295, %v8399
        %v8439 = vsub.f32 %v8296, %v8399
        %v8440 = vsub.f32 %v8297, %v8399
        %v8441 = vsub.f32 %v8298, %v8399
        %v8442 = vsub.f32 %v8299, %v8399
        %v8443 = vsub.f32 %v8300, %v8399
        %v8444 = vsub.f32 %v8301, %v8399
        %v8445 = vsub.f32 %v8302, %v8399
        %v8446 = vsub.f32 %v8303, %v8399
        %v8447 = vsub.f32 %v8304, %v8399
        %v8448 = vsub.f32 %v8305, %v8399
        %v8449 = vsub.f32 %v8306, %v8399
        %v8450 = vsub.f32 %v8307, %v8399
        %v8451 = vsub.f32 %v8308, %v8399
        %v8452 = vsub.f32 %v8309, %v8399
        %v8453 = vsub.f32 %v8310, %v8399
        %v8454 = vsub.f32 %v8311, %v8399
        %v8455 = vsub.f32 %v8312, %v8399
        %v8456 = vsub.f32 %v8313, %v8399
        %v8457 = vsub.f32 %v8314, %v8399
        %v8458 = vsub.f32 %v8315, %v8399
        %v8459 = vsub.f32 %v8316, %v8399
        %v8460 = vsub.f32 %v8317, %v8399
        %v8461 = vsub.f32 %v8318, %v8399
        %v8462 = vsub.f32 %v8319, %v8399
        %v8463 = vsub.f32 %v8320, %v8399
        %v8464 = vsub.f32 %v8321, %v8399
        %v8465 = vmul.f32 %v8401, 1.442695
        %v8466 = vpow.pop %v8465
        %v8467 = vmul.f32 %v8402, 1.442695
        %v8468 = vpow.pop %v8467
        %v8469 = vmul.f32 %v8403, 1.442695
        %v8470 = vpow.pop %v8469
        %v8471 = vmul.f32 %v8404, 1.442695
        %v8472 = vpow.pop %v8471
        %v8473 = vmul.f32 %v8405, 1.442695
        %v8474 = vpow.pop %v8473
        %v8475 = vmul.f32 %v8406, 1.442695
        %v8476 = vpow.pop %v8475
        %v8477 = vmul.f32 %v8407, 1.442695
        %v8478 = vpow.pop %v8477
        %v8479 = vmul.f32 %v8408, 1.442695
        %v8480 = vpow.pop %v8479
        %v8481 = vmul.f32 %v8409, 1.442695
        %v8482 = vpow.pop %v8481
        %v8483 = vmul.f32 %v8410, 1.442695
        %v8484 = vpow.pop %v8483
        %v8485 = vmul.f32 %v8411, 1.442695
        %v8486 = vpow.pop %v8485
        %v8487 = vmul.f32 %v8412, 1.442695
        %v8488 = vpow.pop %v8487
        %v8489 = vmul.f32 %v8413, 1.442695
        %v8490 = vpow.pop %v8489
        %v8491 = vmul.f32 %v8414, 1.442695
        %v8492 = vpow.pop %v8491
        %v8493 = vmul.f32 %v8415, 1.442695
        %v8494 = vpow.pop %v8493
        %v8495 = vmul.f32 %v8416, 1.442695
        %v8496 = vpow.pop %v8495
        %v8497 = vmul.f32 %v8417, 1.442695
        %v8498 = vpow.pop %v8497
        %v8499 = vmul.f32 %v8418, 1.442695
        %v8500 = vpow.pop %v8499
        %v8501 = vmul.f32 %v8419, 1.442695
        %v8502 = vpow.pop %v8501
        %v8503 = vmul.f32 %v8420, 1.442695
        %v8504 = vpow.pop %v8503
        %v8505 = vmul.f32 %v8421, 1.442695
        %v8506 = vpow.pop %v8505
        %v8507 = vmul.f32 %v8422, 1.442695
        %v8508 = vpow.pop %v8507
        %v8509 = vmul.f32 %v8423, 1.442695
        %v8510 = vpow.pop %v8509
        %v8511 = vmul.f32 %v8424, 1.442695
        %v8512 = vpow.pop %v8511
        %v8513 = vmul.f32 %v8425, 1.442695
        %v8514 = vpow.pop %v8513
        %v8515 = vmul.f32 %v8426, 1.442695
        %v8516 = vpow.pop %v8515
        %v8517 = vmul.f32 %v8427, 1.442695
        %v8518 = vpow.pop %v8517
        %v8519 = vmul.f32 %v8428, 1.442695
        %v8520 = vpow.pop %v8519
        %v8521 = vmul.f32 %v8429, 1.442695
        %v8522 = vpow.pop %v8521
        %v8523 = vmul.f32 %v8430, 1.442695
        %v8524 = vpow.pop %v8523
        %v8525 = vmul.f32 %v8431, 1.442695
        %v8526 = vpow.pop %v8525
        %v8527 = vmul.f32 %v8432, 1.442695
        %v8528 = vpow.pop %v8527
        %v8529 = vmul.f32 %v8433, 1.442695
        %v8530 = vpow.pop %v8529
        %v8531 = vmul.f32 %v8434, 1.442695
        %v8532 = vpow.pop %v8531
        %v8533 = vmul.f32 %v8435, 1.442695
        %v8534 = vpow.pop %v8533
        %v8535 = vmul.f32 %v8436, 1.442695
        %v8536 = vpow.pop %v8535
        %v8537 = vmul.f32 %v8437, 1.442695
        %v8538 = vpow.pop %v8537
        %v8539 = vmul.f32 %v8438, 1.442695
        %v8540 = vpow.pop %v8539
        %v8541 = vmul.f32 %v8439, 1.442695
        %v8542 = vpow.pop %v8541
        %v8543 = vmul.f32 %v8440, 1.442695
        %v8544 = vpow.pop %v8543
        %v8545 = vmul.f32 %v8441, 1.442695
        %v8546 = vpow.pop %v8545
        %v8547 = vmul.f32 %v8442, 1.442695
        %v8548 = vpow.pop %v8547
        %v8549 = vmul.f32 %v8443, 1.442695
        %v8550 = vpow.pop %v8549
        %v8551 = vmul.f32 %v8444, 1.442695
        %v8552 = vpow.pop %v8551
        %v8553 = vmul.f32 %v8445, 1.442695
        %v8554 = vpow.pop %v8553
        %v8555 = vmul.f32 %v8446, 1.442695
        %v8556 = vpow.pop %v8555
        %v8557 = vmul.f32 %v8447, 1.442695
        %v8558 = vpow.pop %v8557
        %v8559 = vmul.f32 %v8448, 1.442695
        %v8560 = vpow.pop %v8559
        %v8561 = vmul.f32 %v8449, 1.442695
        %v8562 = vpow.pop %v8561
        %v8563 = vmul.f32 %v8450, 1.442695
        %v8564 = vpow.pop %v8563
        %v8565 = vmul.f32 %v8451, 1.442695
        %v8566 = vpow.pop %v8565
        %v8567 = vmul.f32 %v8452, 1.442695
        %v8568 = vpow.pop %v8567
        %v8569 = vmul.f32 %v8453, 1.442695
        %v8570 = vpow.pop %v8569
        %v8571 = vmul.f32 %v8454, 1.442695
        %v8572 = vpow.pop %v8571
        %v8573 = vmul.f32 %v8455, 1.442695
        %v8574 = vpow.pop %v8573
        %v8575 = vmul.f32 %v8456, 1.442695
        %v8576 = vpow.pop %v8575
        %v8577 = vmul.f32 %v8457, 1.442695
        %v8578 = vpow.pop %v8577
        %v8579 = vmul.f32 %v8458, 1.442695
        %v8580 = vpow.pop %v8579
        %v8581 = vmul.f32 %v8459, 1.442695
        %v8582 = vpow.pop %v8581
        %v8583 = vmul.f32 %v8460, 1.442695
        %v8584 = vpow.pop %v8583
        %v8585 = vmul.f32 %v8461, 1.442695
        %v8586 = vpow.pop %v8585
        %v8587 = vmul.f32 %v8462, 1.442695
        %v8588 = vpow.pop %v8587
        %v8589 = vmul.f32 %v8463, 1.442695
        %v8590 = vpow.pop %v8589
        %v8591 = vmul.f32 %v8464, 1.442695
        %v8592 = vpow.pop %v8591
        %v8593 = vld [vmem:[#allocation3] sm:$0x1]
        %v8594 = vmul.f32 %v8397, %v8593
        %vm8595 = vcmask 7168
        %v8596 = vsel %vm8595, %v8466, 0.0
        %v8597 = vsel %vm8595, %v8468, 0.0
        %v8598 = vadd.f32 %v8596, %v8597
        %v8599 = vsel %vm8595, %v8470, 0.0
        %v8600 = vadd.f32 %v8598, %v8599
        %v8601 = vsel %vm8595, %v8472, 0.0
        %v8602 = vadd.f32 %v8600, %v8601
        %v8603 = vsel %vm8595, %v8474, 0.0
        %v8604 = vadd.f32 %v8602, %v8603
        %v8605 = vsel %vm8595, %v8476, 0.0
        %v8606 = vadd.f32 %v8604, %v8605
        %v8607 = vsel %vm8595, %v8478, 0.0
        %v8608 = vadd.f32 %v8606, %v8607
        %v8609 = vsel %vm8595, %v8480, 0.0
        %v8610 = vadd.f32 %v8608, %v8609
        %v8611 = vsel %vm8595, %v8482, 0.0
        %v8612 = vadd.f32 %v8610, %v8611
        %v8613 = vsel %vm8595, %v8484, 0.0
        %v8614 = vadd.f32 %v8612, %v8613
        %v8615 = vsel %vm8595, %v8486, 0.0
        %v8616 = vadd.f32 %v8614, %v8615
        %v8617 = vsel %vm8595, %v8488, 0.0
        %v8618 = vadd.f32 %v8616, %v8617
        %v8619 = vsel %vm8595, %v8490, 0.0
        %v8620 = vadd.f32 %v8618, %v8619
        %v8621 = vsel %vm8595, %v8492, 0.0
        %v8622 = vadd.f32 %v8620, %v8621
        %v8623 = vsel %vm8595, %v8494, 0.0
        %v8624 = vadd.f32 %v8622, %v8623
        %v8625 = vsel %vm8595, %v8496, 0.0
        %v8626 = vadd.f32 %v8624, %v8625
        %v8627 = vsel %vm8595, %v8498, 0.0
        %v8628 = vadd.f32 %v8626, %v8627
        %v8629 = vsel %vm8595, %v8500, 0.0
        %v8630 = vadd.f32 %v8628, %v8629
        %v8631 = vsel %vm8595, %v8502, 0.0
        %v8632 = vadd.f32 %v8630, %v8631
        %v8633 = vsel %vm8595, %v8504, 0.0
        %v8634 = vadd.f32 %v8632, %v8633
        %v8635 = vsel %vm8595, %v8506, 0.0
        %v8636 = vadd.f32 %v8634, %v8635
        %v8637 = vsel %vm8595, %v8508, 0.0
        %v8638 = vadd.f32 %v8636, %v8637
        %v8639 = vsel %vm8595, %v8510, 0.0
        %v8640 = vadd.f32 %v8638, %v8639
        %v8641 = vsel %vm8595, %v8512, 0.0
        %v8642 = vadd.f32 %v8640, %v8641
        %v8643 = vsel %vm8595, %v8514, 0.0
        %v8644 = vadd.f32 %v8642, %v8643
        %v8645 = vsel %vm8595, %v8516, 0.0
        %v8646 = vadd.f32 %v8644, %v8645
        %v8647 = vsel %vm8595, %v8518, 0.0
        %v8648 = vadd.f32 %v8646, %v8647
        %v8649 = vsel %vm8595, %v8520, 0.0
        %v8650 = vadd.f32 %v8648, %v8649
        %v8651 = vsel %vm8595, %v8522, 0.0
        %v8652 = vadd.f32 %v8650, %v8651
        %v8653 = vsel %vm8595, %v8524, 0.0
        %v8654 = vadd.f32 %v8652, %v8653
        %v8655 = vsel %vm8595, %v8526, 0.0
        %v8656 = vadd.f32 %v8654, %v8655
        %v8657 = vsel %vm8595, %v8528, 0.0
        %v8658 = vadd.f32 %v8656, %v8657
        %v8659 = vsel %vm8595, %v8530, 0.0
        %v8660 = vadd.f32 %v8658, %v8659
        %v8661 = vsel %vm8595, %v8532, 0.0
        %v8662 = vadd.f32 %v8660, %v8661
        %v8663 = vsel %vm8595, %v8534, 0.0
        %v8664 = vadd.f32 %v8662, %v8663
        %v8665 = vsel %vm8595, %v8536, 0.0
        %v8666 = vadd.f32 %v8664, %v8665
        %v8667 = vsel %vm8595, %v8538, 0.0
        %v8668 = vadd.f32 %v8666, %v8667
        %v8669 = vsel %vm8595, %v8540, 0.0
        %v8670 = vadd.f32 %v8668, %v8669
        %v8671 = vsel %vm8595, %v8542, 0.0
        %v8672 = vadd.f32 %v8670, %v8671
        %v8673 = vsel %vm8595, %v8544, 0.0
        %v8674 = vadd.f32 %v8672, %v8673
        %v8675 = vsel %vm8595, %v8546, 0.0
        %v8676 = vadd.f32 %v8674, %v8675
        %v8677 = vsel %vm8595, %v8548, 0.0
        %v8678 = vadd.f32 %v8676, %v8677
        %v8679 = vsel %vm8595, %v8550, 0.0
        %v8680 = vadd.f32 %v8678, %v8679
        %v8681 = vsel %vm8595, %v8552, 0.0
        %v8682 = vadd.f32 %v8680, %v8681
        %v8683 = vsel %vm8595, %v8554, 0.0
        %v8684 = vadd.f32 %v8682, %v8683
        %v8685 = vsel %vm8595, %v8556, 0.0
        %v8686 = vadd.f32 %v8684, %v8685
        %v8687 = vsel %vm8595, %v8558, 0.0
        %v8688 = vadd.f32 %v8686, %v8687
        %v8689 = vsel %vm8595, %v8560, 0.0
        %v8690 = vadd.f32 %v8688, %v8689
        %v8691 = vsel %vm8595, %v8562, 0.0
        %v8692 = vadd.f32 %v8690, %v8691
        %v8693 = vsel %vm8595, %v8564, 0.0
        %v8694 = vadd.f32 %v8692, %v8693
        %v8695 = vsel %vm8595, %v8566, 0.0
        %v8696 = vadd.f32 %v8694, %v8695
        %v8697 = vsel %vm8595, %v8568, 0.0
        %v8698 = vadd.f32 %v8696, %v8697
        %v8699 = vsel %vm8595, %v8570, 0.0
        %v8700 = vadd.f32 %v8698, %v8699
        %v8701 = vsel %vm8595, %v8572, 0.0
        %v8702 = vadd.f32 %v8700, %v8701
        %v8703 = vsel %vm8595, %v8574, 0.0
        %v8704 = vadd.f32 %v8702, %v8703
        %v8705 = vsel %vm8595, %v8576, 0.0
        %v8706 = vadd.f32 %v8704, %v8705
        %v8707 = vsel %vm8595, %v8578, 0.0
        %v8708 = vadd.f32 %v8706, %v8707
        %v8709 = vsel %vm8595, %v8580, 0.0
        %v8710 = vadd.f32 %v8708, %v8709
        %v8711 = vsel %vm8595, %v8582, 0.0
        %v8712 = vadd.f32 %v8710, %v8711
        %v8713 = vsel %vm8595, %v8584, 0.0
        %v8714 = vadd.f32 %v8712, %v8713
        %v8715 = vsel %vm8595, %v8586, 0.0
        %v8716 = vadd.f32 %v8714, %v8715
        %v8717 = vsel %vm8595, %v8588, 0.0
        %v8718 = vadd.f32 %v8716, %v8717
        %v8719 = vsel %vm8595, %v8590, 0.0
        %v8720 = vadd.f32 %v8718, %v8719
        %v8721 = vsel %vm8595, %v8592, 0.0
        %v8722 = vadd.f32 %v8720, %v8721
        %8723 = vadd.xlane.f32.xlu0 %v8722
        %v8724 = vpop.xlane.xlu0 %8723
        %v8725 = vrot.slane %v8724, 4
        %v8726 = vadd.f32 %v8724, %v8725
        %v8727 = vrot.slane %v8726, 2
        %v8728 = vadd.f32 %v8726, %v8727
        %v8729 = vrot.slane %v8728, 1
        %v8730 = vadd.f32 %v8728, %v8729
        %s8731 = vtos %v8730
        %v8732 = vstv %s8731
        %v8733 = vadd.f32 %v8594, %v8732
        %vm8734 = vcmask 0
        %8735 = vst.msk [vmem:[#allocation3] sm:$0x1] %vm8734, %v8733
        %v8736 = vld [vmem:[#allocation4] sm:$0xf]
        %8738 = vset.pattern.permute.xlu0 0
        %8739 = vperm.xlu0 %8738, %v8397
        %v8740 = vpop.permute.xlu0 %8739
        %v8742 = vperm.slane %v8740, 0
        %v8743 = vmul.f32 %v8742, %v8736
        %8745 = vset.pattern.permute.xlu0 0
        %8746 = vperm.xlu0 %8745, %v8466
        %v8747 = vpop.permute.xlu0 %8746
        %8750 = vset.pattern.permute.xlu0 0
        %8751 = vperm.xlu0 %8750, %v8468
        %v8752 = vpop.permute.xlu0 %8751
        %8755 = vset.pattern.permute.xlu0 0
        %8756 = vperm.xlu0 %8755, %v8470
        %v8757 = vpop.permute.xlu0 %8756
        %8760 = vset.pattern.permute.xlu0 0
        %8761 = vperm.xlu0 %8760, %v8472
        %v8762 = vpop.permute.xlu0 %8761
        %8765 = vset.pattern.permute.xlu0 0
        %8766 = vperm.xlu0 %8765, %v8474
        %v8767 = vpop.permute.xlu0 %8766
        %8770 = vset.pattern.permute.xlu0 0
        %8771 = vperm.xlu0 %8770, %v8476
        %v8772 = vpop.permute.xlu0 %8771
        %8775 = vset.pattern.permute.xlu0 0
        %8776 = vperm.xlu0 %8775, %v8478
        %v8777 = vpop.permute.xlu0 %8776
        %8780 = vset.pattern.permute.xlu0 0
        %8781 = vperm.xlu0 %8780, %v8480
        %v8782 = vpop.permute.xlu0 %8781
        %8785 = vset.pattern.permute.xlu0 0
        %8786 = vperm.xlu0 %8785, %v8482
        %v8787 = vpop.permute.xlu0 %8786
        %8790 = vset.pattern.permute.xlu0 0
        %8791 = vperm.xlu0 %8790, %v8484
        %v8792 = vpop.permute.xlu0 %8791
        %8795 = vset.pattern.permute.xlu0 0
        %8796 = vperm.xlu0 %8795, %v8486
        %v8797 = vpop.permute.xlu0 %8796
        %8800 = vset.pattern.permute.xlu0 0
        %8801 = vperm.xlu0 %8800, %v8488
        %v8802 = vpop.permute.xlu0 %8801
        %8805 = vset.pattern.permute.xlu0 0
        %8806 = vperm.xlu0 %8805, %v8490
        %v8807 = vpop.permute.xlu0 %8806
        %8810 = vset.pattern.permute.xlu0 0
        %8811 = vperm.xlu0 %8810, %v8492
        %v8812 = vpop.permute.xlu0 %8811
        %8815 = vset.pattern.permute.xlu0 0
        %8816 = vperm.xlu0 %8815, %v8494
        %v8817 = vpop.permute.xlu0 %8816
        %8820 = vset.pattern.permute.xlu0 0
        %8821 = vperm.xlu0 %8820, %v8496
        %v8822 = vpop.permute.xlu0 %8821
        %8825 = vset.pattern.permute.xlu0 0
        %8826 = vperm.xlu0 %8825, %v8498
        %v8827 = vpop.permute.xlu0 %8826
        %8830 = vset.pattern.permute.xlu0 0
        %8831 = vperm.xlu0 %8830, %v8500
        %v8832 = vpop.permute.xlu0 %8831
        %8835 = vset.pattern.permute.xlu0 0
        %8836 = vperm.xlu0 %8835, %v8502
        %v8837 = vpop.permute.xlu0 %8836
        %8840 = vset.pattern.permute.xlu0 0
        %8841 = vperm.xlu0 %8840, %v8504
        %v8842 = vpop.permute.xlu0 %8841
        %8845 = vset.pattern.permute.xlu0 0
        %8846 = vperm.xlu0 %8845, %v8506
        %v8847 = vpop.permute.xlu0 %8846
        %8850 = vset.pattern.permute.xlu0 0
        %8851 = vperm.xlu0 %8850, %v8508
        %v8852 = vpop.permute.xlu0 %8851
        %8855 = vset.pattern.permute.xlu0 0
        %8856 = vperm.xlu0 %8855, %v8510
        %v8857 = vpop.permute.xlu0 %8856
        %8860 = vset.pattern.permute.xlu0 0
        %8861 = vperm.xlu0 %8860, %v8512
        %v8862 = vpop.permute.xlu0 %8861
        %8865 = vset.pattern.permute.xlu0 0
        %8866 = vperm.xlu0 %8865, %v8514
        %v8867 = vpop.permute.xlu0 %8866
        %8870 = vset.pattern.permute.xlu0 0
        %8871 = vperm.xlu0 %8870, %v8516
        %v8872 = vpop.permute.xlu0 %8871
        %8875 = vset.pattern.permute.xlu0 0
        %8876 = vperm.xlu0 %8875, %v8518
        %v8877 = vpop.permute.xlu0 %8876
        %8880 = vset.pattern.permute.xlu0 0
        %8881 = vperm.xlu0 %8880, %v8520
        %v8882 = vpop.permute.xlu0 %8881
        %8885 = vset.pattern.permute.xlu0 0
        %8886 = vperm.xlu0 %8885, %v8522
        %v8887 = vpop.permute.xlu0 %8886
        %8890 = vset.pattern.permute.xlu0 0
        %8891 = vperm.xlu0 %8890, %v8524
        %v8892 = vpop.permute.xlu0 %8891
        %8895 = vset.pattern.permute.xlu0 0
        %8896 = vperm.xlu0 %8895, %v8526
        %v8897 = vpop.permute.xlu0 %8896
        %8900 = vset.pattern.permute.xlu0 0
        %8901 = vperm.xlu0 %8900, %v8528
        %v8902 = vpop.permute.xlu0 %8901
        %8905 = vset.pattern.permute.xlu0 0
        %8906 = vperm.xlu0 %8905, %v8530
        %v8907 = vpop.permute.xlu0 %8906
        %8910 = vset.pattern.permute.xlu0 0
        %8911 = vperm.xlu0 %8910, %v8532
        %v8912 = vpop.permute.xlu0 %8911
        %8915 = vset.pattern.permute.xlu0 0
        %8916 = vperm.xlu0 %8915, %v8534
        %v8917 = vpop.permute.xlu0 %8916
        %8920 = vset.pattern.permute.xlu0 0
        %8921 = vperm.xlu0 %8920, %v8536
        %v8922 = vpop.permute.xlu0 %8921
        %8925 = vset.pattern.permute.xlu0 0
        %8926 = vperm.xlu0 %8925, %v8538
        %v8927 = vpop.permute.xlu0 %8926
        %8930 = vset.pattern.permute.xlu0 0
        %8931 = vperm.xlu0 %8930, %v8540
        %v8932 = vpop.permute.xlu0 %8931
        %8935 = vset.pattern.permute.xlu0 0
        %8936 = vperm.xlu0 %8935, %v8542
        %v8937 = vpop.permute.xlu0 %8936
        %8940 = vset.pattern.permute.xlu0 0
        %8941 = vperm.xlu0 %8940, %v8544
        %v8942 = vpop.permute.xlu0 %8941
        %8945 = vset.pattern.permute.xlu0 0
        %8946 = vperm.xlu0 %8945, %v8546
        %v8947 = vpop.permute.xlu0 %8946
        %8950 = vset.pattern.permute.xlu0 0
        %8951 = vperm.xlu0 %8950, %v8548
        %v8952 = vpop.permute.xlu0 %8951
        %8955 = vset.pattern.permute.xlu0 0
        %8956 = vperm.xlu0 %8955, %v8550
        %v8957 = vpop.permute.xlu0 %8956
        %8960 = vset.pattern.permute.xlu0 0
        %8961 = vperm.xlu0 %8960, %v8552
        %v8962 = vpop.permute.xlu0 %8961
        %8965 = vset.pattern.permute.xlu0 0
        %8966 = vperm.xlu0 %8965, %v8554
        %v8967 = vpop.permute.xlu0 %8966
        %8970 = vset.pattern.permute.xlu0 0
        %8971 = vperm.xlu0 %8970, %v8556
        %v8972 = vpop.permute.xlu0 %8971
        %8975 = vset.pattern.permute.xlu0 0
        %8976 = vperm.xlu0 %8975, %v8558
        %v8977 = vpop.permute.xlu0 %8976
        %8980 = vset.pattern.permute.xlu0 0
        %8981 = vperm.xlu0 %8980, %v8560
        %v8982 = vpop.permute.xlu0 %8981
        %8985 = vset.pattern.permute.xlu0 0
        %8986 = vperm.xlu0 %8985, %v8562
        %v8987 = vpop.permute.xlu0 %8986
        %8990 = vset.pattern.permute.xlu0 0
        %8991 = vperm.xlu0 %8990, %v8564
        %v8992 = vpop.permute.xlu0 %8991
        %8995 = vset.pattern.permute.xlu0 0
        %8996 = vperm.xlu0 %8995, %v8566
        %v8997 = vpop.permute.xlu0 %8996
        %9000 = vset.pattern.permute.xlu0 0
        %9001 = vperm.xlu0 %9000, %v8568
        %v9002 = vpop.permute.xlu0 %9001
        %9005 = vset.pattern.permute.xlu0 0
        %9006 = vperm.xlu0 %9005, %v8570
        %v9007 = vpop.permute.xlu0 %9006
        %9010 = vset.pattern.permute.xlu0 0
        %9011 = vperm.xlu0 %9010, %v8572
        %v9012 = vpop.permute.xlu0 %9011
        %9015 = vset.pattern.permute.xlu0 0
        %9016 = vperm.xlu0 %9015, %v8574
        %v9017 = vpop.permute.xlu0 %9016
        %9020 = vset.pattern.permute.xlu0 0
        %9021 = vperm.xlu0 %9020, %v8576
        %v9022 = vpop.permute.xlu0 %9021
        %9025 = vset.pattern.permute.xlu0 0
        %9026 = vperm.xlu0 %9025, %v8578
        %v9027 = vpop.permute.xlu0 %9026
        %9030 = vset.pattern.permute.xlu0 0
        %9031 = vperm.xlu0 %9030, %v8580
        %v9032 = vpop.permute.xlu0 %9031
        %9035 = vset.pattern.permute.xlu0 0
        %9036 = vperm.xlu0 %9035, %v8582
        %v9037 = vpop.permute.xlu0 %9036
        %9040 = vset.pattern.permute.xlu0 0
        %9041 = vperm.xlu0 %9040, %v8584
        %v9042 = vpop.permute.xlu0 %9041
        %9045 = vset.pattern.permute.xlu0 0
        %9046 = vperm.xlu0 %9045, %v8586
        %v9047 = vpop.permute.xlu0 %9046
        %9050 = vset.pattern.permute.xlu0 0
        %9051 = vperm.xlu0 %9050, %v8588
        %v9052 = vpop.permute.xlu0 %9051
        %9055 = vset.pattern.permute.xlu0 0
        %9056 = vperm.xlu0 %9055, %v8590
        %v9057 = vpop.permute.xlu0 %9056
        %9060 = vset.pattern.permute.xlu0 0
        %9061 = vperm.xlu0 %9060, %v8592
        %v9062 = vpop.permute.xlu0 %9061
        %v9064 = vmul.f32 %v8747, %v5678
        %v9065 = vmul.f32 %v8747, %v5679
        %v9066 = vmul.f32 %v8747, %v5680
        %v9067 = vmul.f32 %v8747, %v5681
        %v9068 = vmul.f32 %v8752, %v5682
        %v9069 = vmul.f32 %v8752, %v5683
        %v9070 = vmul.f32 %v8752, %v5684
        %v9071 = vmul.f32 %v8752, %v5685
        %v9072 = vmul.f32 %v8757, %v5686
        %v9073 = vmul.f32 %v8757, %v5687
        %v9074 = vmul.f32 %v8757, %v5688
        %v9075 = vmul.f32 %v8757, %v5689
        %v9076 = vmul.f32 %v8762, %v5690
        %v9077 = vmul.f32 %v8762, %v5691
        %v9078 = vmul.f32 %v8762, %v5692
        %v9079 = vmul.f32 %v8762, %v5693
        %v9080 = vmul.f32 %v8767, %v5694
        %v9081 = vmul.f32 %v8767, %v5695
        %v9082 = vmul.f32 %v8767, %v5696
        %v9083 = vmul.f32 %v8767, %v5697
        %v9084 = vmul.f32 %v8772, %v5698
        %v9085 = vmul.f32 %v8772, %v5699
        %v9086 = vmul.f32 %v8772, %v5700
        %v9087 = vmul.f32 %v8772, %v5701
        %v9088 = vmul.f32 %v8777, %v5702
        %v9089 = vmul.f32 %v8777, %v5703
        %v9090 = vmul.f32 %v8777, %v5704
        %v9091 = vmul.f32 %v8777, %v5705
        %v9092 = vmul.f32 %v8782, %v5706
        %v9093 = vmul.f32 %v8782, %v5707
        %v9094 = vmul.f32 %v8782, %v5708
        %v9095 = vmul.f32 %v8782, %v5709
        %v9096 = vmul.f32 %v8787, %v5710
        %v9097 = vmul.f32 %v8787, %v5711
        %v9098 = vmul.f32 %v8787, %v5712
        %v9099 = vmul.f32 %v8787, %v5713
        %v9100 = vmul.f32 %v8792, %v5714
        %v9101 = vmul.f32 %v8792, %v5715
        %v9102 = vmul.f32 %v8792, %v5716
        %v9103 = vmul.f32 %v8792, %v5717
        %v9104 = vmul.f32 %v8797, %v5718
        %v9105 = vmul.f32 %v8797, %v5719
        %v9106 = vmul.f32 %v8797, %v5720
        %v9107 = vmul.f32 %v8797, %v5721
        %v9108 = vmul.f32 %v8802, %v5722
        %v9109 = vmul.f32 %v8802, %v5723
        %v9110 = vmul.f32 %v8802, %v5724
        %v9111 = vmul.f32 %v8802, %v5725
        %v9112 = vmul.f32 %v8807, %v5726
        %v9113 = vmul.f32 %v8807, %v5727
        %v9114 = vmul.f32 %v8807, %v5728
        %v9115 = vmul.f32 %v8807, %v5729
        %v9116 = vmul.f32 %v8812, %v5730
        %v9117 = vmul.f32 %v8812, %v5731
        %v9118 = vmul.f32 %v8812, %v5732
        %v9119 = vmul.f32 %v8812, %v5733
        %v9120 = vmul.f32 %v8817, %v5734
        %v9121 = vmul.f32 %v8817, %v5735
        %v9122 = vmul.f32 %v8817, %v5736
        %v9123 = vmul.f32 %v8817, %v5737
        %v9124 = vmul.f32 %v8822, %v5738
        %v9125 = vmul.f32 %v8822, %v5739
        %v9126 = vmul.f32 %v8822, %v5740
        %v9127 = vmul.f32 %v8822, %v5741
        %v9128 = vmul.f32 %v8827, %v5742
        %v9129 = vmul.f32 %v8827, %v5743
        %v9130 = vmul.f32 %v8827, %v5744
        %v9131 = vmul.f32 %v8827, %v5745
        %v9132 = vmul.f32 %v8832, %v5746
        %v9133 = vmul.f32 %v8832, %v5747
        %v9134 = vmul.f32 %v8832, %v5748
        %v9135 = vmul.f32 %v8832, %v5749
        %v9136 = vmul.f32 %v8837, %v5750
        %v9137 = vmul.f32 %v8837, %v5751
        %v9138 = vmul.f32 %v8837, %v5752
        %v9139 = vmul.f32 %v8837, %v5753
        %v9140 = vmul.f32 %v8842, %v5754
        %v9141 = vmul.f32 %v8842, %v5755
        %v9142 = vmul.f32 %v8842, %v5756
        %v9143 = vmul.f32 %v8842, %v5757
        %v9144 = vmul.f32 %v8847, %v5758
        %v9145 = vmul.f32 %v8847, %v5759
        %v9146 = vmul.f32 %v8847, %v5760
        %v9147 = vmul.f32 %v8847, %v5761
        %v9148 = vmul.f32 %v8852, %v5762
        %v9149 = vmul.f32 %v8852, %v5763
        %v9150 = vmul.f32 %v8852, %v5764
        %v9151 = vmul.f32 %v8852, %v5765
        %v9152 = vmul.f32 %v8857, %v5766
        %v9153 = vmul.f32 %v8857, %v5767
        %v9154 = vmul.f32 %v8857, %v5768
        %v9155 = vmul.f32 %v8857, %v5769
        %v9156 = vmul.f32 %v8862, %v5770
        %v9157 = vmul.f32 %v8862, %v5771
        %v9158 = vmul.f32 %v8862, %v5772
        %v9159 = vmul.f32 %v8862, %v5773
        %v9160 = vmul.f32 %v8867, %v5774
        %v9161 = vmul.f32 %v8867, %v5775
        %v9162 = vmul.f32 %v8867, %v5776
        %v9163 = vmul.f32 %v8867, %v5777
        %v9164 = vmul.f32 %v8872, %v5778
        %v9165 = vmul.f32 %v8872, %v5779
        %v9166 = vmul.f32 %v8872, %v5780
        %v9167 = vmul.f32 %v8872, %v5781
        %v9168 = vmul.f32 %v8877, %v5782
        %v9169 = vmul.f32 %v8877, %v5783
        %v9170 = vmul.f32 %v8877, %v5784
        %v9171 = vmul.f32 %v8877, %v5785
        %v9172 = vmul.f32 %v8882, %v5786
        %v9173 = vmul.f32 %v8882, %v5787
        %v9174 = vmul.f32 %v8882, %v5788
        %v9175 = vmul.f32 %v8882, %v5789
        %v9176 = vmul.f32 %v8887, %v5790
        %v9177 = vmul.f32 %v8887, %v5791
        %v9178 = vmul.f32 %v8887, %v5792
        %v9179 = vmul.f32 %v8887, %v5793
        %v9180 = vmul.f32 %v8892, %v5794
        %v9181 = vmul.f32 %v8892, %v5795
        %v9182 = vmul.f32 %v8892, %v5796
        %v9183 = vmul.f32 %v8892, %v5797
        %v9184 = vmul.f32 %v8897, %v5798
        %v9185 = vmul.f32 %v8897, %v5799
        %v9186 = vmul.f32 %v8897, %v5800
        %v9187 = vmul.f32 %v8897, %v5801
        %v9188 = vmul.f32 %v8902, %v5802
        %v9189 = vmul.f32 %v8902, %v5803
        %v9190 = vmul.f32 %v8902, %v5804
        %v9191 = vmul.f32 %v8902, %v5805
        %v9192 = vmul.f32 %v8907, %v5806
        %v9193 = vmul.f32 %v8907, %v5807
        %v9194 = vmul.f32 %v8907, %v5808
        %v9195 = vmul.f32 %v8907, %v5809
        %v9196 = vmul.f32 %v8912, %v5810
        %v9197 = vmul.f32 %v8912, %v5811
        %v9198 = vmul.f32 %v8912, %v5812
        %v9199 = vmul.f32 %v8912, %v5813
        %v9200 = vmul.f32 %v8917, %v5814
        %v9201 = vmul.f32 %v8917, %v5815
        %v9202 = vmul.f32 %v8917, %v5816
        %v9203 = vmul.f32 %v8917, %v5817
        %v9204 = vmul.f32 %v8922, %v5818
        %v9205 = vmul.f32 %v8922, %v5819
        %v9206 = vmul.f32 %v8922, %v5820
        %v9207 = vmul.f32 %v8922, %v5821
        %v9208 = vmul.f32 %v8927, %v5822
        %v9209 = vmul.f32 %v8927, %v5823
        %v9210 = vmul.f32 %v8927, %v5824
        %v9211 = vmul.f32 %v8927, %v5825
        %v9212 = vmul.f32 %v8932, %v5826
        %v9213 = vmul.f32 %v8932, %v5827
        %v9214 = vmul.f32 %v8932, %v5828
        %v9215 = vmul.f32 %v8932, %v5829
        %v9216 = vmul.f32 %v8937, %v5830
        %v9217 = vmul.f32 %v8937, %v5831
        %v9218 = vmul.f32 %v8937, %v5832
        %v9219 = vmul.f32 %v8937, %v5833
        %v9220 = vmul.f32 %v8942, %v5834
        %v9221 = vmul.f32 %v8942, %v5835
        %v9222 = vmul.f32 %v8942, %v5836
        %v9223 = vmul.f32 %v8942, %v5837
        %v9224 = vmul.f32 %v8947, %v5838
        %v9225 = vmul.f32 %v8947, %v5839
        %v9226 = vmul.f32 %v8947, %v5840
        %v9227 = vmul.f32 %v8947, %v5841
        %v9228 = vmul.f32 %v8952, %v5842
        %v9229 = vmul.f32 %v8952, %v5843
        %v9230 = vmul.f32 %v8952, %v5844
        %v9231 = vmul.f32 %v8952, %v5845
        %v9232 = vmul.f32 %v8957, %v5846
        %v9233 = vmul.f32 %v8957, %v5847
        %v9234 = vmul.f32 %v8957, %v5848
        %v9235 = vmul.f32 %v8957, %v5849
        %v9236 = vmul.f32 %v8962, %v5850
        %v9237 = vmul.f32 %v8962, %v5851
        %v9238 = vmul.f32 %v8962, %v5852
        %v9239 = vmul.f32 %v8962, %v5853
        %v9240 = vmul.f32 %v8967, %v5854
        %v9241 = vmul.f32 %v8967, %v5855
        %v9242 = vmul.f32 %v8967, %v5856
        %v9243 = vmul.f32 %v8967, %v5857
        %v9244 = vmul.f32 %v8972, %v5858
        %v9245 = vmul.f32 %v8972, %v5859
        %v9246 = vmul.f32 %v8972, %v5860
        %v9247 = vmul.f32 %v8972, %v5861
        %v9248 = vmul.f32 %v8977, %v5862
        %v9249 = vmul.f32 %v8977, %v5863
        %v9250 = vmul.f32 %v8977, %v5864
        %v9251 = vmul.f32 %v8977, %v5865
        %v9252 = vmul.f32 %v8982, %v5866
        %v9253 = vmul.f32 %v8982, %v5867
        %v9254 = vmul.f32 %v8982, %v5868
        %v9255 = vmul.f32 %v8982, %v5869
        %v9256 = vmul.f32 %v8987, %v5870
        %v9257 = vmul.f32 %v8987, %v5871
        %v9258 = vmul.f32 %v8987, %v5872
        %v9259 = vmul.f32 %v8987, %v5873
        %v9260 = vmul.f32 %v8992, %v5874
        %v9261 = vmul.f32 %v8992, %v5875
        %v9262 = vmul.f32 %v8992, %v5876
        %v9263 = vmul.f32 %v8992, %v5877
        %v9264 = vmul.f32 %v8997, %v5878
        %v9265 = vmul.f32 %v8997, %v5879
        %v9266 = vmul.f32 %v8997, %v5880
        %v9267 = vmul.f32 %v8997, %v5881
        %v9268 = vmul.f32 %v9002, %v5882
        %v9269 = vmul.f32 %v9002, %v5883
        %v9270 = vmul.f32 %v9002, %v5884
        %v9271 = vmul.f32 %v9002, %v5885
        %v9272 = vmul.f32 %v9007, %v5886
        %v9273 = vmul.f32 %v9007, %v5887
        %v9274 = vmul.f32 %v9007, %v5888
        %v9275 = vmul.f32 %v9007, %v5889
        %v9276 = vmul.f32 %v9012, %v5890
        %v9277 = vmul.f32 %v9012, %v5891
        %v9278 = vmul.f32 %v9012, %v5892
        %v9279 = vmul.f32 %v9012, %v5893
        %v9280 = vmul.f32 %v9017, %v5894
        %v9281 = vmul.f32 %v9017, %v5895
        %v9282 = vmul.f32 %v9017, %v5896
        %v9283 = vmul.f32 %v9017, %v5897
        %v9284 = vmul.f32 %v9022, %v5898
        %v9285 = vmul.f32 %v9022, %v5899
        %v9286 = vmul.f32 %v9022, %v5900
        %v9287 = vmul.f32 %v9022, %v5901
        %v9288 = vmul.f32 %v9027, %v5902
        %v9289 = vmul.f32 %v9027, %v5903
        %v9290 = vmul.f32 %v9027, %v5904
        %v9291 = vmul.f32 %v9027, %v5905
        %v9292 = vmul.f32 %v9032, %v5906
        %v9293 = vmul.f32 %v9032, %v5907
        %v9294 = vmul.f32 %v9032, %v5908
        %v9295 = vmul.f32 %v9032, %v5909
        %v9296 = vmul.f32 %v9037, %v5910
        %v9297 = vmul.f32 %v9037, %v5911
        %v9298 = vmul.f32 %v9037, %v5912
        %v9299 = vmul.f32 %v9037, %v5913
        %v9300 = vmul.f32 %v9042, %v5914
        %v9301 = vmul.f32 %v9042, %v5915
        %v9302 = vmul.f32 %v9042, %v5916
        %v9303 = vmul.f32 %v9042, %v5917
        %v9304 = vmul.f32 %v9047, %v5918
        %v9305 = vmul.f32 %v9047, %v5919
        %v9306 = vmul.f32 %v9047, %v5920
        %v9307 = vmul.f32 %v9047, %v5921
        %v9308 = vmul.f32 %v9052, %v5922
        %v9309 = vmul.f32 %v9052, %v5923
        %v9310 = vmul.f32 %v9052, %v5924
        %v9311 = vmul.f32 %v9052, %v5925
        %v9312 = vmul.f32 %v9057, %v5926
        %v9313 = vmul.f32 %v9057, %v5927
        %v9314 = vmul.f32 %v9057, %v5928
        %v9315 = vmul.f32 %v9057, %v5929
        %v9316 = vmul.f32 %v9062, %v5930
        %v9317 = vmul.f32 %v9062, %v5931
        %v9318 = vmul.f32 %v9062, %v5932
        %v9319 = vmul.f32 %v9062, %v5933
        %v9320 = vadd.f32 %v9064, %v9068
        %v9321 = vadd.f32 %v9320, %v9072
        %v9322 = vadd.f32 %v9321, %v9076
        %v9323 = vadd.f32 %v9322, %v9080
        %v9324 = vadd.f32 %v9323, %v9084
        %v9325 = vadd.f32 %v9324, %v9088
        %v9326 = vadd.f32 %v9325, %v9092
        %v9327 = vadd.f32 %v9326, %v9096
        %v9328 = vadd.f32 %v9327, %v9100
        %v9329 = vadd.f32 %v9328, %v9104
        %v9330 = vadd.f32 %v9329, %v9108
        %v9331 = vadd.f32 %v9330, %v9112
        %v9332 = vadd.f32 %v9331, %v9116
        %v9333 = vadd.f32 %v9332, %v9120
        %v9334 = vadd.f32 %v9333, %v9124
        %v9335 = vadd.f32 %v9334, %v9128
        %v9336 = vadd.f32 %v9335, %v9132
        %v9337 = vadd.f32 %v9336, %v9136
        %v9338 = vadd.f32 %v9337, %v9140
        %v9339 = vadd.f32 %v9338, %v9144
        %v9340 = vadd.f32 %v9339, %v9148
        %v9341 = vadd.f32 %v9340, %v9152
        %v9342 = vadd.f32 %v9341, %v9156
        %v9343 = vadd.f32 %v9342, %v9160
        %v9344 = vadd.f32 %v9343, %v9164
        %v9345 = vadd.f32 %v9344, %v9168
        %v9346 = vadd.f32 %v9345, %v9172
        %v9347 = vadd.f32 %v9346, %v9176
        %v9348 = vadd.f32 %v9347, %v9180
        %v9349 = vadd.f32 %v9348, %v9184
        %v9350 = vadd.f32 %v9349, %v9188
        %v9351 = vadd.f32 %v9350, %v9192
        %v9352 = vadd.f32 %v9351, %v9196
        %v9353 = vadd.f32 %v9352, %v9200
        %v9354 = vadd.f32 %v9353, %v9204
        %v9355 = vadd.f32 %v9354, %v9208
        %v9356 = vadd.f32 %v9355, %v9212
        %v9357 = vadd.f32 %v9356, %v9216
        %v9358 = vadd.f32 %v9357, %v9220
        %v9359 = vadd.f32 %v9358, %v9224
        %v9360 = vadd.f32 %v9359, %v9228
        %v9361 = vadd.f32 %v9360, %v9232
        %v9362 = vadd.f32 %v9361, %v9236
        %v9363 = vadd.f32 %v9362, %v9240
        %v9364 = vadd.f32 %v9363, %v9244
        %v9365 = vadd.f32 %v9364, %v9248
        %v9366 = vadd.f32 %v9365, %v9252
        %v9367 = vadd.f32 %v9366, %v9256
        %v9368 = vadd.f32 %v9367, %v9260
        %v9369 = vadd.f32 %v9368, %v9264
        %v9370 = vadd.f32 %v9369, %v9268
        %v9371 = vadd.f32 %v9370, %v9272
        %v9372 = vadd.f32 %v9371, %v9276
        %v9373 = vadd.f32 %v9372, %v9280
        %v9374 = vadd.f32 %v9373, %v9284
        %v9375 = vadd.f32 %v9374, %v9288
        %v9376 = vadd.f32 %v9375, %v9292
        %v9377 = vadd.f32 %v9376, %v9296
        %v9378 = vadd.f32 %v9377, %v9300
        %v9379 = vadd.f32 %v9378, %v9304
        %v9380 = vadd.f32 %v9379, %v9308
        %v9381 = vadd.f32 %v9380, %v9312
        %v9382 = vadd.f32 %v9381, %v9316
        %v9383 = vrot.slane %v9382, 4
        %v9384 = vadd.f32 %v9382, %v9383
        %v9385 = vrot.slane %v9384, 2
        %v9386 = vadd.f32 %v9384, %v9385
        %v9387 = vrot.slane %v9386, 1
        %v9388 = vadd.f32 %v9386, %v9387
        %v9389 = vadd.f32 %v9065, %v9069
        %v9390 = vadd.f32 %v9389, %v9073
        %v9391 = vadd.f32 %v9390, %v9077
        %v9392 = vadd.f32 %v9391, %v9081
        %v9393 = vadd.f32 %v9392, %v9085
        %v9394 = vadd.f32 %v9393, %v9089
        %v9395 = vadd.f32 %v9394, %v9093
        %v9396 = vadd.f32 %v9395, %v9097
        %v9397 = vadd.f32 %v9396, %v9101
        %v9398 = vadd.f32 %v9397, %v9105
        %v9399 = vadd.f32 %v9398, %v9109
        %v9400 = vadd.f32 %v9399, %v9113
        %v9401 = vadd.f32 %v9400, %v9117
        %v9402 = vadd.f32 %v9401, %v9121
        %v9403 = vadd.f32 %v9402, %v9125
        %v9404 = vadd.f32 %v9403, %v9129
        %v9405 = vadd.f32 %v9404, %v9133
        %v9406 = vadd.f32 %v9405, %v9137
        %v9407 = vadd.f32 %v9406, %v9141
        %v9408 = vadd.f32 %v9407, %v9145
        %v9409 = vadd.f32 %v9408, %v9149
        %v9410 = vadd.f32 %v9409, %v9153
        %v9411 = vadd.f32 %v9410, %v9157
        %v9412 = vadd.f32 %v9411, %v9161
        %v9413 = vadd.f32 %v9412, %v9165
        %v9414 = vadd.f32 %v9413, %v9169
        %v9415 = vadd.f32 %v9414, %v9173
        %v9416 = vadd.f32 %v9415, %v9177
        %v9417 = vadd.f32 %v9416, %v9181
        %v9418 = vadd.f32 %v9417, %v9185
        %v9419 = vadd.f32 %v9418, %v9189
        %v9420 = vadd.f32 %v9419, %v9193
        %v9421 = vadd.f32 %v9420, %v9197
        %v9422 = vadd.f32 %v9421, %v9201
        %v9423 = vadd.f32 %v9422, %v9205
        %v9424 = vadd.f32 %v9423, %v9209
        %v9425 = vadd.f32 %v9424, %v9213
        %v9426 = vadd.f32 %v9425, %v9217
        %v9427 = vadd.f32 %v9426, %v9221
        %v9428 = vadd.f32 %v9427, %v9225
        %v9429 = vadd.f32 %v9428, %v9229
        %v9430 = vadd.f32 %v9429, %v9233
        %v9431 = vadd.f32 %v9430, %v9237
        %v9432 = vadd.f32 %v9431, %v9241
        %v9433 = vadd.f32 %v9432, %v9245
        %v9434 = vadd.f32 %v9433, %v9249
        %v9435 = vadd.f32 %v9434, %v9253
        %v9436 = vadd.f32 %v9435, %v9257
        %v9437 = vadd.f32 %v9436, %v9261
        %v9438 = vadd.f32 %v9437, %v9265
        %v9439 = vadd.f32 %v9438, %v9269
        %v9440 = vadd.f32 %v9439, %v9273
        %v9441 = vadd.f32 %v9440, %v9277
        %v9442 = vadd.f32 %v9441, %v9281
        %v9443 = vadd.f32 %v9442, %v9285
        %v9444 = vadd.f32 %v9443, %v9289
        %v9445 = vadd.f32 %v9444, %v9293
        %v9446 = vadd.f32 %v9445, %v9297
        %v9447 = vadd.f32 %v9446, %v9301
        %v9448 = vadd.f32 %v9447, %v9305
        %v9449 = vadd.f32 %v9448, %v9309
        %v9450 = vadd.f32 %v9449, %v9313
        %v9451 = vadd.f32 %v9450, %v9317
        %v9452 = vrot.slane %v9451, 4
        %v9453 = vadd.f32 %v9451, %v9452
        %v9454 = vrot.slane %v9453, 2
        %v9455 = vadd.f32 %v9453, %v9454
        %v9456 = vrot.slane %v9455, 1
        %v9457 = vadd.f32 %v9455, %v9456
        %v9458 = vadd.f32 %v9066, %v9070
        %v9459 = vadd.f32 %v9458, %v9074
        %v9460 = vadd.f32 %v9459, %v9078
        %v9461 = vadd.f32 %v9460, %v9082
        %v9462 = vadd.f32 %v9461, %v9086
        %v9463 = vadd.f32 %v9462, %v9090
        %v9464 = vadd.f32 %v9463, %v9094
        %v9465 = vadd.f32 %v9464, %v9098
        %v9466 = vadd.f32 %v9465, %v9102
        %v9467 = vadd.f32 %v9466, %v9106
        %v9468 = vadd.f32 %v9467, %v9110
        %v9469 = vadd.f32 %v9468, %v9114
        %v9470 = vadd.f32 %v9469, %v9118
        %v9471 = vadd.f32 %v9470, %v9122
        %v9472 = vadd.f32 %v9471, %v9126
        %v9473 = vadd.f32 %v9472, %v9130
        %v9474 = vadd.f32 %v9473, %v9134
        %v9475 = vadd.f32 %v9474, %v9138
        %v9476 = vadd.f32 %v9475, %v9142
        %v9477 = vadd.f32 %v9476, %v9146
        %v9478 = vadd.f32 %v9477, %v9150
        %v9479 = vadd.f32 %v9478, %v9154
        %v9480 = vadd.f32 %v9479, %v9158
        %v9481 = vadd.f32 %v9480, %v9162
        %v9482 = vadd.f32 %v9481, %v9166
        %v9483 = vadd.f32 %v9482, %v9170
        %v9484 = vadd.f32 %v9483, %v9174
        %v9485 = vadd.f32 %v9484, %v9178
        %v9486 = vadd.f32 %v9485, %v9182
        %v9487 = vadd.f32 %v9486, %v9186
        %v9488 = vadd.f32 %v9487, %v9190
        %v9489 = vadd.f32 %v9488, %v9194
        %v9490 = vadd.f32 %v9489, %v9198
        %v9491 = vadd.f32 %v9490, %v9202
        %v9492 = vadd.f32 %v9491, %v9206
        %v9493 = vadd.f32 %v9492, %v9210
        %v9494 = vadd.f32 %v9493, %v9214
        %v9495 = vadd.f32 %v9494, %v9218
        %v9496 = vadd.f32 %v9495, %v9222
        %v9497 = vadd.f32 %v9496, %v9226
        %v9498 = vadd.f32 %v9497, %v9230
        %v9499 = vadd.f32 %v9498, %v9234
        %v9500 = vadd.f32 %v9499, %v9238
        %v9501 = vadd.f32 %v9500, %v9242
        %v9502 = vadd.f32 %v9501, %v9246
        %v9503 = vadd.f32 %v9502, %v9250
        %v9504 = vadd.f32 %v9503, %v9254
        %v9505 = vadd.f32 %v9504, %v9258
        %v9506 = vadd.f32 %v9505, %v9262
        %v9507 = vadd.f32 %v9506, %v9266
        %v9508 = vadd.f32 %v9507, %v9270
        %v9509 = vadd.f32 %v9508, %v9274
        %v9510 = vadd.f32 %v9509, %v9278
        %v9511 = vadd.f32 %v9510, %v9282
        %v9512 = vadd.f32 %v9511, %v9286
        %v9513 = vadd.f32 %v9512, %v9290
        %v9514 = vadd.f32 %v9513, %v9294
        %v9515 = vadd.f32 %v9514, %v9298
        %v9516 = vadd.f32 %v9515, %v9302
        %v9517 = vadd.f32 %v9516, %v9306
        %v9518 = vadd.f32 %v9517, %v9310
        %v9519 = vadd.f32 %v9518, %v9314
        %v9520 = vadd.f32 %v9519, %v9318
        %v9521 = vrot.slane %v9520, 4
        %v9522 = vadd.f32 %v9520, %v9521
        %v9523 = vrot.slane %v9522, 2
        %v9524 = vadd.f32 %v9522, %v9523
        %v9525 = vrot.slane %v9524, 1
        %v9526 = vadd.f32 %v9524, %v9525
        %v9527 = vadd.f32 %v9067, %v9071
        %v9528 = vadd.f32 %v9527, %v9075
        %v9529 = vadd.f32 %v9528, %v9079
        %v9530 = vadd.f32 %v9529, %v9083
        %v9531 = vadd.f32 %v9530, %v9087
        %v9532 = vadd.f32 %v9531, %v9091
        %v9533 = vadd.f32 %v9532, %v9095
        %v9534 = vadd.f32 %v9533, %v9099
        %v9535 = vadd.f32 %v9534, %v9103
        %v9536 = vadd.f32 %v9535, %v9107
        %v9537 = vadd.f32 %v9536, %v9111
        %v9538 = vadd.f32 %v9537, %v9115
        %v9539 = vadd.f32 %v9538, %v9119
        %v9540 = vadd.f32 %v9539, %v9123
        %v9541 = vadd.f32 %v9540, %v9127
        %v9542 = vadd.f32 %v9541, %v9131
        %v9543 = vadd.f32 %v9542, %v9135
        %v9544 = vadd.f32 %v9543, %v9139
        %v9545 = vadd.f32 %v9544, %v9143
        %v9546 = vadd.f32 %v9545, %v9147
        %v9547 = vadd.f32 %v9546, %v9151
        %v9548 = vadd.f32 %v9547, %v9155
        %v9549 = vadd.f32 %v9548, %v9159
        %v9550 = vadd.f32 %v9549, %v9163
        %v9551 = vadd.f32 %v9550, %v9167
        %v9552 = vadd.f32 %v9551, %v9171
        %v9553 = vadd.f32 %v9552, %v9175
        %v9554 = vadd.f32 %v9553, %v9179
        %v9555 = vadd.f32 %v9554, %v9183
        %v9556 = vadd.f32 %v9555, %v9187
        %v9557 = vadd.f32 %v9556, %v9191
        %v9558 = vadd.f32 %v9557, %v9195
        %v9559 = vadd.f32 %v9558, %v9199
        %v9560 = vadd.f32 %v9559, %v9203
        %v9561 = vadd.f32 %v9560, %v9207
        %v9562 = vadd.f32 %v9561, %v9211
        %v9563 = vadd.f32 %v9562, %v9215
        %v9564 = vadd.f32 %v9563, %v9219
        %v9565 = vadd.f32 %v9564, %v9223
        %v9566 = vadd.f32 %v9565, %v9227
        %v9567 = vadd.f32 %v9566, %v9231
        %v9568 = vadd.f32 %v9567, %v9235
        %v9569 = vadd.f32 %v9568, %v9239
        %v9570 = vadd.f32 %v9569, %v9243
        %v9571 = vadd.f32 %v9570, %v9247
        %v9572 = vadd.f32 %v9571, %v9251
        %v9573 = vadd.f32 %v9572, %v9255
        %v9574 = vadd.f32 %v9573, %v9259
        %v9575 = vadd.f32 %v9574, %v9263
        %v9576 = vadd.f32 %v9575, %v9267
        %v9577 = vadd.f32 %v9576, %v9271
        %v9578 = vadd.f32 %v9577, %v9275
        %v9579 = vadd.f32 %v9578, %v9279
        %v9580 = vadd.f32 %v9579, %v9283
        %v9581 = vadd.f32 %v9580, %v9287
        %v9582 = vadd.f32 %v9581, %v9291
        %v9583 = vadd.f32 %v9582, %v9295
        %v9584 = vadd.f32 %v9583, %v9299
        %v9585 = vadd.f32 %v9584, %v9303
        %v9586 = vadd.f32 %v9585, %v9307
        %v9587 = vadd.f32 %v9586, %v9311
        %v9588 = vadd.f32 %v9587, %v9315
        %v9589 = vadd.f32 %v9588, %v9319
        %v9590 = vrot.slane %v9589, 4
        %v9591 = vadd.f32 %v9589, %v9590
        %v9592 = vrot.slane %v9591, 2
        %v9593 = vadd.f32 %v9591, %v9592
        %v9594 = vrot.slane %v9593, 1
        %v9595 = vadd.f32 %v9593, %v9594
        %v9600 = vrot.slane %v9457, 7
        %v9601 = vrot.slane %v9526, 6
        %v9602 = vrot.slane %v9595, 5
        %v9603 = vsel %vm1705, %v9388, %v9600
        %vm9604 = vcmask 1042434
        %v9605 = vsel %vm9604, %v9601, %v9602
        %vm9606 = vcmask 1041408
        %v9607 = vsel %vm9606, %v9603, %v9605
        %v9609 = vadd.f32 %v8743, %v9607
        %v9610 = vlaneseq
        %vm9611 = vcmp.ge.s32.totalorder %v9610, 0
        %vm9612 = vcmp.lt.s32.totalorder %v9610, 512
        %vm9613 = vmand %vm9611, %vm9612
        %9614 = vst.msk [vmem:[#allocation4] sm:$0xf] %vm9613, %v9609
        %9615 = vst.msk [vmem:[#allocation2] sm:$0x1] %vm8734, %v8394
        %p9616 = scmp.eq.s32.totalorder %s22, 1
        // Predicated region
        $region57: #{tpu_custom_call.1} parent=51 // pred_check
          %p9617 = pneg %p9616
        $region58: #{tpu_custom_call.1} parent=51 // pred_check_branch
          %9619 = sbr.rel (%p9617) target = $region60
        $region59: #{tpu_custom_call.1} parent=51 // pred_region
          %v9620 = vld [vmem:[#allocation4] sm:$0xf]
          %v9621 = vld [vmem:[#allocation3] sm:$0x1]
          %9623 = vset.pattern.permute.xlu0 0
          %9624 = vperm.xlu0 %9623, %v9621
          %v9625 = vpop.permute.xlu0 %9624
          %v9627 = vperm.slane %v9625, 0
          %v9628 = vrcp.pop %v9627
          %v9629 = vmul.f32 %v9627, %v9628
          %v9630 = vsub.f32 1.0, %v9629
          %v9631 = vmul.f32 %v9628, %v9630
          %v9632 = vadd.f32 %v9628, %v9631
          %vm9633 = vweird.f32 %v9627
          %vm9634 = vweird.f32 %v9628
          %vm9635 = vmor %vm9633, %vm9634
          %v9636 = vsel %vm9635, %v9628, %v9632
          %v9637 = vand.u32 2147483647, %v9627
          %vm9638 = vcmp.eq.f32.partialorder %v9637, 8.507059e+37
          %v9639 = vand.u32 %v9627, 2147483648
          %v9640 = vor.u32 1.1754944e-38, %v9639
          %v9641 = vsel %vm9638, %v9640, %v9636
          %v9642 = vmul.f32 %v9620, %v9641
          %v9643 = vld [vmem:[%s7] sm:$0xff]
          %v9644 = vld [vmem:[%s7 + $0x8] sm:$0xff]
          %v9645 = vld [vmem:[%s7 + $0x10] sm:$0xff]
          %v9646 = vld [vmem:[%s7 + $0x18] sm:$0xff]
          %v9647 = vld [vmem:[%s7 + $0x20] sm:$0xff]
          %v9648 = vld [vmem:[%s7 + $0x28] sm:$0xff]
          %v9649 = vld [vmem:[%s7 + $0x30] sm:$0xff]
          %v9650 = vld [vmem:[%s7 + $0x38] sm:$0xff]
          %v9651 = vld [vmem:[%s7 + $0x40] sm:$0xff]
          %v9652 = vld [vmem:[%s7 + $0x48] sm:$0xff]
          %v9653 = vld [vmem:[%s7 + $0x50] sm:$0xff]
          %v9654 = vld [vmem:[%s7 + $0x58] sm:$0xff]
          %v9655 = vld [vmem:[%s7 + $0x60] sm:$0xff]
          %v9656 = vld [vmem:[%s7 + $0x68] sm:$0xff]
          %v9657 = vld [vmem:[%s7 + $0x70] sm:$0xff]
          %v9658 = vld [vmem:[%s7 + $0x78] sm:$0xff]
          %v9659 = vld [vmem:[%s7 + $0x80] sm:$0xff]
          %v9660 = vld [vmem:[%s7 + $0x88] sm:$0xff]
          %v9661 = vld [vmem:[%s7 + $0x90] sm:$0xff]
          %v9662 = vld [vmem:[%s7 + $0x98] sm:$0xff]
          %v9663 = vld [vmem:[%s7 + $0xa0] sm:$0xff]
          %v9664 = vld [vmem:[%s7 + $0xa8] sm:$0xff]
          %v9665 = vld [vmem:[%s7 + $0xb0] sm:$0xff]
          %v9666 = vld [vmem:[%s7 + $0xb8] sm:$0xff]
          %v9667 = vld [vmem:[%s7 + $0xc0] sm:$0xff]
          %v9668 = vld [vmem:[%s7 + $0xc8] sm:$0xff]
          %v9669 = vld [vmem:[%s7 + $0xd0] sm:$0xff]
          %v9670 = vld [vmem:[%s7 + $0xd8] sm:$0xff]
          %v9671 = vld [vmem:[%s7 + $0xe0] sm:$0xff]
          %v9672 = vld [vmem:[%s7 + $0xe8] sm:$0xff]
          %v9673 = vld [vmem:[%s7 + $0xf0] sm:$0xff]
          %v9674 = vld [vmem:[%s7 + $0xf8] sm:$0xff]
          %v9675 = vld [vmem:[%s7 + $0x100] sm:$0xff]
          %v9676 = vld [vmem:[%s7 + $0x108] sm:$0xff]
          %v9677 = vld [vmem:[%s7 + $0x110] sm:$0xff]
          %v9678 = vld [vmem:[%s7 + $0x118] sm:$0xff]
          %v9679 = vld [vmem:[%s7 + $0x120] sm:$0xff]
          %v9680 = vld [vmem:[%s7 + $0x128] sm:$0xff]
          %v9681 = vld [vmem:[%s7 + $0x130] sm:$0xff]
          %v9682 = vld [vmem:[%s7 + $0x138] sm:$0xff]
          %v9683 = vld [vmem:[%s7 + $0x140] sm:$0xff]
          %v9684 = vld [vmem:[%s7 + $0x148] sm:$0xff]
          %v9685 = vld [vmem:[%s7 + $0x150] sm:$0xff]
          %v9686 = vld [vmem:[%s7 + $0x158] sm:$0xff]
          %v9687 = vld [vmem:[%s7 + $0x160] sm:$0xff]
          %v9688 = vld [vmem:[%s7 + $0x168] sm:$0xff]
          %v9689 = vld [vmem:[%s7 + $0x170] sm:$0xff]
          %v9690 = vld [vmem:[%s7 + $0x178] sm:$0xff]
          %v9691 = vld [vmem:[%s7 + $0x180] sm:$0xff]
          %v9692 = vld [vmem:[%s7 + $0x188] sm:$0xff]
          %v9693 = vld [vmem:[%s7 + $0x190] sm:$0xff]
          %v9694 = vld [vmem:[%s7 + $0x198] sm:$0xff]
          %v9695 = vld [vmem:[%s7 + $0x1a0] sm:$0xff]
          %v9696 = vld [vmem:[%s7 + $0x1a8] sm:$0xff]
          %v9697 = vld [vmem:[%s7 + $0x1b0] sm:$0xff]
          %v9698 = vld [vmem:[%s7 + $0x1b8] sm:$0xff]
          %v9699 = vld [vmem:[%s7 + $0x1c0] sm:$0xff]
          %v9700 = vld [vmem:[%s7 + $0x1c8] sm:$0xff]
          %v9701 = vld [vmem:[%s7 + $0x1d0] sm:$0xff]
          %v9702 = vld [vmem:[%s7 + $0x1d8] sm:$0xff]
          %v9703 = vld [vmem:[%s7 + $0x1e0] sm:$0xff]
          %v9704 = vld [vmem:[%s7 + $0x1e8] sm:$0xff]
          %v9705 = vld [vmem:[%s7 + $0x1f0] sm:$0xff]
          %v9706 = vld [vmem:[%s7 + $0x1f8] sm:$0xff]
          %v9707 = vld [vmem:[%s8] sm:$0x1]
          %v9709 = vperm.slane %v9642, 0
          %v9710 = vperm.slane %v9642, 1
          %v9711 = vperm.slane %v9642, 2
          %v9712 = vperm.slane %v9642, 3
          %9717 = vmatpush.msra.mxu0 %v9658
          %9718 = vmatpush.msra.mxu0 %v9657
          %9719 = vmatpush.msra.mxu0 %v9656
          %9720 = vmatpush.msra.mxu0 %v9655
          %9721 = vmatpush.msra.mxu0 %v9654
          %9722 = vmatpush.msra.mxu0 %v9653
          %9723 = vmatpush.msra.mxu0 %v9652
          %9724 = vmatpush.msra.mxu0 %v9651
          %9725 = vmatpush.msra.mxu0 %v9650
          %9726 = vmatpush.msra.mxu0 %v9649
          %9727 = vmatpush.msra.mxu0 %v9648
          %9728 = vmatpush.msra.mxu0 %v9647
          %9729 = vmatpush.msra.mxu0 %v9646
          %9730 = vmatpush.msra.mxu0 %v9645
          %9731 = vmatpush.msra.mxu0 %v9644
          %9732 = vmatpush.msra.mxu0 %v9643
          %9733 = vmatmul.f32.gmra.mxu0 %v9709
          %v9734 = vpop.f32.mrf.mxu0
          %v9735 = vadd.f32 %v9707, %v9734
          %9736 = vdwg.mxu0
          %9737 = vmatpush.msra.mxu0 %v9674
          %9738 = vmatpush.msra.mxu0 %v9673
          %9739 = vmatpush.msra.mxu0 %v9672
          %9740 = vmatpush.msra.mxu0 %v9671
          %9741 = vmatpush.msra.mxu0 %v9670
          %9742 = vmatpush.msra.mxu0 %v9669
          %9743 = vmatpush.msra.mxu0 %v9668
          %9744 = vmatpush.msra.mxu0 %v9667
          %9745 = vmatpush.msra.mxu0 %v9666
          %9746 = vmatpush.msra.mxu0 %v9665
          %9747 = vmatpush.msra.mxu0 %v9664
          %9748 = vmatpush.msra.mxu0 %v9663
          %9749 = vmatpush.msra.mxu0 %v9662
          %9750 = vmatpush.msra.mxu0 %v9661
          %9751 = vmatpush.msra.mxu0 %v9660
          %9752 = vmatpush.msra.mxu0 %v9659
          %9753 = vmatmul.f32.gmra.mxu0 %v9710
          %v9754 = vpop.f32.mrf.mxu0
          %v9755 = vadd.f32 %v9735, %v9754
          %9756 = vdwg.mxu0
          %9757 = vmatpush.msra.mxu0 %v9690
          %9758 = vmatpush.msra.mxu0 %v9689
          %9759 = vmatpush.msra.mxu0 %v9688
          %9760 = vmatpush.msra.mxu0 %v9687
          %9761 = vmatpush.msra.mxu0 %v9686
          %9762 = vmatpush.msra.mxu0 %v9685
          %9763 = vmatpush.msra.mxu0 %v9684
          %9764 = vmatpush.msra.mxu0 %v9683
          %9765 = vmatpush.msra.mxu0 %v9682
          %9766 = vmatpush.msra.mxu0 %v9681
          %9767 = vmatpush.msra.mxu0 %v9680
          %9768 = vmatpush.msra.mxu0 %v9679
          %9769 = vmatpush.msra.mxu0 %v9678
          %9770 = vmatpush.msra.mxu0 %v9677
          %9771 = vmatpush.msra.mxu0 %v9676
          %9772 = vmatpush.msra.mxu0 %v9675
          %9773 = vmatmul.f32.gmra.mxu0 %v9711
          %v9774 = vpop.f32.mrf.mxu0
          %v9775 = vadd.f32 %v9755, %v9774
          %9776 = vdwg.mxu0
          %9777 = vmatpush.msra.mxu0 %v9706
          %9778 = vmatpush.msra.mxu0 %v9705
          %9779 = vmatpush.msra.mxu0 %v9704
          %9780 = vmatpush.msra.mxu0 %v9703
          %9781 = vmatpush.msra.mxu0 %v9702
          %9782 = vmatpush.msra.mxu0 %v9701
          %9783 = vmatpush.msra.mxu0 %v9700
          %9784 = vmatpush.msra.mxu0 %v9699
          %9785 = vmatpush.msra.mxu0 %v9698
          %9786 = vmatpush.msra.mxu0 %v9697
          %9787 = vmatpush.msra.mxu0 %v9696
          %9788 = vmatpush.msra.mxu0 %v9695
          %9789 = vmatpush.msra.mxu0 %v9694
          %9790 = vmatpush.msra.mxu0 %v9693
          %9791 = vmatpush.msra.mxu0 %v9692
          %9792 = vmatpush.msra.mxu0 %v9691
          %9793 = vmatmul.f32.gmra.mxu0 %v9712
          %v9794 = vpop.f32.mrf.mxu0
          %v9795 = vadd.f32 %v9775, %v9794
          %9796 = vdwg.mxu0
          %vm9797 = vcmask 8192
          %9798 = vst.msk [vmem:[#allocation7] sm:$0x1] %vm9797, %v9795
        $region60: #{tpu_custom_call.1} parent=51 // pred_fallthru
          _
        // Predicated region
        $region61: #{tpu_custom_call.1} parent=51 // pred_check
          %p9799 = pneg %p208
        $region62: #{tpu_custom_call.1} parent=51 // pred_check_branch
          %9801 = sbr.rel (%p9799) target = $region64
        $region63: #{tpu_custom_call.1} parent=51 // pred_region
          %9803 = vsyncadd [#allocation8], 0
          %s9805 = sshll.u32 [#allocation7], 4
          %s9806 = int_to_ptr.vmem [resolvable:$true] %s9805
          %s9807 = sshll.u32 %s9, 4
          %s9808 = int_to_ptr.hbm [resolvable:$true] %s9807
          %9810 = dma.vmem_to_hbm [thread:$0]  %s9806, 16, %s9808, [#allocation8]
        $region64: #{tpu_custom_call.1} parent=51 // pred_fallthru
          _
        // Predicated region
        $region65: #{tpu_custom_call.1} parent=51 // pred_check
          %p9811 = pneg %p208
        $region66: #{tpu_custom_call.1} parent=51 // pred_check_branch
          %9813 = sbr.rel (%p9811) target = $region68
        $region67: #{tpu_custom_call.1} parent=51 // pred_region
          %9815 = dma.done [#allocation8], 16
        $region68: #{tpu_custom_call.1} parent=51 // pred_fallthru
          _
      $region52: #{tpu_custom_call.1} parent=5 // pred_fallthru
        _
      %p9816 = scmp.le.s32.totalorder 2, %s17
      // Predicated region
      $region69: #{tpu_custom_call.1} parent=5 // pred_check
        %p9817 = pneg %p9816
      $region70: #{tpu_custom_call.1} parent=5 // pred_check_branch
        %9819 = sbr.rel (%p9817) target = $region72
      $region71: #{tpu_custom_call.1} parent=5 // pred_region
        %s9820 = ssub.s32 %s17, 2
      $region72: #{tpu_custom_call.1} parent=5 // pred_fallthru
        _
    $region6: #{tpu_custom_call.1} parent=1 // loop_footer
      %s21 = sadd.s32 1, %s17
    $region7: #{tpu_custom_call.1} parent=1 // loop_footer_branch
      %16 = sbr.rel target = $region3
    $region8: #{tpu_custom_call.1} parent=1 // loop_exit
      _
    %9821 = vsyncpa [#allocation8], 1
    %s9822 = scalar_lea.sflag [#allocation8], 1
    %9823 = vsyncpa %s9822, 1

</llo_original>
